<compile_context>
chip_gen: v6e
topology: v6e:2x2x1
jax: 0.10.0
libtpu: 0.0.40
codegen_flags: <defaults>
</compile_context>

<pallas_src>
import jax
import jax.numpy as jnp
from jax.experimental import pallas as pl
from jax.experimental.pallas import tpu as pltpu

CHANNELS = 1
IMG_SIZE = 28
IMG_AREA = CHANNELS * IMG_SIZE * IMG_SIZE   # 784
LATENT_DIM = 100
BN_EPS = 0.8                                # nn.BatchNorm1d(out_feat, 0.8) -> eps=0.8
LRELU_SLOPE = 0.2

LATENT_PAD = 128                            # K of first matmul: 100 -> 128 (zero pad)

D1, D2, D3, D4 = 128, 256, 512, 1024
LAYER_DIMS = [LATENT_DIM, D1, D2, D3, D4, IMG_AREA]


def _round_up(n, m=128):
    return ((n + m - 1) // m) * m


# One lane-dense f32 slab holding all small side-params.  Every field starts
# at a multiple-of-128 lane offset so in-kernel slices are vreg-aligned.
# (b2/b3/b4 are intentionally absent — cancelled exactly by BatchNorm.)
_SLAB_FIELDS = (("b1", D1), ("g2", D2), ("be2", D2),
                ("g3", D3), ("be3", D3),
                ("g4", D4), ("be4", D4),
                ("b5", IMG_AREA))
SLAB_OFFSETS = {}
_off = 0
for _name, _dim in _SLAB_FIELDS:
    SLAB_OFFSETS[_name] = _off
    _off += _round_up(_dim)
SLAB_WIDTH = _off                            # 4608 floats (18 KiB)


# ----------------------------- kernel helpers ------------------------------

def _matmul(x, w):
    # bf16 operands on the MXU, f32 accumulation.
    return jnp.dot(x.astype(jnp.bfloat16), w, preferred_element_type=jnp.float32)


def _batchnorm(x, g, be):
    # Training-mode BatchNorm1d: biased batch statistics, computed in f32.
    mu = jnp.mean(x, axis=0, keepdims=True)
    var = jnp.mean((x - mu) * (x - mu), axis=0, keepdims=True)
    return (x - mu) * jax.lax.rsqrt(var + BN_EPS) * g + be


def _lrelu(x):
    return jnp.where(x > 0, x, LRELU_SLOPE * x)


def generator_kernel(z_ref, w1_ref, slab_ref,
                     w2_hbm, w3_hbm, w4_hbm, w5_hbm,
                     out_ref,
                     w2_buf, w3_buf, w4_buf, w5_buf, sems):
    # Start all four large-weight HBM->VMEM DMAs immediately; each layer waits
    # on its own transfer right before its matmul, so layer L+1's weight fetch
    # overlaps layer L's compute.
    copies = (
        pltpu.make_async_copy(w2_hbm, w2_buf, sems.at[0]),
        pltpu.make_async_copy(w3_hbm, w3_buf, sems.at[1]),
        pltpu.make_async_copy(w4_hbm, w4_buf, sems.at[2]),
        pltpu.make_async_copy(w5_hbm, w5_buf, sems.at[3]),
    )
    for cp in copies:
        cp.start()

    def p(name, dim):
        off = SLAB_OFFSETS[name]                 # static, multiple of 128
        return slab_ref[:, off:off + dim]        # (1, dim) f32

    # Layer 1: Linear(100->128) + LeakyReLU (no BN).  z zero-padded to K=128.
    h = _lrelu(_matmul(z_ref[...], w1_ref[...]) + p("b1", D1))                    # (B, 128)

    copies[0].wait()
    h = _lrelu(_batchnorm(_matmul(h, w2_buf[...]), p("g2", D2), p("be2", D2)))    # (B, 256)
    copies[1].wait()
    h = _lrelu(_batchnorm(_matmul(h, w3_buf[...]), p("g3", D3), p("be3", D3)))    # (B, 512)
    copies[2].wait()
    h = _lrelu(_batchnorm(_matmul(h, w4_buf[...]), p("g4", D4), p("be4", D4)))    # (B, 1024)
    copies[3].wait()
    out_ref[...] = jnp.tanh(_matmul(h, w5_buf[...]) + p("b5", IMG_AREA))          # (B, 784)


# --------------------------------- params ----------------------------------

def init_params(key):
    """Deterministic PyTorch-style init (f32, un-padded): Linear weights/biases
    U(-1/sqrt(in), 1/sqrt(in)); BatchNorm gamma=1, beta=0.  Weights (in, out)."""
    params = []
    for li in range(5):
        d_in, d_out = LAYER_DIMS[li], LAYER_DIMS[li + 1]
        key, kw, kb = jax.random.split(key, 3)
        bound = 1.0 / jnp.sqrt(jnp.float32(d_in))
        params.append(jax.random.uniform(kw, (d_in, d_out), jnp.float32, -bound, bound))
        params.append(jax.random.uniform(kb, (1, d_out), jnp.float32, -bound, bound))
        if li in (1, 2, 3):                       # layers with BatchNorm
            params.append(jnp.ones((1, d_out), jnp.float32))    # gamma
            params.append(jnp.zeros((1, d_out), jnp.float32))   # beta
    return params


def pack_params(params):
    """One-time conversion: pad w1 (K: 100->128) with zeros, cast weight
    matrices to bf16, drop b2/b3/b4 (cancelled by BN), and pack all remaining
    small f32 params into one lane-dense slab."""
    (w1, b1, w2, b2, g2, be2, w3, b3, g3, be3, w4, b4, g4, be4, w5, b5) = params
    del b2, b3, b4   # exactly cancelled by training-mode BatchNorm

    w1p = jnp.pad(w1, ((0, LATENT_PAD - LATENT_DIM), (0, 0))).astype(jnp.bfloat16)

    slab = jnp.zeros((1, SLAB_WIDTH), jnp.float32)
    for name, arr in (("b1", b1), ("g2", g2), ("be2", be2),
                      ("g3", g3), ("be3", be3),
                      ("g4", g4), ("be4", be4), ("b5", b5)):
        off = SLAB_OFFSETS[name]
        slab = slab.at[:, off:off + arr.shape[1]].set(arr)

    return (w1p, slab,
            w2.astype(jnp.bfloat16), w3.astype(jnp.bfloat16),
            w4.astype(jnp.bfloat16), w5.astype(jnp.bfloat16))


# -------------------------------- wrapper -----------------------------------

def generator_forward(z, packed_params):
    B = z.shape[0]
    z_pad = jnp.pad(z, ((0, 0), (0, LATENT_PAD - LATENT_DIM)))
    w1p, slab, w2, w3, w4, w5 = packed_params

    vmem = pl.BlockSpec(memory_space=pltpu.MemorySpace.VMEM)
    hbm = pl.BlockSpec(memory_space=pl.ANY)   # raw HBM ref, manual DMA in-kernel

    out = pl.pallas_call(
        generator_kernel,
        out_shape=jax.ShapeDtypeStruct((B, IMG_AREA), jnp.float32),
        in_specs=[
            vmem,                 # z (padded)
            vmem,                 # w1 (small: keep as direct VMEM input)
            vmem,                 # packed side-param slab
            hbm, hbm, hbm, hbm,   # w2..w5 (HBM, manual DMA)
        ],
        out_specs=vmem,
        scratch_shapes=[
            pltpu.VMEM((D1, D2), jnp.bfloat16),        # w2 buffer
            pltpu.VMEM((D2, D3), jnp.bfloat16),        # w3 buffer
            pltpu.VMEM((D3, D4), jnp.bfloat16),        # w4 buffer
            pltpu.VMEM((D4, IMG_AREA), jnp.bfloat16),  # w5 buffer (unpadded, 784 wide)
            pltpu.SemaphoreType.DMA((4,)),
        ],
        compiler_params=pltpu.CompilerParams(vmem_limit_bytes=8 << 20),
    )(z_pad, w1p, slab, w2, w3, w4, w5)

    # NCHW reshape (same memory order as PyTorch .view).
    return out.reshape(B, CHANNELS, IMG_SIZE, IMG_SIZE)


# ------------------------------- references ---------------------------------

def generator_reference(z, params, matmul_dtype=jnp.float32, bn_linear_bias=True):
    """Plain-JAX reference.  matmul_dtype=bf16 + bn_linear_bias=False mirrors
    the kernel's numerics exactly (bf16 MXU operands, f32 accumulation, BN-fed
    biases folded away); the defaults reproduce the original f32 module math."""
    (w1, b1, w2, b2, g2, be2, w3, b3, g3, be3, w4, b4, g4, be4, w5, b5) = params

    def lin(x, w, b=None):
        y = jnp.dot(x.astype(matmul_dtype), w.astype(matmul_dtype),
                    preferred_element_type=jnp.float32)
        return y if b is None else y + b

    def bn(x, g, be):
        mu = jnp.mean(x, axis=0, keepdims=True)
        var = jnp.mean((x - mu) ** 2, axis=0, keepdims=True)
        return (x - mu) * jax.lax.rsqrt(var + BN_EPS) * g + be

    def lrelu(x):
        return jnp.where(x > 0, x, LRELU_SLOPE * x)

    def mb(b):
        return b if bn_linear_bias else None

    h = lrelu(lin(z, w1, b1))
    h = lrelu(bn(lin(h, w2, mb(b2)), g2, be2))
    h = lrelu(bn(lin(h, w3, mb(b3)), g3, be3))
    h = lrelu(bn(lin(h, w4, mb(b4)), g4, be4))
    out = jnp.tanh(lin(h, w5, b5))
    return out.reshape(z.shape[0], CHANNELS, IMG_SIZE, IMG_SIZE)


# ---------------------------------- main -------------------------------------

if __name__ == "__main__":
    key = jax.random.PRNGKey(0)
    key_params, key_z = jax.random.split(key)

    params = init_params(key_params)        # f32, PyTorch-shaped
    packed = pack_params(params)            # padded + bf16 weights + param slab

    B = 8
    z = jax.random.normal(key_z, (B, LATENT_DIM), jnp.float32)

    imgs = jax.block_until_ready(generator_forward(z, packed))
    assert imgs.shape == (B, CHANNELS, IMG_SIZE, IMG_SIZE), imgs.shape
    assert imgs.dtype == jnp.float32

    # Tight check vs a reference with identical numerics (bf16 matmuls, BN-fed
    # biases folded away — mathematically identical to the original module).
    ref_bf16 = jax.block_until_ready(
        generator_reference(z, params, matmul_dtype=jnp.bfloat16,
                            bn_linear_bias=False))
    if not jnp.allclose(imgs, ref_bf16, atol=2e-3, rtol=2e-3):
        raise AssertionError("Pallas kernel mismatch vs bf16-matched reference")

    # Loose sanity check vs the original full-f32 math (bf16 changes numerics).
    ref_f32 = jax.block_until_ready(generator_reference(z, params))
    if not jnp.allclose(imgs, ref_f32, atol=1e-1):
        raise AssertionError("Pallas kernel drifted too far from f32 reference")

    print("KERNEL_OK")
</pallas_src>

<mosaic_0001>
module attributes {stable_mosaic.version = 11 : i64} {
  func.func @generator_kernel(%arg0: memref<8x128xf32, #tpu.memory_space<vmem>>, %arg1: memref<128x128xbf16, #tpu.memory_space<vmem>>, %arg2: memref<1x4608xf32, #tpu.memory_space<vmem>>, %arg3: memref<128x256xbf16, #tpu.memory_space<any>>, %arg4: memref<256x512xbf16, #tpu.memory_space<any>>, %arg5: memref<512x1024xbf16, #tpu.memory_space<any>>, %arg6: memref<1024x784xbf16, #tpu.memory_space<any>>, %arg7: memref<8x784xf32, #tpu.memory_space<vmem>>, %arg8: memref<128x256xbf16, #tpu.memory_space<vmem>>, %arg9: memref<256x512xbf16, #tpu.memory_space<vmem>>, %arg10: memref<512x1024xbf16, #tpu.memory_space<vmem>>, %arg11: memref<1024x784xbf16, #tpu.memory_space<vmem>>, %arg12: memref<4x!tpu.dma_semaphore, #tpu.memory_space<semaphore_mem>>) attributes {dimension_semantics = [], scalar_prefetch = 0 : i64, scratch_operands = 5 : i64, tpu.core_type = #tpu.core_type<tc>} {
    %c0_i32 = arith.constant 0 : i32
    %0 = tpu.memref_slice %arg12[%c0_i32] : memref<4x!tpu.dma_semaphore, #tpu.memory_space<semaphore_mem>> -> memref<1x!tpu.dma_semaphore, #tpu.memory_space<semaphore_mem>>
    %1 = tpu.memref_squeeze %0 : memref<1x!tpu.dma_semaphore, #tpu.memory_space<semaphore_mem>> -> memref<!tpu.dma_semaphore, #tpu.memory_space<semaphore_mem>>
    tpu.enqueue_dma source(%arg3 : memref<128x256xbf16, #tpu.memory_space<any>>) target(%arg8 : memref<128x256xbf16, #tpu.memory_space<vmem>>) target_semaphore(%1 : memref<!tpu.dma_semaphore, #tpu.memory_space<semaphore_mem>>)
    %c1_i32 = arith.constant 1 : i32
    %2 = tpu.memref_slice %arg12[%c1_i32] : memref<4x!tpu.dma_semaphore, #tpu.memory_space<semaphore_mem>> -> memref<1x!tpu.dma_semaphore, #tpu.memory_space<semaphore_mem>>
    %3 = tpu.memref_squeeze %2 : memref<1x!tpu.dma_semaphore, #tpu.memory_space<semaphore_mem>> -> memref<!tpu.dma_semaphore, #tpu.memory_space<semaphore_mem>>
    tpu.enqueue_dma source(%arg4 : memref<256x512xbf16, #tpu.memory_space<any>>) target(%arg9 : memref<256x512xbf16, #tpu.memory_space<vmem>>) target_semaphore(%3 : memref<!tpu.dma_semaphore, #tpu.memory_space<semaphore_mem>>)
    %c2_i32 = arith.constant 2 : i32
    %4 = tpu.memref_slice %arg12[%c2_i32] : memref<4x!tpu.dma_semaphore, #tpu.memory_space<semaphore_mem>> -> memref<1x!tpu.dma_semaphore, #tpu.memory_space<semaphore_mem>>
    %5 = tpu.memref_squeeze %4 : memref<1x!tpu.dma_semaphore, #tpu.memory_space<semaphore_mem>> -> memref<!tpu.dma_semaphore, #tpu.memory_space<semaphore_mem>>
    tpu.enqueue_dma source(%arg5 : memref<512x1024xbf16, #tpu.memory_space<any>>) target(%arg10 : memref<512x1024xbf16, #tpu.memory_space<vmem>>) target_semaphore(%5 : memref<!tpu.dma_semaphore, #tpu.memory_space<semaphore_mem>>)
    %c3_i32 = arith.constant 3 : i32
    %6 = tpu.memref_slice %arg12[%c3_i32] : memref<4x!tpu.dma_semaphore, #tpu.memory_space<semaphore_mem>> -> memref<1x!tpu.dma_semaphore, #tpu.memory_space<semaphore_mem>>
    %7 = tpu.memref_squeeze %6 : memref<1x!tpu.dma_semaphore, #tpu.memory_space<semaphore_mem>> -> memref<!tpu.dma_semaphore, #tpu.memory_space<semaphore_mem>>
    tpu.enqueue_dma source(%arg6 : memref<1024x784xbf16, #tpu.memory_space<any>>) target(%arg11 : memref<1024x784xbf16, #tpu.memory_space<vmem>>) target_semaphore(%7 : memref<!tpu.dma_semaphore, #tpu.memory_space<semaphore_mem>>)
    %c0 = arith.constant 0 : index
    %c0_0 = arith.constant 0 : index
    %8 = vector.load %arg0[%c0, %c0_0] : memref<8x128xf32, #tpu.memory_space<vmem>>, vector<8x128xf32>
    %c0_1 = arith.constant 0 : index
    %c0_2 = arith.constant 0 : index
    %9 = vector.load %arg1[%c0_1, %c0_2] : memref<128x128xbf16, #tpu.memory_space<vmem>>, vector<128x128xbf16>
    %10 = arith.truncf %8 : vector<8x128xf32> to vector<8x128xbf16>
    %cst = arith.constant dense<0.000000e+00> : vector<8x128xf32>
    %11 = tpu.matmul %10, %9, %cst {dimension_numbers = #tpu.dot_dimension_numbers<[1], [0], [0], [1], [0, 0, 1, 1], [], []>} : vector<8x128xbf16>, vector<128x128xbf16>, vector<8x128xf32> -> vector<8x128xf32>
    %c0_3 = arith.constant 0 : index
    %c0_4 = arith.constant 0 : index
    %12 = vector.load %arg2[%c0_3, %c0_4] : memref<1x4608xf32, #tpu.memory_space<vmem>>, vector<1x128xf32>
    %13 = vector.broadcast %12 : vector<1x128xf32> to vector<8x128xf32>
    %14 = arith.addf %11, %13 : vector<8x128xf32>
    %cst_5 = arith.constant 0.000000e+00 : f32
    %15 = vector.broadcast %cst_5 : f32 to vector<8x128xf32>
    %16 = arith.cmpf ogt, %14, %15 : vector<8x128xf32>
    %cst_6 = arith.constant 2.000000e-01 : f32
    %17 = vector.broadcast %cst_6 : f32 to vector<8x128xf32>
    %18 = arith.mulf %17, %14 : vector<8x128xf32>
    %19 = arith.select %16, %14, %18 : vector<8x128xi1>, vector<8x128xf32>
    %c0_i32_7 = arith.constant 0 : i32
    %20 = tpu.memref_slice %arg12[%c0_i32_7] : memref<4x!tpu.dma_semaphore, #tpu.memory_space<semaphore_mem>> -> memref<1x!tpu.dma_semaphore, #tpu.memory_space<semaphore_mem>>
    %21 = tpu.memref_squeeze %20 : memref<1x!tpu.dma_semaphore, #tpu.memory_space<semaphore_mem>> -> memref<!tpu.dma_semaphore, #tpu.memory_space<semaphore_mem>>
    tpu.wait_dma2 semaphore(%21 : memref<!tpu.dma_semaphore, #tpu.memory_space<semaphore_mem>>) src(%arg3 : memref<128x256xbf16, #tpu.memory_space<any>>) dst(%arg8 : memref<128x256xbf16, #tpu.memory_space<vmem>>)
    %c0_8 = arith.constant 0 : index
    %c0_9 = arith.constant 0 : index
    %22 = vector.load %arg8[%c0_8, %c0_9] : memref<128x256xbf16, #tpu.memory_space<vmem>>, vector<128x256xbf16>
    %23 = arith.truncf %19 : vector<8x128xf32> to vector<8x128xbf16>
    %cst_10 = arith.constant dense<0.000000e+00> : vector<8x256xf32>
    %24 = tpu.matmul %23, %22, %cst_10 {dimension_numbers = #tpu.dot_dimension_numbers<[1], [0], [0], [1], [0, 0, 1, 1], [], []>} : vector<8x128xbf16>, vector<128x256xbf16>, vector<8x256xf32> -> vector<8x256xf32>
    %c0_11 = arith.constant 0 : index
    %c128 = arith.constant 128 : index
    %25 = vector.load %arg2[%c0_11, %c128] : memref<1x4608xf32, #tpu.memory_space<vmem>>, vector<1x256xf32>
    %c0_12 = arith.constant 0 : index
    %c384 = arith.constant 384 : index
    %26 = vector.load %arg2[%c0_12, %c384] : memref<1x4608xf32, #tpu.memory_space<vmem>>, vector<1x256xf32>
    %cst_13 = arith.constant dense<0.000000e+00> : vector<256xf32>
    %27 = vector.multi_reduction <add>, %24, %cst_13 [0] : vector<8x256xf32> to vector<256xf32>
    %28 = vector.shape_cast %27 : vector<256xf32> to vector<1x256xf32>
    %cst_14 = arith.constant 8.000000e+00 : f32
    %29 = vector.broadcast %cst_14 : f32 to vector<1x256xf32>
    %30 = arith.divf %28, %29 : vector<1x256xf32>
    %31 = vector.broadcast %30 : vector<1x256xf32> to vector<8x256xf32>
    %32 = arith.subf %24, %31 : vector<8x256xf32>
    %33 = vector.broadcast %30 : vector<1x256xf32> to vector<8x256xf32>
    %34 = arith.subf %24, %33 : vector<8x256xf32>
    %35 = arith.mulf %32, %34 : vector<8x256xf32>
    %cst_15 = arith.constant dense<0.000000e+00> : vector<256xf32>
    %36 = vector.multi_reduction <add>, %35, %cst_15 [0] : vector<8x256xf32> to vector<256xf32>
    %37 = vector.shape_cast %36 : vector<256xf32> to vector<1x256xf32>
    %cst_16 = arith.constant 8.000000e+00 : f32
    %38 = vector.broadcast %cst_16 : f32 to vector<1x256xf32>
    %39 = arith.divf %37, %38 : vector<1x256xf32>
    %40 = vector.broadcast %30 : vector<1x256xf32> to vector<8x256xf32>
    %41 = arith.subf %24, %40 : vector<8x256xf32>
    %cst_17 = arith.constant 8.000000e-01 : f32
    %42 = vector.broadcast %cst_17 : f32 to vector<1x256xf32>
    %43 = arith.addf %39, %42 : vector<1x256xf32>
    %44 = math.rsqrt %43 : vector<1x256xf32>
    %45 = vector.broadcast %44 : vector<1x256xf32> to vector<8x256xf32>
    %46 = arith.mulf %41, %45 : vector<8x256xf32>
    %47 = vector.broadcast %25 : vector<1x256xf32> to vector<8x256xf32>
    %48 = arith.mulf %46, %47 : vector<8x256xf32>
    %49 = vector.broadcast %26 : vector<1x256xf32> to vector<8x256xf32>
    %50 = arith.addf %48, %49 : vector<8x256xf32>
    %cst_18 = arith.constant 0.000000e+00 : f32
    %51 = vector.broadcast %cst_18 : f32 to vector<8x256xf32>
    %52 = arith.cmpf ogt, %50, %51 : vector<8x256xf32>
    %cst_19 = arith.constant 2.000000e-01 : f32
    %53 = vector.broadcast %cst_19 : f32 to vector<8x256xf32>
    %54 = arith.mulf %53, %50 : vector<8x256xf32>
    %55 = arith.select %52, %50, %54 : vector<8x256xi1>, vector<8x256xf32>
    %c1_i32_20 = arith.constant 1 : i32
    %56 = tpu.memref_slice %arg12[%c1_i32_20] : memref<4x!tpu.dma_semaphore, #tpu.memory_space<semaphore_mem>> -> memref<1x!tpu.dma_semaphore, #tpu.memory_space<semaphore_mem>>
    %57 = tpu.memref_squeeze %56 : memref<1x!tpu.dma_semaphore, #tpu.memory_space<semaphore_mem>> -> memref<!tpu.dma_semaphore, #tpu.memory_space<semaphore_mem>>
    tpu.wait_dma2 semaphore(%57 : memref<!tpu.dma_semaphore, #tpu.memory_space<semaphore_mem>>) src(%arg4 : memref<256x512xbf16, #tpu.memory_space<any>>) dst(%arg9 : memref<256x512xbf16, #tpu.memory_space<vmem>>)
    %c0_21 = arith.constant 0 : index
    %c0_22 = arith.constant 0 : index
    %58 = vector.load %arg9[%c0_21, %c0_22] : memref<256x512xbf16, #tpu.memory_space<vmem>>, vector<256x512xbf16>
    %59 = arith.truncf %55 : vector<8x256xf32> to vector<8x256xbf16>
    %cst_23 = arith.constant dense<0.000000e+00> : vector<8x512xf32>
    %60 = tpu.matmul %59, %58, %cst_23 {dimension_numbers = #tpu.dot_dimension_numbers<[1], [0], [0], [1], [0, 0, 1, 1], [], []>} : vector<8x256xbf16>, vector<256x512xbf16>, vector<8x512xf32> -> vector<8x512xf32>
    %c0_24 = arith.constant 0 : index
    %c640 = arith.constant 640 : index
    %61 = vector.load %arg2[%c0_24, %c640] : memref<1x4608xf32, #tpu.memory_space<vmem>>, vector<1x512xf32>
    %c0_25 = arith.constant 0 : index
    %c1152 = arith.constant 1152 : index
    %62 = vector.load %arg2[%c0_25, %c1152] : memref<1x4608xf32, #tpu.memory_space<vmem>>, vector<1x512xf32>
    %cst_26 = arith.constant dense<0.000000e+00> : vector<512xf32>
    %63 = vector.multi_reduction <add>, %60, %cst_26 [0] : vector<8x512xf32> to vector<512xf32>
    %64 = vector.shape_cast %63 : vector<512xf32> to vector<1x512xf32>
    %cst_27 = arith.constant 8.000000e+00 : f32
    %65 = vector.broadcast %cst_27 : f32 to vector<1x512xf32>
    %66 = arith.divf %64, %65 : vector<1x512xf32>
    %67 = vector.broadcast %66 : vector<1x512xf32> to vector<8x512xf32>
    %68 = arith.subf %60, %67 : vector<8x512xf32>
    %69 = vector.broadcast %66 : vector<1x512xf32> to vector<8x512xf32>
    %70 = arith.subf %60, %69 : vector<8x512xf32>
    %71 = arith.mulf %68, %70 : vector<8x512xf32>
    %cst_28 = arith.constant dense<0.000000e+00> : vector<512xf32>
    %72 = vector.multi_reduction <add>, %71, %cst_28 [0] : vector<8x512xf32> to vector<512xf32>
    %73 = vector.shape_cast %72 : vector<512xf32> to vector<1x512xf32>
    %cst_29 = arith.constant 8.000000e+00 : f32
    %74 = vector.broadcast %cst_29 : f32 to vector<1x512xf32>
    %75 = arith.divf %73, %74 : vector<1x512xf32>
    %76 = vector.broadcast %66 : vector<1x512xf32> to vector<8x512xf32>
    %77 = arith.subf %60, %76 : vector<8x512xf32>
    %cst_30 = arith.constant 8.000000e-01 : f32
    %78 = vector.broadcast %cst_30 : f32 to vector<1x512xf32>
    %79 = arith.addf %75, %78 : vector<1x512xf32>
    %80 = math.rsqrt %79 : vector<1x512xf32>
    %81 = vector.broadcast %80 : vector<1x512xf32> to vector<8x512xf32>
    %82 = arith.mulf %77, %81 : vector<8x512xf32>
    %83 = vector.broadcast %61 : vector<1x512xf32> to vector<8x512xf32>
    %84 = arith.mulf %82, %83 : vector<8x512xf32>
    %85 = vector.broadcast %62 : vector<1x512xf32> to vector<8x512xf32>
    %86 = arith.addf %84, %85 : vector<8x512xf32>
    %cst_31 = arith.constant 0.000000e+00 : f32
    %87 = vector.broadcast %cst_31 : f32 to vector<8x512xf32>
    %88 = arith.cmpf ogt, %86, %87 : vector<8x512xf32>
    %cst_32 = arith.constant 2.000000e-01 : f32
    %89 = vector.broadcast %cst_32 : f32 to vector<8x512xf32>
    %90 = arith.mulf %89, %86 : vector<8x512xf32>
    %91 = arith.select %88, %86, %90 : vector<8x512xi1>, vector<8x512xf32>
    %c2_i32_33 = arith.constant 2 : i32
    %92 = tpu.memref_slice %arg12[%c2_i32_33] : memref<4x!tpu.dma_semaphore, #tpu.memory_space<semaphore_mem>> -> memref<1x!tpu.dma_semaphore, #tpu.memory_space<semaphore_mem>>
    %93 = tpu.memref_squeeze %92 : memref<1x!tpu.dma_semaphore, #tpu.memory_space<semaphore_mem>> -> memref<!tpu.dma_semaphore, #tpu.memory_space<semaphore_mem>>
    tpu.wait_dma2 semaphore(%93 : memref<!tpu.dma_semaphore, #tpu.memory_space<semaphore_mem>>) src(%arg5 : memref<512x1024xbf16, #tpu.memory_space<any>>) dst(%arg10 : memref<512x1024xbf16, #tpu.memory_space<vmem>>)
    %c0_34 = arith.constant 0 : index
    %c0_35 = arith.constant 0 : index
    %94 = vector.load %arg10[%c0_34, %c0_35] : memref<512x1024xbf16, #tpu.memory_space<vmem>>, vector<512x1024xbf16>
    %95 = arith.truncf %91 : vector<8x512xf32> to vector<8x512xbf16>
    %cst_36 = arith.constant dense<0.000000e+00> : vector<8x1024xf32>
    %96 = tpu.matmul %95, %94, %cst_36 {dimension_numbers = #tpu.dot_dimension_numbers<[1], [0], [0], [1], [0, 0, 1, 1], [], []>} : vector<8x512xbf16>, vector<512x1024xbf16>, vector<8x1024xf32> -> vector<8x1024xf32>
    %c0_37 = arith.constant 0 : index
    %c1664 = arith.constant 1664 : index
    %97 = vector.load %arg2[%c0_37, %c1664] : memref<1x4608xf32, #tpu.memory_space<vmem>>, vector<1x1024xf32>
    %c0_38 = arith.constant 0 : index
    %c2688 = arith.constant 2688 : index
    %98 = vector.load %arg2[%c0_38, %c2688] : memref<1x4608xf32, #tpu.memory_space<vmem>>, vector<1x1024xf32>
    %cst_39 = arith.constant dense<0.000000e+00> : vector<1024xf32>
    %99 = vector.multi_reduction <add>, %96, %cst_39 [0] : vector<8x1024xf32> to vector<1024xf32>
    %100 = vector.shape_cast %99 : vector<1024xf32> to vector<1x1024xf32>
    %cst_40 = arith.constant 8.000000e+00 : f32
    %101 = vector.broadcast %cst_40 : f32 to vector<1x1024xf32>
    %102 = arith.divf %100, %101 : vector<1x1024xf32>
    %103 = vector.broadcast %102 : vector<1x1024xf32> to vector<8x1024xf32>
    %104 = arith.subf %96, %103 : vector<8x1024xf32>
    %105 = vector.broadcast %102 : vector<1x1024xf32> to vector<8x1024xf32>
    %106 = arith.subf %96, %105 : vector<8x1024xf32>
    %107 = arith.mulf %104, %106 : vector<8x1024xf32>
    %cst_41 = arith.constant dense<0.000000e+00> : vector<1024xf32>
    %108 = vector.multi_reduction <add>, %107, %cst_41 [0] : vector<8x1024xf32> to vector<1024xf32>
    %109 = vector.shape_cast %108 : vector<1024xf32> to vector<1x1024xf32>
    %cst_42 = arith.constant 8.000000e+00 : f32
    %110 = vector.broadcast %cst_42 : f32 to vector<1x1024xf32>
    %111 = arith.divf %109, %110 : vector<1x1024xf32>
    %112 = vector.broadcast %102 : vector<1x1024xf32> to vector<8x1024xf32>
    %113 = arith.subf %96, %112 : vector<8x1024xf32>
    %cst_43 = arith.constant 8.000000e-01 : f32
    %114 = vector.broadcast %cst_43 : f32 to vector<1x1024xf32>
    %115 = arith.addf %111, %114 : vector<1x1024xf32>
    %116 = math.rsqrt %115 : vector<1x1024xf32>
    %117 = vector.broadcast %116 : vector<1x1024xf32> to vector<8x1024xf32>
    %118 = arith.mulf %113, %117 : vector<8x1024xf32>
    %119 = vector.broadcast %97 : vector<1x1024xf32> to vector<8x1024xf32>
    %120 = arith.mulf %118, %119 : vector<8x1024xf32>
    %121 = vector.broadcast %98 : vector<1x1024xf32> to vector<8x1024xf32>
    %122 = arith.addf %120, %121 : vector<8x1024xf32>
    %cst_44 = arith.constant 0.000000e+00 : f32
    %123 = vector.broadcast %cst_44 : f32 to vector<8x1024xf32>
    %124 = arith.cmpf ogt, %122, %123 : vector<8x1024xf32>
    %cst_45 = arith.constant 2.000000e-01 : f32
    %125 = vector.broadcast %cst_45 : f32 to vector<8x1024xf32>
    %126 = arith.mulf %125, %122 : vector<8x1024xf32>
    %127 = arith.select %124, %122, %126 : vector<8x1024xi1>, vector<8x1024xf32>
    %c3_i32_46 = arith.constant 3 : i32
    %128 = tpu.memref_slice %arg12[%c3_i32_46] : memref<4x!tpu.dma_semaphore, #tpu.memory_space<semaphore_mem>> -> memref<1x!tpu.dma_semaphore, #tpu.memory_space<semaphore_mem>>
    %129 = tpu.memref_squeeze %128 : memref<1x!tpu.dma_semaphore, #tpu.memory_space<semaphore_mem>> -> memref<!tpu.dma_semaphore, #tpu.memory_space<semaphore_mem>>
    tpu.wait_dma2 semaphore(%129 : memref<!tpu.dma_semaphore, #tpu.memory_space<semaphore_mem>>) src(%arg6 : memref<1024x784xbf16, #tpu.memory_space<any>>) dst(%arg11 : memref<1024x784xbf16, #tpu.memory_space<vmem>>)
    %c0_47 = arith.constant 0 : index
    %c0_48 = arith.constant 0 : index
    %130 = vector.load %arg11[%c0_47, %c0_48] : memref<1024x784xbf16, #tpu.memory_space<vmem>>, vector<1024x784xbf16>
    %131 = arith.truncf %127 : vector<8x1024xf32> to vector<8x1024xbf16>
    %cst_49 = arith.constant dense<0.000000e+00> : vector<8x784xf32>
    %132 = tpu.matmul %131, %130, %cst_49 {dimension_numbers = #tpu.dot_dimension_numbers<[1], [0], [0], [1], [0, 0, 1, 1], [], []>} : vector<8x1024xbf16>, vector<1024x784xbf16>, vector<8x784xf32> -> vector<8x784xf32>
    %c0_50 = arith.constant 0 : index
    %c3712 = arith.constant 3712 : index
    %133 = vector.load %arg2[%c0_50, %c3712] : memref<1x4608xf32, #tpu.memory_space<vmem>>, vector<1x784xf32>
    %134 = vector.broadcast %133 : vector<1x784xf32> to vector<8x784xf32>
    %135 = arith.addf %132, %134 : vector<8x784xf32>
    %136 = math.tanh %135 : vector<8x784xf32>
    %c0_51 = arith.constant 0 : index
    %c0_52 = arith.constant 0 : index
    %137 = vector.load %arg7[%c0_51, %c0_52] : memref<8x784xf32, #tpu.memory_space<vmem>>, vector<8x784xf32>
    tpu.vector_store %arg7[%c0_51, %c0_52], %136 {strides = array<i32>} : memref<8x784xf32, #tpu.memory_space<vmem>>, vector<8x784xf32>,
    return
  }
}

</mosaic_0001>

<llo_original>
// kernel: tpu_custom_call.1
$region0: #{tpu_custom_call.1}
  #allocation0 [shape = 'u32[]', space=smem, size = 0x4, offset = 0x4, fixed_abs, tag = 'smem constant byte address 0x4 - core index']
  #allocation1 [shape = 'u32[144,128]{1,0:T(1,128)}', space=vmem, size = 0x12000, scoped, tag = 'internal scratch']
  #allocation2 [shape = 'bf16[128,256]{1,0:T(8,128)(2,1)}', space=vmem, size = 0x10000, scoped, tag = 'scratch operand']
  #allocation3 [shape = 'bf16[256,512]{1,0:T(8,128)(2,1)}', space=vmem, size = 0x40000, scoped, tag = 'scratch operand']
  #allocation4 [shape = 'bf16[512,1024]{1,0:T(8,128)(2,1)}', space=vmem, size = 0x100000, scoped, tag = 'scratch operand']
  #allocation5 [shape = 'bf16[1024,784]{1,0:T(8,128)(2,1)}', space=vmem, size = 0x1c0000, scoped, tag = 'scratch operand']
  #allocation6 [shape = 's32[4]{0}', space=sflag, size = 0x10, scoped, tag = 'scratch operand']
  #allocation9 [shape = 's32[]', space=sflag, size = 0x4, offset = 0, fixed_abs, tag = 'sflag constant byte address 0x0 - dummy sync flag']
  #allocation10 [shape = 's32[]', space=sflag, size = 0x4, offset = 0, fixed_abs, tag = 'sflag constant byte address 0x0 - dummy sync flag']
  #allocation11 [shape = 's32[]', space=sflag, size = 0x4, offset = 0, fixed_abs, tag = 'sflag constant byte address 0x0 - dummy sync flag']
  #allocation12 [shape = 's32[]', space=sflag, size = 0x4, offset = 0, fixed_abs, tag = 'sflag constant byte address 0x0 - dummy sync flag']
  %s0 = inlined_call_operand.vmem [shape: f32[8,128], index: 0, kind: input, shape index: {}]
  %s1 = inlined_call_operand.vmem [shape: bf16[128,128], index: 1, kind: input, shape index: {}]
  %s2 = inlined_call_operand.vmem [shape: f32[1,4608], index: 2, kind: input, shape index: {}]
  %s3 = inlined_call_operand.vmem [shape: bf16[128,256], index: 3, kind: input, shape index: {}]
  %s4 = inlined_call_operand.vmem [shape: bf16[256,512], index: 4, kind: input, shape index: {}]
  %s5 = inlined_call_operand.vmem [shape: bf16[512,1024], index: 5, kind: input, shape index: {}]
  %s6 = inlined_call_operand.vmem [shape: bf16[1024,784], index: 6, kind: input, shape index: {}]
  %s7 = inlined_call_operand.hbm [shape: f32[8,784], index: 7, kind: output, shape index: {}]
  %s8 = sld [smem:[#allocation0]]
  $region158: #{tpu_custom_call.1} parent=0
    _
  %s10 = ssub.s32 1, %s8
  %s11 = scalar_select 0, %s10, %s8
  $region1: #{tpu_custom_call.1} parent=0
    #allocation7 [shape = 'u8[28672]{0}', space=vmem, size = 0x7000, scoped, tag = 'output window, operand 0, single buffered']
    #allocation8 [shape = 's32[1]{0}', space=sflag, size = 0x4, scoped, tag = 'scoped memory for tpu_custom_call.1']
    %12 = vsyncpa [#allocation8], 0
    // Predicated region
    $region2: #{tpu_custom_call.1} parent=1 // pred_check
      _
    $region3: #{tpu_custom_call.1} parent=1 // pred_check_branch
      %14 = sbr.rel (0) target = $region5
    $region4: #{tpu_custom_call.1} parent=1 // pred_region
      _
    $region5: #{tpu_custom_call.1} parent=1 // pred_fallthru
      _
    // Predicated region
    $region6: #{tpu_custom_call.1} parent=1 // pred_check
      _
    $region7: #{tpu_custom_call.1} parent=1 // pred_check_branch
      %16 = sbr.rel (0) target = $region9
    $region8: #{tpu_custom_call.1} parent=1 // pred_region
      _
    $region9: #{tpu_custom_call.1} parent=1 // pred_fallthru
      _
    // Predicated region
    $region10: #{tpu_custom_call.1} parent=1 // pred_check
      _
    $region11: #{tpu_custom_call.1} parent=1 // pred_check_branch
      %18 = sbr.rel (0) target = $region13
    $region12: #{tpu_custom_call.1} parent=1 // pred_region
      _
    $region13: #{tpu_custom_call.1} parent=1 // pred_fallthru
      _
    %p21 = scmp.lt.u32.totalorder 128, 8
    %p22 = pneg %p21
    // Predicated region
    $region14: #{tpu_custom_call.1} parent=1 // pred_check
      _
    $region15: #{tpu_custom_call.1} parent=1 // pred_check_branch
      %24 = sbr.rel (%p21) target = $region17
    $region16: #{tpu_custom_call.1} parent=1 // pred_region
      %s40 = sand.u32 128, 7
      %p41 = scmp.eq.s32.totalorder %s40, 0
      // Predicated region
      $region29: #{tpu_custom_call.1} parent=16 // pred_check
        %p42 = pneg %p41
      $region30: #{tpu_custom_call.1} parent=16 // pred_check_branch
        %44 = sbr.rel (%p42) target = $region32
      $region31: #{tpu_custom_call.1} parent=16 // pred_region
        loop: start=0, step=1, limit=1
        $region33: #{tpu_custom_call.1} parent=31 // loop_pre_header
          _
        $region34: #{tpu_custom_call.1} parent=31 // loop_header
          %s46 = sphi 0, %s50
          %p47 = scmp.ge.s32.totalorder %s46, 1
          %s51 = sphi %s3, %s3
          %s52 = sphi [#allocation2], [#allocation2]
        $region35: #{tpu_custom_call.1} parent=31 // loop_header_branch
          %49 = sbr.rel (%p47) target = $region39
        $region36: #{tpu_custom_call.1} parent=31 // loop_body
          %v53 = vld [vmem:[%s51] sm:$0xff]
          %54 = vst [vmem:[%s52] sm:$0xff] %v53
          %v55 = vld [vmem:[%s51 + $0x8] sm:$0xff]
          %56 = vst [vmem:[%s52 + $0x8] sm:$0xff] %v55
          %v57 = vld [vmem:[%s51 + $0x10] sm:$0xff]
          %58 = vst [vmem:[%s52 + $0x10] sm:$0xff] %v57
          %v59 = vld [vmem:[%s51 + $0x18] sm:$0xff]
          %60 = vst [vmem:[%s52 + $0x18] sm:$0xff] %v59
          %v61 = vld [vmem:[%s51 + $0x20] sm:$0xff]
          %62 = vst [vmem:[%s52 + $0x20] sm:$0xff] %v61
          %v63 = vld [vmem:[%s51 + $0x28] sm:$0xff]
          %64 = vst [vmem:[%s52 + $0x28] sm:$0xff] %v63
          %v65 = vld [vmem:[%s51 + $0x30] sm:$0xff]
          %66 = vst [vmem:[%s52 + $0x30] sm:$0xff] %v65
          %v67 = vld [vmem:[%s51 + $0x38] sm:$0xff]
          %68 = vst [vmem:[%s52 + $0x38] sm:$0xff] %v67
          %v69 = vld [vmem:[%s51 + $0x40] sm:$0xff]
          %70 = vst [vmem:[%s52 + $0x40] sm:$0xff] %v69
          %v71 = vld [vmem:[%s51 + $0x48] sm:$0xff]
          %72 = vst [vmem:[%s52 + $0x48] sm:$0xff] %v71
          %v73 = vld [vmem:[%s51 + $0x50] sm:$0xff]
          %74 = vst [vmem:[%s52 + $0x50] sm:$0xff] %v73
          %v75 = vld [vmem:[%s51 + $0x58] sm:$0xff]
          %76 = vst [vmem:[%s52 + $0x58] sm:$0xff] %v75
          %v77 = vld [vmem:[%s51 + $0x60] sm:$0xff]
          %78 = vst [vmem:[%s52 + $0x60] sm:$0xff] %v77
          %v79 = vld [vmem:[%s51 + $0x68] sm:$0xff]
          %80 = vst [vmem:[%s52 + $0x68] sm:$0xff] %v79
          %v81 = vld [vmem:[%s51 + $0x70] sm:$0xff]
          %82 = vst [vmem:[%s52 + $0x70] sm:$0xff] %v81
          %v83 = vld [vmem:[%s51 + $0x78] sm:$0xff]
          %84 = vst [vmem:[%s52 + $0x78] sm:$0xff] %v83
        $region37: #{tpu_custom_call.1} parent=31 // loop_footer
          %s50 = sadd.s32 1, %s46
        $region38: #{tpu_custom_call.1} parent=31 // loop_footer_branch
          %45 = sbr.rel target = $region34
        $region39: #{tpu_custom_call.1} parent=31 // loop_exit
          _
      $region32: #{tpu_custom_call.1} parent=16 // pred_fallthru
        _
      %p85 = pneg %p41
      // Predicated region
      $region40: #{tpu_custom_call.1} parent=16 // pred_check
        _
      $region41: #{tpu_custom_call.1} parent=16 // pred_check_branch
        %87 = sbr.rel (%p41) target = $region43
      $region42: #{tpu_custom_call.1} parent=16 // pred_region
        %s88 = sand.u32 128, 7
      $region43: #{tpu_custom_call.1} parent=16 // pred_fallthru
        _
    $region17: #{tpu_custom_call.1} parent=1 // pred_fallthru
      _
    // Predicated region
    $region18: #{tpu_custom_call.1} parent=1 // pred_check
      %p25 = pneg %p21
    $region19: #{tpu_custom_call.1} parent=1 // pred_check_branch
      %27 = sbr.rel (%p25) target = $region21
    $region20: #{tpu_custom_call.1} parent=1 // pred_region
      %s28 = sshll.u32 1, 128
      %s29 = ssub.s32 %s28, 1
      loop: start=0, step=1, limit=1
      $region22: #{tpu_custom_call.1} parent=20 // loop_pre_header
        _
      $region23: #{tpu_custom_call.1} parent=20 // loop_header
        %s31 = sphi 0, %s35
        %p32 = scmp.ge.s32.totalorder %s31, 1
        %s36 = sphi %s3, %s3
        %s37 = sphi [#allocation2], [#allocation2]
      $region24: #{tpu_custom_call.1} parent=20 // loop_header_branch
        %34 = sbr.rel (%p32) target = $region28
      $region25: #{tpu_custom_call.1} parent=20 // loop_body
        %v38 = vld [vmem:[%s36] sm:%s29]
        %39 = vst [vmem:[%s37] sm:%s29] %v38
      $region26: #{tpu_custom_call.1} parent=20 // loop_footer
        %s35 = sadd.s32 1, %s31
      $region27: #{tpu_custom_call.1} parent=20 // loop_footer_branch
        %30 = sbr.rel target = $region23
      $region28: #{tpu_custom_call.1} parent=20 // loop_exit
        _
    $region21: #{tpu_custom_call.1} parent=1 // pred_fallthru
      _
    // Predicated region
    $region44: #{tpu_custom_call.1} parent=1 // pred_check
      _
    $region45: #{tpu_custom_call.1} parent=1 // pred_check_branch
      %91 = sbr.rel (0) target = $region47
    $region46: #{tpu_custom_call.1} parent=1 // pred_region
      %92 = vsyncadd [#allocation6], 2048
    $region47: #{tpu_custom_call.1} parent=1 // pred_fallthru
      _
    %s93 = scalar_lea.sflag [#allocation6], 1
    %p95 = scmp.lt.u32.totalorder 512, 8
    %p96 = pneg %p95
    // Predicated region
    $region48: #{tpu_custom_call.1} parent=1 // pred_check
      _
    $region49: #{tpu_custom_call.1} parent=1 // pred_check_branch
      %98 = sbr.rel (%p95) target = $region51
    $region50: #{tpu_custom_call.1} parent=1 // pred_region
      %s114 = sand.u32 512, 7
      %p115 = scmp.eq.s32.totalorder %s114, 0
      // Predicated region
      $region63: #{tpu_custom_call.1} parent=50 // pred_check
        %p116 = pneg %p115
      $region64: #{tpu_custom_call.1} parent=50 // pred_check_branch
        %118 = sbr.rel (%p116) target = $region66
      $region65: #{tpu_custom_call.1} parent=50 // pred_region
        loop: start=0, step=1, limit=1
        $region67: #{tpu_custom_call.1} parent=65 // loop_pre_header
          _
        $region68: #{tpu_custom_call.1} parent=65 // loop_header
          %s120 = sphi 0, %s124
          %p121 = scmp.ge.s32.totalorder %s120, 1
          %s125 = sphi %s4, %s4
          %s126 = sphi [#allocation3], [#allocation3]
        $region69: #{tpu_custom_call.1} parent=65 // loop_header_branch
          %123 = sbr.rel (%p121) target = $region73
        $region70: #{tpu_custom_call.1} parent=65 // loop_body
          %v127 = vld [vmem:[%s125] sm:$0xff]
          %128 = vst [vmem:[%s126] sm:$0xff] %v127
          %v129 = vld [vmem:[%s125 + $0x8] sm:$0xff]
          %130 = vst [vmem:[%s126 + $0x8] sm:$0xff] %v129
          %v131 = vld [vmem:[%s125 + $0x10] sm:$0xff]
          %132 = vst [vmem:[%s126 + $0x10] sm:$0xff] %v131
          %v133 = vld [vmem:[%s125 + $0x18] sm:$0xff]
          %134 = vst [vmem:[%s126 + $0x18] sm:$0xff] %v133
          %v135 = vld [vmem:[%s125 + $0x20] sm:$0xff]
          %136 = vst [vmem:[%s126 + $0x20] sm:$0xff] %v135
          %v137 = vld [vmem:[%s125 + $0x28] sm:$0xff]
          %138 = vst [vmem:[%s126 + $0x28] sm:$0xff] %v137
          %v139 = vld [vmem:[%s125 + $0x30] sm:$0xff]
          %140 = vst [vmem:[%s126 + $0x30] sm:$0xff] %v139
          %v141 = vld [vmem:[%s125 + $0x38] sm:$0xff]
          %142 = vst [vmem:[%s126 + $0x38] sm:$0xff] %v141
          %v143 = vld [vmem:[%s125 + $0x40] sm:$0xff]
          %144 = vst [vmem:[%s126 + $0x40] sm:$0xff] %v143
          %v145 = vld [vmem:[%s125 + $0x48] sm:$0xff]
          %146 = vst [vmem:[%s126 + $0x48] sm:$0xff] %v145
          %v147 = vld [vmem:[%s125 + $0x50] sm:$0xff]
          %148 = vst [vmem:[%s126 + $0x50] sm:$0xff] %v147
          %v149 = vld [vmem:[%s125 + $0x58] sm:$0xff]
          %150 = vst [vmem:[%s126 + $0x58] sm:$0xff] %v149
          %v151 = vld [vmem:[%s125 + $0x60] sm:$0xff]
          %152 = vst [vmem:[%s126 + $0x60] sm:$0xff] %v151
          %v153 = vld [vmem:[%s125 + $0x68] sm:$0xff]
          %154 = vst [vmem:[%s126 + $0x68] sm:$0xff] %v153
          %v155 = vld [vmem:[%s125 + $0x70] sm:$0xff]
          %156 = vst [vmem:[%s126 + $0x70] sm:$0xff] %v155
          %v157 = vld [vmem:[%s125 + $0x78] sm:$0xff]
          %158 = vst [vmem:[%s126 + $0x78] sm:$0xff] %v157
          %v159 = vld [vmem:[%s125 + $0x80] sm:$0xff]
          %160 = vst [vmem:[%s126 + $0x80] sm:$0xff] %v159
          %v161 = vld [vmem:[%s125 + $0x88] sm:$0xff]
          %162 = vst [vmem:[%s126 + $0x88] sm:$0xff] %v161
          %v163 = vld [vmem:[%s125 + $0x90] sm:$0xff]
          %164 = vst [vmem:[%s126 + $0x90] sm:$0xff] %v163
          %v165 = vld [vmem:[%s125 + $0x98] sm:$0xff]
          %166 = vst [vmem:[%s126 + $0x98] sm:$0xff] %v165
          %v167 = vld [vmem:[%s125 + $0xa0] sm:$0xff]
          %168 = vst [vmem:[%s126 + $0xa0] sm:$0xff] %v167
          %v169 = vld [vmem:[%s125 + $0xa8] sm:$0xff]
          %170 = vst [vmem:[%s126 + $0xa8] sm:$0xff] %v169
          %v171 = vld [vmem:[%s125 + $0xb0] sm:$0xff]
          %172 = vst [vmem:[%s126 + $0xb0] sm:$0xff] %v171
          %v173 = vld [vmem:[%s125 + $0xb8] sm:$0xff]
          %174 = vst [vmem:[%s126 + $0xb8] sm:$0xff] %v173
          %v175 = vld [vmem:[%s125 + $0xc0] sm:$0xff]
          %176 = vst [vmem:[%s126 + $0xc0] sm:$0xff] %v175
          %v177 = vld [vmem:[%s125 + $0xc8] sm:$0xff]
          %178 = vst [vmem:[%s126 + $0xc8] sm:$0xff] %v177
          %v179 = vld [vmem:[%s125 + $0xd0] sm:$0xff]
          %180 = vst [vmem:[%s126 + $0xd0] sm:$0xff] %v179
          %v181 = vld [vmem:[%s125 + $0xd8] sm:$0xff]
          %182 = vst [vmem:[%s126 + $0xd8] sm:$0xff] %v181
          %v183 = vld [vmem:[%s125 + $0xe0] sm:$0xff]
          %184 = vst [vmem:[%s126 + $0xe0] sm:$0xff] %v183
          %v185 = vld [vmem:[%s125 + $0xe8] sm:$0xff]
          %186 = vst [vmem:[%s126 + $0xe8] sm:$0xff] %v185
          %v187 = vld [vmem:[%s125 + $0xf0] sm:$0xff]
          %188 = vst [vmem:[%s126 + $0xf0] sm:$0xff] %v187
          %v189 = vld [vmem:[%s125 + $0xf8] sm:$0xff]
          %190 = vst [vmem:[%s126 + $0xf8] sm:$0xff] %v189
          %v191 = vld [vmem:[%s125 + $0x100] sm:$0xff]
          %192 = vst [vmem:[%s126 + $0x100] sm:$0xff] %v191
          %v193 = vld [vmem:[%s125 + $0x108] sm:$0xff]
          %194 = vst [vmem:[%s126 + $0x108] sm:$0xff] %v193
          %v195 = vld [vmem:[%s125 + $0x110] sm:$0xff]
          %196 = vst [vmem:[%s126 + $0x110] sm:$0xff] %v195
          %v197 = vld [vmem:[%s125 + $0x118] sm:$0xff]
          %198 = vst [vmem:[%s126 + $0x118] sm:$0xff] %v197
          %v199 = vld [vmem:[%s125 + $0x120] sm:$0xff]
          %200 = vst [vmem:[%s126 + $0x120] sm:$0xff] %v199
          %v201 = vld [vmem:[%s125 + $0x128] sm:$0xff]
          %202 = vst [vmem:[%s126 + $0x128] sm:$0xff] %v201
          %v203 = vld [vmem:[%s125 + $0x130] sm:$0xff]
          %204 = vst [vmem:[%s126 + $0x130] sm:$0xff] %v203
          %v205 = vld [vmem:[%s125 + $0x138] sm:$0xff]
          %206 = vst [vmem:[%s126 + $0x138] sm:$0xff] %v205
          %v207 = vld [vmem:[%s125 + $0x140] sm:$0xff]
          %208 = vst [vmem:[%s126 + $0x140] sm:$0xff] %v207
          %v209 = vld [vmem:[%s125 + $0x148] sm:$0xff]
          %210 = vst [vmem:[%s126 + $0x148] sm:$0xff] %v209
          %v211 = vld [vmem:[%s125 + $0x150] sm:$0xff]
          %212 = vst [vmem:[%s126 + $0x150] sm:$0xff] %v211
          %v213 = vld [vmem:[%s125 + $0x158] sm:$0xff]
          %214 = vst [vmem:[%s126 + $0x158] sm:$0xff] %v213
          %v215 = vld [vmem:[%s125 + $0x160] sm:$0xff]
          %216 = vst [vmem:[%s126 + $0x160] sm:$0xff] %v215
          %v217 = vld [vmem:[%s125 + $0x168] sm:$0xff]
          %218 = vst [vmem:[%s126 + $0x168] sm:$0xff] %v217
          %v219 = vld [vmem:[%s125 + $0x170] sm:$0xff]
          %220 = vst [vmem:[%s126 + $0x170] sm:$0xff] %v219
          %v221 = vld [vmem:[%s125 + $0x178] sm:$0xff]
          %222 = vst [vmem:[%s126 + $0x178] sm:$0xff] %v221
          %v223 = vld [vmem:[%s125 + $0x180] sm:$0xff]
          %224 = vst [vmem:[%s126 + $0x180] sm:$0xff] %v223
          %v225 = vld [vmem:[%s125 + $0x188] sm:$0xff]
          %226 = vst [vmem:[%s126 + $0x188] sm:$0xff] %v225
          %v227 = vld [vmem:[%s125 + $0x190] sm:$0xff]
          %228 = vst [vmem:[%s126 + $0x190] sm:$0xff] %v227
          %v229 = vld [vmem:[%s125 + $0x198] sm:$0xff]
          %230 = vst [vmem:[%s126 + $0x198] sm:$0xff] %v229
          %v231 = vld [vmem:[%s125 + $0x1a0] sm:$0xff]
          %232 = vst [vmem:[%s126 + $0x1a0] sm:$0xff] %v231
          %v233 = vld [vmem:[%s125 + $0x1a8] sm:$0xff]
          %234 = vst [vmem:[%s126 + $0x1a8] sm:$0xff] %v233
          %v235 = vld [vmem:[%s125 + $0x1b0] sm:$0xff]
          %236 = vst [vmem:[%s126 + $0x1b0] sm:$0xff] %v235
          %v237 = vld [vmem:[%s125 + $0x1b8] sm:$0xff]
          %238 = vst [vmem:[%s126 + $0x1b8] sm:$0xff] %v237
          %v239 = vld [vmem:[%s125 + $0x1c0] sm:$0xff]
          %240 = vst [vmem:[%s126 + $0x1c0] sm:$0xff] %v239
          %v241 = vld [vmem:[%s125 + $0x1c8] sm:$0xff]
          %242 = vst [vmem:[%s126 + $0x1c8] sm:$0xff] %v241
          %v243 = vld [vmem:[%s125 + $0x1d0] sm:$0xff]
          %244 = vst [vmem:[%s126 + $0x1d0] sm:$0xff] %v243
          %v245 = vld [vmem:[%s125 + $0x1d8] sm:$0xff]
          %246 = vst [vmem:[%s126 + $0x1d8] sm:$0xff] %v245
          %v247 = vld [vmem:[%s125 + $0x1e0] sm:$0xff]
          %248 = vst [vmem:[%s126 + $0x1e0] sm:$0xff] %v247
          %v249 = vld [vmem:[%s125 + $0x1e8] sm:$0xff]
          %250 = vst [vmem:[%s126 + $0x1e8] sm:$0xff] %v249
          %v251 = vld [vmem:[%s125 + $0x1f0] sm:$0xff]
          %252 = vst [vmem:[%s126 + $0x1f0] sm:$0xff] %v251
          %v253 = vld [vmem:[%s125 + $0x1f8] sm:$0xff]
          %254 = vst [vmem:[%s126 + $0x1f8] sm:$0xff] %v253
        $region71: #{tpu_custom_call.1} parent=65 // loop_footer
          %s124 = sadd.s32 1, %s120
        $region72: #{tpu_custom_call.1} parent=65 // loop_footer_branch
          %119 = sbr.rel target = $region68
        $region73: #{tpu_custom_call.1} parent=65 // loop_exit
          _
      $region66: #{tpu_custom_call.1} parent=50 // pred_fallthru
        _
      %p255 = pneg %p115
      // Predicated region
      $region74: #{tpu_custom_call.1} parent=50 // pred_check
        _
      $region75: #{tpu_custom_call.1} parent=50 // pred_check_branch
        %257 = sbr.rel (%p115) target = $region77
      $region76: #{tpu_custom_call.1} parent=50 // pred_region
        %s258 = sand.u32 512, 7
      $region77: #{tpu_custom_call.1} parent=50 // pred_fallthru
        _
    $region51: #{tpu_custom_call.1} parent=1 // pred_fallthru
      _
    // Predicated region
    $region52: #{tpu_custom_call.1} parent=1 // pred_check
      %p99 = pneg %p95
    $region53: #{tpu_custom_call.1} parent=1 // pred_check_branch
      %101 = sbr.rel (%p99) target = $region55
    $region54: #{tpu_custom_call.1} parent=1 // pred_region
      %s102 = sshll.u32 1, 512
      %s103 = ssub.s32 %s102, 1
      loop: start=0, step=1, limit=1
      $region56: #{tpu_custom_call.1} parent=54 // loop_pre_header
        _
      $region57: #{tpu_custom_call.1} parent=54 // loop_header
        %s105 = sphi 0, %s109
        %p106 = scmp.ge.s32.totalorder %s105, 1
        %s110 = sphi %s4, %s4
        %s111 = sphi [#allocation3], [#allocation3]
      $region58: #{tpu_custom_call.1} parent=54 // loop_header_branch
        %108 = sbr.rel (%p106) target = $region62
      $region59: #{tpu_custom_call.1} parent=54 // loop_body
        %v112 = vld [vmem:[%s110] sm:%s103]
        %113 = vst [vmem:[%s111] sm:%s103] %v112
      $region60: #{tpu_custom_call.1} parent=54 // loop_footer
        %s109 = sadd.s32 1, %s105
      $region61: #{tpu_custom_call.1} parent=54 // loop_footer_branch
        %104 = sbr.rel target = $region57
      $region62: #{tpu_custom_call.1} parent=54 // loop_exit
        _
    $region55: #{tpu_custom_call.1} parent=1 // pred_fallthru
      _
    // Predicated region
    $region78: #{tpu_custom_call.1} parent=1 // pred_check
      _
    $region79: #{tpu_custom_call.1} parent=1 // pred_check_branch
      %261 = sbr.rel (0) target = $region81
    $region80: #{tpu_custom_call.1} parent=1 // pred_region
      %262 = vsyncadd %s93, 8192
    $region81: #{tpu_custom_call.1} parent=1 // pred_fallthru
      _
    %s263 = scalar_lea.sflag [#allocation6], 2
    %p265 = scmp.lt.u32.totalorder 2048, 8
    %p266 = pneg %p265
    // Predicated region
    $region82: #{tpu_custom_call.1} parent=1 // pred_check
      _
    $region83: #{tpu_custom_call.1} parent=1 // pred_check_branch
      %268 = sbr.rel (%p265) target = $region85
    $region84: #{tpu_custom_call.1} parent=1 // pred_region
      %s284 = sand.u32 2048, 7
      %p285 = scmp.eq.s32.totalorder %s284, 0
      // Predicated region
      $region97: #{tpu_custom_call.1} parent=84 // pred_check
        %p286 = pneg %p285
      $region98: #{tpu_custom_call.1} parent=84 // pred_check_branch
        %288 = sbr.rel (%p286) target = $region100
      $region99: #{tpu_custom_call.1} parent=84 // pred_region
        loop: start=0, step=1, limit=1
        $region101: #{tpu_custom_call.1} parent=99 // loop_pre_header
          _
        $region102: #{tpu_custom_call.1} parent=99 // loop_header
          %s290 = sphi 0, %s294
          %p291 = scmp.ge.s32.totalorder %s290, 1
          %s295 = sphi %s5, %s5
          %s296 = sphi [#allocation4], [#allocation4]
        $region103: #{tpu_custom_call.1} parent=99 // loop_header_branch
          %293 = sbr.rel (%p291) target = $region107
        $region104: #{tpu_custom_call.1} parent=99 // loop_body
          %v297 = vld [vmem:[%s295] sm:$0xff]
          %298 = vst [vmem:[%s296] sm:$0xff] %v297
          %v299 = vld [vmem:[%s295 + $0x8] sm:$0xff]
          %300 = vst [vmem:[%s296 + $0x8] sm:$0xff] %v299
          %v301 = vld [vmem:[%s295 + $0x10] sm:$0xff]
          %302 = vst [vmem:[%s296 + $0x10] sm:$0xff] %v301
          %v303 = vld [vmem:[%s295 + $0x18] sm:$0xff]
          %304 = vst [vmem:[%s296 + $0x18] sm:$0xff] %v303
          %v305 = vld [vmem:[%s295 + $0x20] sm:$0xff]
          %306 = vst [vmem:[%s296 + $0x20] sm:$0xff] %v305
          %v307 = vld [vmem:[%s295 + $0x28] sm:$0xff]
          %308 = vst [vmem:[%s296 + $0x28] sm:$0xff] %v307
          %v309 = vld [vmem:[%s295 + $0x30] sm:$0xff]
          %310 = vst [vmem:[%s296 + $0x30] sm:$0xff] %v309
          %v311 = vld [vmem:[%s295 + $0x38] sm:$0xff]
          %312 = vst [vmem:[%s296 + $0x38] sm:$0xff] %v311
          %v313 = vld [vmem:[%s295 + $0x40] sm:$0xff]
          %314 = vst [vmem:[%s296 + $0x40] sm:$0xff] %v313
          %v315 = vld [vmem:[%s295 + $0x48] sm:$0xff]
          %316 = vst [vmem:[%s296 + $0x48] sm:$0xff] %v315
          %v317 = vld [vmem:[%s295 + $0x50] sm:$0xff]
          %318 = vst [vmem:[%s296 + $0x50] sm:$0xff] %v317
          %v319 = vld [vmem:[%s295 + $0x58] sm:$0xff]
          %320 = vst [vmem:[%s296 + $0x58] sm:$0xff] %v319
          %v321 = vld [vmem:[%s295 + $0x60] sm:$0xff]
          %322 = vst [vmem:[%s296 + $0x60] sm:$0xff] %v321
          %v323 = vld [vmem:[%s295 + $0x68] sm:$0xff]
          %324 = vst [vmem:[%s296 + $0x68] sm:$0xff] %v323
          %v325 = vld [vmem:[%s295 + $0x70] sm:$0xff]
          %326 = vst [vmem:[%s296 + $0x70] sm:$0xff] %v325
          %v327 = vld [vmem:[%s295 + $0x78] sm:$0xff]
          %328 = vst [vmem:[%s296 + $0x78] sm:$0xff] %v327
          %v329 = vld [vmem:[%s295 + $0x80] sm:$0xff]
          %330 = vst [vmem:[%s296 + $0x80] sm:$0xff] %v329
          %v331 = vld [vmem:[%s295 + $0x88] sm:$0xff]
          %332 = vst [vmem:[%s296 + $0x88] sm:$0xff] %v331
          %v333 = vld [vmem:[%s295 + $0x90] sm:$0xff]
          %334 = vst [vmem:[%s296 + $0x90] sm:$0xff] %v333
          %v335 = vld [vmem:[%s295 + $0x98] sm:$0xff]
          %336 = vst [vmem:[%s296 + $0x98] sm:$0xff] %v335
          %v337 = vld [vmem:[%s295 + $0xa0] sm:$0xff]
          %338 = vst [vmem:[%s296 + $0xa0] sm:$0xff] %v337
          %v339 = vld [vmem:[%s295 + $0xa8] sm:$0xff]
          %340 = vst [vmem:[%s296 + $0xa8] sm:$0xff] %v339
          %v341 = vld [vmem:[%s295 + $0xb0] sm:$0xff]
          %342 = vst [vmem:[%s296 + $0xb0] sm:$0xff] %v341
          %v343 = vld [vmem:[%s295 + $0xb8] sm:$0xff]
          %344 = vst [vmem:[%s296 + $0xb8] sm:$0xff] %v343
          %v345 = vld [vmem:[%s295 + $0xc0] sm:$0xff]
          %346 = vst [vmem:[%s296 + $0xc0] sm:$0xff] %v345
          %v347 = vld [vmem:[%s295 + $0xc8] sm:$0xff]
          %348 = vst [vmem:[%s296 + $0xc8] sm:$0xff] %v347
          %v349 = vld [vmem:[%s295 + $0xd0] sm:$0xff]
          %350 = vst [vmem:[%s296 + $0xd0] sm:$0xff] %v349
          %v351 = vld [vmem:[%s295 + $0xd8] sm:$0xff]
          %352 = vst [vmem:[%s296 + $0xd8] sm:$0xff] %v351
          %v353 = vld [vmem:[%s295 + $0xe0] sm:$0xff]
          %354 = vst [vmem:[%s296 + $0xe0] sm:$0xff] %v353
          %v355 = vld [vmem:[%s295 + $0xe8] sm:$0xff]
          %356 = vst [vmem:[%s296 + $0xe8] sm:$0xff] %v355
          %v357 = vld [vmem:[%s295 + $0xf0] sm:$0xff]
          %358 = vst [vmem:[%s296 + $0xf0] sm:$0xff] %v357
          %v359 = vld [vmem:[%s295 + $0xf8] sm:$0xff]
          %360 = vst [vmem:[%s296 + $0xf8] sm:$0xff] %v359
          %v361 = vld [vmem:[%s295 + $0x100] sm:$0xff]
          %362 = vst [vmem:[%s296 + $0x100] sm:$0xff] %v361
          %v363 = vld [vmem:[%s295 + $0x108] sm:$0xff]
          %364 = vst [vmem:[%s296 + $0x108] sm:$0xff] %v363
          %v365 = vld [vmem:[%s295 + $0x110] sm:$0xff]
          %366 = vst [vmem:[%s296 + $0x110] sm:$0xff] %v365
          %v367 = vld [vmem:[%s295 + $0x118] sm:$0xff]
          %368 = vst [vmem:[%s296 + $0x118] sm:$0xff] %v367
          %v369 = vld [vmem:[%s295 + $0x120] sm:$0xff]
          %370 = vst [vmem:[%s296 + $0x120] sm:$0xff] %v369
          %v371 = vld [vmem:[%s295 + $0x128] sm:$0xff]
          %372 = vst [vmem:[%s296 + $0x128] sm:$0xff] %v371
          %v373 = vld [vmem:[%s295 + $0x130] sm:$0xff]
          %374 = vst [vmem:[%s296 + $0x130] sm:$0xff] %v373
          %v375 = vld [vmem:[%s295 + $0x138] sm:$0xff]
          %376 = vst [vmem:[%s296 + $0x138] sm:$0xff] %v375
          %v377 = vld [vmem:[%s295 + $0x140] sm:$0xff]
          %378 = vst [vmem:[%s296 + $0x140] sm:$0xff] %v377
          %v379 = vld [vmem:[%s295 + $0x148] sm:$0xff]
          %380 = vst [vmem:[%s296 + $0x148] sm:$0xff] %v379
          %v381 = vld [vmem:[%s295 + $0x150] sm:$0xff]
          %382 = vst [vmem:[%s296 + $0x150] sm:$0xff] %v381
          %v383 = vld [vmem:[%s295 + $0x158] sm:$0xff]
          %384 = vst [vmem:[%s296 + $0x158] sm:$0xff] %v383
          %v385 = vld [vmem:[%s295 + $0x160] sm:$0xff]
          %386 = vst [vmem:[%s296 + $0x160] sm:$0xff] %v385
          %v387 = vld [vmem:[%s295 + $0x168] sm:$0xff]
          %388 = vst [vmem:[%s296 + $0x168] sm:$0xff] %v387
          %v389 = vld [vmem:[%s295 + $0x170] sm:$0xff]
          %390 = vst [vmem:[%s296 + $0x170] sm:$0xff] %v389
          %v391 = vld [vmem:[%s295 + $0x178] sm:$0xff]
          %392 = vst [vmem:[%s296 + $0x178] sm:$0xff] %v391
          %v393 = vld [vmem:[%s295 + $0x180] sm:$0xff]
          %394 = vst [vmem:[%s296 + $0x180] sm:$0xff] %v393
          %v395 = vld [vmem:[%s295 + $0x188] sm:$0xff]
          %396 = vst [vmem:[%s296 + $0x188] sm:$0xff] %v395
          %v397 = vld [vmem:[%s295 + $0x190] sm:$0xff]
          %398 = vst [vmem:[%s296 + $0x190] sm:$0xff] %v397
          %v399 = vld [vmem:[%s295 + $0x198] sm:$0xff]
          %400 = vst [vmem:[%s296 + $0x198] sm:$0xff] %v399
          %v401 = vld [vmem:[%s295 + $0x1a0] sm:$0xff]
          %402 = vst [vmem:[%s296 + $0x1a0] sm:$0xff] %v401
          %v403 = vld [vmem:[%s295 + $0x1a8] sm:$0xff]
          %404 = vst [vmem:[%s296 + $0x1a8] sm:$0xff] %v403
          %v405 = vld [vmem:[%s295 + $0x1b0] sm:$0xff]
          %406 = vst [vmem:[%s296 + $0x1b0] sm:$0xff] %v405
          %v407 = vld [vmem:[%s295 + $0x1b8] sm:$0xff]
          %408 = vst [vmem:[%s296 + $0x1b8] sm:$0xff] %v407
          %v409 = vld [vmem:[%s295 + $0x1c0] sm:$0xff]
          %410 = vst [vmem:[%s296 + $0x1c0] sm:$0xff] %v409
          %v411 = vld [vmem:[%s295 + $0x1c8] sm:$0xff]
          %412 = vst [vmem:[%s296 + $0x1c8] sm:$0xff] %v411
          %v413 = vld [vmem:[%s295 + $0x1d0] sm:$0xff]
          %414 = vst [vmem:[%s296 + $0x1d0] sm:$0xff] %v413
          %v415 = vld [vmem:[%s295 + $0x1d8] sm:$0xff]
          %416 = vst [vmem:[%s296 + $0x1d8] sm:$0xff] %v415
          %v417 = vld [vmem:[%s295 + $0x1e0] sm:$0xff]
          %418 = vst [vmem:[%s296 + $0x1e0] sm:$0xff] %v417
          %v419 = vld [vmem:[%s295 + $0x1e8] sm:$0xff]
          %420 = vst [vmem:[%s296 + $0x1e8] sm:$0xff] %v419
          %v421 = vld [vmem:[%s295 + $0x1f0] sm:$0xff]
          %422 = vst [vmem:[%s296 + $0x1f0] sm:$0xff] %v421
          %v423 = vld [vmem:[%s295 + $0x1f8] sm:$0xff]
          %424 = vst [vmem:[%s296 + $0x1f8] sm:$0xff] %v423
          %v425 = vld [vmem:[%s295 + $0x200] sm:$0xff]
          %426 = vst [vmem:[%s296 + $0x200] sm:$0xff] %v425
          %v427 = vld [vmem:[%s295 + $0x208] sm:$0xff]
          %428 = vst [vmem:[%s296 + $0x208] sm:$0xff] %v427
          %v429 = vld [vmem:[%s295 + $0x210] sm:$0xff]
          %430 = vst [vmem:[%s296 + $0x210] sm:$0xff] %v429
          %v431 = vld [vmem:[%s295 + $0x218] sm:$0xff]
          %432 = vst [vmem:[%s296 + $0x218] sm:$0xff] %v431
          %v433 = vld [vmem:[%s295 + $0x220] sm:$0xff]
          %434 = vst [vmem:[%s296 + $0x220] sm:$0xff] %v433
          %v435 = vld [vmem:[%s295 + $0x228] sm:$0xff]
          %436 = vst [vmem:[%s296 + $0x228] sm:$0xff] %v435
          %v437 = vld [vmem:[%s295 + $0x230] sm:$0xff]
          %438 = vst [vmem:[%s296 + $0x230] sm:$0xff] %v437
          %v439 = vld [vmem:[%s295 + $0x238] sm:$0xff]
          %440 = vst [vmem:[%s296 + $0x238] sm:$0xff] %v439
          %v441 = vld [vmem:[%s295 + $0x240] sm:$0xff]
          %442 = vst [vmem:[%s296 + $0x240] sm:$0xff] %v441
          %v443 = vld [vmem:[%s295 + $0x248] sm:$0xff]
          %444 = vst [vmem:[%s296 + $0x248] sm:$0xff] %v443
          %v445 = vld [vmem:[%s295 + $0x250] sm:$0xff]
          %446 = vst [vmem:[%s296 + $0x250] sm:$0xff] %v445
          %v447 = vld [vmem:[%s295 + $0x258] sm:$0xff]
          %448 = vst [vmem:[%s296 + $0x258] sm:$0xff] %v447
          %v449 = vld [vmem:[%s295 + $0x260] sm:$0xff]
          %450 = vst [vmem:[%s296 + $0x260] sm:$0xff] %v449
          %v451 = vld [vmem:[%s295 + $0x268] sm:$0xff]
          %452 = vst [vmem:[%s296 + $0x268] sm:$0xff] %v451
          %v453 = vld [vmem:[%s295 + $0x270] sm:$0xff]
          %454 = vst [vmem:[%s296 + $0x270] sm:$0xff] %v453
          %v455 = vld [vmem:[%s295 + $0x278] sm:$0xff]
          %456 = vst [vmem:[%s296 + $0x278] sm:$0xff] %v455
          %v457 = vld [vmem:[%s295 + $0x280] sm:$0xff]
          %458 = vst [vmem:[%s296 + $0x280] sm:$0xff] %v457
          %v459 = vld [vmem:[%s295 + $0x288] sm:$0xff]
          %460 = vst [vmem:[%s296 + $0x288] sm:$0xff] %v459
          %v461 = vld [vmem:[%s295 + $0x290] sm:$0xff]
          %462 = vst [vmem:[%s296 + $0x290] sm:$0xff] %v461
          %v463 = vld [vmem:[%s295 + $0x298] sm:$0xff]
          %464 = vst [vmem:[%s296 + $0x298] sm:$0xff] %v463
          %v465 = vld [vmem:[%s295 + $0x2a0] sm:$0xff]
          %466 = vst [vmem:[%s296 + $0x2a0] sm:$0xff] %v465
          %v467 = vld [vmem:[%s295 + $0x2a8] sm:$0xff]
          %468 = vst [vmem:[%s296 + $0x2a8] sm:$0xff] %v467
          %v469 = vld [vmem:[%s295 + $0x2b0] sm:$0xff]
          %470 = vst [vmem:[%s296 + $0x2b0] sm:$0xff] %v469
          %v471 = vld [vmem:[%s295 + $0x2b8] sm:$0xff]
          %472 = vst [vmem:[%s296 + $0x2b8] sm:$0xff] %v471
          %v473 = vld [vmem:[%s295 + $0x2c0] sm:$0xff]
          %474 = vst [vmem:[%s296 + $0x2c0] sm:$0xff] %v473
          %v475 = vld [vmem:[%s295 + $0x2c8] sm:$0xff]
          %476 = vst [vmem:[%s296 + $0x2c8] sm:$0xff] %v475
          %v477 = vld [vmem:[%s295 + $0x2d0] sm:$0xff]
          %478 = vst [vmem:[%s296 + $0x2d0] sm:$0xff] %v477
          %v479 = vld [vmem:[%s295 + $0x2d8] sm:$0xff]
          %480 = vst [vmem:[%s296 + $0x2d8] sm:$0xff] %v479
          %v481 = vld [vmem:[%s295 + $0x2e0] sm:$0xff]
          %482 = vst [vmem:[%s296 + $0x2e0] sm:$0xff] %v481
          %v483 = vld [vmem:[%s295 + $0x2e8] sm:$0xff]
          %484 = vst [vmem:[%s296 + $0x2e8] sm:$0xff] %v483
          %v485 = vld [vmem:[%s295 + $0x2f0] sm:$0xff]
          %486 = vst [vmem:[%s296 + $0x2f0] sm:$0xff] %v485
          %v487 = vld [vmem:[%s295 + $0x2f8] sm:$0xff]
          %488 = vst [vmem:[%s296 + $0x2f8] sm:$0xff] %v487
          %v489 = vld [vmem:[%s295 + $0x300] sm:$0xff]
          %490 = vst [vmem:[%s296 + $0x300] sm:$0xff] %v489
          %v491 = vld [vmem:[%s295 + $0x308] sm:$0xff]
          %492 = vst [vmem:[%s296 + $0x308] sm:$0xff] %v491
          %v493 = vld [vmem:[%s295 + $0x310] sm:$0xff]
          %494 = vst [vmem:[%s296 + $0x310] sm:$0xff] %v493
          %v495 = vld [vmem:[%s295 + $0x318] sm:$0xff]
          %496 = vst [vmem:[%s296 + $0x318] sm:$0xff] %v495
          %v497 = vld [vmem:[%s295 + $0x320] sm:$0xff]
          %498 = vst [vmem:[%s296 + $0x320] sm:$0xff] %v497
          %v499 = vld [vmem:[%s295 + $0x328] sm:$0xff]
          %500 = vst [vmem:[%s296 + $0x328] sm:$0xff] %v499
          %v501 = vld [vmem:[%s295 + $0x330] sm:$0xff]
          %502 = vst [vmem:[%s296 + $0x330] sm:$0xff] %v501
          %v503 = vld [vmem:[%s295 + $0x338] sm:$0xff]
          %504 = vst [vmem:[%s296 + $0x338] sm:$0xff] %v503
          %v505 = vld [vmem:[%s295 + $0x340] sm:$0xff]
          %506 = vst [vmem:[%s296 + $0x340] sm:$0xff] %v505
          %v507 = vld [vmem:[%s295 + $0x348] sm:$0xff]
          %508 = vst [vmem:[%s296 + $0x348] sm:$0xff] %v507
          %v509 = vld [vmem:[%s295 + $0x350] sm:$0xff]
          %510 = vst [vmem:[%s296 + $0x350] sm:$0xff] %v509
          %v511 = vld [vmem:[%s295 + $0x358] sm:$0xff]
          %512 = vst [vmem:[%s296 + $0x358] sm:$0xff] %v511
          %v513 = vld [vmem:[%s295 + $0x360] sm:$0xff]
          %514 = vst [vmem:[%s296 + $0x360] sm:$0xff] %v513
          %v515 = vld [vmem:[%s295 + $0x368] sm:$0xff]
          %516 = vst [vmem:[%s296 + $0x368] sm:$0xff] %v515
          %v517 = vld [vmem:[%s295 + $0x370] sm:$0xff]
          %518 = vst [vmem:[%s296 + $0x370] sm:$0xff] %v517
          %v519 = vld [vmem:[%s295 + $0x378] sm:$0xff]
          %520 = vst [vmem:[%s296 + $0x378] sm:$0xff] %v519
          %v521 = vld [vmem:[%s295 + $0x380] sm:$0xff]
          %522 = vst [vmem:[%s296 + $0x380] sm:$0xff] %v521
          %v523 = vld [vmem:[%s295 + $0x388] sm:$0xff]
          %524 = vst [vmem:[%s296 + $0x388] sm:$0xff] %v523
          %v525 = vld [vmem:[%s295 + $0x390] sm:$0xff]
          %526 = vst [vmem:[%s296 + $0x390] sm:$0xff] %v525
          %v527 = vld [vmem:[%s295 + $0x398] sm:$0xff]
          %528 = vst [vmem:[%s296 + $0x398] sm:$0xff] %v527
          %v529 = vld [vmem:[%s295 + $0x3a0] sm:$0xff]
          %530 = vst [vmem:[%s296 + $0x3a0] sm:$0xff] %v529
          %v531 = vld [vmem:[%s295 + $0x3a8] sm:$0xff]
          %532 = vst [vmem:[%s296 + $0x3a8] sm:$0xff] %v531
          %v533 = vld [vmem:[%s295 + $0x3b0] sm:$0xff]
          %534 = vst [vmem:[%s296 + $0x3b0] sm:$0xff] %v533
          %v535 = vld [vmem:[%s295 + $0x3b8] sm:$0xff]
          %536 = vst [vmem:[%s296 + $0x3b8] sm:$0xff] %v535
          %v537 = vld [vmem:[%s295 + $0x3c0] sm:$0xff]
          %538 = vst [vmem:[%s296 + $0x3c0] sm:$0xff] %v537
          %v539 = vld [vmem:[%s295 + $0x3c8] sm:$0xff]
          %540 = vst [vmem:[%s296 + $0x3c8] sm:$0xff] %v539
          %v541 = vld [vmem:[%s295 + $0x3d0] sm:$0xff]
          %542 = vst [vmem:[%s296 + $0x3d0] sm:$0xff] %v541
          %v543 = vld [vmem:[%s295 + $0x3d8] sm:$0xff]
          %544 = vst [vmem:[%s296 + $0x3d8] sm:$0xff] %v543
          %v545 = vld [vmem:[%s295 + $0x3e0] sm:$0xff]
          %546 = vst [vmem:[%s296 + $0x3e0] sm:$0xff] %v545
          %v547 = vld [vmem:[%s295 + $0x3e8] sm:$0xff]
          %548 = vst [vmem:[%s296 + $0x3e8] sm:$0xff] %v547
          %v549 = vld [vmem:[%s295 + $0x3f0] sm:$0xff]
          %550 = vst [vmem:[%s296 + $0x3f0] sm:$0xff] %v549
          %v551 = vld [vmem:[%s295 + $0x3f8] sm:$0xff]
          %552 = vst [vmem:[%s296 + $0x3f8] sm:$0xff] %v551
          %v553 = vld [vmem:[%s295 + $0x400] sm:$0xff]
          %554 = vst [vmem:[%s296 + $0x400] sm:$0xff] %v553
          %v555 = vld [vmem:[%s295 + $0x408] sm:$0xff]
          %556 = vst [vmem:[%s296 + $0x408] sm:$0xff] %v555
          %v557 = vld [vmem:[%s295 + $0x410] sm:$0xff]
          %558 = vst [vmem:[%s296 + $0x410] sm:$0xff] %v557
          %v559 = vld [vmem:[%s295 + $0x418] sm:$0xff]
          %560 = vst [vmem:[%s296 + $0x418] sm:$0xff] %v559
          %v561 = vld [vmem:[%s295 + $0x420] sm:$0xff]
          %562 = vst [vmem:[%s296 + $0x420] sm:$0xff] %v561
          %v563 = vld [vmem:[%s295 + $0x428] sm:$0xff]
          %564 = vst [vmem:[%s296 + $0x428] sm:$0xff] %v563
          %v565 = vld [vmem:[%s295 + $0x430] sm:$0xff]
          %566 = vst [vmem:[%s296 + $0x430] sm:$0xff] %v565
          %v567 = vld [vmem:[%s295 + $0x438] sm:$0xff]
          %568 = vst [vmem:[%s296 + $0x438] sm:$0xff] %v567
          %v569 = vld [vmem:[%s295 + $0x440] sm:$0xff]
          %570 = vst [vmem:[%s296 + $0x440] sm:$0xff] %v569
          %v571 = vld [vmem:[%s295 + $0x448] sm:$0xff]
          %572 = vst [vmem:[%s296 + $0x448] sm:$0xff] %v571
          %v573 = vld [vmem:[%s295 + $0x450] sm:$0xff]
          %574 = vst [vmem:[%s296 + $0x450] sm:$0xff] %v573
          %v575 = vld [vmem:[%s295 + $0x458] sm:$0xff]
          %576 = vst [vmem:[%s296 + $0x458] sm:$0xff] %v575
          %v577 = vld [vmem:[%s295 + $0x460] sm:$0xff]
          %578 = vst [vmem:[%s296 + $0x460] sm:$0xff] %v577
          %v579 = vld [vmem:[%s295 + $0x468] sm:$0xff]
          %580 = vst [vmem:[%s296 + $0x468] sm:$0xff] %v579
          %v581 = vld [vmem:[%s295 + $0x470] sm:$0xff]
          %582 = vst [vmem:[%s296 + $0x470] sm:$0xff] %v581
          %v583 = vld [vmem:[%s295 + $0x478] sm:$0xff]
          %584 = vst [vmem:[%s296 + $0x478] sm:$0xff] %v583
          %v585 = vld [vmem:[%s295 + $0x480] sm:$0xff]
          %586 = vst [vmem:[%s296 + $0x480] sm:$0xff] %v585
          %v587 = vld [vmem:[%s295 + $0x488] sm:$0xff]
          %588 = vst [vmem:[%s296 + $0x488] sm:$0xff] %v587
          %v589 = vld [vmem:[%s295 + $0x490] sm:$0xff]
          %590 = vst [vmem:[%s296 + $0x490] sm:$0xff] %v589
          %v591 = vld [vmem:[%s295 + $0x498] sm:$0xff]
          %592 = vst [vmem:[%s296 + $0x498] sm:$0xff] %v591
          %v593 = vld [vmem:[%s295 + $0x4a0] sm:$0xff]
          %594 = vst [vmem:[%s296 + $0x4a0] sm:$0xff] %v593
          %v595 = vld [vmem:[%s295 + $0x4a8] sm:$0xff]
          %596 = vst [vmem:[%s296 + $0x4a8] sm:$0xff] %v595
          %v597 = vld [vmem:[%s295 + $0x4b0] sm:$0xff]
          %598 = vst [vmem:[%s296 + $0x4b0] sm:$0xff] %v597
          %v599 = vld [vmem:[%s295 + $0x4b8] sm:$0xff]
          %600 = vst [vmem:[%s296 + $0x4b8] sm:$0xff] %v599
          %v601 = vld [vmem:[%s295 + $0x4c0] sm:$0xff]
          %602 = vst [vmem:[%s296 + $0x4c0] sm:$0xff] %v601
          %v603 = vld [vmem:[%s295 + $0x4c8] sm:$0xff]
          %604 = vst [vmem:[%s296 + $0x4c8] sm:$0xff] %v603
          %v605 = vld [vmem:[%s295 + $0x4d0] sm:$0xff]
          %606 = vst [vmem:[%s296 + $0x4d0] sm:$0xff] %v605
          %v607 = vld [vmem:[%s295 + $0x4d8] sm:$0xff]
          %608 = vst [vmem:[%s296 + $0x4d8] sm:$0xff] %v607
          %v609 = vld [vmem:[%s295 + $0x4e0] sm:$0xff]
          %610 = vst [vmem:[%s296 + $0x4e0] sm:$0xff] %v609
          %v611 = vld [vmem:[%s295 + $0x4e8] sm:$0xff]
          %612 = vst [vmem:[%s296 + $0x4e8] sm:$0xff] %v611
          %v613 = vld [vmem:[%s295 + $0x4f0] sm:$0xff]
          %614 = vst [vmem:[%s296 + $0x4f0] sm:$0xff] %v613
          %v615 = vld [vmem:[%s295 + $0x4f8] sm:$0xff]
          %616 = vst [vmem:[%s296 + $0x4f8] sm:$0xff] %v615
          %v617 = vld [vmem:[%s295 + $0x500] sm:$0xff]
          %618 = vst [vmem:[%s296 + $0x500] sm:$0xff] %v617
          %v619 = vld [vmem:[%s295 + $0x508] sm:$0xff]
          %620 = vst [vmem:[%s296 + $0x508] sm:$0xff] %v619
          %v621 = vld [vmem:[%s295 + $0x510] sm:$0xff]
          %622 = vst [vmem:[%s296 + $0x510] sm:$0xff] %v621
          %v623 = vld [vmem:[%s295 + $0x518] sm:$0xff]
          %624 = vst [vmem:[%s296 + $0x518] sm:$0xff] %v623
          %v625 = vld [vmem:[%s295 + $0x520] sm:$0xff]
          %626 = vst [vmem:[%s296 + $0x520] sm:$0xff] %v625
          %v627 = vld [vmem:[%s295 + $0x528] sm:$0xff]
          %628 = vst [vmem:[%s296 + $0x528] sm:$0xff] %v627
          %v629 = vld [vmem:[%s295 + $0x530] sm:$0xff]
          %630 = vst [vmem:[%s296 + $0x530] sm:$0xff] %v629
          %v631 = vld [vmem:[%s295 + $0x538] sm:$0xff]
          %632 = vst [vmem:[%s296 + $0x538] sm:$0xff] %v631
          %v633 = vld [vmem:[%s295 + $0x540] sm:$0xff]
          %634 = vst [vmem:[%s296 + $0x540] sm:$0xff] %v633
          %v635 = vld [vmem:[%s295 + $0x548] sm:$0xff]
          %636 = vst [vmem:[%s296 + $0x548] sm:$0xff] %v635
          %v637 = vld [vmem:[%s295 + $0x550] sm:$0xff]
          %638 = vst [vmem:[%s296 + $0x550] sm:$0xff] %v637
          %v639 = vld [vmem:[%s295 + $0x558] sm:$0xff]
          %640 = vst [vmem:[%s296 + $0x558] sm:$0xff] %v639
          %v641 = vld [vmem:[%s295 + $0x560] sm:$0xff]
          %642 = vst [vmem:[%s296 + $0x560] sm:$0xff] %v641
          %v643 = vld [vmem:[%s295 + $0x568] sm:$0xff]
          %644 = vst [vmem:[%s296 + $0x568] sm:$0xff] %v643
          %v645 = vld [vmem:[%s295 + $0x570] sm:$0xff]
          %646 = vst [vmem:[%s296 + $0x570] sm:$0xff] %v645
          %v647 = vld [vmem:[%s295 + $0x578] sm:$0xff]
          %648 = vst [vmem:[%s296 + $0x578] sm:$0xff] %v647
          %v649 = vld [vmem:[%s295 + $0x580] sm:$0xff]
          %650 = vst [vmem:[%s296 + $0x580] sm:$0xff] %v649
          %v651 = vld [vmem:[%s295 + $0x588] sm:$0xff]
          %652 = vst [vmem:[%s296 + $0x588] sm:$0xff] %v651
          %v653 = vld [vmem:[%s295 + $0x590] sm:$0xff]
          %654 = vst [vmem:[%s296 + $0x590] sm:$0xff] %v653
          %v655 = vld [vmem:[%s295 + $0x598] sm:$0xff]
          %656 = vst [vmem:[%s296 + $0x598] sm:$0xff] %v655
          %v657 = vld [vmem:[%s295 + $0x5a0] sm:$0xff]
          %658 = vst [vmem:[%s296 + $0x5a0] sm:$0xff] %v657
          %v659 = vld [vmem:[%s295 + $0x5a8] sm:$0xff]
          %660 = vst [vmem:[%s296 + $0x5a8] sm:$0xff] %v659
          %v661 = vld [vmem:[%s295 + $0x5b0] sm:$0xff]
          %662 = vst [vmem:[%s296 + $0x5b0] sm:$0xff] %v661
          %v663 = vld [vmem:[%s295 + $0x5b8] sm:$0xff]
          %664 = vst [vmem:[%s296 + $0x5b8] sm:$0xff] %v663
          %v665 = vld [vmem:[%s295 + $0x5c0] sm:$0xff]
          %666 = vst [vmem:[%s296 + $0x5c0] sm:$0xff] %v665
          %v667 = vld [vmem:[%s295 + $0x5c8] sm:$0xff]
          %668 = vst [vmem:[%s296 + $0x5c8] sm:$0xff] %v667
          %v669 = vld [vmem:[%s295 + $0x5d0] sm:$0xff]
          %670 = vst [vmem:[%s296 + $0x5d0] sm:$0xff] %v669
          %v671 = vld [vmem:[%s295 + $0x5d8] sm:$0xff]
          %672 = vst [vmem:[%s296 + $0x5d8] sm:$0xff] %v671
          %v673 = vld [vmem:[%s295 + $0x5e0] sm:$0xff]
          %674 = vst [vmem:[%s296 + $0x5e0] sm:$0xff] %v673
          %v675 = vld [vmem:[%s295 + $0x5e8] sm:$0xff]
          %676 = vst [vmem:[%s296 + $0x5e8] sm:$0xff] %v675
          %v677 = vld [vmem:[%s295 + $0x5f0] sm:$0xff]
          %678 = vst [vmem:[%s296 + $0x5f0] sm:$0xff] %v677
          %v679 = vld [vmem:[%s295 + $0x5f8] sm:$0xff]
          %680 = vst [vmem:[%s296 + $0x5f8] sm:$0xff] %v679
          %v681 = vld [vmem:[%s295 + $0x600] sm:$0xff]
          %682 = vst [vmem:[%s296 + $0x600] sm:$0xff] %v681
          %v683 = vld [vmem:[%s295 + $0x608] sm:$0xff]
          %684 = vst [vmem:[%s296 + $0x608] sm:$0xff] %v683
          %v685 = vld [vmem:[%s295 + $0x610] sm:$0xff]
          %686 = vst [vmem:[%s296 + $0x610] sm:$0xff] %v685
          %v687 = vld [vmem:[%s295 + $0x618] sm:$0xff]
          %688 = vst [vmem:[%s296 + $0x618] sm:$0xff] %v687
          %v689 = vld [vmem:[%s295 + $0x620] sm:$0xff]
          %690 = vst [vmem:[%s296 + $0x620] sm:$0xff] %v689
          %v691 = vld [vmem:[%s295 + $0x628] sm:$0xff]
          %692 = vst [vmem:[%s296 + $0x628] sm:$0xff] %v691
          %v693 = vld [vmem:[%s295 + $0x630] sm:$0xff]
          %694 = vst [vmem:[%s296 + $0x630] sm:$0xff] %v693
          %v695 = vld [vmem:[%s295 + $0x638] sm:$0xff]
          %696 = vst [vmem:[%s296 + $0x638] sm:$0xff] %v695
          %v697 = vld [vmem:[%s295 + $0x640] sm:$0xff]
          %698 = vst [vmem:[%s296 + $0x640] sm:$0xff] %v697
          %v699 = vld [vmem:[%s295 + $0x648] sm:$0xff]
          %700 = vst [vmem:[%s296 + $0x648] sm:$0xff] %v699
          %v701 = vld [vmem:[%s295 + $0x650] sm:$0xff]
          %702 = vst [vmem:[%s296 + $0x650] sm:$0xff] %v701
          %v703 = vld [vmem:[%s295 + $0x658] sm:$0xff]
          %704 = vst [vmem:[%s296 + $0x658] sm:$0xff] %v703
          %v705 = vld [vmem:[%s295 + $0x660] sm:$0xff]
          %706 = vst [vmem:[%s296 + $0x660] sm:$0xff] %v705
          %v707 = vld [vmem:[%s295 + $0x668] sm:$0xff]
          %708 = vst [vmem:[%s296 + $0x668] sm:$0xff] %v707
          %v709 = vld [vmem:[%s295 + $0x670] sm:$0xff]
          %710 = vst [vmem:[%s296 + $0x670] sm:$0xff] %v709
          %v711 = vld [vmem:[%s295 + $0x678] sm:$0xff]
          %712 = vst [vmem:[%s296 + $0x678] sm:$0xff] %v711
          %v713 = vld [vmem:[%s295 + $0x680] sm:$0xff]
          %714 = vst [vmem:[%s296 + $0x680] sm:$0xff] %v713
          %v715 = vld [vmem:[%s295 + $0x688] sm:$0xff]
          %716 = vst [vmem:[%s296 + $0x688] sm:$0xff] %v715
          %v717 = vld [vmem:[%s295 + $0x690] sm:$0xff]
          %718 = vst [vmem:[%s296 + $0x690] sm:$0xff] %v717
          %v719 = vld [vmem:[%s295 + $0x698] sm:$0xff]
          %720 = vst [vmem:[%s296 + $0x698] sm:$0xff] %v719
          %v721 = vld [vmem:[%s295 + $0x6a0] sm:$0xff]
          %722 = vst [vmem:[%s296 + $0x6a0] sm:$0xff] %v721
          %v723 = vld [vmem:[%s295 + $0x6a8] sm:$0xff]
          %724 = vst [vmem:[%s296 + $0x6a8] sm:$0xff] %v723
          %v725 = vld [vmem:[%s295 + $0x6b0] sm:$0xff]
          %726 = vst [vmem:[%s296 + $0x6b0] sm:$0xff] %v725
          %v727 = vld [vmem:[%s295 + $0x6b8] sm:$0xff]
          %728 = vst [vmem:[%s296 + $0x6b8] sm:$0xff] %v727
          %v729 = vld [vmem:[%s295 + $0x6c0] sm:$0xff]
          %730 = vst [vmem:[%s296 + $0x6c0] sm:$0xff] %v729
          %v731 = vld [vmem:[%s295 + $0x6c8] sm:$0xff]
          %732 = vst [vmem:[%s296 + $0x6c8] sm:$0xff] %v731
          %v733 = vld [vmem:[%s295 + $0x6d0] sm:$0xff]
          %734 = vst [vmem:[%s296 + $0x6d0] sm:$0xff] %v733
          %v735 = vld [vmem:[%s295 + $0x6d8] sm:$0xff]
          %736 = vst [vmem:[%s296 + $0x6d8] sm:$0xff] %v735
          %v737 = vld [vmem:[%s295 + $0x6e0] sm:$0xff]
          %738 = vst [vmem:[%s296 + $0x6e0] sm:$0xff] %v737
          %v739 = vld [vmem:[%s295 + $0x6e8] sm:$0xff]
          %740 = vst [vmem:[%s296 + $0x6e8] sm:$0xff] %v739
          %v741 = vld [vmem:[%s295 + $0x6f0] sm:$0xff]
          %742 = vst [vmem:[%s296 + $0x6f0] sm:$0xff] %v741
          %v743 = vld [vmem:[%s295 + $0x6f8] sm:$0xff]
          %744 = vst [vmem:[%s296 + $0x6f8] sm:$0xff] %v743
          %v745 = vld [vmem:[%s295 + $0x700] sm:$0xff]
          %746 = vst [vmem:[%s296 + $0x700] sm:$0xff] %v745
          %v747 = vld [vmem:[%s295 + $0x708] sm:$0xff]
          %748 = vst [vmem:[%s296 + $0x708] sm:$0xff] %v747
          %v749 = vld [vmem:[%s295 + $0x710] sm:$0xff]
          %750 = vst [vmem:[%s296 + $0x710] sm:$0xff] %v749
          %v751 = vld [vmem:[%s295 + $0x718] sm:$0xff]
          %752 = vst [vmem:[%s296 + $0x718] sm:$0xff] %v751
          %v753 = vld [vmem:[%s295 + $0x720] sm:$0xff]
          %754 = vst [vmem:[%s296 + $0x720] sm:$0xff] %v753
          %v755 = vld [vmem:[%s295 + $0x728] sm:$0xff]
          %756 = vst [vmem:[%s296 + $0x728] sm:$0xff] %v755
          %v757 = vld [vmem:[%s295 + $0x730] sm:$0xff]
          %758 = vst [vmem:[%s296 + $0x730] sm:$0xff] %v757
          %v759 = vld [vmem:[%s295 + $0x738] sm:$0xff]
          %760 = vst [vmem:[%s296 + $0x738] sm:$0xff] %v759
          %v761 = vld [vmem:[%s295 + $0x740] sm:$0xff]
          %762 = vst [vmem:[%s296 + $0x740] sm:$0xff] %v761
          %v763 = vld [vmem:[%s295 + $0x748] sm:$0xff]
          %764 = vst [vmem:[%s296 + $0x748] sm:$0xff] %v763
          %v765 = vld [vmem:[%s295 + $0x750] sm:$0xff]
          %766 = vst [vmem:[%s296 + $0x750] sm:$0xff] %v765
          %v767 = vld [vmem:[%s295 + $0x758] sm:$0xff]
          %768 = vst [vmem:[%s296 + $0x758] sm:$0xff] %v767
          %v769 = vld [vmem:[%s295 + $0x760] sm:$0xff]
          %770 = vst [vmem:[%s296 + $0x760] sm:$0xff] %v769
          %v771 = vld [vmem:[%s295 + $0x768] sm:$0xff]
          %772 = vst [vmem:[%s296 + $0x768] sm:$0xff] %v771
          %v773 = vld [vmem:[%s295 + $0x770] sm:$0xff]
          %774 = vst [vmem:[%s296 + $0x770] sm:$0xff] %v773
          %v775 = vld [vmem:[%s295 + $0x778] sm:$0xff]
          %776 = vst [vmem:[%s296 + $0x778] sm:$0xff] %v775
          %v777 = vld [vmem:[%s295 + $0x780] sm:$0xff]
          %778 = vst [vmem:[%s296 + $0x780] sm:$0xff] %v777
          %v779 = vld [vmem:[%s295 + $0x788] sm:$0xff]
          %780 = vst [vmem:[%s296 + $0x788] sm:$0xff] %v779
          %v781 = vld [vmem:[%s295 + $0x790] sm:$0xff]
          %782 = vst [vmem:[%s296 + $0x790] sm:$0xff] %v781
          %v783 = vld [vmem:[%s295 + $0x798] sm:$0xff]
          %784 = vst [vmem:[%s296 + $0x798] sm:$0xff] %v783
          %v785 = vld [vmem:[%s295 + $0x7a0] sm:$0xff]
          %786 = vst [vmem:[%s296 + $0x7a0] sm:$0xff] %v785
          %v787 = vld [vmem:[%s295 + $0x7a8] sm:$0xff]
          %788 = vst [vmem:[%s296 + $0x7a8] sm:$0xff] %v787
          %v789 = vld [vmem:[%s295 + $0x7b0] sm:$0xff]
          %790 = vst [vmem:[%s296 + $0x7b0] sm:$0xff] %v789
          %v791 = vld [vmem:[%s295 + $0x7b8] sm:$0xff]
          %792 = vst [vmem:[%s296 + $0x7b8] sm:$0xff] %v791
          %v793 = vld [vmem:[%s295 + $0x7c0] sm:$0xff]
          %794 = vst [vmem:[%s296 + $0x7c0] sm:$0xff] %v793
          %v795 = vld [vmem:[%s295 + $0x7c8] sm:$0xff]
          %796 = vst [vmem:[%s296 + $0x7c8] sm:$0xff] %v795
          %v797 = vld [vmem:[%s295 + $0x7d0] sm:$0xff]
          %798 = vst [vmem:[%s296 + $0x7d0] sm:$0xff] %v797
          %v799 = vld [vmem:[%s295 + $0x7d8] sm:$0xff]
          %800 = vst [vmem:[%s296 + $0x7d8] sm:$0xff] %v799
          %v801 = vld [vmem:[%s295 + $0x7e0] sm:$0xff]
          %802 = vst [vmem:[%s296 + $0x7e0] sm:$0xff] %v801
          %v803 = vld [vmem:[%s295 + $0x7e8] sm:$0xff]
          %804 = vst [vmem:[%s296 + $0x7e8] sm:$0xff] %v803
          %v805 = vld [vmem:[%s295 + $0x7f0] sm:$0xff]
          %806 = vst [vmem:[%s296 + $0x7f0] sm:$0xff] %v805
          %v807 = vld [vmem:[%s295 + $0x7f8] sm:$0xff]
          %808 = vst [vmem:[%s296 + $0x7f8] sm:$0xff] %v807
        $region105: #{tpu_custom_call.1} parent=99 // loop_footer
          %s294 = sadd.s32 1, %s290
        $region106: #{tpu_custom_call.1} parent=99 // loop_footer_branch
          %289 = sbr.rel target = $region102
        $region107: #{tpu_custom_call.1} parent=99 // loop_exit
          _
      $region100: #{tpu_custom_call.1} parent=84 // pred_fallthru
        _
      %p809 = pneg %p285
      // Predicated region
      $region108: #{tpu_custom_call.1} parent=84 // pred_check
        _
      $region109: #{tpu_custom_call.1} parent=84 // pred_check_branch
        %811 = sbr.rel (%p285) target = $region111
      $region110: #{tpu_custom_call.1} parent=84 // pred_region
        %s812 = sand.u32 2048, 7
      $region111: #{tpu_custom_call.1} parent=84 // pred_fallthru
        _
    $region85: #{tpu_custom_call.1} parent=1 // pred_fallthru
      _
    // Predicated region
    $region86: #{tpu_custom_call.1} parent=1 // pred_check
      %p269 = pneg %p265
    $region87: #{tpu_custom_call.1} parent=1 // pred_check_branch
      %271 = sbr.rel (%p269) target = $region89
    $region88: #{tpu_custom_call.1} parent=1 // pred_region
      %s272 = sshll.u32 1, 2048
      %s273 = ssub.s32 %s272, 1
      loop: start=0, step=1, limit=1
      $region90: #{tpu_custom_call.1} parent=88 // loop_pre_header
        _
      $region91: #{tpu_custom_call.1} parent=88 // loop_header
        %s275 = sphi 0, %s279
        %p276 = scmp.ge.s32.totalorder %s275, 1
        %s280 = sphi %s5, %s5
        %s281 = sphi [#allocation4], [#allocation4]
      $region92: #{tpu_custom_call.1} parent=88 // loop_header_branch
        %278 = sbr.rel (%p276) target = $region96
      $region93: #{tpu_custom_call.1} parent=88 // loop_body
        %v282 = vld [vmem:[%s280] sm:%s273]
        %283 = vst [vmem:[%s281] sm:%s273] %v282
      $region94: #{tpu_custom_call.1} parent=88 // loop_footer
        %s279 = sadd.s32 1, %s275
      $region95: #{tpu_custom_call.1} parent=88 // loop_footer_branch
        %274 = sbr.rel target = $region91
      $region96: #{tpu_custom_call.1} parent=88 // loop_exit
        _
    $region89: #{tpu_custom_call.1} parent=1 // pred_fallthru
      _
    // Predicated region
    $region112: #{tpu_custom_call.1} parent=1 // pred_check
      _
    $region113: #{tpu_custom_call.1} parent=1 // pred_check_branch
      %815 = sbr.rel (0) target = $region115
    $region114: #{tpu_custom_call.1} parent=1 // pred_region
      %816 = vsyncadd %s263, 32768
    $region115: #{tpu_custom_call.1} parent=1 // pred_fallthru
      _
    %s817 = scalar_lea.sflag [#allocation6], 3
    %p819 = scmp.lt.u32.totalorder 3584, 8
    %p820 = pneg %p819
    // Predicated region
    $region116: #{tpu_custom_call.1} parent=1 // pred_check
      _
    $region117: #{tpu_custom_call.1} parent=1 // pred_check_branch
      %822 = sbr.rel (%p819) target = $region119
    $region118: #{tpu_custom_call.1} parent=1 // pred_region
      %s838 = sand.u32 3584, 7
      %p839 = scmp.eq.s32.totalorder %s838, 0
      // Predicated region
      $region131: #{tpu_custom_call.1} parent=118 // pred_check
        %p840 = pneg %p839
      $region132: #{tpu_custom_call.1} parent=118 // pred_check_branch
        %842 = sbr.rel (%p840) target = $region134
      $region133: #{tpu_custom_call.1} parent=118 // pred_region
        loop: start=0, step=1, limit=1
        $region135: #{tpu_custom_call.1} parent=133 // loop_pre_header
          _
        $region136: #{tpu_custom_call.1} parent=133 // loop_header
          %s844 = sphi 0, %s848
          %p845 = scmp.ge.s32.totalorder %s844, 1
          %s849 = sphi %s6, %s6
          %s850 = sphi [#allocation5], [#allocation5]
        $region137: #{tpu_custom_call.1} parent=133 // loop_header_branch
          %847 = sbr.rel (%p845) target = $region141
        $region138: #{tpu_custom_call.1} parent=133 // loop_body
          %v851 = vld [vmem:[%s849] sm:$0xff]
          %852 = vst [vmem:[%s850] sm:$0xff] %v851
          %v853 = vld [vmem:[%s849 + $0x8] sm:$0xff]
          %854 = vst [vmem:[%s850 + $0x8] sm:$0xff] %v853
          %v855 = vld [vmem:[%s849 + $0x10] sm:$0xff]
          %856 = vst [vmem:[%s850 + $0x10] sm:$0xff] %v855
          %v857 = vld [vmem:[%s849 + $0x18] sm:$0xff]
          %858 = vst [vmem:[%s850 + $0x18] sm:$0xff] %v857
          %v859 = vld [vmem:[%s849 + $0x20] sm:$0xff]
          %860 = vst [vmem:[%s850 + $0x20] sm:$0xff] %v859
          %v861 = vld [vmem:[%s849 + $0x28] sm:$0xff]
          %862 = vst [vmem:[%s850 + $0x28] sm:$0xff] %v861
          %v863 = vld [vmem:[%s849 + $0x30] sm:$0xff]
          %864 = vst [vmem:[%s850 + $0x30] sm:$0xff] %v863
          %v865 = vld [vmem:[%s849 + $0x38] sm:$0xff]
          %866 = vst [vmem:[%s850 + $0x38] sm:$0xff] %v865
          %v867 = vld [vmem:[%s849 + $0x40] sm:$0xff]
          %868 = vst [vmem:[%s850 + $0x40] sm:$0xff] %v867
          %v869 = vld [vmem:[%s849 + $0x48] sm:$0xff]
          %870 = vst [vmem:[%s850 + $0x48] sm:$0xff] %v869
          %v871 = vld [vmem:[%s849 + $0x50] sm:$0xff]
          %872 = vst [vmem:[%s850 + $0x50] sm:$0xff] %v871
          %v873 = vld [vmem:[%s849 + $0x58] sm:$0xff]
          %874 = vst [vmem:[%s850 + $0x58] sm:$0xff] %v873
          %v875 = vld [vmem:[%s849 + $0x60] sm:$0xff]
          %876 = vst [vmem:[%s850 + $0x60] sm:$0xff] %v875
          %v877 = vld [vmem:[%s849 + $0x68] sm:$0xff]
          %878 = vst [vmem:[%s850 + $0x68] sm:$0xff] %v877
          %v879 = vld [vmem:[%s849 + $0x70] sm:$0xff]
          %880 = vst [vmem:[%s850 + $0x70] sm:$0xff] %v879
          %v881 = vld [vmem:[%s849 + $0x78] sm:$0xff]
          %882 = vst [vmem:[%s850 + $0x78] sm:$0xff] %v881
          %v883 = vld [vmem:[%s849 + $0x80] sm:$0xff]
          %884 = vst [vmem:[%s850 + $0x80] sm:$0xff] %v883
          %v885 = vld [vmem:[%s849 + $0x88] sm:$0xff]
          %886 = vst [vmem:[%s850 + $0x88] sm:$0xff] %v885
          %v887 = vld [vmem:[%s849 + $0x90] sm:$0xff]
          %888 = vst [vmem:[%s850 + $0x90] sm:$0xff] %v887
          %v889 = vld [vmem:[%s849 + $0x98] sm:$0xff]
          %890 = vst [vmem:[%s850 + $0x98] sm:$0xff] %v889
          %v891 = vld [vmem:[%s849 + $0xa0] sm:$0xff]
          %892 = vst [vmem:[%s850 + $0xa0] sm:$0xff] %v891
          %v893 = vld [vmem:[%s849 + $0xa8] sm:$0xff]
          %894 = vst [vmem:[%s850 + $0xa8] sm:$0xff] %v893
          %v895 = vld [vmem:[%s849 + $0xb0] sm:$0xff]
          %896 = vst [vmem:[%s850 + $0xb0] sm:$0xff] %v895
          %v897 = vld [vmem:[%s849 + $0xb8] sm:$0xff]
          %898 = vst [vmem:[%s850 + $0xb8] sm:$0xff] %v897
          %v899 = vld [vmem:[%s849 + $0xc0] sm:$0xff]
          %900 = vst [vmem:[%s850 + $0xc0] sm:$0xff] %v899
          %v901 = vld [vmem:[%s849 + $0xc8] sm:$0xff]
          %902 = vst [vmem:[%s850 + $0xc8] sm:$0xff] %v901
          %v903 = vld [vmem:[%s849 + $0xd0] sm:$0xff]
          %904 = vst [vmem:[%s850 + $0xd0] sm:$0xff] %v903
          %v905 = vld [vmem:[%s849 + $0xd8] sm:$0xff]
          %906 = vst [vmem:[%s850 + $0xd8] sm:$0xff] %v905
          %v907 = vld [vmem:[%s849 + $0xe0] sm:$0xff]
          %908 = vst [vmem:[%s850 + $0xe0] sm:$0xff] %v907
          %v909 = vld [vmem:[%s849 + $0xe8] sm:$0xff]
          %910 = vst [vmem:[%s850 + $0xe8] sm:$0xff] %v909
          %v911 = vld [vmem:[%s849 + $0xf0] sm:$0xff]
          %912 = vst [vmem:[%s850 + $0xf0] sm:$0xff] %v911
          %v913 = vld [vmem:[%s849 + $0xf8] sm:$0xff]
          %914 = vst [vmem:[%s850 + $0xf8] sm:$0xff] %v913
          %v915 = vld [vmem:[%s849 + $0x100] sm:$0xff]
          %916 = vst [vmem:[%s850 + $0x100] sm:$0xff] %v915
          %v917 = vld [vmem:[%s849 + $0x108] sm:$0xff]
          %918 = vst [vmem:[%s850 + $0x108] sm:$0xff] %v917
          %v919 = vld [vmem:[%s849 + $0x110] sm:$0xff]
          %920 = vst [vmem:[%s850 + $0x110] sm:$0xff] %v919
          %v921 = vld [vmem:[%s849 + $0x118] sm:$0xff]
          %922 = vst [vmem:[%s850 + $0x118] sm:$0xff] %v921
          %v923 = vld [vmem:[%s849 + $0x120] sm:$0xff]
          %924 = vst [vmem:[%s850 + $0x120] sm:$0xff] %v923
          %v925 = vld [vmem:[%s849 + $0x128] sm:$0xff]
          %926 = vst [vmem:[%s850 + $0x128] sm:$0xff] %v925
          %v927 = vld [vmem:[%s849 + $0x130] sm:$0xff]
          %928 = vst [vmem:[%s850 + $0x130] sm:$0xff] %v927
          %v929 = vld [vmem:[%s849 + $0x138] sm:$0xff]
          %930 = vst [vmem:[%s850 + $0x138] sm:$0xff] %v929
          %v931 = vld [vmem:[%s849 + $0x140] sm:$0xff]
          %932 = vst [vmem:[%s850 + $0x140] sm:$0xff] %v931
          %v933 = vld [vmem:[%s849 + $0x148] sm:$0xff]
          %934 = vst [vmem:[%s850 + $0x148] sm:$0xff] %v933
          %v935 = vld [vmem:[%s849 + $0x150] sm:$0xff]
          %936 = vst [vmem:[%s850 + $0x150] sm:$0xff] %v935
          %v937 = vld [vmem:[%s849 + $0x158] sm:$0xff]
          %938 = vst [vmem:[%s850 + $0x158] sm:$0xff] %v937
          %v939 = vld [vmem:[%s849 + $0x160] sm:$0xff]
          %940 = vst [vmem:[%s850 + $0x160] sm:$0xff] %v939
          %v941 = vld [vmem:[%s849 + $0x168] sm:$0xff]
          %942 = vst [vmem:[%s850 + $0x168] sm:$0xff] %v941
          %v943 = vld [vmem:[%s849 + $0x170] sm:$0xff]
          %944 = vst [vmem:[%s850 + $0x170] sm:$0xff] %v943
          %v945 = vld [vmem:[%s849 + $0x178] sm:$0xff]
          %946 = vst [vmem:[%s850 + $0x178] sm:$0xff] %v945
          %v947 = vld [vmem:[%s849 + $0x180] sm:$0xff]
          %948 = vst [vmem:[%s850 + $0x180] sm:$0xff] %v947
          %v949 = vld [vmem:[%s849 + $0x188] sm:$0xff]
          %950 = vst [vmem:[%s850 + $0x188] sm:$0xff] %v949
          %v951 = vld [vmem:[%s849 + $0x190] sm:$0xff]
          %952 = vst [vmem:[%s850 + $0x190] sm:$0xff] %v951
          %v953 = vld [vmem:[%s849 + $0x198] sm:$0xff]
          %954 = vst [vmem:[%s850 + $0x198] sm:$0xff] %v953
          %v955 = vld [vmem:[%s849 + $0x1a0] sm:$0xff]
          %956 = vst [vmem:[%s850 + $0x1a0] sm:$0xff] %v955
          %v957 = vld [vmem:[%s849 + $0x1a8] sm:$0xff]
          %958 = vst [vmem:[%s850 + $0x1a8] sm:$0xff] %v957
          %v959 = vld [vmem:[%s849 + $0x1b0] sm:$0xff]
          %960 = vst [vmem:[%s850 + $0x1b0] sm:$0xff] %v959
          %v961 = vld [vmem:[%s849 + $0x1b8] sm:$0xff]
          %962 = vst [vmem:[%s850 + $0x1b8] sm:$0xff] %v961
          %v963 = vld [vmem:[%s849 + $0x1c0] sm:$0xff]
          %964 = vst [vmem:[%s850 + $0x1c0] sm:$0xff] %v963
          %v965 = vld [vmem:[%s849 + $0x1c8] sm:$0xff]
          %966 = vst [vmem:[%s850 + $0x1c8] sm:$0xff] %v965
          %v967 = vld [vmem:[%s849 + $0x1d0] sm:$0xff]
          %968 = vst [vmem:[%s850 + $0x1d0] sm:$0xff] %v967
          %v969 = vld [vmem:[%s849 + $0x1d8] sm:$0xff]
          %970 = vst [vmem:[%s850 + $0x1d8] sm:$0xff] %v969
          %v971 = vld [vmem:[%s849 + $0x1e0] sm:$0xff]
          %972 = vst [vmem:[%s850 + $0x1e0] sm:$0xff] %v971
          %v973 = vld [vmem:[%s849 + $0x1e8] sm:$0xff]
          %974 = vst [vmem:[%s850 + $0x1e8] sm:$0xff] %v973
          %v975 = vld [vmem:[%s849 + $0x1f0] sm:$0xff]
          %976 = vst [vmem:[%s850 + $0x1f0] sm:$0xff] %v975
          %v977 = vld [vmem:[%s849 + $0x1f8] sm:$0xff]
          %978 = vst [vmem:[%s850 + $0x1f8] sm:$0xff] %v977
          %v979 = vld [vmem:[%s849 + $0x200] sm:$0xff]
          %980 = vst [vmem:[%s850 + $0x200] sm:$0xff] %v979
          %v981 = vld [vmem:[%s849 + $0x208] sm:$0xff]
          %982 = vst [vmem:[%s850 + $0x208] sm:$0xff] %v981
          %v983 = vld [vmem:[%s849 + $0x210] sm:$0xff]
          %984 = vst [vmem:[%s850 + $0x210] sm:$0xff] %v983
          %v985 = vld [vmem:[%s849 + $0x218] sm:$0xff]
          %986 = vst [vmem:[%s850 + $0x218] sm:$0xff] %v985
          %v987 = vld [vmem:[%s849 + $0x220] sm:$0xff]
          %988 = vst [vmem:[%s850 + $0x220] sm:$0xff] %v987
          %v989 = vld [vmem:[%s849 + $0x228] sm:$0xff]
          %990 = vst [vmem:[%s850 + $0x228] sm:$0xff] %v989
          %v991 = vld [vmem:[%s849 + $0x230] sm:$0xff]
          %992 = vst [vmem:[%s850 + $0x230] sm:$0xff] %v991
          %v993 = vld [vmem:[%s849 + $0x238] sm:$0xff]
          %994 = vst [vmem:[%s850 + $0x238] sm:$0xff] %v993
          %v995 = vld [vmem:[%s849 + $0x240] sm:$0xff]
          %996 = vst [vmem:[%s850 + $0x240] sm:$0xff] %v995
          %v997 = vld [vmem:[%s849 + $0x248] sm:$0xff]
          %998 = vst [vmem:[%s850 + $0x248] sm:$0xff] %v997
          %v999 = vld [vmem:[%s849 + $0x250] sm:$0xff]
          %1000 = vst [vmem:[%s850 + $0x250] sm:$0xff] %v999
          %v1001 = vld [vmem:[%s849 + $0x258] sm:$0xff]
          %1002 = vst [vmem:[%s850 + $0x258] sm:$0xff] %v1001
          %v1003 = vld [vmem:[%s849 + $0x260] sm:$0xff]
          %1004 = vst [vmem:[%s850 + $0x260] sm:$0xff] %v1003
          %v1005 = vld [vmem:[%s849 + $0x268] sm:$0xff]
          %1006 = vst [vmem:[%s850 + $0x268] sm:$0xff] %v1005
          %v1007 = vld [vmem:[%s849 + $0x270] sm:$0xff]
          %1008 = vst [vmem:[%s850 + $0x270] sm:$0xff] %v1007
          %v1009 = vld [vmem:[%s849 + $0x278] sm:$0xff]
          %1010 = vst [vmem:[%s850 + $0x278] sm:$0xff] %v1009
          %v1011 = vld [vmem:[%s849 + $0x280] sm:$0xff]
          %1012 = vst [vmem:[%s850 + $0x280] sm:$0xff] %v1011
          %v1013 = vld [vmem:[%s849 + $0x288] sm:$0xff]
          %1014 = vst [vmem:[%s850 + $0x288] sm:$0xff] %v1013
          %v1015 = vld [vmem:[%s849 + $0x290] sm:$0xff]
          %1016 = vst [vmem:[%s850 + $0x290] sm:$0xff] %v1015
          %v1017 = vld [vmem:[%s849 + $0x298] sm:$0xff]
          %1018 = vst [vmem:[%s850 + $0x298] sm:$0xff] %v1017
          %v1019 = vld [vmem:[%s849 + $0x2a0] sm:$0xff]
          %1020 = vst [vmem:[%s850 + $0x2a0] sm:$0xff] %v1019
          %v1021 = vld [vmem:[%s849 + $0x2a8] sm:$0xff]
          %1022 = vst [vmem:[%s850 + $0x2a8] sm:$0xff] %v1021
          %v1023 = vld [vmem:[%s849 + $0x2b0] sm:$0xff]
          %1024 = vst [vmem:[%s850 + $0x2b0] sm:$0xff] %v1023
          %v1025 = vld [vmem:[%s849 + $0x2b8] sm:$0xff]
          %1026 = vst [vmem:[%s850 + $0x2b8] sm:$0xff] %v1025
          %v1027 = vld [vmem:[%s849 + $0x2c0] sm:$0xff]
          %1028 = vst [vmem:[%s850 + $0x2c0] sm:$0xff] %v1027
          %v1029 = vld [vmem:[%s849 + $0x2c8] sm:$0xff]
          %1030 = vst [vmem:[%s850 + $0x2c8] sm:$0xff] %v1029
          %v1031 = vld [vmem:[%s849 + $0x2d0] sm:$0xff]
          %1032 = vst [vmem:[%s850 + $0x2d0] sm:$0xff] %v1031
          %v1033 = vld [vmem:[%s849 + $0x2d8] sm:$0xff]
          %1034 = vst [vmem:[%s850 + $0x2d8] sm:$0xff] %v1033
          %v1035 = vld [vmem:[%s849 + $0x2e0] sm:$0xff]
          %1036 = vst [vmem:[%s850 + $0x2e0] sm:$0xff] %v1035
          %v1037 = vld [vmem:[%s849 + $0x2e8] sm:$0xff]
          %1038 = vst [vmem:[%s850 + $0x2e8] sm:$0xff] %v1037
          %v1039 = vld [vmem:[%s849 + $0x2f0] sm:$0xff]
          %1040 = vst [vmem:[%s850 + $0x2f0] sm:$0xff] %v1039
          %v1041 = vld [vmem:[%s849 + $0x2f8] sm:$0xff]
          %1042 = vst [vmem:[%s850 + $0x2f8] sm:$0xff] %v1041
          %v1043 = vld [vmem:[%s849 + $0x300] sm:$0xff]
          %1044 = vst [vmem:[%s850 + $0x300] sm:$0xff] %v1043
          %v1045 = vld [vmem:[%s849 + $0x308] sm:$0xff]
          %1046 = vst [vmem:[%s850 + $0x308] sm:$0xff] %v1045
          %v1047 = vld [vmem:[%s849 + $0x310] sm:$0xff]
          %1048 = vst [vmem:[%s850 + $0x310] sm:$0xff] %v1047
          %v1049 = vld [vmem:[%s849 + $0x318] sm:$0xff]
          %1050 = vst [vmem:[%s850 + $0x318] sm:$0xff] %v1049
          %v1051 = vld [vmem:[%s849 + $0x320] sm:$0xff]
          %1052 = vst [vmem:[%s850 + $0x320] sm:$0xff] %v1051
          %v1053 = vld [vmem:[%s849 + $0x328] sm:$0xff]
          %1054 = vst [vmem:[%s850 + $0x328] sm:$0xff] %v1053
          %v1055 = vld [vmem:[%s849 + $0x330] sm:$0xff]
          %1056 = vst [vmem:[%s850 + $0x330] sm:$0xff] %v1055
          %v1057 = vld [vmem:[%s849 + $0x338] sm:$0xff]
          %1058 = vst [vmem:[%s850 + $0x338] sm:$0xff] %v1057
          %v1059 = vld [vmem:[%s849 + $0x340] sm:$0xff]
          %1060 = vst [vmem:[%s850 + $0x340] sm:$0xff] %v1059
          %v1061 = vld [vmem:[%s849 + $0x348] sm:$0xff]
          %1062 = vst [vmem:[%s850 + $0x348] sm:$0xff] %v1061
          %v1063 = vld [vmem:[%s849 + $0x350] sm:$0xff]
          %1064 = vst [vmem:[%s850 + $0x350] sm:$0xff] %v1063
          %v1065 = vld [vmem:[%s849 + $0x358] sm:$0xff]
          %1066 = vst [vmem:[%s850 + $0x358] sm:$0xff] %v1065
          %v1067 = vld [vmem:[%s849 + $0x360] sm:$0xff]
          %1068 = vst [vmem:[%s850 + $0x360] sm:$0xff] %v1067
          %v1069 = vld [vmem:[%s849 + $0x368] sm:$0xff]
          %1070 = vst [vmem:[%s850 + $0x368] sm:$0xff] %v1069
          %v1071 = vld [vmem:[%s849 + $0x370] sm:$0xff]
          %1072 = vst [vmem:[%s850 + $0x370] sm:$0xff] %v1071
          %v1073 = vld [vmem:[%s849 + $0x378] sm:$0xff]
          %1074 = vst [vmem:[%s850 + $0x378] sm:$0xff] %v1073
          %v1075 = vld [vmem:[%s849 + $0x380] sm:$0xff]
          %1076 = vst [vmem:[%s850 + $0x380] sm:$0xff] %v1075
          %v1077 = vld [vmem:[%s849 + $0x388] sm:$0xff]
          %1078 = vst [vmem:[%s850 + $0x388] sm:$0xff] %v1077
          %v1079 = vld [vmem:[%s849 + $0x390] sm:$0xff]
          %1080 = vst [vmem:[%s850 + $0x390] sm:$0xff] %v1079
          %v1081 = vld [vmem:[%s849 + $0x398] sm:$0xff]
          %1082 = vst [vmem:[%s850 + $0x398] sm:$0xff] %v1081
          %v1083 = vld [vmem:[%s849 + $0x3a0] sm:$0xff]
          %1084 = vst [vmem:[%s850 + $0x3a0] sm:$0xff] %v1083
          %v1085 = vld [vmem:[%s849 + $0x3a8] sm:$0xff]
          %1086 = vst [vmem:[%s850 + $0x3a8] sm:$0xff] %v1085
          %v1087 = vld [vmem:[%s849 + $0x3b0] sm:$0xff]
          %1088 = vst [vmem:[%s850 + $0x3b0] sm:$0xff] %v1087
          %v1089 = vld [vmem:[%s849 + $0x3b8] sm:$0xff]
          %1090 = vst [vmem:[%s850 + $0x3b8] sm:$0xff] %v1089
          %v1091 = vld [vmem:[%s849 + $0x3c0] sm:$0xff]
          %1092 = vst [vmem:[%s850 + $0x3c0] sm:$0xff] %v1091
          %v1093 = vld [vmem:[%s849 + $0x3c8] sm:$0xff]
          %1094 = vst [vmem:[%s850 + $0x3c8] sm:$0xff] %v1093
          %v1095 = vld [vmem:[%s849 + $0x3d0] sm:$0xff]
          %1096 = vst [vmem:[%s850 + $0x3d0] sm:$0xff] %v1095
          %v1097 = vld [vmem:[%s849 + $0x3d8] sm:$0xff]
          %1098 = vst [vmem:[%s850 + $0x3d8] sm:$0xff] %v1097
          %v1099 = vld [vmem:[%s849 + $0x3e0] sm:$0xff]
          %1100 = vst [vmem:[%s850 + $0x3e0] sm:$0xff] %v1099
          %v1101 = vld [vmem:[%s849 + $0x3e8] sm:$0xff]
          %1102 = vst [vmem:[%s850 + $0x3e8] sm:$0xff] %v1101
          %v1103 = vld [vmem:[%s849 + $0x3f0] sm:$0xff]
          %1104 = vst [vmem:[%s850 + $0x3f0] sm:$0xff] %v1103
          %v1105 = vld [vmem:[%s849 + $0x3f8] sm:$0xff]
          %1106 = vst [vmem:[%s850 + $0x3f8] sm:$0xff] %v1105
          %v1107 = vld [vmem:[%s849 + $0x400] sm:$0xff]
          %1108 = vst [vmem:[%s850 + $0x400] sm:$0xff] %v1107
          %v1109 = vld [vmem:[%s849 + $0x408] sm:$0xff]
          %1110 = vst [vmem:[%s850 + $0x408] sm:$0xff] %v1109
          %v1111 = vld [vmem:[%s849 + $0x410] sm:$0xff]
          %1112 = vst [vmem:[%s850 + $0x410] sm:$0xff] %v1111
          %v1113 = vld [vmem:[%s849 + $0x418] sm:$0xff]
          %1114 = vst [vmem:[%s850 + $0x418] sm:$0xff] %v1113
          %v1115 = vld [vmem:[%s849 + $0x420] sm:$0xff]
          %1116 = vst [vmem:[%s850 + $0x420] sm:$0xff] %v1115
          %v1117 = vld [vmem:[%s849 + $0x428] sm:$0xff]
          %1118 = vst [vmem:[%s850 + $0x428] sm:$0xff] %v1117
          %v1119 = vld [vmem:[%s849 + $0x430] sm:$0xff]
          %1120 = vst [vmem:[%s850 + $0x430] sm:$0xff] %v1119
          %v1121 = vld [vmem:[%s849 + $0x438] sm:$0xff]
          %1122 = vst [vmem:[%s850 + $0x438] sm:$0xff] %v1121
          %v1123 = vld [vmem:[%s849 + $0x440] sm:$0xff]
          %1124 = vst [vmem:[%s850 + $0x440] sm:$0xff] %v1123
          %v1125 = vld [vmem:[%s849 + $0x448] sm:$0xff]
          %1126 = vst [vmem:[%s850 + $0x448] sm:$0xff] %v1125
          %v1127 = vld [vmem:[%s849 + $0x450] sm:$0xff]
          %1128 = vst [vmem:[%s850 + $0x450] sm:$0xff] %v1127
          %v1129 = vld [vmem:[%s849 + $0x458] sm:$0xff]
          %1130 = vst [vmem:[%s850 + $0x458] sm:$0xff] %v1129
          %v1131 = vld [vmem:[%s849 + $0x460] sm:$0xff]
          %1132 = vst [vmem:[%s850 + $0x460] sm:$0xff] %v1131
          %v1133 = vld [vmem:[%s849 + $0x468] sm:$0xff]
          %1134 = vst [vmem:[%s850 + $0x468] sm:$0xff] %v1133
          %v1135 = vld [vmem:[%s849 + $0x470] sm:$0xff]
          %1136 = vst [vmem:[%s850 + $0x470] sm:$0xff] %v1135
          %v1137 = vld [vmem:[%s849 + $0x478] sm:$0xff]
          %1138 = vst [vmem:[%s850 + $0x478] sm:$0xff] %v1137
          %v1139 = vld [vmem:[%s849 + $0x480] sm:$0xff]
          %1140 = vst [vmem:[%s850 + $0x480] sm:$0xff] %v1139
          %v1141 = vld [vmem:[%s849 + $0x488] sm:$0xff]
          %1142 = vst [vmem:[%s850 + $0x488] sm:$0xff] %v1141
          %v1143 = vld [vmem:[%s849 + $0x490] sm:$0xff]
          %1144 = vst [vmem:[%s850 + $0x490] sm:$0xff] %v1143
          %v1145 = vld [vmem:[%s849 + $0x498] sm:$0xff]
          %1146 = vst [vmem:[%s850 + $0x498] sm:$0xff] %v1145
          %v1147 = vld [vmem:[%s849 + $0x4a0] sm:$0xff]
          %1148 = vst [vmem:[%s850 + $0x4a0] sm:$0xff] %v1147
          %v1149 = vld [vmem:[%s849 + $0x4a8] sm:$0xff]
          %1150 = vst [vmem:[%s850 + $0x4a8] sm:$0xff] %v1149
          %v1151 = vld [vmem:[%s849 + $0x4b0] sm:$0xff]
          %1152 = vst [vmem:[%s850 + $0x4b0] sm:$0xff] %v1151
          %v1153 = vld [vmem:[%s849 + $0x4b8] sm:$0xff]
          %1154 = vst [vmem:[%s850 + $0x4b8] sm:$0xff] %v1153
          %v1155 = vld [vmem:[%s849 + $0x4c0] sm:$0xff]
          %1156 = vst [vmem:[%s850 + $0x4c0] sm:$0xff] %v1155
          %v1157 = vld [vmem:[%s849 + $0x4c8] sm:$0xff]
          %1158 = vst [vmem:[%s850 + $0x4c8] sm:$0xff] %v1157
          %v1159 = vld [vmem:[%s849 + $0x4d0] sm:$0xff]
          %1160 = vst [vmem:[%s850 + $0x4d0] sm:$0xff] %v1159
          %v1161 = vld [vmem:[%s849 + $0x4d8] sm:$0xff]
          %1162 = vst [vmem:[%s850 + $0x4d8] sm:$0xff] %v1161
          %v1163 = vld [vmem:[%s849 + $0x4e0] sm:$0xff]
          %1164 = vst [vmem:[%s850 + $0x4e0] sm:$0xff] %v1163
          %v1165 = vld [vmem:[%s849 + $0x4e8] sm:$0xff]
          %1166 = vst [vmem:[%s850 + $0x4e8] sm:$0xff] %v1165
          %v1167 = vld [vmem:[%s849 + $0x4f0] sm:$0xff]
          %1168 = vst [vmem:[%s850 + $0x4f0] sm:$0xff] %v1167
          %v1169 = vld [vmem:[%s849 + $0x4f8] sm:$0xff]
          %1170 = vst [vmem:[%s850 + $0x4f8] sm:$0xff] %v1169
          %v1171 = vld [vmem:[%s849 + $0x500] sm:$0xff]
          %1172 = vst [vmem:[%s850 + $0x500] sm:$0xff] %v1171
          %v1173 = vld [vmem:[%s849 + $0x508] sm:$0xff]
          %1174 = vst [vmem:[%s850 + $0x508] sm:$0xff] %v1173
          %v1175 = vld [vmem:[%s849 + $0x510] sm:$0xff]
          %1176 = vst [vmem:[%s850 + $0x510] sm:$0xff] %v1175
          %v1177 = vld [vmem:[%s849 + $0x518] sm:$0xff]
          %1178 = vst [vmem:[%s850 + $0x518] sm:$0xff] %v1177
          %v1179 = vld [vmem:[%s849 + $0x520] sm:$0xff]
          %1180 = vst [vmem:[%s850 + $0x520] sm:$0xff] %v1179
          %v1181 = vld [vmem:[%s849 + $0x528] sm:$0xff]
          %1182 = vst [vmem:[%s850 + $0x528] sm:$0xff] %v1181
          %v1183 = vld [vmem:[%s849 + $0x530] sm:$0xff]
          %1184 = vst [vmem:[%s850 + $0x530] sm:$0xff] %v1183
          %v1185 = vld [vmem:[%s849 + $0x538] sm:$0xff]
          %1186 = vst [vmem:[%s850 + $0x538] sm:$0xff] %v1185
          %v1187 = vld [vmem:[%s849 + $0x540] sm:$0xff]
          %1188 = vst [vmem:[%s850 + $0x540] sm:$0xff] %v1187
          %v1189 = vld [vmem:[%s849 + $0x548] sm:$0xff]
          %1190 = vst [vmem:[%s850 + $0x548] sm:$0xff] %v1189
          %v1191 = vld [vmem:[%s849 + $0x550] sm:$0xff]
          %1192 = vst [vmem:[%s850 + $0x550] sm:$0xff] %v1191
          %v1193 = vld [vmem:[%s849 + $0x558] sm:$0xff]
          %1194 = vst [vmem:[%s850 + $0x558] sm:$0xff] %v1193
          %v1195 = vld [vmem:[%s849 + $0x560] sm:$0xff]
          %1196 = vst [vmem:[%s850 + $0x560] sm:$0xff] %v1195
          %v1197 = vld [vmem:[%s849 + $0x568] sm:$0xff]
          %1198 = vst [vmem:[%s850 + $0x568] sm:$0xff] %v1197
          %v1199 = vld [vmem:[%s849 + $0x570] sm:$0xff]
          %1200 = vst [vmem:[%s850 + $0x570] sm:$0xff] %v1199
          %v1201 = vld [vmem:[%s849 + $0x578] sm:$0xff]
          %1202 = vst [vmem:[%s850 + $0x578] sm:$0xff] %v1201
          %v1203 = vld [vmem:[%s849 + $0x580] sm:$0xff]
          %1204 = vst [vmem:[%s850 + $0x580] sm:$0xff] %v1203
          %v1205 = vld [vmem:[%s849 + $0x588] sm:$0xff]
          %1206 = vst [vmem:[%s850 + $0x588] sm:$0xff] %v1205
          %v1207 = vld [vmem:[%s849 + $0x590] sm:$0xff]
          %1208 = vst [vmem:[%s850 + $0x590] sm:$0xff] %v1207
          %v1209 = vld [vmem:[%s849 + $0x598] sm:$0xff]
          %1210 = vst [vmem:[%s850 + $0x598] sm:$0xff] %v1209
          %v1211 = vld [vmem:[%s849 + $0x5a0] sm:$0xff]
          %1212 = vst [vmem:[%s850 + $0x5a0] sm:$0xff] %v1211
          %v1213 = vld [vmem:[%s849 + $0x5a8] sm:$0xff]
          %1214 = vst [vmem:[%s850 + $0x5a8] sm:$0xff] %v1213
          %v1215 = vld [vmem:[%s849 + $0x5b0] sm:$0xff]
          %1216 = vst [vmem:[%s850 + $0x5b0] sm:$0xff] %v1215
          %v1217 = vld [vmem:[%s849 + $0x5b8] sm:$0xff]
          %1218 = vst [vmem:[%s850 + $0x5b8] sm:$0xff] %v1217
          %v1219 = vld [vmem:[%s849 + $0x5c0] sm:$0xff]
          %1220 = vst [vmem:[%s850 + $0x5c0] sm:$0xff] %v1219
          %v1221 = vld [vmem:[%s849 + $0x5c8] sm:$0xff]
          %1222 = vst [vmem:[%s850 + $0x5c8] sm:$0xff] %v1221
          %v1223 = vld [vmem:[%s849 + $0x5d0] sm:$0xff]
          %1224 = vst [vmem:[%s850 + $0x5d0] sm:$0xff] %v1223
          %v1225 = vld [vmem:[%s849 + $0x5d8] sm:$0xff]
          %1226 = vst [vmem:[%s850 + $0x5d8] sm:$0xff] %v1225
          %v1227 = vld [vmem:[%s849 + $0x5e0] sm:$0xff]
          %1228 = vst [vmem:[%s850 + $0x5e0] sm:$0xff] %v1227
          %v1229 = vld [vmem:[%s849 + $0x5e8] sm:$0xff]
          %1230 = vst [vmem:[%s850 + $0x5e8] sm:$0xff] %v1229
          %v1231 = vld [vmem:[%s849 + $0x5f0] sm:$0xff]
          %1232 = vst [vmem:[%s850 + $0x5f0] sm:$0xff] %v1231
          %v1233 = vld [vmem:[%s849 + $0x5f8] sm:$0xff]
          %1234 = vst [vmem:[%s850 + $0x5f8] sm:$0xff] %v1233
          %v1235 = vld [vmem:[%s849 + $0x600] sm:$0xff]
          %1236 = vst [vmem:[%s850 + $0x600] sm:$0xff] %v1235
          %v1237 = vld [vmem:[%s849 + $0x608] sm:$0xff]
          %1238 = vst [vmem:[%s850 + $0x608] sm:$0xff] %v1237
          %v1239 = vld [vmem:[%s849 + $0x610] sm:$0xff]
          %1240 = vst [vmem:[%s850 + $0x610] sm:$0xff] %v1239
          %v1241 = vld [vmem:[%s849 + $0x618] sm:$0xff]
          %1242 = vst [vmem:[%s850 + $0x618] sm:$0xff] %v1241
          %v1243 = vld [vmem:[%s849 + $0x620] sm:$0xff]
          %1244 = vst [vmem:[%s850 + $0x620] sm:$0xff] %v1243
          %v1245 = vld [vmem:[%s849 + $0x628] sm:$0xff]
          %1246 = vst [vmem:[%s850 + $0x628] sm:$0xff] %v1245
          %v1247 = vld [vmem:[%s849 + $0x630] sm:$0xff]
          %1248 = vst [vmem:[%s850 + $0x630] sm:$0xff] %v1247
          %v1249 = vld [vmem:[%s849 + $0x638] sm:$0xff]
          %1250 = vst [vmem:[%s850 + $0x638] sm:$0xff] %v1249
          %v1251 = vld [vmem:[%s849 + $0x640] sm:$0xff]
          %1252 = vst [vmem:[%s850 + $0x640] sm:$0xff] %v1251
          %v1253 = vld [vmem:[%s849 + $0x648] sm:$0xff]
          %1254 = vst [vmem:[%s850 + $0x648] sm:$0xff] %v1253
          %v1255 = vld [vmem:[%s849 + $0x650] sm:$0xff]
          %1256 = vst [vmem:[%s850 + $0x650] sm:$0xff] %v1255
          %v1257 = vld [vmem:[%s849 + $0x658] sm:$0xff]
          %1258 = vst [vmem:[%s850 + $0x658] sm:$0xff] %v1257
          %v1259 = vld [vmem:[%s849 + $0x660] sm:$0xff]
          %1260 = vst [vmem:[%s850 + $0x660] sm:$0xff] %v1259
          %v1261 = vld [vmem:[%s849 + $0x668] sm:$0xff]
          %1262 = vst [vmem:[%s850 + $0x668] sm:$0xff] %v1261
          %v1263 = vld [vmem:[%s849 + $0x670] sm:$0xff]
          %1264 = vst [vmem:[%s850 + $0x670] sm:$0xff] %v1263
          %v1265 = vld [vmem:[%s849 + $0x678] sm:$0xff]
          %1266 = vst [vmem:[%s850 + $0x678] sm:$0xff] %v1265
          %v1267 = vld [vmem:[%s849 + $0x680] sm:$0xff]
          %1268 = vst [vmem:[%s850 + $0x680] sm:$0xff] %v1267
          %v1269 = vld [vmem:[%s849 + $0x688] sm:$0xff]
          %1270 = vst [vmem:[%s850 + $0x688] sm:$0xff] %v1269
          %v1271 = vld [vmem:[%s849 + $0x690] sm:$0xff]
          %1272 = vst [vmem:[%s850 + $0x690] sm:$0xff] %v1271
          %v1273 = vld [vmem:[%s849 + $0x698] sm:$0xff]
          %1274 = vst [vmem:[%s850 + $0x698] sm:$0xff] %v1273
          %v1275 = vld [vmem:[%s849 + $0x6a0] sm:$0xff]
          %1276 = vst [vmem:[%s850 + $0x6a0] sm:$0xff] %v1275
          %v1277 = vld [vmem:[%s849 + $0x6a8] sm:$0xff]
          %1278 = vst [vmem:[%s850 + $0x6a8] sm:$0xff] %v1277
          %v1279 = vld [vmem:[%s849 + $0x6b0] sm:$0xff]
          %1280 = vst [vmem:[%s850 + $0x6b0] sm:$0xff] %v1279
          %v1281 = vld [vmem:[%s849 + $0x6b8] sm:$0xff]
          %1282 = vst [vmem:[%s850 + $0x6b8] sm:$0xff] %v1281
          %v1283 = vld [vmem:[%s849 + $0x6c0] sm:$0xff]
          %1284 = vst [vmem:[%s850 + $0x6c0] sm:$0xff] %v1283
          %v1285 = vld [vmem:[%s849 + $0x6c8] sm:$0xff]
          %1286 = vst [vmem:[%s850 + $0x6c8] sm:$0xff] %v1285
          %v1287 = vld [vmem:[%s849 + $0x6d0] sm:$0xff]
          %1288 = vst [vmem:[%s850 + $0x6d0] sm:$0xff] %v1287
          %v1289 = vld [vmem:[%s849 + $0x6d8] sm:$0xff]
          %1290 = vst [vmem:[%s850 + $0x6d8] sm:$0xff] %v1289
          %v1291 = vld [vmem:[%s849 + $0x6e0] sm:$0xff]
          %1292 = vst [vmem:[%s850 + $0x6e0] sm:$0xff] %v1291
          %v1293 = vld [vmem:[%s849 + $0x6e8] sm:$0xff]
          %1294 = vst [vmem:[%s850 + $0x6e8] sm:$0xff] %v1293
          %v1295 = vld [vmem:[%s849 + $0x6f0] sm:$0xff]
          %1296 = vst [vmem:[%s850 + $0x6f0] sm:$0xff] %v1295
          %v1297 = vld [vmem:[%s849 + $0x6f8] sm:$0xff]
          %1298 = vst [vmem:[%s850 + $0x6f8] sm:$0xff] %v1297
          %v1299 = vld [vmem:[%s849 + $0x700] sm:$0xff]
          %1300 = vst [vmem:[%s850 + $0x700] sm:$0xff] %v1299
          %v1301 = vld [vmem:[%s849 + $0x708] sm:$0xff]
          %1302 = vst [vmem:[%s850 + $0x708] sm:$0xff] %v1301
          %v1303 = vld [vmem:[%s849 + $0x710] sm:$0xff]
          %1304 = vst [vmem:[%s850 + $0x710] sm:$0xff] %v1303
          %v1305 = vld [vmem:[%s849 + $0x718] sm:$0xff]
          %1306 = vst [vmem:[%s850 + $0x718] sm:$0xff] %v1305
          %v1307 = vld [vmem:[%s849 + $0x720] sm:$0xff]
          %1308 = vst [vmem:[%s850 + $0x720] sm:$0xff] %v1307
          %v1309 = vld [vmem:[%s849 + $0x728] sm:$0xff]
          %1310 = vst [vmem:[%s850 + $0x728] sm:$0xff] %v1309
          %v1311 = vld [vmem:[%s849 + $0x730] sm:$0xff]
          %1312 = vst [vmem:[%s850 + $0x730] sm:$0xff] %v1311
          %v1313 = vld [vmem:[%s849 + $0x738] sm:$0xff]
          %1314 = vst [vmem:[%s850 + $0x738] sm:$0xff] %v1313
          %v1315 = vld [vmem:[%s849 + $0x740] sm:$0xff]
          %1316 = vst [vmem:[%s850 + $0x740] sm:$0xff] %v1315
          %v1317 = vld [vmem:[%s849 + $0x748] sm:$0xff]
          %1318 = vst [vmem:[%s850 + $0x748] sm:$0xff] %v1317
          %v1319 = vld [vmem:[%s849 + $0x750] sm:$0xff]
          %1320 = vst [vmem:[%s850 + $0x750] sm:$0xff] %v1319
          %v1321 = vld [vmem:[%s849 + $0x758] sm:$0xff]
          %1322 = vst [vmem:[%s850 + $0x758] sm:$0xff] %v1321
          %v1323 = vld [vmem:[%s849 + $0x760] sm:$0xff]
          %1324 = vst [vmem:[%s850 + $0x760] sm:$0xff] %v1323
          %v1325 = vld [vmem:[%s849 + $0x768] sm:$0xff]
          %1326 = vst [vmem:[%s850 + $0x768] sm:$0xff] %v1325
          %v1327 = vld [vmem:[%s849 + $0x770] sm:$0xff]
          %1328 = vst [vmem:[%s850 + $0x770] sm:$0xff] %v1327
          %v1329 = vld [vmem:[%s849 + $0x778] sm:$0xff]
          %1330 = vst [vmem:[%s850 + $0x778] sm:$0xff] %v1329
          %v1331 = vld [vmem:[%s849 + $0x780] sm:$0xff]
          %1332 = vst [vmem:[%s850 + $0x780] sm:$0xff] %v1331
          %v1333 = vld [vmem:[%s849 + $0x788] sm:$0xff]
          %1334 = vst [vmem:[%s850 + $0x788] sm:$0xff] %v1333
          %v1335 = vld [vmem:[%s849 + $0x790] sm:$0xff]
          %1336 = vst [vmem:[%s850 + $0x790] sm:$0xff] %v1335
          %v1337 = vld [vmem:[%s849 + $0x798] sm:$0xff]
          %1338 = vst [vmem:[%s850 + $0x798] sm:$0xff] %v1337
          %v1339 = vld [vmem:[%s849 + $0x7a0] sm:$0xff]
          %1340 = vst [vmem:[%s850 + $0x7a0] sm:$0xff] %v1339
          %v1341 = vld [vmem:[%s849 + $0x7a8] sm:$0xff]
          %1342 = vst [vmem:[%s850 + $0x7a8] sm:$0xff] %v1341
          %v1343 = vld [vmem:[%s849 + $0x7b0] sm:$0xff]
          %1344 = vst [vmem:[%s850 + $0x7b0] sm:$0xff] %v1343
          %v1345 = vld [vmem:[%s849 + $0x7b8] sm:$0xff]
          %1346 = vst [vmem:[%s850 + $0x7b8] sm:$0xff] %v1345
          %v1347 = vld [vmem:[%s849 + $0x7c0] sm:$0xff]
          %1348 = vst [vmem:[%s850 + $0x7c0] sm:$0xff] %v1347
          %v1349 = vld [vmem:[%s849 + $0x7c8] sm:$0xff]
          %1350 = vst [vmem:[%s850 + $0x7c8] sm:$0xff] %v1349
          %v1351 = vld [vmem:[%s849 + $0x7d0] sm:$0xff]
          %1352 = vst [vmem:[%s850 + $0x7d0] sm:$0xff] %v1351
          %v1353 = vld [vmem:[%s849 + $0x7d8] sm:$0xff]
          %1354 = vst [vmem:[%s850 + $0x7d8] sm:$0xff] %v1353
          %v1355 = vld [vmem:[%s849 + $0x7e0] sm:$0xff]
          %1356 = vst [vmem:[%s850 + $0x7e0] sm:$0xff] %v1355
          %v1357 = vld [vmem:[%s849 + $0x7e8] sm:$0xff]
          %1358 = vst [vmem:[%s850 + $0x7e8] sm:$0xff] %v1357
          %v1359 = vld [vmem:[%s849 + $0x7f0] sm:$0xff]
          %1360 = vst [vmem:[%s850 + $0x7f0] sm:$0xff] %v1359
          %v1361 = vld [vmem:[%s849 + $0x7f8] sm:$0xff]
          %1362 = vst [vmem:[%s850 + $0x7f8] sm:$0xff] %v1361
          %v1363 = vld [vmem:[%s849 + $0x800] sm:$0xff]
          %1364 = vst [vmem:[%s850 + $0x800] sm:$0xff] %v1363
          %v1365 = vld [vmem:[%s849 + $0x808] sm:$0xff]
          %1366 = vst [vmem:[%s850 + $0x808] sm:$0xff] %v1365
          %v1367 = vld [vmem:[%s849 + $0x810] sm:$0xff]
          %1368 = vst [vmem:[%s850 + $0x810] sm:$0xff] %v1367
          %v1369 = vld [vmem:[%s849 + $0x818] sm:$0xff]
          %1370 = vst [vmem:[%s850 + $0x818] sm:$0xff] %v1369
          %v1371 = vld [vmem:[%s849 + $0x820] sm:$0xff]
          %1372 = vst [vmem:[%s850 + $0x820] sm:$0xff] %v1371
          %v1373 = vld [vmem:[%s849 + $0x828] sm:$0xff]
          %1374 = vst [vmem:[%s850 + $0x828] sm:$0xff] %v1373
          %v1375 = vld [vmem:[%s849 + $0x830] sm:$0xff]
          %1376 = vst [vmem:[%s850 + $0x830] sm:$0xff] %v1375
          %v1377 = vld [vmem:[%s849 + $0x838] sm:$0xff]
          %1378 = vst [vmem:[%s850 + $0x838] sm:$0xff] %v1377
          %v1379 = vld [vmem:[%s849 + $0x840] sm:$0xff]
          %1380 = vst [vmem:[%s850 + $0x840] sm:$0xff] %v1379
          %v1381 = vld [vmem:[%s849 + $0x848] sm:$0xff]
          %1382 = vst [vmem:[%s850 + $0x848] sm:$0xff] %v1381
          %v1383 = vld [vmem:[%s849 + $0x850] sm:$0xff]
          %1384 = vst [vmem:[%s850 + $0x850] sm:$0xff] %v1383
          %v1385 = vld [vmem:[%s849 + $0x858] sm:$0xff]
          %1386 = vst [vmem:[%s850 + $0x858] sm:$0xff] %v1385
          %v1387 = vld [vmem:[%s849 + $0x860] sm:$0xff]
          %1388 = vst [vmem:[%s850 + $0x860] sm:$0xff] %v1387
          %v1389 = vld [vmem:[%s849 + $0x868] sm:$0xff]
          %1390 = vst [vmem:[%s850 + $0x868] sm:$0xff] %v1389
          %v1391 = vld [vmem:[%s849 + $0x870] sm:$0xff]
          %1392 = vst [vmem:[%s850 + $0x870] sm:$0xff] %v1391
          %v1393 = vld [vmem:[%s849 + $0x878] sm:$0xff]
          %1394 = vst [vmem:[%s850 + $0x878] sm:$0xff] %v1393
          %v1395 = vld [vmem:[%s849 + $0x880] sm:$0xff]
          %1396 = vst [vmem:[%s850 + $0x880] sm:$0xff] %v1395
          %v1397 = vld [vmem:[%s849 + $0x888] sm:$0xff]
          %1398 = vst [vmem:[%s850 + $0x888] sm:$0xff] %v1397
          %v1399 = vld [vmem:[%s849 + $0x890] sm:$0xff]
          %1400 = vst [vmem:[%s850 + $0x890] sm:$0xff] %v1399
          %v1401 = vld [vmem:[%s849 + $0x898] sm:$0xff]
          %1402 = vst [vmem:[%s850 + $0x898] sm:$0xff] %v1401
          %v1403 = vld [vmem:[%s849 + $0x8a0] sm:$0xff]
          %1404 = vst [vmem:[%s850 + $0x8a0] sm:$0xff] %v1403
          %v1405 = vld [vmem:[%s849 + $0x8a8] sm:$0xff]
          %1406 = vst [vmem:[%s850 + $0x8a8] sm:$0xff] %v1405
          %v1407 = vld [vmem:[%s849 + $0x8b0] sm:$0xff]
          %1408 = vst [vmem:[%s850 + $0x8b0] sm:$0xff] %v1407
          %v1409 = vld [vmem:[%s849 + $0x8b8] sm:$0xff]
          %1410 = vst [vmem:[%s850 + $0x8b8] sm:$0xff] %v1409
          %v1411 = vld [vmem:[%s849 + $0x8c0] sm:$0xff]
          %1412 = vst [vmem:[%s850 + $0x8c0] sm:$0xff] %v1411
          %v1413 = vld [vmem:[%s849 + $0x8c8] sm:$0xff]
          %1414 = vst [vmem:[%s850 + $0x8c8] sm:$0xff] %v1413
          %v1415 = vld [vmem:[%s849 + $0x8d0] sm:$0xff]
          %1416 = vst [vmem:[%s850 + $0x8d0] sm:$0xff] %v1415
          %v1417 = vld [vmem:[%s849 + $0x8d8] sm:$0xff]
          %1418 = vst [vmem:[%s850 + $0x8d8] sm:$0xff] %v1417
          %v1419 = vld [vmem:[%s849 + $0x8e0] sm:$0xff]
          %1420 = vst [vmem:[%s850 + $0x8e0] sm:$0xff] %v1419
          %v1421 = vld [vmem:[%s849 + $0x8e8] sm:$0xff]
          %1422 = vst [vmem:[%s850 + $0x8e8] sm:$0xff] %v1421
          %v1423 = vld [vmem:[%s849 + $0x8f0] sm:$0xff]
          %1424 = vst [vmem:[%s850 + $0x8f0] sm:$0xff] %v1423
          %v1425 = vld [vmem:[%s849 + $0x8f8] sm:$0xff]
          %1426 = vst [vmem:[%s850 + $0x8f8] sm:$0xff] %v1425
          %v1427 = vld [vmem:[%s849 + $0x900] sm:$0xff]
          %1428 = vst [vmem:[%s850 + $0x900] sm:$0xff] %v1427
          %v1429 = vld [vmem:[%s849 + $0x908] sm:$0xff]
          %1430 = vst [vmem:[%s850 + $0x908] sm:$0xff] %v1429
          %v1431 = vld [vmem:[%s849 + $0x910] sm:$0xff]
          %1432 = vst [vmem:[%s850 + $0x910] sm:$0xff] %v1431
          %v1433 = vld [vmem:[%s849 + $0x918] sm:$0xff]
          %1434 = vst [vmem:[%s850 + $0x918] sm:$0xff] %v1433
          %v1435 = vld [vmem:[%s849 + $0x920] sm:$0xff]
          %1436 = vst [vmem:[%s850 + $0x920] sm:$0xff] %v1435
          %v1437 = vld [vmem:[%s849 + $0x928] sm:$0xff]
          %1438 = vst [vmem:[%s850 + $0x928] sm:$0xff] %v1437
          %v1439 = vld [vmem:[%s849 + $0x930] sm:$0xff]
          %1440 = vst [vmem:[%s850 + $0x930] sm:$0xff] %v1439
          %v1441 = vld [vmem:[%s849 + $0x938] sm:$0xff]
          %1442 = vst [vmem:[%s850 + $0x938] sm:$0xff] %v1441
          %v1443 = vld [vmem:[%s849 + $0x940] sm:$0xff]
          %1444 = vst [vmem:[%s850 + $0x940] sm:$0xff] %v1443
          %v1445 = vld [vmem:[%s849 + $0x948] sm:$0xff]
          %1446 = vst [vmem:[%s850 + $0x948] sm:$0xff] %v1445
          %v1447 = vld [vmem:[%s849 + $0x950] sm:$0xff]
          %1448 = vst [vmem:[%s850 + $0x950] sm:$0xff] %v1447
          %v1449 = vld [vmem:[%s849 + $0x958] sm:$0xff]
          %1450 = vst [vmem:[%s850 + $0x958] sm:$0xff] %v1449
          %v1451 = vld [vmem:[%s849 + $0x960] sm:$0xff]
          %1452 = vst [vmem:[%s850 + $0x960] sm:$0xff] %v1451
          %v1453 = vld [vmem:[%s849 + $0x968] sm:$0xff]
          %1454 = vst [vmem:[%s850 + $0x968] sm:$0xff] %v1453
          %v1455 = vld [vmem:[%s849 + $0x970] sm:$0xff]
          %1456 = vst [vmem:[%s850 + $0x970] sm:$0xff] %v1455
          %v1457 = vld [vmem:[%s849 + $0x978] sm:$0xff]
          %1458 = vst [vmem:[%s850 + $0x978] sm:$0xff] %v1457
          %v1459 = vld [vmem:[%s849 + $0x980] sm:$0xff]
          %1460 = vst [vmem:[%s850 + $0x980] sm:$0xff] %v1459
          %v1461 = vld [vmem:[%s849 + $0x988] sm:$0xff]
          %1462 = vst [vmem:[%s850 + $0x988] sm:$0xff] %v1461
          %v1463 = vld [vmem:[%s849 + $0x990] sm:$0xff]
          %1464 = vst [vmem:[%s850 + $0x990] sm:$0xff] %v1463
          %v1465 = vld [vmem:[%s849 + $0x998] sm:$0xff]
          %1466 = vst [vmem:[%s850 + $0x998] sm:$0xff] %v1465
          %v1467 = vld [vmem:[%s849 + $0x9a0] sm:$0xff]
          %1468 = vst [vmem:[%s850 + $0x9a0] sm:$0xff] %v1467
          %v1469 = vld [vmem:[%s849 + $0x9a8] sm:$0xff]
          %1470 = vst [vmem:[%s850 + $0x9a8] sm:$0xff] %v1469
          %v1471 = vld [vmem:[%s849 + $0x9b0] sm:$0xff]
          %1472 = vst [vmem:[%s850 + $0x9b0] sm:$0xff] %v1471
          %v1473 = vld [vmem:[%s849 + $0x9b8] sm:$0xff]
          %1474 = vst [vmem:[%s850 + $0x9b8] sm:$0xff] %v1473
          %v1475 = vld [vmem:[%s849 + $0x9c0] sm:$0xff]
          %1476 = vst [vmem:[%s850 + $0x9c0] sm:$0xff] %v1475
          %v1477 = vld [vmem:[%s849 + $0x9c8] sm:$0xff]
          %1478 = vst [vmem:[%s850 + $0x9c8] sm:$0xff] %v1477
          %v1479 = vld [vmem:[%s849 + $0x9d0] sm:$0xff]
          %1480 = vst [vmem:[%s850 + $0x9d0] sm:$0xff] %v1479
          %v1481 = vld [vmem:[%s849 + $0x9d8] sm:$0xff]
          %1482 = vst [vmem:[%s850 + $0x9d8] sm:$0xff] %v1481
          %v1483 = vld [vmem:[%s849 + $0x9e0] sm:$0xff]
          %1484 = vst [vmem:[%s850 + $0x9e0] sm:$0xff] %v1483
          %v1485 = vld [vmem:[%s849 + $0x9e8] sm:$0xff]
          %1486 = vst [vmem:[%s850 + $0x9e8] sm:$0xff] %v1485
          %v1487 = vld [vmem:[%s849 + $0x9f0] sm:$0xff]
          %1488 = vst [vmem:[%s850 + $0x9f0] sm:$0xff] %v1487
          %v1489 = vld [vmem:[%s849 + $0x9f8] sm:$0xff]
          %1490 = vst [vmem:[%s850 + $0x9f8] sm:$0xff] %v1489
          %v1491 = vld [vmem:[%s849 + $0xa00] sm:$0xff]
          %1492 = vst [vmem:[%s850 + $0xa00] sm:$0xff] %v1491
          %v1493 = vld [vmem:[%s849 + $0xa08] sm:$0xff]
          %1494 = vst [vmem:[%s850 + $0xa08] sm:$0xff] %v1493
          %v1495 = vld [vmem:[%s849 + $0xa10] sm:$0xff]
          %1496 = vst [vmem:[%s850 + $0xa10] sm:$0xff] %v1495
          %v1497 = vld [vmem:[%s849 + $0xa18] sm:$0xff]
          %1498 = vst [vmem:[%s850 + $0xa18] sm:$0xff] %v1497
          %v1499 = vld [vmem:[%s849 + $0xa20] sm:$0xff]
          %1500 = vst [vmem:[%s850 + $0xa20] sm:$0xff] %v1499
          %v1501 = vld [vmem:[%s849 + $0xa28] sm:$0xff]
          %1502 = vst [vmem:[%s850 + $0xa28] sm:$0xff] %v1501
          %v1503 = vld [vmem:[%s849 + $0xa30] sm:$0xff]
          %1504 = vst [vmem:[%s850 + $0xa30] sm:$0xff] %v1503
          %v1505 = vld [vmem:[%s849 + $0xa38] sm:$0xff]
          %1506 = vst [vmem:[%s850 + $0xa38] sm:$0xff] %v1505
          %v1507 = vld [vmem:[%s849 + $0xa40] sm:$0xff]
          %1508 = vst [vmem:[%s850 + $0xa40] sm:$0xff] %v1507
          %v1509 = vld [vmem:[%s849 + $0xa48] sm:$0xff]
          %1510 = vst [vmem:[%s850 + $0xa48] sm:$0xff] %v1509
          %v1511 = vld [vmem:[%s849 + $0xa50] sm:$0xff]
          %1512 = vst [vmem:[%s850 + $0xa50] sm:$0xff] %v1511
          %v1513 = vld [vmem:[%s849 + $0xa58] sm:$0xff]
          %1514 = vst [vmem:[%s850 + $0xa58] sm:$0xff] %v1513
          %v1515 = vld [vmem:[%s849 + $0xa60] sm:$0xff]
          %1516 = vst [vmem:[%s850 + $0xa60] sm:$0xff] %v1515
          %v1517 = vld [vmem:[%s849 + $0xa68] sm:$0xff]
          %1518 = vst [vmem:[%s850 + $0xa68] sm:$0xff] %v1517
          %v1519 = vld [vmem:[%s849 + $0xa70] sm:$0xff]
          %1520 = vst [vmem:[%s850 + $0xa70] sm:$0xff] %v1519
          %v1521 = vld [vmem:[%s849 + $0xa78] sm:$0xff]
          %1522 = vst [vmem:[%s850 + $0xa78] sm:$0xff] %v1521
          %v1523 = vld [vmem:[%s849 + $0xa80] sm:$0xff]
          %1524 = vst [vmem:[%s850 + $0xa80] sm:$0xff] %v1523
          %v1525 = vld [vmem:[%s849 + $0xa88] sm:$0xff]
          %1526 = vst [vmem:[%s850 + $0xa88] sm:$0xff] %v1525
          %v1527 = vld [vmem:[%s849 + $0xa90] sm:$0xff]
          %1528 = vst [vmem:[%s850 + $0xa90] sm:$0xff] %v1527
          %v1529 = vld [vmem:[%s849 + $0xa98] sm:$0xff]
          %1530 = vst [vmem:[%s850 + $0xa98] sm:$0xff] %v1529
          %v1531 = vld [vmem:[%s849 + $0xaa0] sm:$0xff]
          %1532 = vst [vmem:[%s850 + $0xaa0] sm:$0xff] %v1531
          %v1533 = vld [vmem:[%s849 + $0xaa8] sm:$0xff]
          %1534 = vst [vmem:[%s850 + $0xaa8] sm:$0xff] %v1533
          %v1535 = vld [vmem:[%s849 + $0xab0] sm:$0xff]
          %1536 = vst [vmem:[%s850 + $0xab0] sm:$0xff] %v1535
          %v1537 = vld [vmem:[%s849 + $0xab8] sm:$0xff]
          %1538 = vst [vmem:[%s850 + $0xab8] sm:$0xff] %v1537
          %v1539 = vld [vmem:[%s849 + $0xac0] sm:$0xff]
          %1540 = vst [vmem:[%s850 + $0xac0] sm:$0xff] %v1539
          %v1541 = vld [vmem:[%s849 + $0xac8] sm:$0xff]
          %1542 = vst [vmem:[%s850 + $0xac8] sm:$0xff] %v1541
          %v1543 = vld [vmem:[%s849 + $0xad0] sm:$0xff]
          %1544 = vst [vmem:[%s850 + $0xad0] sm:$0xff] %v1543
          %v1545 = vld [vmem:[%s849 + $0xad8] sm:$0xff]
          %1546 = vst [vmem:[%s850 + $0xad8] sm:$0xff] %v1545
          %v1547 = vld [vmem:[%s849 + $0xae0] sm:$0xff]
          %1548 = vst [vmem:[%s850 + $0xae0] sm:$0xff] %v1547
          %v1549 = vld [vmem:[%s849 + $0xae8] sm:$0xff]
          %1550 = vst [vmem:[%s850 + $0xae8] sm:$0xff] %v1549
          %v1551 = vld [vmem:[%s849 + $0xaf0] sm:$0xff]
          %1552 = vst [vmem:[%s850 + $0xaf0] sm:$0xff] %v1551
          %v1553 = vld [vmem:[%s849 + $0xaf8] sm:$0xff]
          %1554 = vst [vmem:[%s850 + $0xaf8] sm:$0xff] %v1553
          %v1555 = vld [vmem:[%s849 + $0xb00] sm:$0xff]
          %1556 = vst [vmem:[%s850 + $0xb00] sm:$0xff] %v1555
          %v1557 = vld [vmem:[%s849 + $0xb08] sm:$0xff]
          %1558 = vst [vmem:[%s850 + $0xb08] sm:$0xff] %v1557
          %v1559 = vld [vmem:[%s849 + $0xb10] sm:$0xff]
          %1560 = vst [vmem:[%s850 + $0xb10] sm:$0xff] %v1559
          %v1561 = vld [vmem:[%s849 + $0xb18] sm:$0xff]
          %1562 = vst [vmem:[%s850 + $0xb18] sm:$0xff] %v1561
          %v1563 = vld [vmem:[%s849 + $0xb20] sm:$0xff]
          %1564 = vst [vmem:[%s850 + $0xb20] sm:$0xff] %v1563
          %v1565 = vld [vmem:[%s849 + $0xb28] sm:$0xff]
          %1566 = vst [vmem:[%s850 + $0xb28] sm:$0xff] %v1565
          %v1567 = vld [vmem:[%s849 + $0xb30] sm:$0xff]
          %1568 = vst [vmem:[%s850 + $0xb30] sm:$0xff] %v1567
          %v1569 = vld [vmem:[%s849 + $0xb38] sm:$0xff]
          %1570 = vst [vmem:[%s850 + $0xb38] sm:$0xff] %v1569
          %v1571 = vld [vmem:[%s849 + $0xb40] sm:$0xff]
          %1572 = vst [vmem:[%s850 + $0xb40] sm:$0xff] %v1571
          %v1573 = vld [vmem:[%s849 + $0xb48] sm:$0xff]
          %1574 = vst [vmem:[%s850 + $0xb48] sm:$0xff] %v1573
          %v1575 = vld [vmem:[%s849 + $0xb50] sm:$0xff]
          %1576 = vst [vmem:[%s850 + $0xb50] sm:$0xff] %v1575
          %v1577 = vld [vmem:[%s849 + $0xb58] sm:$0xff]
          %1578 = vst [vmem:[%s850 + $0xb58] sm:$0xff] %v1577
          %v1579 = vld [vmem:[%s849 + $0xb60] sm:$0xff]
          %1580 = vst [vmem:[%s850 + $0xb60] sm:$0xff] %v1579
          %v1581 = vld [vmem:[%s849 + $0xb68] sm:$0xff]
          %1582 = vst [vmem:[%s850 + $0xb68] sm:$0xff] %v1581
          %v1583 = vld [vmem:[%s849 + $0xb70] sm:$0xff]
          %1584 = vst [vmem:[%s850 + $0xb70] sm:$0xff] %v1583
          %v1585 = vld [vmem:[%s849 + $0xb78] sm:$0xff]
          %1586 = vst [vmem:[%s850 + $0xb78] sm:$0xff] %v1585
          %v1587 = vld [vmem:[%s849 + $0xb80] sm:$0xff]
          %1588 = vst [vmem:[%s850 + $0xb80] sm:$0xff] %v1587
          %v1589 = vld [vmem:[%s849 + $0xb88] sm:$0xff]
          %1590 = vst [vmem:[%s850 + $0xb88] sm:$0xff] %v1589
          %v1591 = vld [vmem:[%s849 + $0xb90] sm:$0xff]
          %1592 = vst [vmem:[%s850 + $0xb90] sm:$0xff] %v1591
          %v1593 = vld [vmem:[%s849 + $0xb98] sm:$0xff]
          %1594 = vst [vmem:[%s850 + $0xb98] sm:$0xff] %v1593
          %v1595 = vld [vmem:[%s849 + $0xba0] sm:$0xff]
          %1596 = vst [vmem:[%s850 + $0xba0] sm:$0xff] %v1595
          %v1597 = vld [vmem:[%s849 + $0xba8] sm:$0xff]
          %1598 = vst [vmem:[%s850 + $0xba8] sm:$0xff] %v1597
          %v1599 = vld [vmem:[%s849 + $0xbb0] sm:$0xff]
          %1600 = vst [vmem:[%s850 + $0xbb0] sm:$0xff] %v1599
          %v1601 = vld [vmem:[%s849 + $0xbb8] sm:$0xff]
          %1602 = vst [vmem:[%s850 + $0xbb8] sm:$0xff] %v1601
          %v1603 = vld [vmem:[%s849 + $0xbc0] sm:$0xff]
          %1604 = vst [vmem:[%s850 + $0xbc0] sm:$0xff] %v1603
          %v1605 = vld [vmem:[%s849 + $0xbc8] sm:$0xff]
          %1606 = vst [vmem:[%s850 + $0xbc8] sm:$0xff] %v1605
          %v1607 = vld [vmem:[%s849 + $0xbd0] sm:$0xff]
          %1608 = vst [vmem:[%s850 + $0xbd0] sm:$0xff] %v1607
          %v1609 = vld [vmem:[%s849 + $0xbd8] sm:$0xff]
          %1610 = vst [vmem:[%s850 + $0xbd8] sm:$0xff] %v1609
          %v1611 = vld [vmem:[%s849 + $0xbe0] sm:$0xff]
          %1612 = vst [vmem:[%s850 + $0xbe0] sm:$0xff] %v1611
          %v1613 = vld [vmem:[%s849 + $0xbe8] sm:$0xff]
          %1614 = vst [vmem:[%s850 + $0xbe8] sm:$0xff] %v1613
          %v1615 = vld [vmem:[%s849 + $0xbf0] sm:$0xff]
          %1616 = vst [vmem:[%s850 + $0xbf0] sm:$0xff] %v1615
          %v1617 = vld [vmem:[%s849 + $0xbf8] sm:$0xff]
          %1618 = vst [vmem:[%s850 + $0xbf8] sm:$0xff] %v1617
          %v1619 = vld [vmem:[%s849 + $0xc00] sm:$0xff]
          %1620 = vst [vmem:[%s850 + $0xc00] sm:$0xff] %v1619
          %v1621 = vld [vmem:[%s849 + $0xc08] sm:$0xff]
          %1622 = vst [vmem:[%s850 + $0xc08] sm:$0xff] %v1621
          %v1623 = vld [vmem:[%s849 + $0xc10] sm:$0xff]
          %1624 = vst [vmem:[%s850 + $0xc10] sm:$0xff] %v1623
          %v1625 = vld [vmem:[%s849 + $0xc18] sm:$0xff]
          %1626 = vst [vmem:[%s850 + $0xc18] sm:$0xff] %v1625
          %v1627 = vld [vmem:[%s849 + $0xc20] sm:$0xff]
          %1628 = vst [vmem:[%s850 + $0xc20] sm:$0xff] %v1627
          %v1629 = vld [vmem:[%s849 + $0xc28] sm:$0xff]
          %1630 = vst [vmem:[%s850 + $0xc28] sm:$0xff] %v1629
          %v1631 = vld [vmem:[%s849 + $0xc30] sm:$0xff]
          %1632 = vst [vmem:[%s850 + $0xc30] sm:$0xff] %v1631
          %v1633 = vld [vmem:[%s849 + $0xc38] sm:$0xff]
          %1634 = vst [vmem:[%s850 + $0xc38] sm:$0xff] %v1633
          %v1635 = vld [vmem:[%s849 + $0xc40] sm:$0xff]
          %1636 = vst [vmem:[%s850 + $0xc40] sm:$0xff] %v1635
          %v1637 = vld [vmem:[%s849 + $0xc48] sm:$0xff]
          %1638 = vst [vmem:[%s850 + $0xc48] sm:$0xff] %v1637
          %v1639 = vld [vmem:[%s849 + $0xc50] sm:$0xff]
          %1640 = vst [vmem:[%s850 + $0xc50] sm:$0xff] %v1639
          %v1641 = vld [vmem:[%s849 + $0xc58] sm:$0xff]
          %1642 = vst [vmem:[%s850 + $0xc58] sm:$0xff] %v1641
          %v1643 = vld [vmem:[%s849 + $0xc60] sm:$0xff]
          %1644 = vst [vmem:[%s850 + $0xc60] sm:$0xff] %v1643
          %v1645 = vld [vmem:[%s849 + $0xc68] sm:$0xff]
          %1646 = vst [vmem:[%s850 + $0xc68] sm:$0xff] %v1645
          %v1647 = vld [vmem:[%s849 + $0xc70] sm:$0xff]
          %1648 = vst [vmem:[%s850 + $0xc70] sm:$0xff] %v1647
          %v1649 = vld [vmem:[%s849 + $0xc78] sm:$0xff]
          %1650 = vst [vmem:[%s850 + $0xc78] sm:$0xff] %v1649
          %v1651 = vld [vmem:[%s849 + $0xc80] sm:$0xff]
          %1652 = vst [vmem:[%s850 + $0xc80] sm:$0xff] %v1651
          %v1653 = vld [vmem:[%s849 + $0xc88] sm:$0xff]
          %1654 = vst [vmem:[%s850 + $0xc88] sm:$0xff] %v1653
          %v1655 = vld [vmem:[%s849 + $0xc90] sm:$0xff]
          %1656 = vst [vmem:[%s850 + $0xc90] sm:$0xff] %v1655
          %v1657 = vld [vmem:[%s849 + $0xc98] sm:$0xff]
          %1658 = vst [vmem:[%s850 + $0xc98] sm:$0xff] %v1657
          %v1659 = vld [vmem:[%s849 + $0xca0] sm:$0xff]
          %1660 = vst [vmem:[%s850 + $0xca0] sm:$0xff] %v1659
          %v1661 = vld [vmem:[%s849 + $0xca8] sm:$0xff]
          %1662 = vst [vmem:[%s850 + $0xca8] sm:$0xff] %v1661
          %v1663 = vld [vmem:[%s849 + $0xcb0] sm:$0xff]
          %1664 = vst [vmem:[%s850 + $0xcb0] sm:$0xff] %v1663
          %v1665 = vld [vmem:[%s849 + $0xcb8] sm:$0xff]
          %1666 = vst [vmem:[%s850 + $0xcb8] sm:$0xff] %v1665
          %v1667 = vld [vmem:[%s849 + $0xcc0] sm:$0xff]
          %1668 = vst [vmem:[%s850 + $0xcc0] sm:$0xff] %v1667
          %v1669 = vld [vmem:[%s849 + $0xcc8] sm:$0xff]
          %1670 = vst [vmem:[%s850 + $0xcc8] sm:$0xff] %v1669
          %v1671 = vld [vmem:[%s849 + $0xcd0] sm:$0xff]
          %1672 = vst [vmem:[%s850 + $0xcd0] sm:$0xff] %v1671
          %v1673 = vld [vmem:[%s849 + $0xcd8] sm:$0xff]
          %1674 = vst [vmem:[%s850 + $0xcd8] sm:$0xff] %v1673
          %v1675 = vld [vmem:[%s849 + $0xce0] sm:$0xff]
          %1676 = vst [vmem:[%s850 + $0xce0] sm:$0xff] %v1675
          %v1677 = vld [vmem:[%s849 + $0xce8] sm:$0xff]
          %1678 = vst [vmem:[%s850 + $0xce8] sm:$0xff] %v1677
          %v1679 = vld [vmem:[%s849 + $0xcf0] sm:$0xff]
          %1680 = vst [vmem:[%s850 + $0xcf0] sm:$0xff] %v1679
          %v1681 = vld [vmem:[%s849 + $0xcf8] sm:$0xff]
          %1682 = vst [vmem:[%s850 + $0xcf8] sm:$0xff] %v1681
          %v1683 = vld [vmem:[%s849 + $0xd00] sm:$0xff]
          %1684 = vst [vmem:[%s850 + $0xd00] sm:$0xff] %v1683
          %v1685 = vld [vmem:[%s849 + $0xd08] sm:$0xff]
          %1686 = vst [vmem:[%s850 + $0xd08] sm:$0xff] %v1685
          %v1687 = vld [vmem:[%s849 + $0xd10] sm:$0xff]
          %1688 = vst [vmem:[%s850 + $0xd10] sm:$0xff] %v1687
          %v1689 = vld [vmem:[%s849 + $0xd18] sm:$0xff]
          %1690 = vst [vmem:[%s850 + $0xd18] sm:$0xff] %v1689
          %v1691 = vld [vmem:[%s849 + $0xd20] sm:$0xff]
          %1692 = vst [vmem:[%s850 + $0xd20] sm:$0xff] %v1691
          %v1693 = vld [vmem:[%s849 + $0xd28] sm:$0xff]
          %1694 = vst [vmem:[%s850 + $0xd28] sm:$0xff] %v1693
          %v1695 = vld [vmem:[%s849 + $0xd30] sm:$0xff]
          %1696 = vst [vmem:[%s850 + $0xd30] sm:$0xff] %v1695
          %v1697 = vld [vmem:[%s849 + $0xd38] sm:$0xff]
          %1698 = vst [vmem:[%s850 + $0xd38] sm:$0xff] %v1697
          %v1699 = vld [vmem:[%s849 + $0xd40] sm:$0xff]
          %1700 = vst [vmem:[%s850 + $0xd40] sm:$0xff] %v1699
          %v1701 = vld [vmem:[%s849 + $0xd48] sm:$0xff]
          %1702 = vst [vmem:[%s850 + $0xd48] sm:$0xff] %v1701
          %v1703 = vld [vmem:[%s849 + $0xd50] sm:$0xff]
          %1704 = vst [vmem:[%s850 + $0xd50] sm:$0xff] %v1703
          %v1705 = vld [vmem:[%s849 + $0xd58] sm:$0xff]
          %1706 = vst [vmem:[%s850 + $0xd58] sm:$0xff] %v1705
          %v1707 = vld [vmem:[%s849 + $0xd60] sm:$0xff]
          %1708 = vst [vmem:[%s850 + $0xd60] sm:$0xff] %v1707
          %v1709 = vld [vmem:[%s849 + $0xd68] sm:$0xff]
          %1710 = vst [vmem:[%s850 + $0xd68] sm:$0xff] %v1709
          %v1711 = vld [vmem:[%s849 + $0xd70] sm:$0xff]
          %1712 = vst [vmem:[%s850 + $0xd70] sm:$0xff] %v1711
          %v1713 = vld [vmem:[%s849 + $0xd78] sm:$0xff]
          %1714 = vst [vmem:[%s850 + $0xd78] sm:$0xff] %v1713
          %v1715 = vld [vmem:[%s849 + $0xd80] sm:$0xff]
          %1716 = vst [vmem:[%s850 + $0xd80] sm:$0xff] %v1715
          %v1717 = vld [vmem:[%s849 + $0xd88] sm:$0xff]
          %1718 = vst [vmem:[%s850 + $0xd88] sm:$0xff] %v1717
          %v1719 = vld [vmem:[%s849 + $0xd90] sm:$0xff]
          %1720 = vst [vmem:[%s850 + $0xd90] sm:$0xff] %v1719
          %v1721 = vld [vmem:[%s849 + $0xd98] sm:$0xff]
          %1722 = vst [vmem:[%s850 + $0xd98] sm:$0xff] %v1721
          %v1723 = vld [vmem:[%s849 + $0xda0] sm:$0xff]
          %1724 = vst [vmem:[%s850 + $0xda0] sm:$0xff] %v1723
          %v1725 = vld [vmem:[%s849 + $0xda8] sm:$0xff]
          %1726 = vst [vmem:[%s850 + $0xda8] sm:$0xff] %v1725
          %v1727 = vld [vmem:[%s849 + $0xdb0] sm:$0xff]
          %1728 = vst [vmem:[%s850 + $0xdb0] sm:$0xff] %v1727
          %v1729 = vld [vmem:[%s849 + $0xdb8] sm:$0xff]
          %1730 = vst [vmem:[%s850 + $0xdb8] sm:$0xff] %v1729
          %v1731 = vld [vmem:[%s849 + $0xdc0] sm:$0xff]
          %1732 = vst [vmem:[%s850 + $0xdc0] sm:$0xff] %v1731
          %v1733 = vld [vmem:[%s849 + $0xdc8] sm:$0xff]
          %1734 = vst [vmem:[%s850 + $0xdc8] sm:$0xff] %v1733
          %v1735 = vld [vmem:[%s849 + $0xdd0] sm:$0xff]
          %1736 = vst [vmem:[%s850 + $0xdd0] sm:$0xff] %v1735
          %v1737 = vld [vmem:[%s849 + $0xdd8] sm:$0xff]
          %1738 = vst [vmem:[%s850 + $0xdd8] sm:$0xff] %v1737
          %v1739 = vld [vmem:[%s849 + $0xde0] sm:$0xff]
          %1740 = vst [vmem:[%s850 + $0xde0] sm:$0xff] %v1739
          %v1741 = vld [vmem:[%s849 + $0xde8] sm:$0xff]
          %1742 = vst [vmem:[%s850 + $0xde8] sm:$0xff] %v1741
          %v1743 = vld [vmem:[%s849 + $0xdf0] sm:$0xff]
          %1744 = vst [vmem:[%s850 + $0xdf0] sm:$0xff] %v1743
          %v1745 = vld [vmem:[%s849 + $0xdf8] sm:$0xff]
          %1746 = vst [vmem:[%s850 + $0xdf8] sm:$0xff] %v1745
        $region139: #{tpu_custom_call.1} parent=133 // loop_footer
          %s848 = sadd.s32 1, %s844
        $region140: #{tpu_custom_call.1} parent=133 // loop_footer_branch
          %843 = sbr.rel target = $region136
        $region141: #{tpu_custom_call.1} parent=133 // loop_exit
          _
      $region134: #{tpu_custom_call.1} parent=118 // pred_fallthru
        _
      %p1747 = pneg %p839
      // Predicated region
      $region142: #{tpu_custom_call.1} parent=118 // pred_check
        _
      $region143: #{tpu_custom_call.1} parent=118 // pred_check_branch
        %1749 = sbr.rel (%p839) target = $region145
      $region144: #{tpu_custom_call.1} parent=118 // pred_region
        %s1750 = sand.u32 3584, 7
      $region145: #{tpu_custom_call.1} parent=118 // pred_fallthru
        _
    $region119: #{tpu_custom_call.1} parent=1 // pred_fallthru
      _
    // Predicated region
    $region120: #{tpu_custom_call.1} parent=1 // pred_check
      %p823 = pneg %p819
    $region121: #{tpu_custom_call.1} parent=1 // pred_check_branch
      %825 = sbr.rel (%p823) target = $region123
    $region122: #{tpu_custom_call.1} parent=1 // pred_region
      %s826 = sshll.u32 1, 3584
      %s827 = ssub.s32 %s826, 1
      loop: start=0, step=1, limit=1
      $region124: #{tpu_custom_call.1} parent=122 // loop_pre_header
        _
      $region125: #{tpu_custom_call.1} parent=122 // loop_header
        %s829 = sphi 0, %s833
        %p830 = scmp.ge.s32.totalorder %s829, 1
        %s834 = sphi %s6, %s6
        %s835 = sphi [#allocation5], [#allocation5]
      $region126: #{tpu_custom_call.1} parent=122 // loop_header_branch
        %832 = sbr.rel (%p830) target = $region130
      $region127: #{tpu_custom_call.1} parent=122 // loop_body
        %v836 = vld [vmem:[%s834] sm:%s827]
        %837 = vst [vmem:[%s835] sm:%s827] %v836
      $region128: #{tpu_custom_call.1} parent=122 // loop_footer
        %s833 = sadd.s32 1, %s829
      $region129: #{tpu_custom_call.1} parent=122 // loop_footer_branch
        %828 = sbr.rel target = $region125
      $region130: #{tpu_custom_call.1} parent=122 // loop_exit
        _
    $region123: #{tpu_custom_call.1} parent=1 // pred_fallthru
      _
    // Predicated region
    $region146: #{tpu_custom_call.1} parent=1 // pred_check
      _
    $region147: #{tpu_custom_call.1} parent=1 // pred_check_branch
      %1753 = sbr.rel (0) target = $region149
    $region148: #{tpu_custom_call.1} parent=1 // pred_region
      %1754 = vsyncadd %s817, 57344
    $region149: #{tpu_custom_call.1} parent=1 // pred_fallthru
      _
    %v1755 = vld [vmem:[%s0] sm:$0xff]
    %v1756 = vld [vmem:[%s1] sm:$0xf]
    %v1757 = vld [vmem:[%s1 + $0x4] sm:$0xf]
    %v1758 = vld [vmem:[%s1 + $0x8] sm:$0xf]
    %v1759 = vld [vmem:[%s1 + $0xc] sm:$0xf]
    %v1760 = vld [vmem:[%s1 + $0x10] sm:$0xf]
    %v1761 = vld [vmem:[%s1 + $0x14] sm:$0xf]
    %v1762 = vld [vmem:[%s1 + $0x18] sm:$0xf]
    %v1763 = vld [vmem:[%s1 + $0x1c] sm:$0xf]
    %v1764 = vld [vmem:[%s1 + $0x20] sm:$0xf]
    %v1765 = vld [vmem:[%s1 + $0x24] sm:$0xf]
    %v1766 = vld [vmem:[%s1 + $0x28] sm:$0xf]
    %v1767 = vld [vmem:[%s1 + $0x2c] sm:$0xf]
    %v1768 = vld [vmem:[%s1 + $0x30] sm:$0xf]
    %v1769 = vld [vmem:[%s1 + $0x34] sm:$0xf]
    %v1770 = vld [vmem:[%s1 + $0x38] sm:$0xf]
    %v1771 = vld [vmem:[%s1 + $0x3c] sm:$0xf]
    %v1772 = vpack.c.bf16 %v1755, %v1755
    %v1773 = vld [vmem:[%s2] sm:$0x1]
    %v1775 = vlaneseq
    %v1776 = vshrl.u32 %v1775, 7
    %v1777 = vsub.s32 0, %v1776
    %v1778 = vrot.slane %v1773, %v1777
    %v1796 = vunpack.c.l.b16 %v1756
    %v1797 = vunpack.c.l.b16 %v1757
    %v1798 = vunpack.c.l.b16 %v1758
    %v1799 = vunpack.c.l.b16 %v1759
    %v1800 = vunpack.c.l.b16 %v1760
    %v1801 = vunpack.c.l.b16 %v1761
    %v1802 = vunpack.c.l.b16 %v1762
    %v1803 = vunpack.c.l.b16 %v1763
    %v1804 = vunpack.c.l.b16 %v1764
    %v1805 = vunpack.c.l.b16 %v1765
    %v1806 = vunpack.c.l.b16 %v1766
    %v1807 = vunpack.c.l.b16 %v1767
    %v1808 = vunpack.c.l.b16 %v1768
    %v1809 = vunpack.c.l.b16 %v1769
    %v1810 = vunpack.c.l.b16 %v1770
    %v1811 = vunpack.c.l.b16 %v1771
    %v1812 = vpack.c.b16 %v1797, %v1796
    %v1813 = vpack.c.b16 %v1799, %v1798
    %v1814 = vpack.c.b16 %v1801, %v1800
    %v1815 = vpack.c.b16 %v1803, %v1802
    %v1816 = vpack.c.b16 %v1805, %v1804
    %v1817 = vpack.c.b16 %v1807, %v1806
    %v1818 = vpack.c.b16 %v1809, %v1808
    %v1819 = vpack.c.b16 %v1811, %v1810
    %1828 = vmatprep.subr.bf16.mxu0 0
    %1829 = vmatpush1.bf16.msra.mxu0 %v1819
    %1830 = vmatprep.subr.bf16.mxu0 0
    %1831 = vmatpush1.bf16.msra.mxu0 %v1818
    %1832 = vmatprep.subr.bf16.mxu0 0
    %1833 = vmatpush1.bf16.msra.mxu0 %v1817
    %1834 = vmatprep.subr.bf16.mxu0 0
    %1835 = vmatpush1.bf16.msra.mxu0 %v1816
    %1836 = vmatprep.subr.bf16.mxu0 0
    %1837 = vmatpush1.bf16.msra.mxu0 %v1815
    %1838 = vmatprep.subr.bf16.mxu0 0
    %1839 = vmatpush1.bf16.msra.mxu0 %v1814
    %1840 = vmatprep.subr.bf16.mxu0 0
    %1841 = vmatpush1.bf16.msra.mxu0 %v1813
    %1842 = vmatprep.subr.bf16.mxu0 0
    %1843 = vmatpush1.bf16.msra.mxu0 %v1812
    %1844 = vmatprep.subr.bf16.mxu0 0
    %1845 = vmatpush2.bf16.msra.mxu0 0
    %1846 = vmatprep.subr.bf16.mxu0 0
    %1847 = vmatpush2.bf16.msra.mxu0 0
    %1848 = vmatprep.subr.bf16.mxu0 0
    %1849 = vmatpush2.bf16.msra.mxu0 0
    %1850 = vmatprep.subr.bf16.mxu0 0
    %1851 = vmatpush2.bf16.msra.mxu0 0
    %1852 = vmatprep.subr.bf16.mxu0 0
    %1853 = vmatpush2.bf16.msra.mxu0 0
    %1854 = vmatprep.subr.bf16.mxu0 0
    %1855 = vmatpush2.bf16.msra.mxu0 0
    %1856 = vmatprep.subr.bf16.mxu0 0
    %1857 = vmatpush2.bf16.msra.mxu0 0
    %1858 = vmatprep.subr.bf16.mxu0 0
    %1859 = vmatpush2.bf16.msra.mxu0 0
    %1860 = vmatprep.mubr.bf16.mxu0 0
    %1861 = vmatmul.mubr.bf16.gmra.mxu0 %v1772
    %v1862 = vpop.f32.mrf.mxu0
    %v1863 = vadd.f32 %v1778, %v1862
    %v1864 = vpop.f32.mrf.mxu0
    %v1865 = vpop.f32.mrf.mxu0
    %v1866 = vpop.f32.mrf.mxu0
    %1867 = vdwg.mxu0
    %vm1868 = vcmp.gt.f32.partialorder %v1863, 0.0
    %v1869 = vmul.f32 %v1863, 0.2
    %v1870 = vsel %vm1868, %v1863, %v1869
    %s1871 = smul.u32 4, 16
    %s1872 = smul.u32 %s1871, 2
    %s1873 = sshll.u32 %s1872, 4
    %1874 = dma.done [#allocation6], %s1873
    %v1875 = vld [vmem:[#allocation2] sm:$0xff]
    %v1876 = vld [vmem:[#allocation2 + $0x8] sm:$0xff]
    %v1877 = vld [vmem:[#allocation2 + $0x10] sm:$0xff]
    %v1878 = vld [vmem:[#allocation2 + $0x18] sm:$0xff]
    %v1879 = vld [vmem:[#allocation2 + $0x20] sm:$0xff]
    %v1880 = vld [vmem:[#allocation2 + $0x28] sm:$0xff]
    %v1881 = vld [vmem:[#allocation2 + $0x30] sm:$0xff]
    %v1882 = vld [vmem:[#allocation2 + $0x38] sm:$0xff]
    %v1883 = vld [vmem:[#allocation2 + $0x40] sm:$0xff]
    %v1884 = vld [vmem:[#allocation2 + $0x48] sm:$0xff]
    %v1885 = vld [vmem:[#allocation2 + $0x50] sm:$0xff]
    %v1886 = vld [vmem:[#allocation2 + $0x58] sm:$0xff]
    %v1887 = vld [vmem:[#allocation2 + $0x60] sm:$0xff]
    %v1888 = vld [vmem:[#allocation2 + $0x68] sm:$0xff]
    %v1889 = vld [vmem:[#allocation2 + $0x70] sm:$0xff]
    %v1890 = vld [vmem:[#allocation2 + $0x78] sm:$0xff]
    %v1891 = vpack.c.bf16 %v1870, %v1870
    %v1908 = vunpack.c.l.b16 %v1875
    %v1909 = vunpack.c.h.b16 %v1875
    %v1910 = vunpack.c.l.b16 %v1876
    %v1911 = vunpack.c.h.b16 %v1876
    %v1912 = vunpack.c.l.b16 %v1877
    %v1913 = vunpack.c.h.b16 %v1877
    %v1914 = vunpack.c.l.b16 %v1878
    %v1915 = vunpack.c.h.b16 %v1878
    %v1916 = vunpack.c.l.b16 %v1879
    %v1917 = vunpack.c.h.b16 %v1879
    %v1918 = vunpack.c.l.b16 %v1880
    %v1919 = vunpack.c.h.b16 %v1880
    %v1920 = vunpack.c.l.b16 %v1881
    %v1921 = vunpack.c.h.b16 %v1881
    %v1922 = vunpack.c.l.b16 %v1882
    %v1923 = vunpack.c.h.b16 %v1882
    %v1924 = vunpack.c.l.b16 %v1883
    %v1925 = vunpack.c.h.b16 %v1883
    %v1926 = vunpack.c.l.b16 %v1884
    %v1927 = vunpack.c.h.b16 %v1884
    %v1928 = vunpack.c.l.b16 %v1885
    %v1929 = vunpack.c.h.b16 %v1885
    %v1930 = vunpack.c.l.b16 %v1886
    %v1931 = vunpack.c.h.b16 %v1886
    %v1932 = vunpack.c.l.b16 %v1887
    %v1933 = vunpack.c.h.b16 %v1887
    %v1934 = vunpack.c.l.b16 %v1888
    %v1935 = vunpack.c.h.b16 %v1888
    %v1936 = vunpack.c.l.b16 %v1889
    %v1937 = vunpack.c.h.b16 %v1889
    %v1938 = vunpack.c.l.b16 %v1890
    %v1939 = vunpack.c.h.b16 %v1890
    %v1940 = vpack.c.b16 %v1910, %v1908
    %v1941 = vpack.c.b16 %v1911, %v1909
    %v1942 = vpack.c.b16 %v1914, %v1912
    %v1943 = vpack.c.b16 %v1915, %v1913
    %v1944 = vpack.c.b16 %v1918, %v1916
    %v1945 = vpack.c.b16 %v1919, %v1917
    %v1946 = vpack.c.b16 %v1922, %v1920
    %v1947 = vpack.c.b16 %v1923, %v1921
    %v1948 = vpack.c.b16 %v1926, %v1924
    %v1949 = vpack.c.b16 %v1927, %v1925
    %v1950 = vpack.c.b16 %v1930, %v1928
    %v1951 = vpack.c.b16 %v1931, %v1929
    %v1952 = vpack.c.b16 %v1934, %v1932
    %v1953 = vpack.c.b16 %v1935, %v1933
    %v1954 = vpack.c.b16 %v1938, %v1936
    %v1955 = vpack.c.b16 %v1939, %v1937
    %1972 = vmatprep.subr.bf16.mxu0 %v1955
    %1973 = vmatpush1.bf16.msra.mxu0 %v1954
    %1974 = vmatprep.subr.bf16.mxu0 %v1953
    %1975 = vmatpush1.bf16.msra.mxu0 %v1952
    %1976 = vmatprep.subr.bf16.mxu0 %v1951
    %1977 = vmatpush1.bf16.msra.mxu0 %v1950
    %1978 = vmatprep.subr.bf16.mxu0 %v1949
    %1979 = vmatpush1.bf16.msra.mxu0 %v1948
    %1980 = vmatprep.subr.bf16.mxu0 %v1947
    %1981 = vmatpush1.bf16.msra.mxu0 %v1946
    %1982 = vmatprep.subr.bf16.mxu0 %v1945
    %1983 = vmatpush1.bf16.msra.mxu0 %v1944
    %1984 = vmatprep.subr.bf16.mxu0 %v1943
    %1985 = vmatpush1.bf16.msra.mxu0 %v1942
    %1986 = vmatprep.subr.bf16.mxu0 %v1941
    %1987 = vmatpush1.bf16.msra.mxu0 %v1940
    %1988 = vmatprep.subr.bf16.mxu0 0
    %1989 = vmatpush2.bf16.msra.mxu0 0
    %1990 = vmatprep.subr.bf16.mxu0 0
    %1991 = vmatpush2.bf16.msra.mxu0 0
    %1992 = vmatprep.subr.bf16.mxu0 0
    %1993 = vmatpush2.bf16.msra.mxu0 0
    %1994 = vmatprep.subr.bf16.mxu0 0
    %1995 = vmatpush2.bf16.msra.mxu0 0
    %1996 = vmatprep.subr.bf16.mxu0 0
    %1997 = vmatpush2.bf16.msra.mxu0 0
    %1998 = vmatprep.subr.bf16.mxu0 0
    %1999 = vmatpush2.bf16.msra.mxu0 0
    %2000 = vmatprep.subr.bf16.mxu0 0
    %2001 = vmatpush2.bf16.msra.mxu0 0
    %2002 = vmatprep.subr.bf16.mxu0 0
    %2003 = vmatpush2.bf16.msra.mxu0 0
    %2004 = vmatprep.mubr.bf16.mxu0 0
    %2005 = vmatmul.mubr.bf16.gmra.mxu0 %v1891
    %v2006 = vpop.f32.mrf.mxu0
    %v2007 = vadd.f32 0.0, %v2006
    %v2008 = vpop.f32.mrf.mxu0
    %v2009 = vadd.f32 0.0, %v2008
    %v2010 = vpop.f32.mrf.mxu0
    %v2011 = vpop.f32.mrf.mxu0
    %2012 = vdwg.mxu0
    %v2013 = vld [vmem:[%s2 + $0x1] sm:$0x3]
    %v2014 = vld [vmem:[%s2 + $0x3] sm:$0x3]
    %v2015 = vrot.slane %v2007, 4
    %v2016 = vadd.f32 %v2007, %v2015
    %v2017 = vrot.slane %v2016, 2
    %v2018 = vadd.f32 %v2016, %v2017
    %v2019 = vrot.slane %v2018, 1
    %v2020 = vadd.f32 %v2018, %v2019
    %v2021 = vrot.slane %v2009, 4
    %v2022 = vadd.f32 %v2009, %v2021
    %v2023 = vrot.slane %v2022, 2
    %v2024 = vadd.f32 %v2022, %v2023
    %v2025 = vrot.slane %v2024, 1
    %v2026 = vadd.f32 %v2024, %v2025
    %v2027 = vrcp.pop 8.0
    %v2028 = vmul.f32 %v2020, %v2027
    %v2029 = vmul.f32 %v2026, %v2027
    %v2030 = vsub.f32 %v2007, %v2028
    %v2031 = vsub.f32 %v2009, %v2029
    %v2032 = vmul.f32 %v2030, %v2030
    %v2033 = vmul.f32 %v2031, %v2031
    %v2034 = vrot.slane %v2032, 4
    %v2035 = vadd.f32 %v2032, %v2034
    %v2036 = vrot.slane %v2035, 2
    %v2037 = vadd.f32 %v2035, %v2036
    %v2038 = vrot.slane %v2037, 1
    %v2039 = vadd.f32 %v2037, %v2038
    %v2040 = vrot.slane %v2033, 4
    %v2041 = vadd.f32 %v2033, %v2040
    %v2042 = vrot.slane %v2041, 2
    %v2043 = vadd.f32 %v2041, %v2042
    %v2044 = vrot.slane %v2043, 1
    %v2045 = vadd.f32 %v2043, %v2044
    %v2046 = vmul.f32 %v2039, %v2027
    %v2047 = vmul.f32 %v2045, %v2027
    %v2048 = vadd.f32 %v2046, 0.8
    %v2049 = vadd.f32 %v2047, 0.8
    %v2050 = vrsqrt.pop %v2048
    %v2051 = vrsqrt.pop %v2049
    %v2052 = vmul.f32 %v2030, %v2050
    %v2053 = vmul.f32 %v2031, %v2051
    %v2055 = vlaneseq
    %v2056 = vshrl.u32 %v2055, 7
    %v2057 = vsub.s32 0, %v2056
    %v2058 = vrot.slane %v2013, %v2057
    %v2059 = vlaneseq
    %v2060 = vshrl.u32 %v2059, 7
    %v2061 = vsub.s32 1, %v2060
    %v2062 = vrot.slane %v2013, %v2061
    %v2065 = vmul.f32 %v2052, %v2058
    %v2066 = vmul.f32 %v2053, %v2062
    %v2068 = vlaneseq
    %v2069 = vshrl.u32 %v2068, 7
    %v2070 = vsub.s32 0, %v2069
    %v2071 = vrot.slane %v2014, %v2070
    %v2072 = vlaneseq
    %v2073 = vshrl.u32 %v2072, 7
    %v2074 = vsub.s32 1, %v2073
    %v2075 = vrot.slane %v2014, %v2074
    %v2078 = vadd.f32 %v2065, %v2071
    %v2079 = vadd.f32 %v2066, %v2075
    %vm2080 = vcmp.gt.f32.partialorder %v2078, 0.0
    %vm2081 = vcmp.gt.f32.partialorder %v2079, 0.0
    %v2082 = vmul.f32 %v2078, 0.2
    %v2083 = vmul.f32 %v2079, 0.2
    %v2084 = vsel %vm2080, %v2078, %v2082
    %v2085 = vsel %vm2081, %v2079, %v2083
    %s2086 = smul.u32 4, 32
    %s2087 = smul.u32 %s2086, 4
    %s2088 = sshll.u32 %s2087, 4
    %2089 = dma.done %s93, %s2088
    %v2090 = vld [vmem:[#allocation3] sm:$0xff]
    %v2091 = vld [vmem:[#allocation3 + $0x8] sm:$0xff]
    %v2092 = vld [vmem:[#allocation3 + $0x10] sm:$0xff]
    %v2093 = vld [vmem:[#allocation3 + $0x18] sm:$0xff]
    %v2094 = vld [vmem:[#allocation3 + $0x20] sm:$0xff]
    %v2095 = vld [vmem:[#allocation3 + $0x28] sm:$0xff]
    %v2096 = vld [vmem:[#allocation3 + $0x30] sm:$0xff]
    %v2097 = vld [vmem:[#allocation3 + $0x38] sm:$0xff]
    %v2098 = vld [vmem:[#allocation3 + $0x40] sm:$0xff]
    %v2099 = vld [vmem:[#allocation3 + $0x48] sm:$0xff]
    %v2100 = vld [vmem:[#allocation3 + $0x50] sm:$0xff]
    %v2101 = vld [vmem:[#allocation3 + $0x58] sm:$0xff]
    %v2102 = vld [vmem:[#allocation3 + $0x60] sm:$0xff]
    %v2103 = vld [vmem:[#allocation3 + $0x68] sm:$0xff]
    %v2104 = vld [vmem:[#allocation3 + $0x70] sm:$0xff]
    %v2105 = vld [vmem:[#allocation3 + $0x78] sm:$0xff]
    %v2106 = vld [vmem:[#allocation3 + $0x80] sm:$0xff]
    %v2107 = vld [vmem:[#allocation3 + $0x88] sm:$0xff]
    %v2108 = vld [vmem:[#allocation3 + $0x90] sm:$0xff]
    %v2109 = vld [vmem:[#allocation3 + $0x98] sm:$0xff]
    %v2110 = vld [vmem:[#allocation3 + $0xa0] sm:$0xff]
    %v2111 = vld [vmem:[#allocation3 + $0xa8] sm:$0xff]
    %v2112 = vld [vmem:[#allocation3 + $0xb0] sm:$0xff]
    %v2113 = vld [vmem:[#allocation3 + $0xb8] sm:$0xff]
    %v2114 = vld [vmem:[#allocation3 + $0xc0] sm:$0xff]
    %v2115 = vld [vmem:[#allocation3 + $0xc8] sm:$0xff]
    %v2116 = vld [vmem:[#allocation3 + $0xd0] sm:$0xff]
    %v2117 = vld [vmem:[#allocation3 + $0xd8] sm:$0xff]
    %v2118 = vld [vmem:[#allocation3 + $0xe0] sm:$0xff]
    %v2119 = vld [vmem:[#allocation3 + $0xe8] sm:$0xff]
    %v2120 = vld [vmem:[#allocation3 + $0xf0] sm:$0xff]
    %v2121 = vld [vmem:[#allocation3 + $0xf8] sm:$0xff]
    %v2122 = vld [vmem:[#allocation3 + $0x100] sm:$0xff]
    %v2123 = vld [vmem:[#allocation3 + $0x108] sm:$0xff]
    %v2124 = vld [vmem:[#allocation3 + $0x110] sm:$0xff]
    %v2125 = vld [vmem:[#allocation3 + $0x118] sm:$0xff]
    %v2126 = vld [vmem:[#allocation3 + $0x120] sm:$0xff]
    %v2127 = vld [vmem:[#allocation3 + $0x128] sm:$0xff]
    %v2128 = vld [vmem:[#allocation3 + $0x130] sm:$0xff]
    %v2129 = vld [vmem:[#allocation3 + $0x138] sm:$0xff]
    %v2130 = vld [vmem:[#allocation3 + $0x140] sm:$0xff]
    %v2131 = vld [vmem:[#allocation3 + $0x148] sm:$0xff]
    %v2132 = vld [vmem:[#allocation3 + $0x150] sm:$0xff]
    %v2133 = vld [vmem:[#allocation3 + $0x158] sm:$0xff]
    %v2134 = vld [vmem:[#allocation3 + $0x160] sm:$0xff]
    %v2135 = vld [vmem:[#allocation3 + $0x168] sm:$0xff]
    %v2136 = vld [vmem:[#allocation3 + $0x170] sm:$0xff]
    %v2137 = vld [vmem:[#allocation3 + $0x178] sm:$0xff]
    %v2138 = vld [vmem:[#allocation3 + $0x180] sm:$0xff]
    %v2139 = vld [vmem:[#allocation3 + $0x188] sm:$0xff]
    %v2140 = vld [vmem:[#allocation3 + $0x190] sm:$0xff]
    %v2141 = vld [vmem:[#allocation3 + $0x198] sm:$0xff]
    %v2142 = vld [vmem:[#allocation3 + $0x1a0] sm:$0xff]
    %v2143 = vld [vmem:[#allocation3 + $0x1a8] sm:$0xff]
    %v2144 = vld [vmem:[#allocation3 + $0x1b0] sm:$0xff]
    %v2145 = vld [vmem:[#allocation3 + $0x1b8] sm:$0xff]
    %v2146 = vld [vmem:[#allocation3 + $0x1c0] sm:$0xff]
    %v2147 = vld [vmem:[#allocation3 + $0x1c8] sm:$0xff]
    %v2148 = vld [vmem:[#allocation3 + $0x1d0] sm:$0xff]
    %v2149 = vld [vmem:[#allocation3 + $0x1d8] sm:$0xff]
    %v2150 = vld [vmem:[#allocation3 + $0x1e0] sm:$0xff]
    %v2151 = vld [vmem:[#allocation3 + $0x1e8] sm:$0xff]
    %v2152 = vld [vmem:[#allocation3 + $0x1f0] sm:$0xff]
    %v2153 = vld [vmem:[#allocation3 + $0x1f8] sm:$0xff]
    %v2154 = vpack.c.bf16 %v2084, %v2084
    %v2155 = vpack.c.bf16 %v2085, %v2085
    %v2220 = vunpack.c.l.b16 %v2090
    %v2221 = vunpack.c.h.b16 %v2090
    %v2222 = vunpack.c.l.b16 %v2091
    %v2223 = vunpack.c.h.b16 %v2091
    %v2224 = vunpack.c.l.b16 %v2092
    %v2225 = vunpack.c.h.b16 %v2092
    %v2226 = vunpack.c.l.b16 %v2093
    %v2227 = vunpack.c.h.b16 %v2093
    %v2228 = vunpack.c.l.b16 %v2094
    %v2229 = vunpack.c.h.b16 %v2094
    %v2230 = vunpack.c.l.b16 %v2095
    %v2231 = vunpack.c.h.b16 %v2095
    %v2232 = vunpack.c.l.b16 %v2096
    %v2233 = vunpack.c.h.b16 %v2096
    %v2234 = vunpack.c.l.b16 %v2097
    %v2235 = vunpack.c.h.b16 %v2097
    %v2236 = vunpack.c.l.b16 %v2098
    %v2237 = vunpack.c.h.b16 %v2098
    %v2238 = vunpack.c.l.b16 %v2099
    %v2239 = vunpack.c.h.b16 %v2099
    %v2240 = vunpack.c.l.b16 %v2100
    %v2241 = vunpack.c.h.b16 %v2100
    %v2242 = vunpack.c.l.b16 %v2101
    %v2243 = vunpack.c.h.b16 %v2101
    %v2244 = vunpack.c.l.b16 %v2102
    %v2245 = vunpack.c.h.b16 %v2102
    %v2246 = vunpack.c.l.b16 %v2103
    %v2247 = vunpack.c.h.b16 %v2103
    %v2248 = vunpack.c.l.b16 %v2104
    %v2249 = vunpack.c.h.b16 %v2104
    %v2250 = vunpack.c.l.b16 %v2105
    %v2251 = vunpack.c.h.b16 %v2105
    %v2252 = vunpack.c.l.b16 %v2106
    %v2253 = vunpack.c.h.b16 %v2106
    %v2254 = vunpack.c.l.b16 %v2107
    %v2255 = vunpack.c.h.b16 %v2107
    %v2256 = vunpack.c.l.b16 %v2108
    %v2257 = vunpack.c.h.b16 %v2108
    %v2258 = vunpack.c.l.b16 %v2109
    %v2259 = vunpack.c.h.b16 %v2109
    %v2260 = vunpack.c.l.b16 %v2110
    %v2261 = vunpack.c.h.b16 %v2110
    %v2262 = vunpack.c.l.b16 %v2111
    %v2263 = vunpack.c.h.b16 %v2111
    %v2264 = vunpack.c.l.b16 %v2112
    %v2265 = vunpack.c.h.b16 %v2112
    %v2266 = vunpack.c.l.b16 %v2113
    %v2267 = vunpack.c.h.b16 %v2113
    %v2268 = vunpack.c.l.b16 %v2114
    %v2269 = vunpack.c.h.b16 %v2114
    %v2270 = vunpack.c.l.b16 %v2115
    %v2271 = vunpack.c.h.b16 %v2115
    %v2272 = vunpack.c.l.b16 %v2116
    %v2273 = vunpack.c.h.b16 %v2116
    %v2274 = vunpack.c.l.b16 %v2117
    %v2275 = vunpack.c.h.b16 %v2117
    %v2276 = vunpack.c.l.b16 %v2118
    %v2277 = vunpack.c.h.b16 %v2118
    %v2278 = vunpack.c.l.b16 %v2119
    %v2279 = vunpack.c.h.b16 %v2119
    %v2280 = vunpack.c.l.b16 %v2120
    %v2281 = vunpack.c.h.b16 %v2120
    %v2282 = vunpack.c.l.b16 %v2121
    %v2283 = vunpack.c.h.b16 %v2121
    %v2284 = vunpack.c.l.b16 %v2122
    %v2285 = vunpack.c.h.b16 %v2122
    %v2286 = vunpack.c.l.b16 %v2123
    %v2287 = vunpack.c.h.b16 %v2123
    %v2288 = vunpack.c.l.b16 %v2124
    %v2289 = vunpack.c.h.b16 %v2124
    %v2290 = vunpack.c.l.b16 %v2125
    %v2291 = vunpack.c.h.b16 %v2125
    %v2292 = vunpack.c.l.b16 %v2126
    %v2293 = vunpack.c.h.b16 %v2126
    %v2294 = vunpack.c.l.b16 %v2127
    %v2295 = vunpack.c.h.b16 %v2127
    %v2296 = vunpack.c.l.b16 %v2128
    %v2297 = vunpack.c.h.b16 %v2128
    %v2298 = vunpack.c.l.b16 %v2129
    %v2299 = vunpack.c.h.b16 %v2129
    %v2300 = vunpack.c.l.b16 %v2130
    %v2301 = vunpack.c.h.b16 %v2130
    %v2302 = vunpack.c.l.b16 %v2131
    %v2303 = vunpack.c.h.b16 %v2131
    %v2304 = vunpack.c.l.b16 %v2132
    %v2305 = vunpack.c.h.b16 %v2132
    %v2306 = vunpack.c.l.b16 %v2133
    %v2307 = vunpack.c.h.b16 %v2133
    %v2308 = vunpack.c.l.b16 %v2134
    %v2309 = vunpack.c.h.b16 %v2134
    %v2310 = vunpack.c.l.b16 %v2135
    %v2311 = vunpack.c.h.b16 %v2135
    %v2312 = vunpack.c.l.b16 %v2136
    %v2313 = vunpack.c.h.b16 %v2136
    %v2314 = vunpack.c.l.b16 %v2137
    %v2315 = vunpack.c.h.b16 %v2137
    %v2316 = vunpack.c.l.b16 %v2138
    %v2317 = vunpack.c.h.b16 %v2138
    %v2318 = vunpack.c.l.b16 %v2139
    %v2319 = vunpack.c.h.b16 %v2139
    %v2320 = vunpack.c.l.b16 %v2140
    %v2321 = vunpack.c.h.b16 %v2140
    %v2322 = vunpack.c.l.b16 %v2141
    %v2323 = vunpack.c.h.b16 %v2141
    %v2324 = vunpack.c.l.b16 %v2142
    %v2325 = vunpack.c.h.b16 %v2142
    %v2326 = vunpack.c.l.b16 %v2143
    %v2327 = vunpack.c.h.b16 %v2143
    %v2328 = vunpack.c.l.b16 %v2144
    %v2329 = vunpack.c.h.b16 %v2144
    %v2330 = vunpack.c.l.b16 %v2145
    %v2331 = vunpack.c.h.b16 %v2145
    %v2332 = vunpack.c.l.b16 %v2146
    %v2333 = vunpack.c.h.b16 %v2146
    %v2334 = vunpack.c.l.b16 %v2147
    %v2335 = vunpack.c.h.b16 %v2147
    %v2336 = vunpack.c.l.b16 %v2148
    %v2337 = vunpack.c.h.b16 %v2148
    %v2338 = vunpack.c.l.b16 %v2149
    %v2339 = vunpack.c.h.b16 %v2149
    %v2340 = vunpack.c.l.b16 %v2150
    %v2341 = vunpack.c.h.b16 %v2150
    %v2342 = vunpack.c.l.b16 %v2151
    %v2343 = vunpack.c.h.b16 %v2151
    %v2344 = vunpack.c.l.b16 %v2152
    %v2345 = vunpack.c.h.b16 %v2152
    %v2346 = vunpack.c.l.b16 %v2153
    %v2347 = vunpack.c.h.b16 %v2153
    %v2348 = vpack.c.b16 %v2224, %v2220
    %v2349 = vpack.c.b16 %v2225, %v2221
    %v2350 = vpack.c.b16 %v2226, %v2222
    %v2351 = vpack.c.b16 %v2227, %v2223
    %v2352 = vpack.c.b16 %v2232, %v2228
    %v2353 = vpack.c.b16 %v2233, %v2229
    %v2354 = vpack.c.b16 %v2234, %v2230
    %v2355 = vpack.c.b16 %v2235, %v2231
    %v2356 = vpack.c.b16 %v2240, %v2236
    %v2357 = vpack.c.b16 %v2241, %v2237
    %v2358 = vpack.c.b16 %v2242, %v2238
    %v2359 = vpack.c.b16 %v2243, %v2239
    %v2360 = vpack.c.b16 %v2248, %v2244
    %v2361 = vpack.c.b16 %v2249, %v2245
    %v2362 = vpack.c.b16 %v2250, %v2246
    %v2363 = vpack.c.b16 %v2251, %v2247
    %v2364 = vpack.c.b16 %v2256, %v2252
    %v2365 = vpack.c.b16 %v2257, %v2253
    %v2366 = vpack.c.b16 %v2258, %v2254
    %v2367 = vpack.c.b16 %v2259, %v2255
    %v2368 = vpack.c.b16 %v2264, %v2260
    %v2369 = vpack.c.b16 %v2265, %v2261
    %v2370 = vpack.c.b16 %v2266, %v2262
    %v2371 = vpack.c.b16 %v2267, %v2263
    %v2372 = vpack.c.b16 %v2272, %v2268
    %v2373 = vpack.c.b16 %v2273, %v2269
    %v2374 = vpack.c.b16 %v2274, %v2270
    %v2375 = vpack.c.b16 %v2275, %v2271
    %v2376 = vpack.c.b16 %v2280, %v2276
    %v2377 = vpack.c.b16 %v2281, %v2277
    %v2378 = vpack.c.b16 %v2282, %v2278
    %v2379 = vpack.c.b16 %v2283, %v2279
    %v2380 = vpack.c.b16 %v2288, %v2284
    %v2381 = vpack.c.b16 %v2289, %v2285
    %v2382 = vpack.c.b16 %v2290, %v2286
    %v2383 = vpack.c.b16 %v2291, %v2287
    %v2384 = vpack.c.b16 %v2296, %v2292
    %v2385 = vpack.c.b16 %v2297, %v2293
    %v2386 = vpack.c.b16 %v2298, %v2294
    %v2387 = vpack.c.b16 %v2299, %v2295
    %v2388 = vpack.c.b16 %v2304, %v2300
    %v2389 = vpack.c.b16 %v2305, %v2301
    %v2390 = vpack.c.b16 %v2306, %v2302
    %v2391 = vpack.c.b16 %v2307, %v2303
    %v2392 = vpack.c.b16 %v2312, %v2308
    %v2393 = vpack.c.b16 %v2313, %v2309
    %v2394 = vpack.c.b16 %v2314, %v2310
    %v2395 = vpack.c.b16 %v2315, %v2311
    %v2396 = vpack.c.b16 %v2320, %v2316
    %v2397 = vpack.c.b16 %v2321, %v2317
    %v2398 = vpack.c.b16 %v2322, %v2318
    %v2399 = vpack.c.b16 %v2323, %v2319
    %v2400 = vpack.c.b16 %v2328, %v2324
    %v2401 = vpack.c.b16 %v2329, %v2325
    %v2402 = vpack.c.b16 %v2330, %v2326
    %v2403 = vpack.c.b16 %v2331, %v2327
    %v2404 = vpack.c.b16 %v2336, %v2332
    %v2405 = vpack.c.b16 %v2337, %v2333
    %v2406 = vpack.c.b16 %v2338, %v2334
    %v2407 = vpack.c.b16 %v2339, %v2335
    %v2408 = vpack.c.b16 %v2344, %v2340
    %v2409 = vpack.c.b16 %v2345, %v2341
    %v2410 = vpack.c.b16 %v2346, %v2342
    %v2411 = vpack.c.b16 %v2347, %v2343
    %2476 = vmatprep.subr.bf16.mxu0 %v2377
    %2477 = vmatpush1.bf16.msra.mxu0 %v2376
    %2478 = vmatprep.subr.bf16.mxu0 %v2373
    %2479 = vmatpush1.bf16.msra.mxu0 %v2372
    %2480 = vmatprep.subr.bf16.mxu0 %v2369
    %2481 = vmatpush1.bf16.msra.mxu0 %v2368
    %2482 = vmatprep.subr.bf16.mxu0 %v2365
    %2483 = vmatpush1.bf16.msra.mxu0 %v2364
    %2484 = vmatprep.subr.bf16.mxu0 %v2361
    %2485 = vmatpush1.bf16.msra.mxu0 %v2360
    %2486 = vmatprep.subr.bf16.mxu0 %v2357
    %2487 = vmatpush1.bf16.msra.mxu0 %v2356
    %2488 = vmatprep.subr.bf16.mxu0 %v2353
    %2489 = vmatpush1.bf16.msra.mxu0 %v2352
    %2490 = vmatprep.subr.bf16.mxu0 %v2349
    %2491 = vmatpush1.bf16.msra.mxu0 %v2348
    %2492 = vmatprep.subr.bf16.mxu0 %v2409
    %2493 = vmatpush2.bf16.msra.mxu0 %v2408
    %2494 = vmatprep.subr.bf16.mxu0 %v2405
    %2495 = vmatpush2.bf16.msra.mxu0 %v2404
    %2496 = vmatprep.subr.bf16.mxu0 %v2401
    %2497 = vmatpush2.bf16.msra.mxu0 %v2400
    %2498 = vmatprep.subr.bf16.mxu0 %v2397
    %2499 = vmatpush2.bf16.msra.mxu0 %v2396
    %2500 = vmatprep.subr.bf16.mxu0 %v2393
    %2501 = vmatpush2.bf16.msra.mxu0 %v2392
    %2502 = vmatprep.subr.bf16.mxu0 %v2389
    %2503 = vmatpush2.bf16.msra.mxu0 %v2388
    %2504 = vmatprep.subr.bf16.mxu0 %v2385
    %2505 = vmatpush2.bf16.msra.mxu0 %v2384
    %2506 = vmatprep.subr.bf16.mxu0 %v2381
    %2507 = vmatpush2.bf16.msra.mxu0 %v2380
    %2508 = vmatprep.mubr.bf16.mxu0 %v2155
    %2509 = vmatmul.mubr.bf16.gmra.mxu0 %v2154
    %v2510 = vpop.f32.mrf.mxu0
    %v2511 = vadd.f32 0.0, %v2510
    %v2512 = vpop.f32.mrf.mxu0
    %v2513 = vadd.f32 0.0, %v2512
    %v2514 = vpop.f32.mrf.mxu0
    %v2515 = vpop.f32.mrf.mxu0
    %2516 = vdwg.mxu0
    %2517 = vmatprep.subr.bf16.mxu0 %v2379
    %2518 = vmatpush1.bf16.msra.mxu0 %v2378
    %2519 = vmatprep.subr.bf16.mxu0 %v2375
    %2520 = vmatpush1.bf16.msra.mxu0 %v2374
    %2521 = vmatprep.subr.bf16.mxu0 %v2371
    %2522 = vmatpush1.bf16.msra.mxu0 %v2370
    %2523 = vmatprep.subr.bf16.mxu0 %v2367
    %2524 = vmatpush1.bf16.msra.mxu0 %v2366
    %2525 = vmatprep.subr.bf16.mxu0 %v2363
    %2526 = vmatpush1.bf16.msra.mxu0 %v2362
    %2527 = vmatprep.subr.bf16.mxu0 %v2359
    %2528 = vmatpush1.bf16.msra.mxu0 %v2358
    %2529 = vmatprep.subr.bf16.mxu0 %v2355
    %2530 = vmatpush1.bf16.msra.mxu0 %v2354
    %2531 = vmatprep.subr.bf16.mxu0 %v2351
    %2532 = vmatpush1.bf16.msra.mxu0 %v2350
    %2533 = vmatprep.subr.bf16.mxu0 %v2411
    %2534 = vmatpush2.bf16.msra.mxu0 %v2410
    %2535 = vmatprep.subr.bf16.mxu0 %v2407
    %2536 = vmatpush2.bf16.msra.mxu0 %v2406
    %2537 = vmatprep.subr.bf16.mxu0 %v2403
    %2538 = vmatpush2.bf16.msra.mxu0 %v2402
    %2539 = vmatprep.subr.bf16.mxu0 %v2399
    %2540 = vmatpush2.bf16.msra.mxu0 %v2398
    %2541 = vmatprep.subr.bf16.mxu0 %v2395
    %2542 = vmatpush2.bf16.msra.mxu0 %v2394
    %2543 = vmatprep.subr.bf16.mxu0 %v2391
    %2544 = vmatpush2.bf16.msra.mxu0 %v2390
    %2545 = vmatprep.subr.bf16.mxu0 %v2387
    %2546 = vmatpush2.bf16.msra.mxu0 %v2386
    %2547 = vmatprep.subr.bf16.mxu0 %v2383
    %2548 = vmatpush2.bf16.msra.mxu0 %v2382
    %2549 = vmatprep.mubr.bf16.mxu0 %v2155
    %2550 = vmatmul.mubr.bf16.gmra.mxu0 %v2154
    %v2551 = vpop.f32.mrf.mxu0
    %v2552 = vadd.f32 0.0, %v2551
    %v2553 = vpop.f32.mrf.mxu0
    %v2554 = vadd.f32 0.0, %v2553
    %v2555 = vpop.f32.mrf.mxu0
    %v2556 = vpop.f32.mrf.mxu0
    %2557 = vdwg.mxu0
    %v2558 = vld [vmem:[%s2 + $0x5] sm:$0xf]
    %v2559 = vld [vmem:[%s2 + $0x9] sm:$0xf]
    %v2560 = vrot.slane %v2511, 4
    %v2561 = vadd.f32 %v2511, %v2560
    %v2562 = vrot.slane %v2561, 2
    %v2563 = vadd.f32 %v2561, %v2562
    %v2564 = vrot.slane %v2563, 1
    %v2565 = vadd.f32 %v2563, %v2564
    %v2566 = vrot.slane %v2513, 4
    %v2567 = vadd.f32 %v2513, %v2566
    %v2568 = vrot.slane %v2567, 2
    %v2569 = vadd.f32 %v2567, %v2568
    %v2570 = vrot.slane %v2569, 1
    %v2571 = vadd.f32 %v2569, %v2570
    %v2572 = vrot.slane %v2552, 4
    %v2573 = vadd.f32 %v2552, %v2572
    %v2574 = vrot.slane %v2573, 2
    %v2575 = vadd.f32 %v2573, %v2574
    %v2576 = vrot.slane %v2575, 1
    %v2577 = vadd.f32 %v2575, %v2576
    %v2578 = vrot.slane %v2554, 4
    %v2579 = vadd.f32 %v2554, %v2578
    %v2580 = vrot.slane %v2579, 2
    %v2581 = vadd.f32 %v2579, %v2580
    %v2582 = vrot.slane %v2581, 1
    %v2583 = vadd.f32 %v2581, %v2582
    %v2584 = vmul.f32 %v2565, %v2027
    %v2585 = vmul.f32 %v2571, %v2027
    %v2586 = vmul.f32 %v2577, %v2027
    %v2587 = vmul.f32 %v2583, %v2027
    %v2588 = vsub.f32 %v2511, %v2584
    %v2589 = vsub.f32 %v2513, %v2585
    %v2590 = vsub.f32 %v2552, %v2586
    %v2591 = vsub.f32 %v2554, %v2587
    %v2592 = vmul.f32 %v2588, %v2588
    %v2593 = vmul.f32 %v2589, %v2589
    %v2594 = vmul.f32 %v2590, %v2590
    %v2595 = vmul.f32 %v2591, %v2591
    %v2596 = vrot.slane %v2592, 4
    %v2597 = vadd.f32 %v2592, %v2596
    %v2598 = vrot.slane %v2597, 2
    %v2599 = vadd.f32 %v2597, %v2598
    %v2600 = vrot.slane %v2599, 1
    %v2601 = vadd.f32 %v2599, %v2600
    %v2602 = vrot.slane %v2593, 4
    %v2603 = vadd.f32 %v2593, %v2602
    %v2604 = vrot.slane %v2603, 2
    %v2605 = vadd.f32 %v2603, %v2604
    %v2606 = vrot.slane %v2605, 1
    %v2607 = vadd.f32 %v2605, %v2606
    %v2608 = vrot.slane %v2594, 4
    %v2609 = vadd.f32 %v2594, %v2608
    %v2610 = vrot.slane %v2609, 2
    %v2611 = vadd.f32 %v2609, %v2610
    %v2612 = vrot.slane %v2611, 1
    %v2613 = vadd.f32 %v2611, %v2612
    %v2614 = vrot.slane %v2595, 4
    %v2615 = vadd.f32 %v2595, %v2614
    %v2616 = vrot.slane %v2615, 2
    %v2617 = vadd.f32 %v2615, %v2616
    %v2618 = vrot.slane %v2617, 1
    %v2619 = vadd.f32 %v2617, %v2618
    %v2620 = vmul.f32 %v2601, %v2027
    %v2621 = vmul.f32 %v2607, %v2027
    %v2622 = vmul.f32 %v2613, %v2027
    %v2623 = vmul.f32 %v2619, %v2027
    %v2624 = vadd.f32 %v2620, 0.8
    %v2625 = vadd.f32 %v2621, 0.8
    %v2626 = vadd.f32 %v2622, 0.8
    %v2627 = vadd.f32 %v2623, 0.8
    %v2628 = vrsqrt.pop %v2624
    %v2629 = vrsqrt.pop %v2625
    %v2630 = vrsqrt.pop %v2626
    %v2631 = vrsqrt.pop %v2627
    %v2632 = vmul.f32 %v2588, %v2628
    %v2633 = vmul.f32 %v2589, %v2629
    %v2634 = vmul.f32 %v2590, %v2630
    %v2635 = vmul.f32 %v2591, %v2631
    %v2637 = vlaneseq
    %v2638 = vshrl.u32 %v2637, 7
    %v2639 = vsub.s32 0, %v2638
    %v2640 = vrot.slane %v2558, %v2639
    %v2641 = vlaneseq
    %v2642 = vshrl.u32 %v2641, 7
    %v2643 = vsub.s32 1, %v2642
    %v2644 = vrot.slane %v2558, %v2643
    %v2645 = vlaneseq
    %v2646 = vshrl.u32 %v2645, 7
    %v2647 = vsub.s32 2, %v2646
    %v2648 = vrot.slane %v2558, %v2647
    %v2649 = vlaneseq
    %v2650 = vshrl.u32 %v2649, 7
    %v2651 = vsub.s32 3, %v2650
    %v2652 = vrot.slane %v2558, %v2651
    %v2657 = vmul.f32 %v2632, %v2640
    %v2658 = vmul.f32 %v2633, %v2644
    %v2659 = vmul.f32 %v2634, %v2648
    %v2660 = vmul.f32 %v2635, %v2652
    %v2662 = vlaneseq
    %v2663 = vshrl.u32 %v2662, 7
    %v2664 = vsub.s32 0, %v2663
    %v2665 = vrot.slane %v2559, %v2664
    %v2666 = vlaneseq
    %v2667 = vshrl.u32 %v2666, 7
    %v2668 = vsub.s32 1, %v2667
    %v2669 = vrot.slane %v2559, %v2668
    %v2670 = vlaneseq
    %v2671 = vshrl.u32 %v2670, 7
    %v2672 = vsub.s32 2, %v2671
    %v2673 = vrot.slane %v2559, %v2672
    %v2674 = vlaneseq
    %v2675 = vshrl.u32 %v2674, 7
    %v2676 = vsub.s32 3, %v2675
    %v2677 = vrot.slane %v2559, %v2676
    %v2682 = vadd.f32 %v2657, %v2665
    %v2683 = vadd.f32 %v2658, %v2669
    %v2684 = vadd.f32 %v2659, %v2673
    %v2685 = vadd.f32 %v2660, %v2677
    %vm2686 = vcmp.gt.f32.partialorder %v2682, 0.0
    %vm2687 = vcmp.gt.f32.partialorder %v2683, 0.0
    %vm2688 = vcmp.gt.f32.partialorder %v2684, 0.0
    %vm2689 = vcmp.gt.f32.partialorder %v2685, 0.0
    %v2690 = vmul.f32 %v2682, 0.2
    %v2691 = vmul.f32 %v2683, 0.2
    %v2692 = vmul.f32 %v2684, 0.2
    %v2693 = vmul.f32 %v2685, 0.2
    %v2694 = vsel %vm2686, %v2682, %v2690
    %v2695 = vsel %vm2687, %v2683, %v2691
    %v2696 = vsel %vm2688, %v2684, %v2692
    %v2697 = vsel %vm2689, %v2685, %v2693
    %s2698 = smul.u32 4, 64
    %s2699 = smul.u32 %s2698, 8
    %s2700 = sshll.u32 %s2699, 4
    %2701 = dma.done %s263, %s2700
    %v2702 = vld [vmem:[#allocation4] sm:$0xff]
    %v2703 = vld [vmem:[#allocation4 + $0x8] sm:$0xff]
    %v2704 = vld [vmem:[#allocation4 + $0x10] sm:$0xff]
    %v2705 = vld [vmem:[#allocation4 + $0x18] sm:$0xff]
    %v2706 = vld [vmem:[#allocation4 + $0x20] sm:$0xff]
    %v2707 = vld [vmem:[#allocation4 + $0x28] sm:$0xff]
    %v2708 = vld [vmem:[#allocation4 + $0x30] sm:$0xff]
    %v2709 = vld [vmem:[#allocation4 + $0x38] sm:$0xff]
    %v2710 = vld [vmem:[#allocation4 + $0x40] sm:$0xff]
    %v2711 = vld [vmem:[#allocation4 + $0x48] sm:$0xff]
    %v2712 = vld [vmem:[#allocation4 + $0x50] sm:$0xff]
    %v2713 = vld [vmem:[#allocation4 + $0x58] sm:$0xff]
    %v2714 = vld [vmem:[#allocation4 + $0x60] sm:$0xff]
    %v2715 = vld [vmem:[#allocation4 + $0x68] sm:$0xff]
    %v2716 = vld [vmem:[#allocation4 + $0x70] sm:$0xff]
    %v2717 = vld [vmem:[#allocation4 + $0x78] sm:$0xff]
    %v2718 = vld [vmem:[#allocation4 + $0x80] sm:$0xff]
    %v2719 = vld [vmem:[#allocation4 + $0x88] sm:$0xff]
    %v2720 = vld [vmem:[#allocation4 + $0x90] sm:$0xff]
    %v2721 = vld [vmem:[#allocation4 + $0x98] sm:$0xff]
    %v2722 = vld [vmem:[#allocation4 + $0xa0] sm:$0xff]
    %v2723 = vld [vmem:[#allocation4 + $0xa8] sm:$0xff]
    %v2724 = vld [vmem:[#allocation4 + $0xb0] sm:$0xff]
    %v2725 = vld [vmem:[#allocation4 + $0xb8] sm:$0xff]
    %v2726 = vld [vmem:[#allocation4 + $0xc0] sm:$0xff]
    %v2727 = vld [vmem:[#allocation4 + $0xc8] sm:$0xff]
    %v2728 = vld [vmem:[#allocation4 + $0xd0] sm:$0xff]
    %v2729 = vld [vmem:[#allocation4 + $0xd8] sm:$0xff]
    %v2730 = vld [vmem:[#allocation4 + $0xe0] sm:$0xff]
    %v2731 = vld [vmem:[#allocation4 + $0xe8] sm:$0xff]
    %v2732 = vld [vmem:[#allocation4 + $0xf0] sm:$0xff]
    %v2733 = vld [vmem:[#allocation4 + $0xf8] sm:$0xff]
    %v2734 = vld [vmem:[#allocation4 + $0x100] sm:$0xff]
    %v2735 = vld [vmem:[#allocation4 + $0x108] sm:$0xff]
    %v2736 = vld [vmem:[#allocation4 + $0x110] sm:$0xff]
    %v2737 = vld [vmem:[#allocation4 + $0x118] sm:$0xff]
    %v2738 = vld [vmem:[#allocation4 + $0x120] sm:$0xff]
    %v2739 = vld [vmem:[#allocation4 + $0x128] sm:$0xff]
    %v2740 = vld [vmem:[#allocation4 + $0x130] sm:$0xff]
    %v2741 = vld [vmem:[#allocation4 + $0x138] sm:$0xff]
    %v2742 = vld [vmem:[#allocation4 + $0x140] sm:$0xff]
    %v2743 = vld [vmem:[#allocation4 + $0x148] sm:$0xff]
    %v2744 = vld [vmem:[#allocation4 + $0x150] sm:$0xff]
    %v2745 = vld [vmem:[#allocation4 + $0x158] sm:$0xff]
    %v2746 = vld [vmem:[#allocation4 + $0x160] sm:$0xff]
    %v2747 = vld [vmem:[#allocation4 + $0x168] sm:$0xff]
    %v2748 = vld [vmem:[#allocation4 + $0x170] sm:$0xff]
    %v2749 = vld [vmem:[#allocation4 + $0x178] sm:$0xff]
    %v2750 = vld [vmem:[#allocation4 + $0x180] sm:$0xff]
    %v2751 = vld [vmem:[#allocation4 + $0x188] sm:$0xff]
    %v2752 = vld [vmem:[#allocation4 + $0x190] sm:$0xff]
    %v2753 = vld [vmem:[#allocation4 + $0x198] sm:$0xff]
    %v2754 = vld [vmem:[#allocation4 + $0x1a0] sm:$0xff]
    %v2755 = vld [vmem:[#allocation4 + $0x1a8] sm:$0xff]
    %v2756 = vld [vmem:[#allocation4 + $0x1b0] sm:$0xff]
    %v2757 = vld [vmem:[#allocation4 + $0x1b8] sm:$0xff]
    %v2758 = vld [vmem:[#allocation4 + $0x1c0] sm:$0xff]
    %v2759 = vld [vmem:[#allocation4 + $0x1c8] sm:$0xff]
    %v2760 = vld [vmem:[#allocation4 + $0x1d0] sm:$0xff]
    %v2761 = vld [vmem:[#allocation4 + $0x1d8] sm:$0xff]
    %v2762 = vld [vmem:[#allocation4 + $0x1e0] sm:$0xff]
    %v2763 = vld [vmem:[#allocation4 + $0x1e8] sm:$0xff]
    %v2764 = vld [vmem:[#allocation4 + $0x1f0] sm:$0xff]
    %v2765 = vld [vmem:[#allocation4 + $0x1f8] sm:$0xff]
    %v2766 = vld [vmem:[#allocation4 + $0x200] sm:$0xff]
    %v2767 = vld [vmem:[#allocation4 + $0x208] sm:$0xff]
    %v2768 = vld [vmem:[#allocation4 + $0x210] sm:$0xff]
    %v2769 = vld [vmem:[#allocation4 + $0x218] sm:$0xff]
    %v2770 = vld [vmem:[#allocation4 + $0x220] sm:$0xff]
    %v2771 = vld [vmem:[#allocation4 + $0x228] sm:$0xff]
    %v2772 = vld [vmem:[#allocation4 + $0x230] sm:$0xff]
    %v2773 = vld [vmem:[#allocation4 + $0x238] sm:$0xff]
    %v2774 = vld [vmem:[#allocation4 + $0x240] sm:$0xff]
    %v2775 = vld [vmem:[#allocation4 + $0x248] sm:$0xff]
    %v2776 = vld [vmem:[#allocation4 + $0x250] sm:$0xff]
    %v2777 = vld [vmem:[#allocation4 + $0x258] sm:$0xff]
    %v2778 = vld [vmem:[#allocation4 + $0x260] sm:$0xff]
    %v2779 = vld [vmem:[#allocation4 + $0x268] sm:$0xff]
    %v2780 = vld [vmem:[#allocation4 + $0x270] sm:$0xff]
    %v2781 = vld [vmem:[#allocation4 + $0x278] sm:$0xff]
    %v2782 = vld [vmem:[#allocation4 + $0x280] sm:$0xff]
    %v2783 = vld [vmem:[#allocation4 + $0x288] sm:$0xff]
    %v2784 = vld [vmem:[#allocation4 + $0x290] sm:$0xff]
    %v2785 = vld [vmem:[#allocation4 + $0x298] sm:$0xff]
    %v2786 = vld [vmem:[#allocation4 + $0x2a0] sm:$0xff]
    %v2787 = vld [vmem:[#allocation4 + $0x2a8] sm:$0xff]
    %v2788 = vld [vmem:[#allocation4 + $0x2b0] sm:$0xff]
    %v2789 = vld [vmem:[#allocation4 + $0x2b8] sm:$0xff]
    %v2790 = vld [vmem:[#allocation4 + $0x2c0] sm:$0xff]
    %v2791 = vld [vmem:[#allocation4 + $0x2c8] sm:$0xff]
    %v2792 = vld [vmem:[#allocation4 + $0x2d0] sm:$0xff]
    %v2793 = vld [vmem:[#allocation4 + $0x2d8] sm:$0xff]
    %v2794 = vld [vmem:[#allocation4 + $0x2e0] sm:$0xff]
    %v2795 = vld [vmem:[#allocation4 + $0x2e8] sm:$0xff]
    %v2796 = vld [vmem:[#allocation4 + $0x2f0] sm:$0xff]
    %v2797 = vld [vmem:[#allocation4 + $0x2f8] sm:$0xff]
    %v2798 = vld [vmem:[#allocation4 + $0x300] sm:$0xff]
    %v2799 = vld [vmem:[#allocation4 + $0x308] sm:$0xff]
    %v2800 = vld [vmem:[#allocation4 + $0x310] sm:$0xff]
    %v2801 = vld [vmem:[#allocation4 + $0x318] sm:$0xff]
    %v2802 = vld [vmem:[#allocation4 + $0x320] sm:$0xff]
    %v2803 = vld [vmem:[#allocation4 + $0x328] sm:$0xff]
    %v2804 = vld [vmem:[#allocation4 + $0x330] sm:$0xff]
    %v2805 = vld [vmem:[#allocation4 + $0x338] sm:$0xff]
    %v2806 = vld [vmem:[#allocation4 + $0x340] sm:$0xff]
    %v2807 = vld [vmem:[#allocation4 + $0x348] sm:$0xff]
    %v2808 = vld [vmem:[#allocation4 + $0x350] sm:$0xff]
    %v2809 = vld [vmem:[#allocation4 + $0x358] sm:$0xff]
    %v2810 = vld [vmem:[#allocation4 + $0x360] sm:$0xff]
    %v2811 = vld [vmem:[#allocation4 + $0x368] sm:$0xff]
    %v2812 = vld [vmem:[#allocation4 + $0x370] sm:$0xff]
    %v2813 = vld [vmem:[#allocation4 + $0x378] sm:$0xff]
    %v2814 = vld [vmem:[#allocation4 + $0x380] sm:$0xff]
    %v2815 = vld [vmem:[#allocation4 + $0x388] sm:$0xff]
    %v2816 = vld [vmem:[#allocation4 + $0x390] sm:$0xff]
    %v2817 = vld [vmem:[#allocation4 + $0x398] sm:$0xff]
    %v2818 = vld [vmem:[#allocation4 + $0x3a0] sm:$0xff]
    %v2819 = vld [vmem:[#allocation4 + $0x3a8] sm:$0xff]
    %v2820 = vld [vmem:[#allocation4 + $0x3b0] sm:$0xff]
    %v2821 = vld [vmem:[#allocation4 + $0x3b8] sm:$0xff]
    %v2822 = vld [vmem:[#allocation4 + $0x3c0] sm:$0xff]
    %v2823 = vld [vmem:[#allocation4 + $0x3c8] sm:$0xff]
    %v2824 = vld [vmem:[#allocation4 + $0x3d0] sm:$0xff]
    %v2825 = vld [vmem:[#allocation4 + $0x3d8] sm:$0xff]
    %v2826 = vld [vmem:[#allocation4 + $0x3e0] sm:$0xff]
    %v2827 = vld [vmem:[#allocation4 + $0x3e8] sm:$0xff]
    %v2828 = vld [vmem:[#allocation4 + $0x3f0] sm:$0xff]
    %v2829 = vld [vmem:[#allocation4 + $0x3f8] sm:$0xff]
    %v2830 = vld [vmem:[#allocation4 + $0x400] sm:$0xff]
    %v2831 = vld [vmem:[#allocation4 + $0x408] sm:$0xff]
    %v2832 = vld [vmem:[#allocation4 + $0x410] sm:$0xff]
    %v2833 = vld [vmem:[#allocation4 + $0x418] sm:$0xff]
    %v2834 = vld [vmem:[#allocation4 + $0x420] sm:$0xff]
    %v2835 = vld [vmem:[#allocation4 + $0x428] sm:$0xff]
    %v2836 = vld [vmem:[#allocation4 + $0x430] sm:$0xff]
    %v2837 = vld [vmem:[#allocation4 + $0x438] sm:$0xff]
    %v2838 = vld [vmem:[#allocation4 + $0x440] sm:$0xff]
    %v2839 = vld [vmem:[#allocation4 + $0x448] sm:$0xff]
    %v2840 = vld [vmem:[#allocation4 + $0x450] sm:$0xff]
    %v2841 = vld [vmem:[#allocation4 + $0x458] sm:$0xff]
    %v2842 = vld [vmem:[#allocation4 + $0x460] sm:$0xff]
    %v2843 = vld [vmem:[#allocation4 + $0x468] sm:$0xff]
    %v2844 = vld [vmem:[#allocation4 + $0x470] sm:$0xff]
    %v2845 = vld [vmem:[#allocation4 + $0x478] sm:$0xff]
    %v2846 = vld [vmem:[#allocation4 + $0x480] sm:$0xff]
    %v2847 = vld [vmem:[#allocation4 + $0x488] sm:$0xff]
    %v2848 = vld [vmem:[#allocation4 + $0x490] sm:$0xff]
    %v2849 = vld [vmem:[#allocation4 + $0x498] sm:$0xff]
    %v2850 = vld [vmem:[#allocation4 + $0x4a0] sm:$0xff]
    %v2851 = vld [vmem:[#allocation4 + $0x4a8] sm:$0xff]
    %v2852 = vld [vmem:[#allocation4 + $0x4b0] sm:$0xff]
    %v2853 = vld [vmem:[#allocation4 + $0x4b8] sm:$0xff]
    %v2854 = vld [vmem:[#allocation4 + $0x4c0] sm:$0xff]
    %v2855 = vld [vmem:[#allocation4 + $0x4c8] sm:$0xff]
    %v2856 = vld [vmem:[#allocation4 + $0x4d0] sm:$0xff]
    %v2857 = vld [vmem:[#allocation4 + $0x4d8] sm:$0xff]
    %v2858 = vld [vmem:[#allocation4 + $0x4e0] sm:$0xff]
    %v2859 = vld [vmem:[#allocation4 + $0x4e8] sm:$0xff]
    %v2860 = vld [vmem:[#allocation4 + $0x4f0] sm:$0xff]
    %v2861 = vld [vmem:[#allocation4 + $0x4f8] sm:$0xff]
    %v2862 = vld [vmem:[#allocation4 + $0x500] sm:$0xff]
    %v2863 = vld [vmem:[#allocation4 + $0x508] sm:$0xff]
    %v2864 = vld [vmem:[#allocation4 + $0x510] sm:$0xff]
    %v2865 = vld [vmem:[#allocation4 + $0x518] sm:$0xff]
    %v2866 = vld [vmem:[#allocation4 + $0x520] sm:$0xff]
    %v2867 = vld [vmem:[#allocation4 + $0x528] sm:$0xff]
    %v2868 = vld [vmem:[#allocation4 + $0x530] sm:$0xff]
    %v2869 = vld [vmem:[#allocation4 + $0x538] sm:$0xff]
    %v2870 = vld [vmem:[#allocation4 + $0x540] sm:$0xff]
    %v2871 = vld [vmem:[#allocation4 + $0x548] sm:$0xff]
    %v2872 = vld [vmem:[#allocation4 + $0x550] sm:$0xff]
    %v2873 = vld [vmem:[#allocation4 + $0x558] sm:$0xff]
    %v2874 = vld [vmem:[#allocation4 + $0x560] sm:$0xff]
    %v2875 = vld [vmem:[#allocation4 + $0x568] sm:$0xff]
    %v2876 = vld [vmem:[#allocation4 + $0x570] sm:$0xff]
    %v2877 = vld [vmem:[#allocation4 + $0x578] sm:$0xff]
    %v2878 = vld [vmem:[#allocation4 + $0x580] sm:$0xff]
    %v2879 = vld [vmem:[#allocation4 + $0x588] sm:$0xff]
    %v2880 = vld [vmem:[#allocation4 + $0x590] sm:$0xff]
    %v2881 = vld [vmem:[#allocation4 + $0x598] sm:$0xff]
    %v2882 = vld [vmem:[#allocation4 + $0x5a0] sm:$0xff]
    %v2883 = vld [vmem:[#allocation4 + $0x5a8] sm:$0xff]
    %v2884 = vld [vmem:[#allocation4 + $0x5b0] sm:$0xff]
    %v2885 = vld [vmem:[#allocation4 + $0x5b8] sm:$0xff]
    %v2886 = vld [vmem:[#allocation4 + $0x5c0] sm:$0xff]
    %v2887 = vld [vmem:[#allocation4 + $0x5c8] sm:$0xff]
    %v2888 = vld [vmem:[#allocation4 + $0x5d0] sm:$0xff]
    %v2889 = vld [vmem:[#allocation4 + $0x5d8] sm:$0xff]
    %v2890 = vld [vmem:[#allocation4 + $0x5e0] sm:$0xff]
    %v2891 = vld [vmem:[#allocation4 + $0x5e8] sm:$0xff]
    %v2892 = vld [vmem:[#allocation4 + $0x5f0] sm:$0xff]
    %v2893 = vld [vmem:[#allocation4 + $0x5f8] sm:$0xff]
    %v2894 = vld [vmem:[#allocation4 + $0x600] sm:$0xff]
    %v2895 = vld [vmem:[#allocation4 + $0x608] sm:$0xff]
    %v2896 = vld [vmem:[#allocation4 + $0x610] sm:$0xff]
    %v2897 = vld [vmem:[#allocation4 + $0x618] sm:$0xff]
    %v2898 = vld [vmem:[#allocation4 + $0x620] sm:$0xff]
    %v2899 = vld [vmem:[#allocation4 + $0x628] sm:$0xff]
    %v2900 = vld [vmem:[#allocation4 + $0x630] sm:$0xff]
    %v2901 = vld [vmem:[#allocation4 + $0x638] sm:$0xff]
    %v2902 = vld [vmem:[#allocation4 + $0x640] sm:$0xff]
    %v2903 = vld [vmem:[#allocation4 + $0x648] sm:$0xff]
    %v2904 = vld [vmem:[#allocation4 + $0x650] sm:$0xff]
    %v2905 = vld [vmem:[#allocation4 + $0x658] sm:$0xff]
    %v2906 = vld [vmem:[#allocation4 + $0x660] sm:$0xff]
    %v2907 = vld [vmem:[#allocation4 + $0x668] sm:$0xff]
    %v2908 = vld [vmem:[#allocation4 + $0x670] sm:$0xff]
    %v2909 = vld [vmem:[#allocation4 + $0x678] sm:$0xff]
    %v2910 = vld [vmem:[#allocation4 + $0x680] sm:$0xff]
    %v2911 = vld [vmem:[#allocation4 + $0x688] sm:$0xff]
    %v2912 = vld [vmem:[#allocation4 + $0x690] sm:$0xff]
    %v2913 = vld [vmem:[#allocation4 + $0x698] sm:$0xff]
    %v2914 = vld [vmem:[#allocation4 + $0x6a0] sm:$0xff]
    %v2915 = vld [vmem:[#allocation4 + $0x6a8] sm:$0xff]
    %v2916 = vld [vmem:[#allocation4 + $0x6b0] sm:$0xff]
    %v2917 = vld [vmem:[#allocation4 + $0x6b8] sm:$0xff]
    %v2918 = vld [vmem:[#allocation4 + $0x6c0] sm:$0xff]
    %v2919 = vld [vmem:[#allocation4 + $0x6c8] sm:$0xff]
    %v2920 = vld [vmem:[#allocation4 + $0x6d0] sm:$0xff]
    %v2921 = vld [vmem:[#allocation4 + $0x6d8] sm:$0xff]
    %v2922 = vld [vmem:[#allocation4 + $0x6e0] sm:$0xff]
    %v2923 = vld [vmem:[#allocation4 + $0x6e8] sm:$0xff]
    %v2924 = vld [vmem:[#allocation4 + $0x6f0] sm:$0xff]
    %v2925 = vld [vmem:[#allocation4 + $0x6f8] sm:$0xff]
    %v2926 = vld [vmem:[#allocation4 + $0x700] sm:$0xff]
    %v2927 = vld [vmem:[#allocation4 + $0x708] sm:$0xff]
    %v2928 = vld [vmem:[#allocation4 + $0x710] sm:$0xff]
    %v2929 = vld [vmem:[#allocation4 + $0x718] sm:$0xff]
    %v2930 = vld [vmem:[#allocation4 + $0x720] sm:$0xff]
    %v2931 = vld [vmem:[#allocation4 + $0x728] sm:$0xff]
    %v2932 = vld [vmem:[#allocation4 + $0x730] sm:$0xff]
    %v2933 = vld [vmem:[#allocation4 + $0x738] sm:$0xff]
    %v2934 = vld [vmem:[#allocation4 + $0x740] sm:$0xff]
    %v2935 = vld [vmem:[#allocation4 + $0x748] sm:$0xff]
    %v2936 = vld [vmem:[#allocation4 + $0x750] sm:$0xff]
    %v2937 = vld [vmem:[#allocation4 + $0x758] sm:$0xff]
    %v2938 = vld [vmem:[#allocation4 + $0x760] sm:$0xff]
    %v2939 = vld [vmem:[#allocation4 + $0x768] sm:$0xff]
    %v2940 = vld [vmem:[#allocation4 + $0x770] sm:$0xff]
    %v2941 = vld [vmem:[#allocation4 + $0x778] sm:$0xff]
    %v2942 = vld [vmem:[#allocation4 + $0x780] sm:$0xff]
    %v2943 = vld [vmem:[#allocation4 + $0x788] sm:$0xff]
    %v2944 = vld [vmem:[#allocation4 + $0x790] sm:$0xff]
    %v2945 = vld [vmem:[#allocation4 + $0x798] sm:$0xff]
    %v2946 = vld [vmem:[#allocation4 + $0x7a0] sm:$0xff]
    %v2947 = vld [vmem:[#allocation4 + $0x7a8] sm:$0xff]
    %v2948 = vld [vmem:[#allocation4 + $0x7b0] sm:$0xff]
    %v2949 = vld [vmem:[#allocation4 + $0x7b8] sm:$0xff]
    %v2950 = vld [vmem:[#allocation4 + $0x7c0] sm:$0xff]
    %v2951 = vld [vmem:[#allocation4 + $0x7c8] sm:$0xff]
    %v2952 = vld [vmem:[#allocation4 + $0x7d0] sm:$0xff]
    %v2953 = vld [vmem:[#allocation4 + $0x7d8] sm:$0xff]
    %v2954 = vld [vmem:[#allocation4 + $0x7e0] sm:$0xff]
    %v2955 = vld [vmem:[#allocation4 + $0x7e8] sm:$0xff]
    %v2956 = vld [vmem:[#allocation4 + $0x7f0] sm:$0xff]
    %v2957 = vld [vmem:[#allocation4 + $0x7f8] sm:$0xff]
    %v2958 = vpack.c.bf16 %v2694, %v2694
    %v2959 = vpack.c.bf16 %v2695, %v2695
    %v2960 = vpack.c.bf16 %v2696, %v2696
    %v2961 = vpack.c.bf16 %v2697, %v2697
    %v3218 = vunpack.c.l.b16 %v2702
    %v3219 = vunpack.c.h.b16 %v2702
    %v3220 = vunpack.c.l.b16 %v2703
    %v3221 = vunpack.c.h.b16 %v2703
    %v3222 = vunpack.c.l.b16 %v2704
    %v3223 = vunpack.c.h.b16 %v2704
    %v3224 = vunpack.c.l.b16 %v2705
    %v3225 = vunpack.c.h.b16 %v2705
    %v3226 = vunpack.c.l.b16 %v2706
    %v3227 = vunpack.c.h.b16 %v2706
    %v3228 = vunpack.c.l.b16 %v2707
    %v3229 = vunpack.c.h.b16 %v2707
    %v3230 = vunpack.c.l.b16 %v2708
    %v3231 = vunpack.c.h.b16 %v2708
    %v3232 = vunpack.c.l.b16 %v2709
    %v3233 = vunpack.c.h.b16 %v2709
    %v3234 = vunpack.c.l.b16 %v2710
    %v3235 = vunpack.c.h.b16 %v2710
    %v3236 = vunpack.c.l.b16 %v2711
    %v3237 = vunpack.c.h.b16 %v2711
    %v3238 = vunpack.c.l.b16 %v2712
    %v3239 = vunpack.c.h.b16 %v2712
    %v3240 = vunpack.c.l.b16 %v2713
    %v3241 = vunpack.c.h.b16 %v2713
    %v3242 = vunpack.c.l.b16 %v2714
    %v3243 = vunpack.c.h.b16 %v2714
    %v3244 = vunpack.c.l.b16 %v2715
    %v3245 = vunpack.c.h.b16 %v2715
    %v3246 = vunpack.c.l.b16 %v2716
    %v3247 = vunpack.c.h.b16 %v2716
    %v3248 = vunpack.c.l.b16 %v2717
    %v3249 = vunpack.c.h.b16 %v2717
    %v3250 = vunpack.c.l.b16 %v2718
    %v3251 = vunpack.c.h.b16 %v2718
    %v3252 = vunpack.c.l.b16 %v2719
    %v3253 = vunpack.c.h.b16 %v2719
    %v3254 = vunpack.c.l.b16 %v2720
    %v3255 = vunpack.c.h.b16 %v2720
    %v3256 = vunpack.c.l.b16 %v2721
    %v3257 = vunpack.c.h.b16 %v2721
    %v3258 = vunpack.c.l.b16 %v2722
    %v3259 = vunpack.c.h.b16 %v2722
    %v3260 = vunpack.c.l.b16 %v2723
    %v3261 = vunpack.c.h.b16 %v2723
    %v3262 = vunpack.c.l.b16 %v2724
    %v3263 = vunpack.c.h.b16 %v2724
    %v3264 = vunpack.c.l.b16 %v2725
    %v3265 = vunpack.c.h.b16 %v2725
    %v3266 = vunpack.c.l.b16 %v2726
    %v3267 = vunpack.c.h.b16 %v2726
    %v3268 = vunpack.c.l.b16 %v2727
    %v3269 = vunpack.c.h.b16 %v2727
    %v3270 = vunpack.c.l.b16 %v2728
    %v3271 = vunpack.c.h.b16 %v2728
    %v3272 = vunpack.c.l.b16 %v2729
    %v3273 = vunpack.c.h.b16 %v2729
    %v3274 = vunpack.c.l.b16 %v2730
    %v3275 = vunpack.c.h.b16 %v2730
    %v3276 = vunpack.c.l.b16 %v2731
    %v3277 = vunpack.c.h.b16 %v2731
    %v3278 = vunpack.c.l.b16 %v2732
    %v3279 = vunpack.c.h.b16 %v2732
    %v3280 = vunpack.c.l.b16 %v2733
    %v3281 = vunpack.c.h.b16 %v2733
    %v3282 = vunpack.c.l.b16 %v2734
    %v3283 = vunpack.c.h.b16 %v2734
    %v3284 = vunpack.c.l.b16 %v2735
    %v3285 = vunpack.c.h.b16 %v2735
    %v3286 = vunpack.c.l.b16 %v2736
    %v3287 = vunpack.c.h.b16 %v2736
    %v3288 = vunpack.c.l.b16 %v2737
    %v3289 = vunpack.c.h.b16 %v2737
    %v3290 = vunpack.c.l.b16 %v2738
    %v3291 = vunpack.c.h.b16 %v2738
    %v3292 = vunpack.c.l.b16 %v2739
    %v3293 = vunpack.c.h.b16 %v2739
    %v3294 = vunpack.c.l.b16 %v2740
    %v3295 = vunpack.c.h.b16 %v2740
    %v3296 = vunpack.c.l.b16 %v2741
    %v3297 = vunpack.c.h.b16 %v2741
    %v3298 = vunpack.c.l.b16 %v2742
    %v3299 = vunpack.c.h.b16 %v2742
    %v3300 = vunpack.c.l.b16 %v2743
    %v3301 = vunpack.c.h.b16 %v2743
    %v3302 = vunpack.c.l.b16 %v2744
    %v3303 = vunpack.c.h.b16 %v2744
    %v3304 = vunpack.c.l.b16 %v2745
    %v3305 = vunpack.c.h.b16 %v2745
    %v3306 = vunpack.c.l.b16 %v2746
    %v3307 = vunpack.c.h.b16 %v2746
    %v3308 = vunpack.c.l.b16 %v2747
    %v3309 = vunpack.c.h.b16 %v2747
    %v3310 = vunpack.c.l.b16 %v2748
    %v3311 = vunpack.c.h.b16 %v2748
    %v3312 = vunpack.c.l.b16 %v2749
    %v3313 = vunpack.c.h.b16 %v2749
    %v3314 = vunpack.c.l.b16 %v2750
    %v3315 = vunpack.c.h.b16 %v2750
    %v3316 = vunpack.c.l.b16 %v2751
    %v3317 = vunpack.c.h.b16 %v2751
    %v3318 = vunpack.c.l.b16 %v2752
    %v3319 = vunpack.c.h.b16 %v2752
    %v3320 = vunpack.c.l.b16 %v2753
    %v3321 = vunpack.c.h.b16 %v2753
    %v3322 = vunpack.c.l.b16 %v2754
    %v3323 = vunpack.c.h.b16 %v2754
    %v3324 = vunpack.c.l.b16 %v2755
    %v3325 = vunpack.c.h.b16 %v2755
    %v3326 = vunpack.c.l.b16 %v2756
    %v3327 = vunpack.c.h.b16 %v2756
    %v3328 = vunpack.c.l.b16 %v2757
    %v3329 = vunpack.c.h.b16 %v2757
    %v3330 = vunpack.c.l.b16 %v2758
    %v3331 = vunpack.c.h.b16 %v2758
    %v3332 = vunpack.c.l.b16 %v2759
    %v3333 = vunpack.c.h.b16 %v2759
    %v3334 = vunpack.c.l.b16 %v2760
    %v3335 = vunpack.c.h.b16 %v2760
    %v3336 = vunpack.c.l.b16 %v2761
    %v3337 = vunpack.c.h.b16 %v2761
    %v3338 = vunpack.c.l.b16 %v2762
    %v3339 = vunpack.c.h.b16 %v2762
    %v3340 = vunpack.c.l.b16 %v2763
    %v3341 = vunpack.c.h.b16 %v2763
    %v3342 = vunpack.c.l.b16 %v2764
    %v3343 = vunpack.c.h.b16 %v2764
    %v3344 = vunpack.c.l.b16 %v2765
    %v3345 = vunpack.c.h.b16 %v2765
    %v3346 = vunpack.c.l.b16 %v2766
    %v3347 = vunpack.c.h.b16 %v2766
    %v3348 = vunpack.c.l.b16 %v2767
    %v3349 = vunpack.c.h.b16 %v2767
    %v3350 = vunpack.c.l.b16 %v2768
    %v3351 = vunpack.c.h.b16 %v2768
    %v3352 = vunpack.c.l.b16 %v2769
    %v3353 = vunpack.c.h.b16 %v2769
    %v3354 = vunpack.c.l.b16 %v2770
    %v3355 = vunpack.c.h.b16 %v2770
    %v3356 = vunpack.c.l.b16 %v2771
    %v3357 = vunpack.c.h.b16 %v2771
    %v3358 = vunpack.c.l.b16 %v2772
    %v3359 = vunpack.c.h.b16 %v2772
    %v3360 = vunpack.c.l.b16 %v2773
    %v3361 = vunpack.c.h.b16 %v2773
    %v3362 = vunpack.c.l.b16 %v2774
    %v3363 = vunpack.c.h.b16 %v2774
    %v3364 = vunpack.c.l.b16 %v2775
    %v3365 = vunpack.c.h.b16 %v2775
    %v3366 = vunpack.c.l.b16 %v2776
    %v3367 = vunpack.c.h.b16 %v2776
    %v3368 = vunpack.c.l.b16 %v2777
    %v3369 = vunpack.c.h.b16 %v2777
    %v3370 = vunpack.c.l.b16 %v2778
    %v3371 = vunpack.c.h.b16 %v2778
    %v3372 = vunpack.c.l.b16 %v2779
    %v3373 = vunpack.c.h.b16 %v2779
    %v3374 = vunpack.c.l.b16 %v2780
    %v3375 = vunpack.c.h.b16 %v2780
    %v3376 = vunpack.c.l.b16 %v2781
    %v3377 = vunpack.c.h.b16 %v2781
    %v3378 = vunpack.c.l.b16 %v2782
    %v3379 = vunpack.c.h.b16 %v2782
    %v3380 = vunpack.c.l.b16 %v2783
    %v3381 = vunpack.c.h.b16 %v2783
    %v3382 = vunpack.c.l.b16 %v2784
    %v3383 = vunpack.c.h.b16 %v2784
    %v3384 = vunpack.c.l.b16 %v2785
    %v3385 = vunpack.c.h.b16 %v2785
    %v3386 = vunpack.c.l.b16 %v2786
    %v3387 = vunpack.c.h.b16 %v2786
    %v3388 = vunpack.c.l.b16 %v2787
    %v3389 = vunpack.c.h.b16 %v2787
    %v3390 = vunpack.c.l.b16 %v2788
    %v3391 = vunpack.c.h.b16 %v2788
    %v3392 = vunpack.c.l.b16 %v2789
    %v3393 = vunpack.c.h.b16 %v2789
    %v3394 = vunpack.c.l.b16 %v2790
    %v3395 = vunpack.c.h.b16 %v2790
    %v3396 = vunpack.c.l.b16 %v2791
    %v3397 = vunpack.c.h.b16 %v2791
    %v3398 = vunpack.c.l.b16 %v2792
    %v3399 = vunpack.c.h.b16 %v2792
    %v3400 = vunpack.c.l.b16 %v2793
    %v3401 = vunpack.c.h.b16 %v2793
    %v3402 = vunpack.c.l.b16 %v2794
    %v3403 = vunpack.c.h.b16 %v2794
    %v3404 = vunpack.c.l.b16 %v2795
    %v3405 = vunpack.c.h.b16 %v2795
    %v3406 = vunpack.c.l.b16 %v2796
    %v3407 = vunpack.c.h.b16 %v2796
    %v3408 = vunpack.c.l.b16 %v2797
    %v3409 = vunpack.c.h.b16 %v2797
    %v3410 = vunpack.c.l.b16 %v2798
    %v3411 = vunpack.c.h.b16 %v2798
    %v3412 = vunpack.c.l.b16 %v2799
    %v3413 = vunpack.c.h.b16 %v2799
    %v3414 = vunpack.c.l.b16 %v2800
    %v3415 = vunpack.c.h.b16 %v2800
    %v3416 = vunpack.c.l.b16 %v2801
    %v3417 = vunpack.c.h.b16 %v2801
    %v3418 = vunpack.c.l.b16 %v2802
    %v3419 = vunpack.c.h.b16 %v2802
    %v3420 = vunpack.c.l.b16 %v2803
    %v3421 = vunpack.c.h.b16 %v2803
    %v3422 = vunpack.c.l.b16 %v2804
    %v3423 = vunpack.c.h.b16 %v2804
    %v3424 = vunpack.c.l.b16 %v2805
    %v3425 = vunpack.c.h.b16 %v2805
    %v3426 = vunpack.c.l.b16 %v2806
    %v3427 = vunpack.c.h.b16 %v2806
    %v3428 = vunpack.c.l.b16 %v2807
    %v3429 = vunpack.c.h.b16 %v2807
    %v3430 = vunpack.c.l.b16 %v2808
    %v3431 = vunpack.c.h.b16 %v2808
    %v3432 = vunpack.c.l.b16 %v2809
    %v3433 = vunpack.c.h.b16 %v2809
    %v3434 = vunpack.c.l.b16 %v2810
    %v3435 = vunpack.c.h.b16 %v2810
    %v3436 = vunpack.c.l.b16 %v2811
    %v3437 = vunpack.c.h.b16 %v2811
    %v3438 = vunpack.c.l.b16 %v2812
    %v3439 = vunpack.c.h.b16 %v2812
    %v3440 = vunpack.c.l.b16 %v2813
    %v3441 = vunpack.c.h.b16 %v2813
    %v3442 = vunpack.c.l.b16 %v2814
    %v3443 = vunpack.c.h.b16 %v2814
    %v3444 = vunpack.c.l.b16 %v2815
    %v3445 = vunpack.c.h.b16 %v2815
    %v3446 = vunpack.c.l.b16 %v2816
    %v3447 = vunpack.c.h.b16 %v2816
    %v3448 = vunpack.c.l.b16 %v2817
    %v3449 = vunpack.c.h.b16 %v2817
    %v3450 = vunpack.c.l.b16 %v2818
    %v3451 = vunpack.c.h.b16 %v2818
    %v3452 = vunpack.c.l.b16 %v2819
    %v3453 = vunpack.c.h.b16 %v2819
    %v3454 = vunpack.c.l.b16 %v2820
    %v3455 = vunpack.c.h.b16 %v2820
    %v3456 = vunpack.c.l.b16 %v2821
    %v3457 = vunpack.c.h.b16 %v2821
    %v3458 = vunpack.c.l.b16 %v2822
    %v3459 = vunpack.c.h.b16 %v2822
    %v3460 = vunpack.c.l.b16 %v2823
    %v3461 = vunpack.c.h.b16 %v2823
    %v3462 = vunpack.c.l.b16 %v2824
    %v3463 = vunpack.c.h.b16 %v2824
    %v3464 = vunpack.c.l.b16 %v2825
    %v3465 = vunpack.c.h.b16 %v2825
    %v3466 = vunpack.c.l.b16 %v2826
    %v3467 = vunpack.c.h.b16 %v2826
    %v3468 = vunpack.c.l.b16 %v2827
    %v3469 = vunpack.c.h.b16 %v2827
    %v3470 = vunpack.c.l.b16 %v2828
    %v3471 = vunpack.c.h.b16 %v2828
    %v3472 = vunpack.c.l.b16 %v2829
    %v3473 = vunpack.c.h.b16 %v2829
    %v3474 = vunpack.c.l.b16 %v2830
    %v3475 = vunpack.c.h.b16 %v2830
    %v3476 = vunpack.c.l.b16 %v2831
    %v3477 = vunpack.c.h.b16 %v2831
    %v3478 = vunpack.c.l.b16 %v2832
    %v3479 = vunpack.c.h.b16 %v2832
    %v3480 = vunpack.c.l.b16 %v2833
    %v3481 = vunpack.c.h.b16 %v2833
    %v3482 = vunpack.c.l.b16 %v2834
    %v3483 = vunpack.c.h.b16 %v2834
    %v3484 = vunpack.c.l.b16 %v2835
    %v3485 = vunpack.c.h.b16 %v2835
    %v3486 = vunpack.c.l.b16 %v2836
    %v3487 = vunpack.c.h.b16 %v2836
    %v3488 = vunpack.c.l.b16 %v2837
    %v3489 = vunpack.c.h.b16 %v2837
    %v3490 = vunpack.c.l.b16 %v2838
    %v3491 = vunpack.c.h.b16 %v2838
    %v3492 = vunpack.c.l.b16 %v2839
    %v3493 = vunpack.c.h.b16 %v2839
    %v3494 = vunpack.c.l.b16 %v2840
    %v3495 = vunpack.c.h.b16 %v2840
    %v3496 = vunpack.c.l.b16 %v2841
    %v3497 = vunpack.c.h.b16 %v2841
    %v3498 = vunpack.c.l.b16 %v2842
    %v3499 = vunpack.c.h.b16 %v2842
    %v3500 = vunpack.c.l.b16 %v2843
    %v3501 = vunpack.c.h.b16 %v2843
    %v3502 = vunpack.c.l.b16 %v2844
    %v3503 = vunpack.c.h.b16 %v2844
    %v3504 = vunpack.c.l.b16 %v2845
    %v3505 = vunpack.c.h.b16 %v2845
    %v3506 = vunpack.c.l.b16 %v2846
    %v3507 = vunpack.c.h.b16 %v2846
    %v3508 = vunpack.c.l.b16 %v2847
    %v3509 = vunpack.c.h.b16 %v2847
    %v3510 = vunpack.c.l.b16 %v2848
    %v3511 = vunpack.c.h.b16 %v2848
    %v3512 = vunpack.c.l.b16 %v2849
    %v3513 = vunpack.c.h.b16 %v2849
    %v3514 = vunpack.c.l.b16 %v2850
    %v3515 = vunpack.c.h.b16 %v2850
    %v3516 = vunpack.c.l.b16 %v2851
    %v3517 = vunpack.c.h.b16 %v2851
    %v3518 = vunpack.c.l.b16 %v2852
    %v3519 = vunpack.c.h.b16 %v2852
    %v3520 = vunpack.c.l.b16 %v2853
    %v3521 = vunpack.c.h.b16 %v2853
    %v3522 = vunpack.c.l.b16 %v2854
    %v3523 = vunpack.c.h.b16 %v2854
    %v3524 = vunpack.c.l.b16 %v2855
    %v3525 = vunpack.c.h.b16 %v2855
    %v3526 = vunpack.c.l.b16 %v2856
    %v3527 = vunpack.c.h.b16 %v2856
    %v3528 = vunpack.c.l.b16 %v2857
    %v3529 = vunpack.c.h.b16 %v2857
    %v3530 = vunpack.c.l.b16 %v2858
    %v3531 = vunpack.c.h.b16 %v2858
    %v3532 = vunpack.c.l.b16 %v2859
    %v3533 = vunpack.c.h.b16 %v2859
    %v3534 = vunpack.c.l.b16 %v2860
    %v3535 = vunpack.c.h.b16 %v2860
    %v3536 = vunpack.c.l.b16 %v2861
    %v3537 = vunpack.c.h.b16 %v2861
    %v3538 = vunpack.c.l.b16 %v2862
    %v3539 = vunpack.c.h.b16 %v2862
    %v3540 = vunpack.c.l.b16 %v2863
    %v3541 = vunpack.c.h.b16 %v2863
    %v3542 = vunpack.c.l.b16 %v2864
    %v3543 = vunpack.c.h.b16 %v2864
    %v3544 = vunpack.c.l.b16 %v2865
    %v3545 = vunpack.c.h.b16 %v2865
    %v3546 = vunpack.c.l.b16 %v2866
    %v3547 = vunpack.c.h.b16 %v2866
    %v3548 = vunpack.c.l.b16 %v2867
    %v3549 = vunpack.c.h.b16 %v2867
    %v3550 = vunpack.c.l.b16 %v2868
    %v3551 = vunpack.c.h.b16 %v2868
    %v3552 = vunpack.c.l.b16 %v2869
    %v3553 = vunpack.c.h.b16 %v2869
    %v3554 = vunpack.c.l.b16 %v2870
    %v3555 = vunpack.c.h.b16 %v2870
    %v3556 = vunpack.c.l.b16 %v2871
    %v3557 = vunpack.c.h.b16 %v2871
    %v3558 = vunpack.c.l.b16 %v2872
    %v3559 = vunpack.c.h.b16 %v2872
    %v3560 = vunpack.c.l.b16 %v2873
    %v3561 = vunpack.c.h.b16 %v2873
    %v3562 = vunpack.c.l.b16 %v2874
    %v3563 = vunpack.c.h.b16 %v2874
    %v3564 = vunpack.c.l.b16 %v2875
    %v3565 = vunpack.c.h.b16 %v2875
    %v3566 = vunpack.c.l.b16 %v2876
    %v3567 = vunpack.c.h.b16 %v2876
    %v3568 = vunpack.c.l.b16 %v2877
    %v3569 = vunpack.c.h.b16 %v2877
    %v3570 = vunpack.c.l.b16 %v2878
    %v3571 = vunpack.c.h.b16 %v2878
    %v3572 = vunpack.c.l.b16 %v2879
    %v3573 = vunpack.c.h.b16 %v2879
    %v3574 = vunpack.c.l.b16 %v2880
    %v3575 = vunpack.c.h.b16 %v2880
    %v3576 = vunpack.c.l.b16 %v2881
    %v3577 = vunpack.c.h.b16 %v2881
    %v3578 = vunpack.c.l.b16 %v2882
    %v3579 = vunpack.c.h.b16 %v2882
    %v3580 = vunpack.c.l.b16 %v2883
    %v3581 = vunpack.c.h.b16 %v2883
    %v3582 = vunpack.c.l.b16 %v2884
    %v3583 = vunpack.c.h.b16 %v2884
    %v3584 = vunpack.c.l.b16 %v2885
    %v3585 = vunpack.c.h.b16 %v2885
    %v3586 = vunpack.c.l.b16 %v2886
    %v3587 = vunpack.c.h.b16 %v2886
    %v3588 = vunpack.c.l.b16 %v2887
    %v3589 = vunpack.c.h.b16 %v2887
    %v3590 = vunpack.c.l.b16 %v2888
    %v3591 = vunpack.c.h.b16 %v2888
    %v3592 = vunpack.c.l.b16 %v2889
    %v3593 = vunpack.c.h.b16 %v2889
    %v3594 = vunpack.c.l.b16 %v2890
    %v3595 = vunpack.c.h.b16 %v2890
    %v3596 = vunpack.c.l.b16 %v2891
    %v3597 = vunpack.c.h.b16 %v2891
    %v3598 = vunpack.c.l.b16 %v2892
    %v3599 = vunpack.c.h.b16 %v2892
    %v3600 = vunpack.c.l.b16 %v2893
    %v3601 = vunpack.c.h.b16 %v2893
    %v3602 = vunpack.c.l.b16 %v2894
    %v3603 = vunpack.c.h.b16 %v2894
    %v3604 = vunpack.c.l.b16 %v2895
    %v3605 = vunpack.c.h.b16 %v2895
    %v3606 = vunpack.c.l.b16 %v2896
    %v3607 = vunpack.c.h.b16 %v2896
    %v3608 = vunpack.c.l.b16 %v2897
    %v3609 = vunpack.c.h.b16 %v2897
    %v3610 = vunpack.c.l.b16 %v2898
    %v3611 = vunpack.c.h.b16 %v2898
    %v3612 = vunpack.c.l.b16 %v2899
    %v3613 = vunpack.c.h.b16 %v2899
    %v3614 = vunpack.c.l.b16 %v2900
    %v3615 = vunpack.c.h.b16 %v2900
    %v3616 = vunpack.c.l.b16 %v2901
    %v3617 = vunpack.c.h.b16 %v2901
    %v3618 = vunpack.c.l.b16 %v2902
    %v3619 = vunpack.c.h.b16 %v2902
    %v3620 = vunpack.c.l.b16 %v2903
    %v3621 = vunpack.c.h.b16 %v2903
    %v3622 = vunpack.c.l.b16 %v2904
    %v3623 = vunpack.c.h.b16 %v2904
    %v3624 = vunpack.c.l.b16 %v2905
    %v3625 = vunpack.c.h.b16 %v2905
    %v3626 = vunpack.c.l.b16 %v2906
    %v3627 = vunpack.c.h.b16 %v2906
    %v3628 = vunpack.c.l.b16 %v2907
    %v3629 = vunpack.c.h.b16 %v2907
    %v3630 = vunpack.c.l.b16 %v2908
    %v3631 = vunpack.c.h.b16 %v2908
    %v3632 = vunpack.c.l.b16 %v2909
    %v3633 = vunpack.c.h.b16 %v2909
    %v3634 = vunpack.c.l.b16 %v2910
    %v3635 = vunpack.c.h.b16 %v2910
    %v3636 = vunpack.c.l.b16 %v2911
    %v3637 = vunpack.c.h.b16 %v2911
    %v3638 = vunpack.c.l.b16 %v2912
    %v3639 = vunpack.c.h.b16 %v2912
    %v3640 = vunpack.c.l.b16 %v2913
    %v3641 = vunpack.c.h.b16 %v2913
    %v3642 = vunpack.c.l.b16 %v2914
    %v3643 = vunpack.c.h.b16 %v2914
    %v3644 = vunpack.c.l.b16 %v2915
    %v3645 = vunpack.c.h.b16 %v2915
    %v3646 = vunpack.c.l.b16 %v2916
    %v3647 = vunpack.c.h.b16 %v2916
    %v3648 = vunpack.c.l.b16 %v2917
    %v3649 = vunpack.c.h.b16 %v2917
    %v3650 = vunpack.c.l.b16 %v2918
    %v3651 = vunpack.c.h.b16 %v2918
    %v3652 = vunpack.c.l.b16 %v2919
    %v3653 = vunpack.c.h.b16 %v2919
    %v3654 = vunpack.c.l.b16 %v2920
    %v3655 = vunpack.c.h.b16 %v2920
    %v3656 = vunpack.c.l.b16 %v2921
    %v3657 = vunpack.c.h.b16 %v2921
    %v3658 = vunpack.c.l.b16 %v2922
    %v3659 = vunpack.c.h.b16 %v2922
    %v3660 = vunpack.c.l.b16 %v2923
    %v3661 = vunpack.c.h.b16 %v2923
    %v3662 = vunpack.c.l.b16 %v2924
    %v3663 = vunpack.c.h.b16 %v2924
    %v3664 = vunpack.c.l.b16 %v2925
    %v3665 = vunpack.c.h.b16 %v2925
    %v3666 = vunpack.c.l.b16 %v2926
    %v3667 = vunpack.c.h.b16 %v2926
    %v3668 = vunpack.c.l.b16 %v2927
    %v3669 = vunpack.c.h.b16 %v2927
    %v3670 = vunpack.c.l.b16 %v2928
    %v3671 = vunpack.c.h.b16 %v2928
    %v3672 = vunpack.c.l.b16 %v2929
    %v3673 = vunpack.c.h.b16 %v2929
    %v3674 = vunpack.c.l.b16 %v2930
    %v3675 = vunpack.c.h.b16 %v2930
    %v3676 = vunpack.c.l.b16 %v2931
    %v3677 = vunpack.c.h.b16 %v2931
    %v3678 = vunpack.c.l.b16 %v2932
    %v3679 = vunpack.c.h.b16 %v2932
    %v3680 = vunpack.c.l.b16 %v2933
    %v3681 = vunpack.c.h.b16 %v2933
    %v3682 = vunpack.c.l.b16 %v2934
    %v3683 = vunpack.c.h.b16 %v2934
    %v3684 = vunpack.c.l.b16 %v2935
    %v3685 = vunpack.c.h.b16 %v2935
    %v3686 = vunpack.c.l.b16 %v2936
    %v3687 = vunpack.c.h.b16 %v2936
    %v3688 = vunpack.c.l.b16 %v2937
    %v3689 = vunpack.c.h.b16 %v2937
    %v3690 = vunpack.c.l.b16 %v2938
    %v3691 = vunpack.c.h.b16 %v2938
    %v3692 = vunpack.c.l.b16 %v2939
    %v3693 = vunpack.c.h.b16 %v2939
    %v3694 = vunpack.c.l.b16 %v2940
    %v3695 = vunpack.c.h.b16 %v2940
    %v3696 = vunpack.c.l.b16 %v2941
    %v3697 = vunpack.c.h.b16 %v2941
    %v3698 = vunpack.c.l.b16 %v2942
    %v3699 = vunpack.c.h.b16 %v2942
    %v3700 = vunpack.c.l.b16 %v2943
    %v3701 = vunpack.c.h.b16 %v2943
    %v3702 = vunpack.c.l.b16 %v2944
    %v3703 = vunpack.c.h.b16 %v2944
    %v3704 = vunpack.c.l.b16 %v2945
    %v3705 = vunpack.c.h.b16 %v2945
    %v3706 = vunpack.c.l.b16 %v2946
    %v3707 = vunpack.c.h.b16 %v2946
    %v3708 = vunpack.c.l.b16 %v2947
    %v3709 = vunpack.c.h.b16 %v2947
    %v3710 = vunpack.c.l.b16 %v2948
    %v3711 = vunpack.c.h.b16 %v2948
    %v3712 = vunpack.c.l.b16 %v2949
    %v3713 = vunpack.c.h.b16 %v2949
    %v3714 = vunpack.c.l.b16 %v2950
    %v3715 = vunpack.c.h.b16 %v2950
    %v3716 = vunpack.c.l.b16 %v2951
    %v3717 = vunpack.c.h.b16 %v2951
    %v3718 = vunpack.c.l.b16 %v2952
    %v3719 = vunpack.c.h.b16 %v2952
    %v3720 = vunpack.c.l.b16 %v2953
    %v3721 = vunpack.c.h.b16 %v2953
    %v3722 = vunpack.c.l.b16 %v2954
    %v3723 = vunpack.c.h.b16 %v2954
    %v3724 = vunpack.c.l.b16 %v2955
    %v3725 = vunpack.c.h.b16 %v2955
    %v3726 = vunpack.c.l.b16 %v2956
    %v3727 = vunpack.c.h.b16 %v2956
    %v3728 = vunpack.c.l.b16 %v2957
    %v3729 = vunpack.c.h.b16 %v2957
    %v3730 = vpack.c.b16 %v3226, %v3218
    %v3731 = vpack.c.b16 %v3227, %v3219
    %v3732 = vpack.c.b16 %v3228, %v3220
    %v3733 = vpack.c.b16 %v3229, %v3221
    %v3734 = vpack.c.b16 %v3230, %v3222
    %v3735 = vpack.c.b16 %v3231, %v3223
    %v3736 = vpack.c.b16 %v3232, %v3224
    %v3737 = vpack.c.b16 %v3233, %v3225
    %v3738 = vpack.c.b16 %v3242, %v3234
    %v3739 = vpack.c.b16 %v3243, %v3235
    %v3740 = vpack.c.b16 %v3244, %v3236
    %v3741 = vpack.c.b16 %v3245, %v3237
    %v3742 = vpack.c.b16 %v3246, %v3238
    %v3743 = vpack.c.b16 %v3247, %v3239
    %v3744 = vpack.c.b16 %v3248, %v3240
    %v3745 = vpack.c.b16 %v3249, %v3241
    %v3746 = vpack.c.b16 %v3258, %v3250
    %v3747 = vpack.c.b16 %v3259, %v3251
    %v3748 = vpack.c.b16 %v3260, %v3252
    %v3749 = vpack.c.b16 %v3261, %v3253
    %v3750 = vpack.c.b16 %v3262, %v3254
    %v3751 = vpack.c.b16 %v3263, %v3255
    %v3752 = vpack.c.b16 %v3264, %v3256
    %v3753 = vpack.c.b16 %v3265, %v3257
    %v3754 = vpack.c.b16 %v3274, %v3266
    %v3755 = vpack.c.b16 %v3275, %v3267
    %v3756 = vpack.c.b16 %v3276, %v3268
    %v3757 = vpack.c.b16 %v3277, %v3269
    %v3758 = vpack.c.b16 %v3278, %v3270
    %v3759 = vpack.c.b16 %v3279, %v3271
    %v3760 = vpack.c.b16 %v3280, %v3272
    %v3761 = vpack.c.b16 %v3281, %v3273
    %v3762 = vpack.c.b16 %v3290, %v3282
    %v3763 = vpack.c.b16 %v3291, %v3283
    %v3764 = vpack.c.b16 %v3292, %v3284
    %v3765 = vpack.c.b16 %v3293, %v3285
    %v3766 = vpack.c.b16 %v3294, %v3286
    %v3767 = vpack.c.b16 %v3295, %v3287
    %v3768 = vpack.c.b16 %v3296, %v3288
    %v3769 = vpack.c.b16 %v3297, %v3289
    %v3770 = vpack.c.b16 %v3306, %v3298
    %v3771 = vpack.c.b16 %v3307, %v3299
    %v3772 = vpack.c.b16 %v3308, %v3300
    %v3773 = vpack.c.b16 %v3309, %v3301
    %v3774 = vpack.c.b16 %v3310, %v3302
    %v3775 = vpack.c.b16 %v3311, %v3303
    %v3776 = vpack.c.b16 %v3312, %v3304
    %v3777 = vpack.c.b16 %v3313, %v3305
    %v3778 = vpack.c.b16 %v3322, %v3314
    %v3779 = vpack.c.b16 %v3323, %v3315
    %v3780 = vpack.c.b16 %v3324, %v3316
    %v3781 = vpack.c.b16 %v3325, %v3317
    %v3782 = vpack.c.b16 %v3326, %v3318
    %v3783 = vpack.c.b16 %v3327, %v3319
    %v3784 = vpack.c.b16 %v3328, %v3320
    %v3785 = vpack.c.b16 %v3329, %v3321
    %v3786 = vpack.c.b16 %v3338, %v3330
    %v3787 = vpack.c.b16 %v3339, %v3331
    %v3788 = vpack.c.b16 %v3340, %v3332
    %v3789 = vpack.c.b16 %v3341, %v3333
    %v3790 = vpack.c.b16 %v3342, %v3334
    %v3791 = vpack.c.b16 %v3343, %v3335
    %v3792 = vpack.c.b16 %v3344, %v3336
    %v3793 = vpack.c.b16 %v3345, %v3337
    %v3794 = vpack.c.b16 %v3354, %v3346
    %v3795 = vpack.c.b16 %v3355, %v3347
    %v3796 = vpack.c.b16 %v3356, %v3348
    %v3797 = vpack.c.b16 %v3357, %v3349
    %v3798 = vpack.c.b16 %v3358, %v3350
    %v3799 = vpack.c.b16 %v3359, %v3351
    %v3800 = vpack.c.b16 %v3360, %v3352
    %v3801 = vpack.c.b16 %v3361, %v3353
    %v3802 = vpack.c.b16 %v3370, %v3362
    %v3803 = vpack.c.b16 %v3371, %v3363
    %v3804 = vpack.c.b16 %v3372, %v3364
    %v3805 = vpack.c.b16 %v3373, %v3365
    %v3806 = vpack.c.b16 %v3374, %v3366
    %v3807 = vpack.c.b16 %v3375, %v3367
    %v3808 = vpack.c.b16 %v3376, %v3368
    %v3809 = vpack.c.b16 %v3377, %v3369
    %v3810 = vpack.c.b16 %v3386, %v3378
    %v3811 = vpack.c.b16 %v3387, %v3379
    %v3812 = vpack.c.b16 %v3388, %v3380
    %v3813 = vpack.c.b16 %v3389, %v3381
    %v3814 = vpack.c.b16 %v3390, %v3382
    %v3815 = vpack.c.b16 %v3391, %v3383
    %v3816 = vpack.c.b16 %v3392, %v3384
    %v3817 = vpack.c.b16 %v3393, %v3385
    %v3818 = vpack.c.b16 %v3402, %v3394
    %v3819 = vpack.c.b16 %v3403, %v3395
    %v3820 = vpack.c.b16 %v3404, %v3396
    %v3821 = vpack.c.b16 %v3405, %v3397
    %v3822 = vpack.c.b16 %v3406, %v3398
    %v3823 = vpack.c.b16 %v3407, %v3399
    %v3824 = vpack.c.b16 %v3408, %v3400
    %v3825 = vpack.c.b16 %v3409, %v3401
    %v3826 = vpack.c.b16 %v3418, %v3410
    %v3827 = vpack.c.b16 %v3419, %v3411
    %v3828 = vpack.c.b16 %v3420, %v3412
    %v3829 = vpack.c.b16 %v3421, %v3413
    %v3830 = vpack.c.b16 %v3422, %v3414
    %v3831 = vpack.c.b16 %v3423, %v3415
    %v3832 = vpack.c.b16 %v3424, %v3416
    %v3833 = vpack.c.b16 %v3425, %v3417
    %v3834 = vpack.c.b16 %v3434, %v3426
    %v3835 = vpack.c.b16 %v3435, %v3427
    %v3836 = vpack.c.b16 %v3436, %v3428
    %v3837 = vpack.c.b16 %v3437, %v3429
    %v3838 = vpack.c.b16 %v3438, %v3430
    %v3839 = vpack.c.b16 %v3439, %v3431
    %v3840 = vpack.c.b16 %v3440, %v3432
    %v3841 = vpack.c.b16 %v3441, %v3433
    %v3842 = vpack.c.b16 %v3450, %v3442
    %v3843 = vpack.c.b16 %v3451, %v3443
    %v3844 = vpack.c.b16 %v3452, %v3444
    %v3845 = vpack.c.b16 %v3453, %v3445
    %v3846 = vpack.c.b16 %v3454, %v3446
    %v3847 = vpack.c.b16 %v3455, %v3447
    %v3848 = vpack.c.b16 %v3456, %v3448
    %v3849 = vpack.c.b16 %v3457, %v3449
    %v3850 = vpack.c.b16 %v3466, %v3458
    %v3851 = vpack.c.b16 %v3467, %v3459
    %v3852 = vpack.c.b16 %v3468, %v3460
    %v3853 = vpack.c.b16 %v3469, %v3461
    %v3854 = vpack.c.b16 %v3470, %v3462
    %v3855 = vpack.c.b16 %v3471, %v3463
    %v3856 = vpack.c.b16 %v3472, %v3464
    %v3857 = vpack.c.b16 %v3473, %v3465
    %v3858 = vpack.c.b16 %v3482, %v3474
    %v3859 = vpack.c.b16 %v3483, %v3475
    %v3860 = vpack.c.b16 %v3484, %v3476
    %v3861 = vpack.c.b16 %v3485, %v3477
    %v3862 = vpack.c.b16 %v3486, %v3478
    %v3863 = vpack.c.b16 %v3487, %v3479
    %v3864 = vpack.c.b16 %v3488, %v3480
    %v3865 = vpack.c.b16 %v3489, %v3481
    %v3866 = vpack.c.b16 %v3498, %v3490
    %v3867 = vpack.c.b16 %v3499, %v3491
    %v3868 = vpack.c.b16 %v3500, %v3492
    %v3869 = vpack.c.b16 %v3501, %v3493
    %v3870 = vpack.c.b16 %v3502, %v3494
    %v3871 = vpack.c.b16 %v3503, %v3495
    %v3872 = vpack.c.b16 %v3504, %v3496
    %v3873 = vpack.c.b16 %v3505, %v3497
    %v3874 = vpack.c.b16 %v3514, %v3506
    %v3875 = vpack.c.b16 %v3515, %v3507
    %v3876 = vpack.c.b16 %v3516, %v3508
    %v3877 = vpack.c.b16 %v3517, %v3509
    %v3878 = vpack.c.b16 %v3518, %v3510
    %v3879 = vpack.c.b16 %v3519, %v3511
    %v3880 = vpack.c.b16 %v3520, %v3512
    %v3881 = vpack.c.b16 %v3521, %v3513
    %v3882 = vpack.c.b16 %v3530, %v3522
    %v3883 = vpack.c.b16 %v3531, %v3523
    %v3884 = vpack.c.b16 %v3532, %v3524
    %v3885 = vpack.c.b16 %v3533, %v3525
    %v3886 = vpack.c.b16 %v3534, %v3526
    %v3887 = vpack.c.b16 %v3535, %v3527
    %v3888 = vpack.c.b16 %v3536, %v3528
    %v3889 = vpack.c.b16 %v3537, %v3529
    %v3890 = vpack.c.b16 %v3546, %v3538
    %v3891 = vpack.c.b16 %v3547, %v3539
    %v3892 = vpack.c.b16 %v3548, %v3540
    %v3893 = vpack.c.b16 %v3549, %v3541
    %v3894 = vpack.c.b16 %v3550, %v3542
    %v3895 = vpack.c.b16 %v3551, %v3543
    %v3896 = vpack.c.b16 %v3552, %v3544
    %v3897 = vpack.c.b16 %v3553, %v3545
    %v3898 = vpack.c.b16 %v3562, %v3554
    %v3899 = vpack.c.b16 %v3563, %v3555
    %v3900 = vpack.c.b16 %v3564, %v3556
    %v3901 = vpack.c.b16 %v3565, %v3557
    %v3902 = vpack.c.b16 %v3566, %v3558
    %v3903 = vpack.c.b16 %v3567, %v3559
    %v3904 = vpack.c.b16 %v3568, %v3560
    %v3905 = vpack.c.b16 %v3569, %v3561
    %v3906 = vpack.c.b16 %v3578, %v3570
    %v3907 = vpack.c.b16 %v3579, %v3571
    %v3908 = vpack.c.b16 %v3580, %v3572
    %v3909 = vpack.c.b16 %v3581, %v3573
    %v3910 = vpack.c.b16 %v3582, %v3574
    %v3911 = vpack.c.b16 %v3583, %v3575
    %v3912 = vpack.c.b16 %v3584, %v3576
    %v3913 = vpack.c.b16 %v3585, %v3577
    %v3914 = vpack.c.b16 %v3594, %v3586
    %v3915 = vpack.c.b16 %v3595, %v3587
    %v3916 = vpack.c.b16 %v3596, %v3588
    %v3917 = vpack.c.b16 %v3597, %v3589
    %v3918 = vpack.c.b16 %v3598, %v3590
    %v3919 = vpack.c.b16 %v3599, %v3591
    %v3920 = vpack.c.b16 %v3600, %v3592
    %v3921 = vpack.c.b16 %v3601, %v3593
    %v3922 = vpack.c.b16 %v3610, %v3602
    %v3923 = vpack.c.b16 %v3611, %v3603
    %v3924 = vpack.c.b16 %v3612, %v3604
    %v3925 = vpack.c.b16 %v3613, %v3605
    %v3926 = vpack.c.b16 %v3614, %v3606
    %v3927 = vpack.c.b16 %v3615, %v3607
    %v3928 = vpack.c.b16 %v3616, %v3608
    %v3929 = vpack.c.b16 %v3617, %v3609
    %v3930 = vpack.c.b16 %v3626, %v3618
    %v3931 = vpack.c.b16 %v3627, %v3619
    %v3932 = vpack.c.b16 %v3628, %v3620
    %v3933 = vpack.c.b16 %v3629, %v3621
    %v3934 = vpack.c.b16 %v3630, %v3622
    %v3935 = vpack.c.b16 %v3631, %v3623
    %v3936 = vpack.c.b16 %v3632, %v3624
    %v3937 = vpack.c.b16 %v3633, %v3625
    %v3938 = vpack.c.b16 %v3642, %v3634
    %v3939 = vpack.c.b16 %v3643, %v3635
    %v3940 = vpack.c.b16 %v3644, %v3636
    %v3941 = vpack.c.b16 %v3645, %v3637
    %v3942 = vpack.c.b16 %v3646, %v3638
    %v3943 = vpack.c.b16 %v3647, %v3639
    %v3944 = vpack.c.b16 %v3648, %v3640
    %v3945 = vpack.c.b16 %v3649, %v3641
    %v3946 = vpack.c.b16 %v3658, %v3650
    %v3947 = vpack.c.b16 %v3659, %v3651
    %v3948 = vpack.c.b16 %v3660, %v3652
    %v3949 = vpack.c.b16 %v3661, %v3653
    %v3950 = vpack.c.b16 %v3662, %v3654
    %v3951 = vpack.c.b16 %v3663, %v3655
    %v3952 = vpack.c.b16 %v3664, %v3656
    %v3953 = vpack.c.b16 %v3665, %v3657
    %v3954 = vpack.c.b16 %v3674, %v3666
    %v3955 = vpack.c.b16 %v3675, %v3667
    %v3956 = vpack.c.b16 %v3676, %v3668
    %v3957 = vpack.c.b16 %v3677, %v3669
    %v3958 = vpack.c.b16 %v3678, %v3670
    %v3959 = vpack.c.b16 %v3679, %v3671
    %v3960 = vpack.c.b16 %v3680, %v3672
    %v3961 = vpack.c.b16 %v3681, %v3673
    %v3962 = vpack.c.b16 %v3690, %v3682
    %v3963 = vpack.c.b16 %v3691, %v3683
    %v3964 = vpack.c.b16 %v3692, %v3684
    %v3965 = vpack.c.b16 %v3693, %v3685
    %v3966 = vpack.c.b16 %v3694, %v3686
    %v3967 = vpack.c.b16 %v3695, %v3687
    %v3968 = vpack.c.b16 %v3696, %v3688
    %v3969 = vpack.c.b16 %v3697, %v3689
    %v3970 = vpack.c.b16 %v3706, %v3698
    %v3971 = vpack.c.b16 %v3707, %v3699
    %v3972 = vpack.c.b16 %v3708, %v3700
    %v3973 = vpack.c.b16 %v3709, %v3701
    %v3974 = vpack.c.b16 %v3710, %v3702
    %v3975 = vpack.c.b16 %v3711, %v3703
    %v3976 = vpack.c.b16 %v3712, %v3704
    %v3977 = vpack.c.b16 %v3713, %v3705
    %v3978 = vpack.c.b16 %v3722, %v3714
    %v3979 = vpack.c.b16 %v3723, %v3715
    %v3980 = vpack.c.b16 %v3724, %v3716
    %v3981 = vpack.c.b16 %v3725, %v3717
    %v3982 = vpack.c.b16 %v3726, %v3718
    %v3983 = vpack.c.b16 %v3727, %v3719
    %v3984 = vpack.c.b16 %v3728, %v3720
    %v3985 = vpack.c.b16 %v3729, %v3721
    %4242 = vmatprep.subr.bf16.mxu0 %v3787
    %4243 = vmatpush1.bf16.msra.mxu0 %v3786
    %4244 = vmatprep.subr.bf16.mxu0 %v3779
    %4245 = vmatpush1.bf16.msra.mxu0 %v3778
    %4246 = vmatprep.subr.bf16.mxu0 %v3771
    %4247 = vmatpush1.bf16.msra.mxu0 %v3770
    %4248 = vmatprep.subr.bf16.mxu0 %v3763
    %4249 = vmatpush1.bf16.msra.mxu0 %v3762
    %4250 = vmatprep.subr.bf16.mxu0 %v3755
    %4251 = vmatpush1.bf16.msra.mxu0 %v3754
    %4252 = vmatprep.subr.bf16.mxu0 %v3747
    %4253 = vmatpush1.bf16.msra.mxu0 %v3746
    %4254 = vmatprep.subr.bf16.mxu0 %v3739
    %4255 = vmatpush1.bf16.msra.mxu0 %v3738
    %4256 = vmatprep.subr.bf16.mxu0 %v3731
    %4257 = vmatpush1.bf16.msra.mxu0 %v3730
    %4258 = vmatprep.subr.bf16.mxu0 %v3851
    %4259 = vmatpush2.bf16.msra.mxu0 %v3850
    %4260 = vmatprep.subr.bf16.mxu0 %v3843
    %4261 = vmatpush2.bf16.msra.mxu0 %v3842
    %4262 = vmatprep.subr.bf16.mxu0 %v3835
    %4263 = vmatpush2.bf16.msra.mxu0 %v3834
    %4264 = vmatprep.subr.bf16.mxu0 %v3827
    %4265 = vmatpush2.bf16.msra.mxu0 %v3826
    %4266 = vmatprep.subr.bf16.mxu0 %v3819
    %4267 = vmatpush2.bf16.msra.mxu0 %v3818
    %4268 = vmatprep.subr.bf16.mxu0 %v3811
    %4269 = vmatpush2.bf16.msra.mxu0 %v3810
    %4270 = vmatprep.subr.bf16.mxu0 %v3803
    %4271 = vmatpush2.bf16.msra.mxu0 %v3802
    %4272 = vmatprep.subr.bf16.mxu0 %v3795
    %4273 = vmatpush2.bf16.msra.mxu0 %v3794
    %4274 = vmatprep.mubr.bf16.mxu0 %v2959
    %4275 = vmatmul.mubr.bf16.gmra.mxu0 %v2958
    %v4276 = vpop.f32.mrf.mxu0
    %v4277 = vadd.f32 0.0, %v4276
    %v4278 = vpop.f32.mrf.mxu0
    %v4279 = vadd.f32 0.0, %v4278
    %v4280 = vpop.f32.mrf.mxu0
    %v4281 = vpop.f32.mrf.mxu0
    %4282 = vdwg.mxu0
    %4283 = vmatprep.subr.bf16.mxu0 %v3915
    %4284 = vmatpush1.bf16.msra.mxu0 %v3914
    %4285 = vmatprep.subr.bf16.mxu0 %v3907
    %4286 = vmatpush1.bf16.msra.mxu0 %v3906
    %4287 = vmatprep.subr.bf16.mxu0 %v3899
    %4288 = vmatpush1.bf16.msra.mxu0 %v3898
    %4289 = vmatprep.subr.bf16.mxu0 %v3891
    %4290 = vmatpush1.bf16.msra.mxu0 %v3890
    %4291 = vmatprep.subr.bf16.mxu0 %v3883
    %4292 = vmatpush1.bf16.msra.mxu0 %v3882
    %4293 = vmatprep.subr.bf16.mxu0 %v3875
    %4294 = vmatpush1.bf16.msra.mxu0 %v3874
    %4295 = vmatprep.subr.bf16.mxu0 %v3867
    %4296 = vmatpush1.bf16.msra.mxu0 %v3866
    %4297 = vmatprep.subr.bf16.mxu0 %v3859
    %4298 = vmatpush1.bf16.msra.mxu0 %v3858
    %4299 = vmatprep.subr.bf16.mxu0 %v3979
    %4300 = vmatpush2.bf16.msra.mxu0 %v3978
    %4301 = vmatprep.subr.bf16.mxu0 %v3971
    %4302 = vmatpush2.bf16.msra.mxu0 %v3970
    %4303 = vmatprep.subr.bf16.mxu0 %v3963
    %4304 = vmatpush2.bf16.msra.mxu0 %v3962
    %4305 = vmatprep.subr.bf16.mxu0 %v3955
    %4306 = vmatpush2.bf16.msra.mxu0 %v3954
    %4307 = vmatprep.subr.bf16.mxu0 %v3947
    %4308 = vmatpush2.bf16.msra.mxu0 %v3946
    %4309 = vmatprep.subr.bf16.mxu0 %v3939
    %4310 = vmatpush2.bf16.msra.mxu0 %v3938
    %4311 = vmatprep.subr.bf16.mxu0 %v3931
    %4312 = vmatpush2.bf16.msra.mxu0 %v3930
    %4313 = vmatprep.subr.bf16.mxu0 %v3923
    %4314 = vmatpush2.bf16.msra.mxu0 %v3922
    %4315 = vmatprep.mubr.bf16.mxu0 %v2961
    %4316 = vmatmul.mubr.bf16.gmra.mxu0 %v2960
    %v4317 = vpop.f32.mrf.mxu0
    %v4318 = vadd.f32 %v4277, %v4317
    %v4319 = vpop.f32.mrf.mxu0
    %v4320 = vadd.f32 %v4279, %v4319
    %v4321 = vpop.f32.mrf.mxu0
    %v4322 = vpop.f32.mrf.mxu0
    %4323 = vdwg.mxu0
    %4324 = vmatprep.subr.bf16.mxu0 %v3789
    %4325 = vmatpush1.bf16.msra.mxu0 %v3788
    %4326 = vmatprep.subr.bf16.mxu0 %v3781
    %4327 = vmatpush1.bf16.msra.mxu0 %v3780
    %4328 = vmatprep.subr.bf16.mxu0 %v3773
    %4329 = vmatpush1.bf16.msra.mxu0 %v3772
    %4330 = vmatprep.subr.bf16.mxu0 %v3765
    %4331 = vmatpush1.bf16.msra.mxu0 %v3764
    %4332 = vmatprep.subr.bf16.mxu0 %v3757
    %4333 = vmatpush1.bf16.msra.mxu0 %v3756
    %4334 = vmatprep.subr.bf16.mxu0 %v3749
    %4335 = vmatpush1.bf16.msra.mxu0 %v3748
    %4336 = vmatprep.subr.bf16.mxu0 %v3741
    %4337 = vmatpush1.bf16.msra.mxu0 %v3740
    %4338 = vmatprep.subr.bf16.mxu0 %v3733
    %4339 = vmatpush1.bf16.msra.mxu0 %v3732
    %4340 = vmatprep.subr.bf16.mxu0 %v3853
    %4341 = vmatpush2.bf16.msra.mxu0 %v3852
    %4342 = vmatprep.subr.bf16.mxu0 %v3845
    %4343 = vmatpush2.bf16.msra.mxu0 %v3844
    %4344 = vmatprep.subr.bf16.mxu0 %v3837
    %4345 = vmatpush2.bf16.msra.mxu0 %v3836
    %4346 = vmatprep.subr.bf16.mxu0 %v3829
    %4347 = vmatpush2.bf16.msra.mxu0 %v3828
    %4348 = vmatprep.subr.bf16.mxu0 %v3821
    %4349 = vmatpush2.bf16.msra.mxu0 %v3820
    %4350 = vmatprep.subr.bf16.mxu0 %v3813
    %4351 = vmatpush2.bf16.msra.mxu0 %v3812
    %4352 = vmatprep.subr.bf16.mxu0 %v3805
    %4353 = vmatpush2.bf16.msra.mxu0 %v3804
    %4354 = vmatprep.subr.bf16.mxu0 %v3797
    %4355 = vmatpush2.bf16.msra.mxu0 %v3796
    %4356 = vmatprep.mubr.bf16.mxu0 %v2959
    %4357 = vmatmul.mubr.bf16.gmra.mxu0 %v2958
    %v4358 = vpop.f32.mrf.mxu0
    %v4359 = vadd.f32 0.0, %v4358
    %v4360 = vpop.f32.mrf.mxu0
    %v4361 = vadd.f32 0.0, %v4360
    %v4362 = vpop.f32.mrf.mxu0
    %v4363 = vpop.f32.mrf.mxu0
    %4364 = vdwg.mxu0
    %4365 = vmatprep.subr.bf16.mxu0 %v3917
    %4366 = vmatpush1.bf16.msra.mxu0 %v3916
    %4367 = vmatprep.subr.bf16.mxu0 %v3909
    %4368 = vmatpush1.bf16.msra.mxu0 %v3908
    %4369 = vmatprep.subr.bf16.mxu0 %v3901
    %4370 = vmatpush1.bf16.msra.mxu0 %v3900
    %4371 = vmatprep.subr.bf16.mxu0 %v3893
    %4372 = vmatpush1.bf16.msra.mxu0 %v3892
    %4373 = vmatprep.subr.bf16.mxu0 %v3885
    %4374 = vmatpush1.bf16.msra.mxu0 %v3884
    %4375 = vmatprep.subr.bf16.mxu0 %v3877
    %4376 = vmatpush1.bf16.msra.mxu0 %v3876
    %4377 = vmatprep.subr.bf16.mxu0 %v3869
    %4378 = vmatpush1.bf16.msra.mxu0 %v3868
    %4379 = vmatprep.subr.bf16.mxu0 %v3861
    %4380 = vmatpush1.bf16.msra.mxu0 %v3860
    %4381 = vmatprep.subr.bf16.mxu0 %v3981
    %4382 = vmatpush2.bf16.msra.mxu0 %v3980
    %4383 = vmatprep.subr.bf16.mxu0 %v3973
    %4384 = vmatpush2.bf16.msra.mxu0 %v3972
    %4385 = vmatprep.subr.bf16.mxu0 %v3965
    %4386 = vmatpush2.bf16.msra.mxu0 %v3964
    %4387 = vmatprep.subr.bf16.mxu0 %v3957
    %4388 = vmatpush2.bf16.msra.mxu0 %v3956
    %4389 = vmatprep.subr.bf16.mxu0 %v3949
    %4390 = vmatpush2.bf16.msra.mxu0 %v3948
    %4391 = vmatprep.subr.bf16.mxu0 %v3941
    %4392 = vmatpush2.bf16.msra.mxu0 %v3940
    %4393 = vmatprep.subr.bf16.mxu0 %v3933
    %4394 = vmatpush2.bf16.msra.mxu0 %v3932
    %4395 = vmatprep.subr.bf16.mxu0 %v3925
    %4396 = vmatpush2.bf16.msra.mxu0 %v3924
    %4397 = vmatprep.mubr.bf16.mxu0 %v2961
    %4398 = vmatmul.mubr.bf16.gmra.mxu0 %v2960
    %v4399 = vpop.f32.mrf.mxu0
    %v4400 = vadd.f32 %v4359, %v4399
    %v4401 = vpop.f32.mrf.mxu0
    %v4402 = vadd.f32 %v4361, %v4401
    %v4403 = vpop.f32.mrf.mxu0
    %v4404 = vpop.f32.mrf.mxu0
    %4405 = vdwg.mxu0
    %4406 = vmatprep.subr.bf16.mxu0 %v3791
    %4407 = vmatpush1.bf16.msra.mxu0 %v3790
    %4408 = vmatprep.subr.bf16.mxu0 %v3783
    %4409 = vmatpush1.bf16.msra.mxu0 %v3782
    %4410 = vmatprep.subr.bf16.mxu0 %v3775
    %4411 = vmatpush1.bf16.msra.mxu0 %v3774
    %4412 = vmatprep.subr.bf16.mxu0 %v3767
    %4413 = vmatpush1.bf16.msra.mxu0 %v3766
    %4414 = vmatprep.subr.bf16.mxu0 %v3759
    %4415 = vmatpush1.bf16.msra.mxu0 %v3758
    %4416 = vmatprep.subr.bf16.mxu0 %v3751
    %4417 = vmatpush1.bf16.msra.mxu0 %v3750
    %4418 = vmatprep.subr.bf16.mxu0 %v3743
    %4419 = vmatpush1.bf16.msra.mxu0 %v3742
    %4420 = vmatprep.subr.bf16.mxu0 %v3735
    %4421 = vmatpush1.bf16.msra.mxu0 %v3734
    %4422 = vmatprep.subr.bf16.mxu0 %v3855
    %4423 = vmatpush2.bf16.msra.mxu0 %v3854
    %4424 = vmatprep.subr.bf16.mxu0 %v3847
    %4425 = vmatpush2.bf16.msra.mxu0 %v3846
    %4426 = vmatprep.subr.bf16.mxu0 %v3839
    %4427 = vmatpush2.bf16.msra.mxu0 %v3838
    %4428 = vmatprep.subr.bf16.mxu0 %v3831
    %4429 = vmatpush2.bf16.msra.mxu0 %v3830
    %4430 = vmatprep.subr.bf16.mxu0 %v3823
    %4431 = vmatpush2.bf16.msra.mxu0 %v3822
    %4432 = vmatprep.subr.bf16.mxu0 %v3815
    %4433 = vmatpush2.bf16.msra.mxu0 %v3814
    %4434 = vmatprep.subr.bf16.mxu0 %v3807
    %4435 = vmatpush2.bf16.msra.mxu0 %v3806
    %4436 = vmatprep.subr.bf16.mxu0 %v3799
    %4437 = vmatpush2.bf16.msra.mxu0 %v3798
    %4438 = vmatprep.mubr.bf16.mxu0 %v2959
    %4439 = vmatmul.mubr.bf16.gmra.mxu0 %v2958
    %v4440 = vpop.f32.mrf.mxu0
    %v4441 = vadd.f32 0.0, %v4440
    %v4442 = vpop.f32.mrf.mxu0
    %v4443 = vadd.f32 0.0, %v4442
    %v4444 = vpop.f32.mrf.mxu0
    %v4445 = vpop.f32.mrf.mxu0
    %4446 = vdwg.mxu0
    %4447 = vmatprep.subr.bf16.mxu0 %v3919
    %4448 = vmatpush1.bf16.msra.mxu0 %v3918
    %4449 = vmatprep.subr.bf16.mxu0 %v3911
    %4450 = vmatpush1.bf16.msra.mxu0 %v3910
    %4451 = vmatprep.subr.bf16.mxu0 %v3903
    %4452 = vmatpush1.bf16.msra.mxu0 %v3902
    %4453 = vmatprep.subr.bf16.mxu0 %v3895
    %4454 = vmatpush1.bf16.msra.mxu0 %v3894
    %4455 = vmatprep.subr.bf16.mxu0 %v3887
    %4456 = vmatpush1.bf16.msra.mxu0 %v3886
    %4457 = vmatprep.subr.bf16.mxu0 %v3879
    %4458 = vmatpush1.bf16.msra.mxu0 %v3878
    %4459 = vmatprep.subr.bf16.mxu0 %v3871
    %4460 = vmatpush1.bf16.msra.mxu0 %v3870
    %4461 = vmatprep.subr.bf16.mxu0 %v3863
    %4462 = vmatpush1.bf16.msra.mxu0 %v3862
    %4463 = vmatprep.subr.bf16.mxu0 %v3983
    %4464 = vmatpush2.bf16.msra.mxu0 %v3982
    %4465 = vmatprep.subr.bf16.mxu0 %v3975
    %4466 = vmatpush2.bf16.msra.mxu0 %v3974
    %4467 = vmatprep.subr.bf16.mxu0 %v3967
    %4468 = vmatpush2.bf16.msra.mxu0 %v3966
    %4469 = vmatprep.subr.bf16.mxu0 %v3959
    %4470 = vmatpush2.bf16.msra.mxu0 %v3958
    %4471 = vmatprep.subr.bf16.mxu0 %v3951
    %4472 = vmatpush2.bf16.msra.mxu0 %v3950
    %4473 = vmatprep.subr.bf16.mxu0 %v3943
    %4474 = vmatpush2.bf16.msra.mxu0 %v3942
    %4475 = vmatprep.subr.bf16.mxu0 %v3935
    %4476 = vmatpush2.bf16.msra.mxu0 %v3934
    %4477 = vmatprep.subr.bf16.mxu0 %v3927
    %4478 = vmatpush2.bf16.msra.mxu0 %v3926
    %4479 = vmatprep.mubr.bf16.mxu0 %v2961
    %4480 = vmatmul.mubr.bf16.gmra.mxu0 %v2960
    %v4481 = vpop.f32.mrf.mxu0
    %v4482 = vadd.f32 %v4441, %v4481
    %v4483 = vpop.f32.mrf.mxu0
    %v4484 = vadd.f32 %v4443, %v4483
    %v4485 = vpop.f32.mrf.mxu0
    %v4486 = vpop.f32.mrf.mxu0
    %4487 = vdwg.mxu0
    %4488 = vmatprep.subr.bf16.mxu0 %v3793
    %4489 = vmatpush1.bf16.msra.mxu0 %v3792
    %4490 = vmatprep.subr.bf16.mxu0 %v3785
    %4491 = vmatpush1.bf16.msra.mxu0 %v3784
    %4492 = vmatprep.subr.bf16.mxu0 %v3777
    %4493 = vmatpush1.bf16.msra.mxu0 %v3776
    %4494 = vmatprep.subr.bf16.mxu0 %v3769
    %4495 = vmatpush1.bf16.msra.mxu0 %v3768
    %4496 = vmatprep.subr.bf16.mxu0 %v3761
    %4497 = vmatpush1.bf16.msra.mxu0 %v3760
    %4498 = vmatprep.subr.bf16.mxu0 %v3753
    %4499 = vmatpush1.bf16.msra.mxu0 %v3752
    %4500 = vmatprep.subr.bf16.mxu0 %v3745
    %4501 = vmatpush1.bf16.msra.mxu0 %v3744
    %4502 = vmatprep.subr.bf16.mxu0 %v3737
    %4503 = vmatpush1.bf16.msra.mxu0 %v3736
    %4504 = vmatprep.subr.bf16.mxu0 %v3857
    %4505 = vmatpush2.bf16.msra.mxu0 %v3856
    %4506 = vmatprep.subr.bf16.mxu0 %v3849
    %4507 = vmatpush2.bf16.msra.mxu0 %v3848
    %4508 = vmatprep.subr.bf16.mxu0 %v3841
    %4509 = vmatpush2.bf16.msra.mxu0 %v3840
    %4510 = vmatprep.subr.bf16.mxu0 %v3833
    %4511 = vmatpush2.bf16.msra.mxu0 %v3832
    %4512 = vmatprep.subr.bf16.mxu0 %v3825
    %4513 = vmatpush2.bf16.msra.mxu0 %v3824
    %4514 = vmatprep.subr.bf16.mxu0 %v3817
    %4515 = vmatpush2.bf16.msra.mxu0 %v3816
    %4516 = vmatprep.subr.bf16.mxu0 %v3809
    %4517 = vmatpush2.bf16.msra.mxu0 %v3808
    %4518 = vmatprep.subr.bf16.mxu0 %v3801
    %4519 = vmatpush2.bf16.msra.mxu0 %v3800
    %4520 = vmatprep.mubr.bf16.mxu0 %v2959
    %4521 = vmatmul.mubr.bf16.gmra.mxu0 %v2958
    %v4522 = vpop.f32.mrf.mxu0
    %v4523 = vadd.f32 0.0, %v4522
    %v4524 = vpop.f32.mrf.mxu0
    %v4525 = vadd.f32 0.0, %v4524
    %v4526 = vpop.f32.mrf.mxu0
    %v4527 = vpop.f32.mrf.mxu0
    %4528 = vdwg.mxu0
    %4529 = vmatprep.subr.bf16.mxu0 %v3921
    %4530 = vmatpush1.bf16.msra.mxu0 %v3920
    %4531 = vmatprep.subr.bf16.mxu0 %v3913
    %4532 = vmatpush1.bf16.msra.mxu0 %v3912
    %4533 = vmatprep.subr.bf16.mxu0 %v3905
    %4534 = vmatpush1.bf16.msra.mxu0 %v3904
    %4535 = vmatprep.subr.bf16.mxu0 %v3897
    %4536 = vmatpush1.bf16.msra.mxu0 %v3896
    %4537 = vmatprep.subr.bf16.mxu0 %v3889
    %4538 = vmatpush1.bf16.msra.mxu0 %v3888
    %4539 = vmatprep.subr.bf16.mxu0 %v3881
    %4540 = vmatpush1.bf16.msra.mxu0 %v3880
    %4541 = vmatprep.subr.bf16.mxu0 %v3873
    %4542 = vmatpush1.bf16.msra.mxu0 %v3872
    %4543 = vmatprep.subr.bf16.mxu0 %v3865
    %4544 = vmatpush1.bf16.msra.mxu0 %v3864
    %4545 = vmatprep.subr.bf16.mxu0 %v3985
    %4546 = vmatpush2.bf16.msra.mxu0 %v3984
    %4547 = vmatprep.subr.bf16.mxu0 %v3977
    %4548 = vmatpush2.bf16.msra.mxu0 %v3976
    %4549 = vmatprep.subr.bf16.mxu0 %v3969
    %4550 = vmatpush2.bf16.msra.mxu0 %v3968
    %4551 = vmatprep.subr.bf16.mxu0 %v3961
    %4552 = vmatpush2.bf16.msra.mxu0 %v3960
    %4553 = vmatprep.subr.bf16.mxu0 %v3953
    %4554 = vmatpush2.bf16.msra.mxu0 %v3952
    %4555 = vmatprep.subr.bf16.mxu0 %v3945
    %4556 = vmatpush2.bf16.msra.mxu0 %v3944
    %4557 = vmatprep.subr.bf16.mxu0 %v3937
    %4558 = vmatpush2.bf16.msra.mxu0 %v3936
    %4559 = vmatprep.subr.bf16.mxu0 %v3929
    %4560 = vmatpush2.bf16.msra.mxu0 %v3928
    %4561 = vmatprep.mubr.bf16.mxu0 %v2961
    %4562 = vmatmul.mubr.bf16.gmra.mxu0 %v2960
    %v4563 = vpop.f32.mrf.mxu0
    %v4564 = vadd.f32 %v4523, %v4563
    %v4565 = vpop.f32.mrf.mxu0
    %v4566 = vadd.f32 %v4525, %v4565
    %v4567 = vpop.f32.mrf.mxu0
    %v4568 = vpop.f32.mrf.mxu0
    %4569 = vdwg.mxu0
    %v4570 = vld [vmem:[%s2 + $0xd] sm:$0xff]
    %v4571 = vld [vmem:[%s2 + $0x15] sm:$0xff]
    %v4572 = vrot.slane %v4318, 4
    %v4573 = vadd.f32 %v4318, %v4572
    %v4574 = vrot.slane %v4573, 2
    %v4575 = vadd.f32 %v4573, %v4574
    %v4576 = vrot.slane %v4575, 1
    %v4577 = vadd.f32 %v4575, %v4576
    %v4578 = vrot.slane %v4320, 4
    %v4579 = vadd.f32 %v4320, %v4578
    %v4580 = vrot.slane %v4579, 2
    %v4581 = vadd.f32 %v4579, %v4580
    %v4582 = vrot.slane %v4581, 1
    %v4583 = vadd.f32 %v4581, %v4582
    %v4584 = vrot.slane %v4400, 4
    %v4585 = vadd.f32 %v4400, %v4584
    %v4586 = vrot.slane %v4585, 2
    %v4587 = vadd.f32 %v4585, %v4586
    %v4588 = vrot.slane %v4587, 1
    %v4589 = vadd.f32 %v4587, %v4588
    %v4590 = vrot.slane %v4402, 4
    %v4591 = vadd.f32 %v4402, %v4590
    %v4592 = vrot.slane %v4591, 2
    %v4593 = vadd.f32 %v4591, %v4592
    %v4594 = vrot.slane %v4593, 1
    %v4595 = vadd.f32 %v4593, %v4594
    %v4596 = vrot.slane %v4482, 4
    %v4597 = vadd.f32 %v4482, %v4596
    %v4598 = vrot.slane %v4597, 2
    %v4599 = vadd.f32 %v4597, %v4598
    %v4600 = vrot.slane %v4599, 1
    %v4601 = vadd.f32 %v4599, %v4600
    %v4602 = vrot.slane %v4484, 4
    %v4603 = vadd.f32 %v4484, %v4602
    %v4604 = vrot.slane %v4603, 2
    %v4605 = vadd.f32 %v4603, %v4604
    %v4606 = vrot.slane %v4605, 1
    %v4607 = vadd.f32 %v4605, %v4606
    %v4608 = vrot.slane %v4564, 4
    %v4609 = vadd.f32 %v4564, %v4608
    %v4610 = vrot.slane %v4609, 2
    %v4611 = vadd.f32 %v4609, %v4610
    %v4612 = vrot.slane %v4611, 1
    %v4613 = vadd.f32 %v4611, %v4612
    %v4614 = vrot.slane %v4566, 4
    %v4615 = vadd.f32 %v4566, %v4614
    %v4616 = vrot.slane %v4615, 2
    %v4617 = vadd.f32 %v4615, %v4616
    %v4618 = vrot.slane %v4617, 1
    %v4619 = vadd.f32 %v4617, %v4618
    %v4620 = vmul.f32 %v4577, %v2027
    %v4621 = vmul.f32 %v4583, %v2027
    %v4622 = vmul.f32 %v4589, %v2027
    %v4623 = vmul.f32 %v4595, %v2027
    %v4624 = vmul.f32 %v4601, %v2027
    %v4625 = vmul.f32 %v4607, %v2027
    %v4626 = vmul.f32 %v4613, %v2027
    %v4627 = vmul.f32 %v4619, %v2027
    %v4628 = vsub.f32 %v4318, %v4620
    %v4629 = vsub.f32 %v4320, %v4621
    %v4630 = vsub.f32 %v4400, %v4622
    %v4631 = vsub.f32 %v4402, %v4623
    %v4632 = vsub.f32 %v4482, %v4624
    %v4633 = vsub.f32 %v4484, %v4625
    %v4634 = vsub.f32 %v4564, %v4626
    %v4635 = vsub.f32 %v4566, %v4627
    %v4636 = vmul.f32 %v4628, %v4628
    %v4637 = vmul.f32 %v4629, %v4629
    %v4638 = vmul.f32 %v4630, %v4630
    %v4639 = vmul.f32 %v4631, %v4631
    %v4640 = vmul.f32 %v4632, %v4632
    %v4641 = vmul.f32 %v4633, %v4633
    %v4642 = vmul.f32 %v4634, %v4634
    %v4643 = vmul.f32 %v4635, %v4635
    %v4644 = vrot.slane %v4636, 4
    %v4645 = vadd.f32 %v4636, %v4644
    %v4646 = vrot.slane %v4645, 2
    %v4647 = vadd.f32 %v4645, %v4646
    %v4648 = vrot.slane %v4647, 1
    %v4649 = vadd.f32 %v4647, %v4648
    %v4650 = vrot.slane %v4637, 4
    %v4651 = vadd.f32 %v4637, %v4650
    %v4652 = vrot.slane %v4651, 2
    %v4653 = vadd.f32 %v4651, %v4652
    %v4654 = vrot.slane %v4653, 1
    %v4655 = vadd.f32 %v4653, %v4654
    %v4656 = vrot.slane %v4638, 4
    %v4657 = vadd.f32 %v4638, %v4656
    %v4658 = vrot.slane %v4657, 2
    %v4659 = vadd.f32 %v4657, %v4658
    %v4660 = vrot.slane %v4659, 1
    %v4661 = vadd.f32 %v4659, %v4660
    %v4662 = vrot.slane %v4639, 4
    %v4663 = vadd.f32 %v4639, %v4662
    %v4664 = vrot.slane %v4663, 2
    %v4665 = vadd.f32 %v4663, %v4664
    %v4666 = vrot.slane %v4665, 1
    %v4667 = vadd.f32 %v4665, %v4666
    %v4668 = vrot.slane %v4640, 4
    %v4669 = vadd.f32 %v4640, %v4668
    %v4670 = vrot.slane %v4669, 2
    %v4671 = vadd.f32 %v4669, %v4670
    %v4672 = vrot.slane %v4671, 1
    %v4673 = vadd.f32 %v4671, %v4672
    %v4674 = vrot.slane %v4641, 4
    %v4675 = vadd.f32 %v4641, %v4674
    %v4676 = vrot.slane %v4675, 2
    %v4677 = vadd.f32 %v4675, %v4676
    %v4678 = vrot.slane %v4677, 1
    %v4679 = vadd.f32 %v4677, %v4678
    %v4680 = vrot.slane %v4642, 4
    %v4681 = vadd.f32 %v4642, %v4680
    %v4682 = vrot.slane %v4681, 2
    %v4683 = vadd.f32 %v4681, %v4682
    %v4684 = vrot.slane %v4683, 1
    %v4685 = vadd.f32 %v4683, %v4684
    %v4686 = vrot.slane %v4643, 4
    %v4687 = vadd.f32 %v4643, %v4686
    %v4688 = vrot.slane %v4687, 2
    %v4689 = vadd.f32 %v4687, %v4688
    %v4690 = vrot.slane %v4689, 1
    %v4691 = vadd.f32 %v4689, %v4690
    %v4692 = vmul.f32 %v4649, %v2027
    %v4693 = vmul.f32 %v4655, %v2027
    %v4694 = vmul.f32 %v4661, %v2027
    %v4695 = vmul.f32 %v4667, %v2027
    %v4696 = vmul.f32 %v4673, %v2027
    %v4697 = vmul.f32 %v4679, %v2027
    %v4698 = vmul.f32 %v4685, %v2027
    %v4699 = vmul.f32 %v4691, %v2027
    %v4700 = vadd.f32 %v4692, 0.8
    %v4701 = vadd.f32 %v4693, 0.8
    %v4702 = vadd.f32 %v4694, 0.8
    %v4703 = vadd.f32 %v4695, 0.8
    %v4704 = vadd.f32 %v4696, 0.8
    %v4705 = vadd.f32 %v4697, 0.8
    %v4706 = vadd.f32 %v4698, 0.8
    %v4707 = vadd.f32 %v4699, 0.8
    %v4708 = vrsqrt.pop %v4700
    %v4709 = vrsqrt.pop %v4701
    %v4710 = vrsqrt.pop %v4702
    %v4711 = vrsqrt.pop %v4703
    %v4712 = vrsqrt.pop %v4704
    %v4713 = vrsqrt.pop %v4705
    %v4714 = vrsqrt.pop %v4706
    %v4715 = vrsqrt.pop %v4707
    %v4716 = vmul.f32 %v4628, %v4708
    %v4717 = vmul.f32 %v4629, %v4709
    %v4718 = vmul.f32 %v4630, %v4710
    %v4719 = vmul.f32 %v4631, %v4711
    %v4720 = vmul.f32 %v4632, %v4712
    %v4721 = vmul.f32 %v4633, %v4713
    %v4722 = vmul.f32 %v4634, %v4714
    %v4723 = vmul.f32 %v4635, %v4715
    %v4725 = vlaneseq
    %v4726 = vshrl.u32 %v4725, 7
    %v4727 = vsub.s32 0, %v4726
    %v4728 = vrot.slane %v4570, %v4727
    %v4729 = vlaneseq
    %v4730 = vshrl.u32 %v4729, 7
    %v4731 = vsub.s32 1, %v4730
    %v4732 = vrot.slane %v4570, %v4731
    %v4733 = vlaneseq
    %v4734 = vshrl.u32 %v4733, 7
    %v4735 = vsub.s32 2, %v4734
    %v4736 = vrot.slane %v4570, %v4735
    %v4737 = vlaneseq
    %v4738 = vshrl.u32 %v4737, 7
    %v4739 = vsub.s32 3, %v4738
    %v4740 = vrot.slane %v4570, %v4739
    %v4741 = vlaneseq
    %v4742 = vshrl.u32 %v4741, 7
    %v4743 = vsub.s32 4, %v4742
    %v4744 = vrot.slane %v4570, %v4743
    %v4745 = vlaneseq
    %v4746 = vshrl.u32 %v4745, 7
    %v4747 = vsub.s32 5, %v4746
    %v4748 = vrot.slane %v4570, %v4747
    %v4749 = vlaneseq
    %v4750 = vshrl.u32 %v4749, 7
    %v4751 = vsub.s32 6, %v4750
    %v4752 = vrot.slane %v4570, %v4751
    %v4753 = vlaneseq
    %v4754 = vshrl.u32 %v4753, 7
    %v4755 = vsub.s32 7, %v4754
    %v4756 = vrot.slane %v4570, %v4755
    %v4765 = vmul.f32 %v4716, %v4728
    %v4766 = vmul.f32 %v4717, %v4732
    %v4767 = vmul.f32 %v4718, %v4736
    %v4768 = vmul.f32 %v4719, %v4740
    %v4769 = vmul.f32 %v4720, %v4744
    %v4770 = vmul.f32 %v4721, %v4748
    %v4771 = vmul.f32 %v4722, %v4752
    %v4772 = vmul.f32 %v4723, %v4756
    %v4774 = vlaneseq
    %v4775 = vshrl.u32 %v4774, 7
    %v4776 = vsub.s32 0, %v4775
    %v4777 = vrot.slane %v4571, %v4776
    %v4778 = vlaneseq
    %v4779 = vshrl.u32 %v4778, 7
    %v4780 = vsub.s32 1, %v4779
    %v4781 = vrot.slane %v4571, %v4780
    %v4782 = vlaneseq
    %v4783 = vshrl.u32 %v4782, 7
    %v4784 = vsub.s32 2, %v4783
    %v4785 = vrot.slane %v4571, %v4784
    %v4786 = vlaneseq
    %v4787 = vshrl.u32 %v4786, 7
    %v4788 = vsub.s32 3, %v4787
    %v4789 = vrot.slane %v4571, %v4788
    %v4790 = vlaneseq
    %v4791 = vshrl.u32 %v4790, 7
    %v4792 = vsub.s32 4, %v4791
    %v4793 = vrot.slane %v4571, %v4792
    %v4794 = vlaneseq
    %v4795 = vshrl.u32 %v4794, 7
    %v4796 = vsub.s32 5, %v4795
    %v4797 = vrot.slane %v4571, %v4796
    %v4798 = vlaneseq
    %v4799 = vshrl.u32 %v4798, 7
    %v4800 = vsub.s32 6, %v4799
    %v4801 = vrot.slane %v4571, %v4800
    %v4802 = vlaneseq
    %v4803 = vshrl.u32 %v4802, 7
    %v4804 = vsub.s32 7, %v4803
    %v4805 = vrot.slane %v4571, %v4804
    %v4814 = vadd.f32 %v4765, %v4777
    %v4815 = vadd.f32 %v4766, %v4781
    %v4816 = vadd.f32 %v4767, %v4785
    %v4817 = vadd.f32 %v4768, %v4789
    %v4818 = vadd.f32 %v4769, %v4793
    %v4819 = vadd.f32 %v4770, %v4797
    %v4820 = vadd.f32 %v4771, %v4801
    %v4821 = vadd.f32 %v4772, %v4805
    %vm4822 = vcmp.gt.f32.partialorder %v4814, 0.0
    %vm4823 = vcmp.gt.f32.partialorder %v4815, 0.0
    %vm4824 = vcmp.gt.f32.partialorder %v4816, 0.0
    %vm4825 = vcmp.gt.f32.partialorder %v4817, 0.0
    %vm4826 = vcmp.gt.f32.partialorder %v4818, 0.0
    %vm4827 = vcmp.gt.f32.partialorder %v4819, 0.0
    %vm4828 = vcmp.gt.f32.partialorder %v4820, 0.0
    %vm4829 = vcmp.gt.f32.partialorder %v4821, 0.0
    %v4830 = vmul.f32 %v4814, 0.2
    %v4831 = vmul.f32 %v4815, 0.2
    %v4832 = vmul.f32 %v4816, 0.2
    %v4833 = vmul.f32 %v4817, 0.2
    %v4834 = vmul.f32 %v4818, 0.2
    %v4835 = vmul.f32 %v4819, 0.2
    %v4836 = vmul.f32 %v4820, 0.2
    %v4837 = vmul.f32 %v4821, 0.2
    %v4838 = vsel %vm4822, %v4814, %v4830
    %v4839 = vsel %vm4823, %v4815, %v4831
    %v4840 = vsel %vm4824, %v4816, %v4832
    %v4841 = vsel %vm4825, %v4817, %v4833
    %v4842 = vsel %vm4826, %v4818, %v4834
    %v4843 = vsel %vm4827, %v4819, %v4835
    %v4844 = vsel %vm4828, %v4820, %v4836
    %v4845 = vsel %vm4829, %v4821, %v4837
    %s4846 = smul.u32 4, 128
    %s4847 = smul.u32 %s4846, 7
    %s4848 = sshll.u32 %s4847, 4
    %4849 = dma.done %s817, %s4848
    %v4850 = vld [vmem:[#allocation5] sm:$0xff]
    %v4851 = vld [vmem:[#allocation5 + $0x8] sm:$0xff]
    %v4852 = vld [vmem:[#allocation5 + $0x10] sm:$0xff]
    %v4853 = vld [vmem:[#allocation5 + $0x18] sm:$0xf]
    %v4854 = vld [vmem:[#allocation5 + $0x1c] sm:$0xff]
    %v4855 = vld [vmem:[#allocation5 + $0x24] sm:$0xff]
    %v4856 = vld [vmem:[#allocation5 + $0x2c] sm:$0xff]
    %v4857 = vld [vmem:[#allocation5 + $0x34] sm:$0xf]
    %v4858 = vld [vmem:[#allocation5 + $0x38] sm:$0xff]
    %v4859 = vld [vmem:[#allocation5 + $0x40] sm:$0xff]
    %v4860 = vld [vmem:[#allocation5 + $0x48] sm:$0xff]
    %v4861 = vld [vmem:[#allocation5 + $0x50] sm:$0xf]
    %v4862 = vld [vmem:[#allocation5 + $0x54] sm:$0xff]
    %v4863 = vld [vmem:[#allocation5 + $0x5c] sm:$0xff]
    %v4864 = vld [vmem:[#allocation5 + $0x64] sm:$0xff]
    %v4865 = vld [vmem:[#allocation5 + $0x6c] sm:$0xf]
    %v4866 = vld [vmem:[#allocation5 + $0x70] sm:$0xff]
    %v4867 = vld [vmem:[#allocation5 + $0x78] sm:$0xff]
    %v4868 = vld [vmem:[#allocation5 + $0x80] sm:$0xff]
    %v4869 = vld [vmem:[#allocation5 + $0x88] sm:$0xf]
    %v4870 = vld [vmem:[#allocation5 + $0x8c] sm:$0xff]
    %v4871 = vld [vmem:[#allocation5 + $0x94] sm:$0xff]
    %v4872 = vld [vmem:[#allocation5 + $0x9c] sm:$0xff]
    %v4873 = vld [vmem:[#allocation5 + $0xa4] sm:$0xf]
    %v4874 = vld [vmem:[#allocation5 + $0xa8] sm:$0xff]
    %v4875 = vld [vmem:[#allocation5 + $0xb0] sm:$0xff]
    %v4876 = vld [vmem:[#allocation5 + $0xb8] sm:$0xff]
    %v4877 = vld [vmem:[#allocation5 + $0xc0] sm:$0xf]
    %v4878 = vld [vmem:[#allocation5 + $0xc4] sm:$0xff]
    %v4879 = vld [vmem:[#allocation5 + $0xcc] sm:$0xff]
    %v4880 = vld [vmem:[#allocation5 + $0xd4] sm:$0xff]
    %v4881 = vld [vmem:[#allocation5 + $0xdc] sm:$0xf]
    %v4882 = vld [vmem:[#allocation5 + $0xe0] sm:$0xff]
    %v4883 = vld [vmem:[#allocation5 + $0xe8] sm:$0xff]
    %v4884 = vld [vmem:[#allocation5 + $0xf0] sm:$0xff]
    %v4885 = vld [vmem:[#allocation5 + $0xf8] sm:$0xf]
    %v4886 = vld [vmem:[#allocation5 + $0xfc] sm:$0xff]
    %v4887 = vld [vmem:[#allocation5 + $0x104] sm:$0xff]
    %v4888 = vld [vmem:[#allocation5 + $0x10c] sm:$0xff]
    %v4889 = vld [vmem:[#allocation5 + $0x114] sm:$0xf]
    %v4890 = vld [vmem:[#allocation5 + $0x118] sm:$0xff]
    %v4891 = vld [vmem:[#allocation5 + $0x120] sm:$0xff]
    %v4892 = vld [vmem:[#allocation5 + $0x128] sm:$0xff]
    %v4893 = vld [vmem:[#allocation5 + $0x130] sm:$0xf]
    %v4894 = vld [vmem:[#allocation5 + $0x134] sm:$0xff]
    %v4895 = vld [vmem:[#allocation5 + $0x13c] sm:$0xff]
    %v4896 = vld [vmem:[#allocation5 + $0x144] sm:$0xff]
    %v4897 = vld [vmem:[#allocation5 + $0x14c] sm:$0xf]
    %v4898 = vld [vmem:[#allocation5 + $0x150] sm:$0xff]
    %v4899 = vld [vmem:[#allocation5 + $0x158] sm:$0xff]
    %v4900 = vld [vmem:[#allocation5 + $0x160] sm:$0xff]
    %v4901 = vld [vmem:[#allocation5 + $0x168] sm:$0xf]
    %v4902 = vld [vmem:[#allocation5 + $0x16c] sm:$0xff]
    %v4903 = vld [vmem:[#allocation5 + $0x174] sm:$0xff]
    %v4904 = vld [vmem:[#allocation5 + $0x17c] sm:$0xff]
    %v4905 = vld [vmem:[#allocation5 + $0x184] sm:$0xf]
    %v4906 = vld [vmem:[#allocation5 + $0x188] sm:$0xff]
    %v4907 = vld [vmem:[#allocation5 + $0x190] sm:$0xff]
    %v4908 = vld [vmem:[#allocation5 + $0x198] sm:$0xff]
    %v4909 = vld [vmem:[#allocation5 + $0x1a0] sm:$0xf]
    %v4910 = vld [vmem:[#allocation5 + $0x1a4] sm:$0xff]
    %v4911 = vld [vmem:[#allocation5 + $0x1ac] sm:$0xff]
    %v4912 = vld [vmem:[#allocation5 + $0x1b4] sm:$0xff]
    %v4913 = vld [vmem:[#allocation5 + $0x1bc] sm:$0xf]
    %v4914 = vld [vmem:[#allocation5 + $0x1c0] sm:$0xff]
    %v4915 = vld [vmem:[#allocation5 + $0x1c8] sm:$0xff]
    %v4916 = vld [vmem:[#allocation5 + $0x1d0] sm:$0xff]
    %v4917 = vld [vmem:[#allocation5 + $0x1d8] sm:$0xf]
    %v4918 = vld [vmem:[#allocation5 + $0x1dc] sm:$0xff]
    %v4919 = vld [vmem:[#allocation5 + $0x1e4] sm:$0xff]
    %v4920 = vld [vmem:[#allocation5 + $0x1ec] sm:$0xff]
    %v4921 = vld [vmem:[#allocation5 + $0x1f4] sm:$0xf]
    %v4922 = vld [vmem:[#allocation5 + $0x1f8] sm:$0xff]
    %v4923 = vld [vmem:[#allocation5 + $0x200] sm:$0xff]
    %v4924 = vld [vmem:[#allocation5 + $0x208] sm:$0xff]
    %v4925 = vld [vmem:[#allocation5 + $0x210] sm:$0xf]
    %v4926 = vld [vmem:[#allocation5 + $0x214] sm:$0xff]
    %v4927 = vld [vmem:[#allocation5 + $0x21c] sm:$0xff]
    %v4928 = vld [vmem:[#allocation5 + $0x224] sm:$0xff]
    %v4929 = vld [vmem:[#allocation5 + $0x22c] sm:$0xf]
    %v4930 = vld [vmem:[#allocation5 + $0x230] sm:$0xff]
    %v4931 = vld [vmem:[#allocation5 + $0x238] sm:$0xff]
    %v4932 = vld [vmem:[#allocation5 + $0x240] sm:$0xff]
    %v4933 = vld [vmem:[#allocation5 + $0x248] sm:$0xf]
    %v4934 = vld [vmem:[#allocation5 + $0x24c] sm:$0xff]
    %v4935 = vld [vmem:[#allocation5 + $0x254] sm:$0xff]
    %v4936 = vld [vmem:[#allocation5 + $0x25c] sm:$0xff]
    %v4937 = vld [vmem:[#allocation5 + $0x264] sm:$0xf]
    %v4938 = vld [vmem:[#allocation5 + $0x268] sm:$0xff]
    %v4939 = vld [vmem:[#allocation5 + $0x270] sm:$0xff]
    %v4940 = vld [vmem:[#allocation5 + $0x278] sm:$0xff]
    %v4941 = vld [vmem:[#allocation5 + $0x280] sm:$0xf]
    %v4942 = vld [vmem:[#allocation5 + $0x284] sm:$0xff]
    %v4943 = vld [vmem:[#allocation5 + $0x28c] sm:$0xff]
    %v4944 = vld [vmem:[#allocation5 + $0x294] sm:$0xff]
    %v4945 = vld [vmem:[#allocation5 + $0x29c] sm:$0xf]
    %v4946 = vld [vmem:[#allocation5 + $0x2a0] sm:$0xff]
    %v4947 = vld [vmem:[#allocation5 + $0x2a8] sm:$0xff]
    %v4948 = vld [vmem:[#allocation5 + $0x2b0] sm:$0xff]
    %v4949 = vld [vmem:[#allocation5 + $0x2b8] sm:$0xf]
    %v4950 = vld [vmem:[#allocation5 + $0x2bc] sm:$0xff]
    %v4951 = vld [vmem:[#allocation5 + $0x2c4] sm:$0xff]
    %v4952 = vld [vmem:[#allocation5 + $0x2cc] sm:$0xff]
    %v4953 = vld [vmem:[#allocation5 + $0x2d4] sm:$0xf]
    %v4954 = vld [vmem:[#allocation5 + $0x2d8] sm:$0xff]
    %v4955 = vld [vmem:[#allocation5 + $0x2e0] sm:$0xff]
    %v4956 = vld [vmem:[#allocation5 + $0x2e8] sm:$0xff]
    %v4957 = vld [vmem:[#allocation5 + $0x2f0] sm:$0xf]
    %v4958 = vld [vmem:[#allocation5 + $0x2f4] sm:$0xff]
    %v4959 = vld [vmem:[#allocation5 + $0x2fc] sm:$0xff]
    %v4960 = vld [vmem:[#allocation5 + $0x304] sm:$0xff]
    %v4961 = vld [vmem:[#allocation5 + $0x30c] sm:$0xf]
    %v4962 = vld [vmem:[#allocation5 + $0x310] sm:$0xff]
    %v4963 = vld [vmem:[#allocation5 + $0x318] sm:$0xff]
    %v4964 = vld [vmem:[#allocation5 + $0x320] sm:$0xff]
    %v4965 = vld [vmem:[#allocation5 + $0x328] sm:$0xf]
    %v4966 = vld [vmem:[#allocation5 + $0x32c] sm:$0xff]
    %v4967 = vld [vmem:[#allocation5 + $0x334] sm:$0xff]
    %v4968 = vld [vmem:[#allocation5 + $0x33c] sm:$0xff]
    %v4969 = vld [vmem:[#allocation5 + $0x344] sm:$0xf]
    %v4970 = vld [vmem:[#allocation5 + $0x348] sm:$0xff]
    %v4971 = vld [vmem:[#allocation5 + $0x350] sm:$0xff]
    %v4972 = vld [vmem:[#allocation5 + $0x358] sm:$0xff]
    %v4973 = vld [vmem:[#allocation5 + $0x360] sm:$0xf]
    %v4974 = vld [vmem:[#allocation5 + $0x364] sm:$0xff]
    %v4975 = vld [vmem:[#allocation5 + $0x36c] sm:$0xff]
    %v4976 = vld [vmem:[#allocation5 + $0x374] sm:$0xff]
    %v4977 = vld [vmem:[#allocation5 + $0x37c] sm:$0xf]
    %v4978 = vld [vmem:[#allocation5 + $0x380] sm:$0xff]
    %v4979 = vld [vmem:[#allocation5 + $0x388] sm:$0xff]
    %v4980 = vld [vmem:[#allocation5 + $0x390] sm:$0xff]
    %v4981 = vld [vmem:[#allocation5 + $0x398] sm:$0xf]
    %v4982 = vld [vmem:[#allocation5 + $0x39c] sm:$0xff]
    %v4983 = vld [vmem:[#allocation5 + $0x3a4] sm:$0xff]
    %v4984 = vld [vmem:[#allocation5 + $0x3ac] sm:$0xff]
    %v4985 = vld [vmem:[#allocation5 + $0x3b4] sm:$0xf]
    %v4986 = vld [vmem:[#allocation5 + $0x3b8] sm:$0xff]
    %v4987 = vld [vmem:[#allocation5 + $0x3c0] sm:$0xff]
    %v4988 = vld [vmem:[#allocation5 + $0x3c8] sm:$0xff]
    %v4989 = vld [vmem:[#allocation5 + $0x3d0] sm:$0xf]
    %v4990 = vld [vmem:[#allocation5 + $0x3d4] sm:$0xff]
    %v4991 = vld [vmem:[#allocation5 + $0x3dc] sm:$0xff]
    %v4992 = vld [vmem:[#allocation5 + $0x3e4] sm:$0xff]
    %v4993 = vld [vmem:[#allocation5 + $0x3ec] sm:$0xf]
    %v4994 = vld [vmem:[#allocation5 + $0x3f0] sm:$0xff]
    %v4995 = vld [vmem:[#allocation5 + $0x3f8] sm:$0xff]
    %v4996 = vld [vmem:[#allocation5 + $0x400] sm:$0xff]
    %v4997 = vld [vmem:[#allocation5 + $0x408] sm:$0xf]
    %v4998 = vld [vmem:[#allocation5 + $0x40c] sm:$0xff]
    %v4999 = vld [vmem:[#allocation5 + $0x414] sm:$0xff]
    %v5000 = vld [vmem:[#allocation5 + $0x41c] sm:$0xff]
    %v5001 = vld [vmem:[#allocation5 + $0x424] sm:$0xf]
    %v5002 = vld [vmem:[#allocation5 + $0x428] sm:$0xff]
    %v5003 = vld [vmem:[#allocation5 + $0x430] sm:$0xff]
    %v5004 = vld [vmem:[#allocation5 + $0x438] sm:$0xff]
    %v5005 = vld [vmem:[#allocation5 + $0x440] sm:$0xf]
    %v5006 = vld [vmem:[#allocation5 + $0x444] sm:$0xff]
    %v5007 = vld [vmem:[#allocation5 + $0x44c] sm:$0xff]
    %v5008 = vld [vmem:[#allocation5 + $0x454] sm:$0xff]
    %v5009 = vld [vmem:[#allocation5 + $0x45c] sm:$0xf]
    %v5010 = vld [vmem:[#allocation5 + $0x460] sm:$0xff]
    %v5011 = vld [vmem:[#allocation5 + $0x468] sm:$0xff]
    %v5012 = vld [vmem:[#allocation5 + $0x470] sm:$0xff]
    %v5013 = vld [vmem:[#allocation5 + $0x478] sm:$0xf]
    %v5014 = vld [vmem:[#allocation5 + $0x47c] sm:$0xff]
    %v5015 = vld [vmem:[#allocation5 + $0x484] sm:$0xff]
    %v5016 = vld [vmem:[#allocation5 + $0x48c] sm:$0xff]
    %v5017 = vld [vmem:[#allocation5 + $0x494] sm:$0xf]
    %v5018 = vld [vmem:[#allocation5 + $0x498] sm:$0xff]
    %v5019 = vld [vmem:[#allocation5 + $0x4a0] sm:$0xff]
    %v5020 = vld [vmem:[#allocation5 + $0x4a8] sm:$0xff]
    %v5021 = vld [vmem:[#allocation5 + $0x4b0] sm:$0xf]
    %v5022 = vld [vmem:[#allocation5 + $0x4b4] sm:$0xff]
    %v5023 = vld [vmem:[#allocation5 + $0x4bc] sm:$0xff]
    %v5024 = vld [vmem:[#allocation5 + $0x4c4] sm:$0xff]
    %v5025 = vld [vmem:[#allocation5 + $0x4cc] sm:$0xf]
    %v5026 = vld [vmem:[#allocation5 + $0x4d0] sm:$0xff]
    %v5027 = vld [vmem:[#allocation5 + $0x4d8] sm:$0xff]
    %v5028 = vld [vmem:[#allocation5 + $0x4e0] sm:$0xff]
    %v5029 = vld [vmem:[#allocation5 + $0x4e8] sm:$0xf]
    %v5030 = vld [vmem:[#allocation5 + $0x4ec] sm:$0xff]
    %v5031 = vld [vmem:[#allocation5 + $0x4f4] sm:$0xff]
    %v5032 = vld [vmem:[#allocation5 + $0x4fc] sm:$0xff]
    %v5033 = vld [vmem:[#allocation5 + $0x504] sm:$0xf]
    %v5034 = vld [vmem:[#allocation5 + $0x508] sm:$0xff]
    %v5035 = vld [vmem:[#allocation5 + $0x510] sm:$0xff]
    %v5036 = vld [vmem:[#allocation5 + $0x518] sm:$0xff]
    %v5037 = vld [vmem:[#allocation5 + $0x520] sm:$0xf]
    %v5038 = vld [vmem:[#allocation5 + $0x524] sm:$0xff]
    %v5039 = vld [vmem:[#allocation5 + $0x52c] sm:$0xff]
    %v5040 = vld [vmem:[#allocation5 + $0x534] sm:$0xff]
    %v5041 = vld [vmem:[#allocation5 + $0x53c] sm:$0xf]
    %v5042 = vld [vmem:[#allocation5 + $0x540] sm:$0xff]
    %v5043 = vld [vmem:[#allocation5 + $0x548] sm:$0xff]
    %v5044 = vld [vmem:[#allocation5 + $0x550] sm:$0xff]
    %v5045 = vld [vmem:[#allocation5 + $0x558] sm:$0xf]
    %v5046 = vld [vmem:[#allocation5 + $0x55c] sm:$0xff]
    %v5047 = vld [vmem:[#allocation5 + $0x564] sm:$0xff]
    %v5048 = vld [vmem:[#allocation5 + $0x56c] sm:$0xff]
    %v5049 = vld [vmem:[#allocation5 + $0x574] sm:$0xf]
    %v5050 = vld [vmem:[#allocation5 + $0x578] sm:$0xff]
    %v5051 = vld [vmem:[#allocation5 + $0x580] sm:$0xff]
    %v5052 = vld [vmem:[#allocation5 + $0x588] sm:$0xff]
    %v5053 = vld [vmem:[#allocation5 + $0x590] sm:$0xf]
    %v5054 = vld [vmem:[#allocation5 + $0x594] sm:$0xff]
    %v5055 = vld [vmem:[#allocation5 + $0x59c] sm:$0xff]
    %v5056 = vld [vmem:[#allocation5 + $0x5a4] sm:$0xff]
    %v5057 = vld [vmem:[#allocation5 + $0x5ac] sm:$0xf]
    %v5058 = vld [vmem:[#allocation5 + $0x5b0] sm:$0xff]
    %v5059 = vld [vmem:[#allocation5 + $0x5b8] sm:$0xff]
    %v5060 = vld [vmem:[#allocation5 + $0x5c0] sm:$0xff]
    %v5061 = vld [vmem:[#allocation5 + $0x5c8] sm:$0xf]
    %v5062 = vld [vmem:[#allocation5 + $0x5cc] sm:$0xff]
    %v5063 = vld [vmem:[#allocation5 + $0x5d4] sm:$0xff]
    %v5064 = vld [vmem:[#allocation5 + $0x5dc] sm:$0xff]
    %v5065 = vld [vmem:[#allocation5 + $0x5e4] sm:$0xf]
    %v5066 = vld [vmem:[#allocation5 + $0x5e8] sm:$0xff]
    %v5067 = vld [vmem:[#allocation5 + $0x5f0] sm:$0xff]
    %v5068 = vld [vmem:[#allocation5 + $0x5f8] sm:$0xff]
    %v5069 = vld [vmem:[#allocation5 + $0x600] sm:$0xf]
    %v5070 = vld [vmem:[#allocation5 + $0x604] sm:$0xff]
    %v5071 = vld [vmem:[#allocation5 + $0x60c] sm:$0xff]
    %v5072 = vld [vmem:[#allocation5 + $0x614] sm:$0xff]
    %v5073 = vld [vmem:[#allocation5 + $0x61c] sm:$0xf]
    %v5074 = vld [vmem:[#allocation5 + $0x620] sm:$0xff]
    %v5075 = vld [vmem:[#allocation5 + $0x628] sm:$0xff]
    %v5076 = vld [vmem:[#allocation5 + $0x630] sm:$0xff]
    %v5077 = vld [vmem:[#allocation5 + $0x638] sm:$0xf]
    %v5078 = vld [vmem:[#allocation5 + $0x63c] sm:$0xff]
    %v5079 = vld [vmem:[#allocation5 + $0x644] sm:$0xff]
    %v5080 = vld [vmem:[#allocation5 + $0x64c] sm:$0xff]
    %v5081 = vld [vmem:[#allocation5 + $0x654] sm:$0xf]
    %v5082 = vld [vmem:[#allocation5 + $0x658] sm:$0xff]
    %v5083 = vld [vmem:[#allocation5 + $0x660] sm:$0xff]
    %v5084 = vld [vmem:[#allocation5 + $0x668] sm:$0xff]
    %v5085 = vld [vmem:[#allocation5 + $0x670] sm:$0xf]
    %v5086 = vld [vmem:[#allocation5 + $0x674] sm:$0xff]
    %v5087 = vld [vmem:[#allocation5 + $0x67c] sm:$0xff]
    %v5088 = vld [vmem:[#allocation5 + $0x684] sm:$0xff]
    %v5089 = vld [vmem:[#allocation5 + $0x68c] sm:$0xf]
    %v5090 = vld [vmem:[#allocation5 + $0x690] sm:$0xff]
    %v5091 = vld [vmem:[#allocation5 + $0x698] sm:$0xff]
    %v5092 = vld [vmem:[#allocation5 + $0x6a0] sm:$0xff]
    %v5093 = vld [vmem:[#allocation5 + $0x6a8] sm:$0xf]
    %v5094 = vld [vmem:[#allocation5 + $0x6ac] sm:$0xff]
    %v5095 = vld [vmem:[#allocation5 + $0x6b4] sm:$0xff]
    %v5096 = vld [vmem:[#allocation5 + $0x6bc] sm:$0xff]
    %v5097 = vld [vmem:[#allocation5 + $0x6c4] sm:$0xf]
    %v5098 = vld [vmem:[#allocation5 + $0x6c8] sm:$0xff]
    %v5099 = vld [vmem:[#allocation5 + $0x6d0] sm:$0xff]
    %v5100 = vld [vmem:[#allocation5 + $0x6d8] sm:$0xff]
    %v5101 = vld [vmem:[#allocation5 + $0x6e0] sm:$0xf]
    %v5102 = vld [vmem:[#allocation5 + $0x6e4] sm:$0xff]
    %v5103 = vld [vmem:[#allocation5 + $0x6ec] sm:$0xff]
    %v5104 = vld [vmem:[#allocation5 + $0x6f4] sm:$0xff]
    %v5105 = vld [vmem:[#allocation5 + $0x6fc] sm:$0xf]
    %v5106 = vld [vmem:[#allocation5 + $0x700] sm:$0xff]
    %v5107 = vld [vmem:[#allocation5 + $0x708] sm:$0xff]
    %v5108 = vld [vmem:[#allocation5 + $0x710] sm:$0xff]
    %v5109 = vld [vmem:[#allocation5 + $0x718] sm:$0xf]
    %v5110 = vld [vmem:[#allocation5 + $0x71c] sm:$0xff]
    %v5111 = vld [vmem:[#allocation5 + $0x724] sm:$0xff]
    %v5112 = vld [vmem:[#allocation5 + $0x72c] sm:$0xff]
    %v5113 = vld [vmem:[#allocation5 + $0x734] sm:$0xf]
    %v5114 = vld [vmem:[#allocation5 + $0x738] sm:$0xff]
    %v5115 = vld [vmem:[#allocation5 + $0x740] sm:$0xff]
    %v5116 = vld [vmem:[#allocation5 + $0x748] sm:$0xff]
    %v5117 = vld [vmem:[#allocation5 + $0x750] sm:$0xf]
    %v5118 = vld [vmem:[#allocation5 + $0x754] sm:$0xff]
    %v5119 = vld [vmem:[#allocation5 + $0x75c] sm:$0xff]
    %v5120 = vld [vmem:[#allocation5 + $0x764] sm:$0xff]
    %v5121 = vld [vmem:[#allocation5 + $0x76c] sm:$0xf]
    %v5122 = vld [vmem:[#allocation5 + $0x770] sm:$0xff]
    %v5123 = vld [vmem:[#allocation5 + $0x778] sm:$0xff]
    %v5124 = vld [vmem:[#allocation5 + $0x780] sm:$0xff]
    %v5125 = vld [vmem:[#allocation5 + $0x788] sm:$0xf]
    %v5126 = vld [vmem:[#allocation5 + $0x78c] sm:$0xff]
    %v5127 = vld [vmem:[#allocation5 + $0x794] sm:$0xff]
    %v5128 = vld [vmem:[#allocation5 + $0x79c] sm:$0xff]
    %v5129 = vld [vmem:[#allocation5 + $0x7a4] sm:$0xf]
    %v5130 = vld [vmem:[#allocation5 + $0x7a8] sm:$0xff]
    %v5131 = vld [vmem:[#allocation5 + $0x7b0] sm:$0xff]
    %v5132 = vld [vmem:[#allocation5 + $0x7b8] sm:$0xff]
    %v5133 = vld [vmem:[#allocation5 + $0x7c0] sm:$0xf]
    %v5134 = vld [vmem:[#allocation5 + $0x7c4] sm:$0xff]
    %v5135 = vld [vmem:[#allocation5 + $0x7cc] sm:$0xff]
    %v5136 = vld [vmem:[#allocation5 + $0x7d4] sm:$0xff]
    %v5137 = vld [vmem:[#allocation5 + $0x7dc] sm:$0xf]
    %v5138 = vld [vmem:[#allocation5 + $0x7e0] sm:$0xff]
    %v5139 = vld [vmem:[#allocation5 + $0x7e8] sm:$0xff]
    %v5140 = vld [vmem:[#allocation5 + $0x7f0] sm:$0xff]
    %v5141 = vld [vmem:[#allocation5 + $0x7f8] sm:$0xf]
    %v5142 = vld [vmem:[#allocation5 + $0x7fc] sm:$0xff]
    %v5143 = vld [vmem:[#allocation5 + $0x804] sm:$0xff]
    %v5144 = vld [vmem:[#allocation5 + $0x80c] sm:$0xff]
    %v5145 = vld [vmem:[#allocation5 + $0x814] sm:$0xf]
    %v5146 = vld [vmem:[#allocation5 + $0x818] sm:$0xff]
    %v5147 = vld [vmem:[#allocation5 + $0x820] sm:$0xff]
    %v5148 = vld [vmem:[#allocation5 + $0x828] sm:$0xff]
    %v5149 = vld [vmem:[#allocation5 + $0x830] sm:$0xf]
    %v5150 = vld [vmem:[#allocation5 + $0x834] sm:$0xff]
    %v5151 = vld [vmem:[#allocation5 + $0x83c] sm:$0xff]
    %v5152 = vld [vmem:[#allocation5 + $0x844] sm:$0xff]
    %v5153 = vld [vmem:[#allocation5 + $0x84c] sm:$0xf]
    %v5154 = vld [vmem:[#allocation5 + $0x850] sm:$0xff]
    %v5155 = vld [vmem:[#allocation5 + $0x858] sm:$0xff]
    %v5156 = vld [vmem:[#allocation5 + $0x860] sm:$0xff]
    %v5157 = vld [vmem:[#allocation5 + $0x868] sm:$0xf]
    %v5158 = vld [vmem:[#allocation5 + $0x86c] sm:$0xff]
    %v5159 = vld [vmem:[#allocation5 + $0x874] sm:$0xff]
    %v5160 = vld [vmem:[#allocation5 + $0x87c] sm:$0xff]
    %v5161 = vld [vmem:[#allocation5 + $0x884] sm:$0xf]
    %v5162 = vld [vmem:[#allocation5 + $0x888] sm:$0xff]
    %v5163 = vld [vmem:[#allocation5 + $0x890] sm:$0xff]
    %v5164 = vld [vmem:[#allocation5 + $0x898] sm:$0xff]
    %v5165 = vld [vmem:[#allocation5 + $0x8a0] sm:$0xf]
    %v5166 = vld [vmem:[#allocation5 + $0x8a4] sm:$0xff]
    %v5167 = vld [vmem:[#allocation5 + $0x8ac] sm:$0xff]
    %v5168 = vld [vmem:[#allocation5 + $0x8b4] sm:$0xff]
    %v5169 = vld [vmem:[#allocation5 + $0x8bc] sm:$0xf]
    %v5170 = vld [vmem:[#allocation5 + $0x8c0] sm:$0xff]
    %v5171 = vld [vmem:[#allocation5 + $0x8c8] sm:$0xff]
    %v5172 = vld [vmem:[#allocation5 + $0x8d0] sm:$0xff]
    %v5173 = vld [vmem:[#allocation5 + $0x8d8] sm:$0xf]
    %v5174 = vld [vmem:[#allocation5 + $0x8dc] sm:$0xff]
    %v5175 = vld [vmem:[#allocation5 + $0x8e4] sm:$0xff]
    %v5176 = vld [vmem:[#allocation5 + $0x8ec] sm:$0xff]
    %v5177 = vld [vmem:[#allocation5 + $0x8f4] sm:$0xf]
    %v5178 = vld [vmem:[#allocation5 + $0x8f8] sm:$0xff]
    %v5179 = vld [vmem:[#allocation5 + $0x900] sm:$0xff]
    %v5180 = vld [vmem:[#allocation5 + $0x908] sm:$0xff]
    %v5181 = vld [vmem:[#allocation5 + $0x910] sm:$0xf]
    %v5182 = vld [vmem:[#allocation5 + $0x914] sm:$0xff]
    %v5183 = vld [vmem:[#allocation5 + $0x91c] sm:$0xff]
    %v5184 = vld [vmem:[#allocation5 + $0x924] sm:$0xff]
    %v5185 = vld [vmem:[#allocation5 + $0x92c] sm:$0xf]
    %v5186 = vld [vmem:[#allocation5 + $0x930] sm:$0xff]
    %v5187 = vld [vmem:[#allocation5 + $0x938] sm:$0xff]
    %v5188 = vld [vmem:[#allocation5 + $0x940] sm:$0xff]
    %v5189 = vld [vmem:[#allocation5 + $0x948] sm:$0xf]
    %v5190 = vld [vmem:[#allocation5 + $0x94c] sm:$0xff]
    %v5191 = vld [vmem:[#allocation5 + $0x954] sm:$0xff]
    %v5192 = vld [vmem:[#allocation5 + $0x95c] sm:$0xff]
    %v5193 = vld [vmem:[#allocation5 + $0x964] sm:$0xf]
    %v5194 = vld [vmem:[#allocation5 + $0x968] sm:$0xff]
    %v5195 = vld [vmem:[#allocation5 + $0x970] sm:$0xff]
    %v5196 = vld [vmem:[#allocation5 + $0x978] sm:$0xff]
    %v5197 = vld [vmem:[#allocation5 + $0x980] sm:$0xf]
    %v5198 = vld [vmem:[#allocation5 + $0x984] sm:$0xff]
    %v5199 = vld [vmem:[#allocation5 + $0x98c] sm:$0xff]
    %v5200 = vld [vmem:[#allocation5 + $0x994] sm:$0xff]
    %v5201 = vld [vmem:[#allocation5 + $0x99c] sm:$0xf]
    %v5202 = vld [vmem:[#allocation5 + $0x9a0] sm:$0xff]
    %v5203 = vld [vmem:[#allocation5 + $0x9a8] sm:$0xff]
    %v5204 = vld [vmem:[#allocation5 + $0x9b0] sm:$0xff]
    %v5205 = vld [vmem:[#allocation5 + $0x9b8] sm:$0xf]
    %v5206 = vld [vmem:[#allocation5 + $0x9bc] sm:$0xff]
    %v5207 = vld [vmem:[#allocation5 + $0x9c4] sm:$0xff]
    %v5208 = vld [vmem:[#allocation5 + $0x9cc] sm:$0xff]
    %v5209 = vld [vmem:[#allocation5 + $0x9d4] sm:$0xf]
    %v5210 = vld [vmem:[#allocation5 + $0x9d8] sm:$0xff]
    %v5211 = vld [vmem:[#allocation5 + $0x9e0] sm:$0xff]
    %v5212 = vld [vmem:[#allocation5 + $0x9e8] sm:$0xff]
    %v5213 = vld [vmem:[#allocation5 + $0x9f0] sm:$0xf]
    %v5214 = vld [vmem:[#allocation5 + $0x9f4] sm:$0xff]
    %v5215 = vld [vmem:[#allocation5 + $0x9fc] sm:$0xff]
    %v5216 = vld [vmem:[#allocation5 + $0xa04] sm:$0xff]
    %v5217 = vld [vmem:[#allocation5 + $0xa0c] sm:$0xf]
    %v5218 = vld [vmem:[#allocation5 + $0xa10] sm:$0xff]
    %v5219 = vld [vmem:[#allocation5 + $0xa18] sm:$0xff]
    %v5220 = vld [vmem:[#allocation5 + $0xa20] sm:$0xff]
    %v5221 = vld [vmem:[#allocation5 + $0xa28] sm:$0xf]
    %v5222 = vld [vmem:[#allocation5 + $0xa2c] sm:$0xff]
    %v5223 = vld [vmem:[#allocation5 + $0xa34] sm:$0xff]
    %v5224 = vld [vmem:[#allocation5 + $0xa3c] sm:$0xff]
    %v5225 = vld [vmem:[#allocation5 + $0xa44] sm:$0xf]
    %v5226 = vld [vmem:[#allocation5 + $0xa48] sm:$0xff]
    %v5227 = vld [vmem:[#allocation5 + $0xa50] sm:$0xff]
    %v5228 = vld [vmem:[#allocation5 + $0xa58] sm:$0xff]
    %v5229 = vld [vmem:[#allocation5 + $0xa60] sm:$0xf]
    %v5230 = vld [vmem:[#allocation5 + $0xa64] sm:$0xff]
    %v5231 = vld [vmem:[#allocation5 + $0xa6c] sm:$0xff]
    %v5232 = vld [vmem:[#allocation5 + $0xa74] sm:$0xff]
    %v5233 = vld [vmem:[#allocation5 + $0xa7c] sm:$0xf]
    %v5234 = vld [vmem:[#allocation5 + $0xa80] sm:$0xff]
    %v5235 = vld [vmem:[#allocation5 + $0xa88] sm:$0xff]
    %v5236 = vld [vmem:[#allocation5 + $0xa90] sm:$0xff]
    %v5237 = vld [vmem:[#allocation5 + $0xa98] sm:$0xf]
    %v5238 = vld [vmem:[#allocation5 + $0xa9c] sm:$0xff]
    %v5239 = vld [vmem:[#allocation5 + $0xaa4] sm:$0xff]
    %v5240 = vld [vmem:[#allocation5 + $0xaac] sm:$0xff]
    %v5241 = vld [vmem:[#allocation5 + $0xab4] sm:$0xf]
    %v5242 = vld [vmem:[#allocation5 + $0xab8] sm:$0xff]
    %v5243 = vld [vmem:[#allocation5 + $0xac0] sm:$0xff]
    %v5244 = vld [vmem:[#allocation5 + $0xac8] sm:$0xff]
    %v5245 = vld [vmem:[#allocation5 + $0xad0] sm:$0xf]
    %v5246 = vld [vmem:[#allocation5 + $0xad4] sm:$0xff]
    %v5247 = vld [vmem:[#allocation5 + $0xadc] sm:$0xff]
    %v5248 = vld [vmem:[#allocation5 + $0xae4] sm:$0xff]
    %v5249 = vld [vmem:[#allocation5 + $0xaec] sm:$0xf]
    %v5250 = vld [vmem:[#allocation5 + $0xaf0] sm:$0xff]
    %v5251 = vld [vmem:[#allocation5 + $0xaf8] sm:$0xff]
    %v5252 = vld [vmem:[#allocation5 + $0xb00] sm:$0xff]
    %v5253 = vld [vmem:[#allocation5 + $0xb08] sm:$0xf]
    %v5254 = vld [vmem:[#allocation5 + $0xb0c] sm:$0xff]
    %v5255 = vld [vmem:[#allocation5 + $0xb14] sm:$0xff]
    %v5256 = vld [vmem:[#allocation5 + $0xb1c] sm:$0xff]
    %v5257 = vld [vmem:[#allocation5 + $0xb24] sm:$0xf]
    %v5258 = vld [vmem:[#allocation5 + $0xb28] sm:$0xff]
    %v5259 = vld [vmem:[#allocation5 + $0xb30] sm:$0xff]
    %v5260 = vld [vmem:[#allocation5 + $0xb38] sm:$0xff]
    %v5261 = vld [vmem:[#allocation5 + $0xb40] sm:$0xf]
    %v5262 = vld [vmem:[#allocation5 + $0xb44] sm:$0xff]
    %v5263 = vld [vmem:[#allocation5 + $0xb4c] sm:$0xff]
    %v5264 = vld [vmem:[#allocation5 + $0xb54] sm:$0xff]
    %v5265 = vld [vmem:[#allocation5 + $0xb5c] sm:$0xf]
    %v5266 = vld [vmem:[#allocation5 + $0xb60] sm:$0xff]
    %v5267 = vld [vmem:[#allocation5 + $0xb68] sm:$0xff]
    %v5268 = vld [vmem:[#allocation5 + $0xb70] sm:$0xff]
    %v5269 = vld [vmem:[#allocation5 + $0xb78] sm:$0xf]
    %v5270 = vld [vmem:[#allocation5 + $0xb7c] sm:$0xff]
    %v5271 = vld [vmem:[#allocation5 + $0xb84] sm:$0xff]
    %v5272 = vld [vmem:[#allocation5 + $0xb8c] sm:$0xff]
    %v5273 = vld [vmem:[#allocation5 + $0xb94] sm:$0xf]
    %v5274 = vld [vmem:[#allocation5 + $0xb98] sm:$0xff]
    %v5275 = vld [vmem:[#allocation5 + $0xba0] sm:$0xff]
    %v5276 = vld [vmem:[#allocation5 + $0xba8] sm:$0xff]
    %v5277 = vld [vmem:[#allocation5 + $0xbb0] sm:$0xf]
    %v5278 = vld [vmem:[#allocation5 + $0xbb4] sm:$0xff]
    %v5279 = vld [vmem:[#allocation5 + $0xbbc] sm:$0xff]
    %v5280 = vld [vmem:[#allocation5 + $0xbc4] sm:$0xff]
    %v5281 = vld [vmem:[#allocation5 + $0xbcc] sm:$0xf]
    %v5282 = vld [vmem:[#allocation5 + $0xbd0] sm:$0xff]
    %v5283 = vld [vmem:[#allocation5 + $0xbd8] sm:$0xff]
    %v5284 = vld [vmem:[#allocation5 + $0xbe0] sm:$0xff]
    %v5285 = vld [vmem:[#allocation5 + $0xbe8] sm:$0xf]
    %v5286 = vld [vmem:[#allocation5 + $0xbec] sm:$0xff]
    %v5287 = vld [vmem:[#allocation5 + $0xbf4] sm:$0xff]
    %v5288 = vld [vmem:[#allocation5 + $0xbfc] sm:$0xff]
    %v5289 = vld [vmem:[#allocation5 + $0xc04] sm:$0xf]
    %v5290 = vld [vmem:[#allocation5 + $0xc08] sm:$0xff]
    %v5291 = vld [vmem:[#allocation5 + $0xc10] sm:$0xff]
    %v5292 = vld [vmem:[#allocation5 + $0xc18] sm:$0xff]
    %v5293 = vld [vmem:[#allocation5 + $0xc20] sm:$0xf]
    %v5294 = vld [vmem:[#allocation5 + $0xc24] sm:$0xff]
    %v5295 = vld [vmem:[#allocation5 + $0xc2c] sm:$0xff]
    %v5296 = vld [vmem:[#allocation5 + $0xc34] sm:$0xff]
    %v5297 = vld [vmem:[#allocation5 + $0xc3c] sm:$0xf]
    %v5298 = vld [vmem:[#allocation5 + $0xc40] sm:$0xff]
    %v5299 = vld [vmem:[#allocation5 + $0xc48] sm:$0xff]
    %v5300 = vld [vmem:[#allocation5 + $0xc50] sm:$0xff]
    %v5301 = vld [vmem:[#allocation5 + $0xc58] sm:$0xf]
    %v5302 = vld [vmem:[#allocation5 + $0xc5c] sm:$0xff]
    %v5303 = vld [vmem:[#allocation5 + $0xc64] sm:$0xff]
    %v5304 = vld [vmem:[#allocation5 + $0xc6c] sm:$0xff]
    %v5305 = vld [vmem:[#allocation5 + $0xc74] sm:$0xf]
    %v5306 = vld [vmem:[#allocation5 + $0xc78] sm:$0xff]
    %v5307 = vld [vmem:[#allocation5 + $0xc80] sm:$0xff]
    %v5308 = vld [vmem:[#allocation5 + $0xc88] sm:$0xff]
    %v5309 = vld [vmem:[#allocation5 + $0xc90] sm:$0xf]
    %v5310 = vld [vmem:[#allocation5 + $0xc94] sm:$0xff]
    %v5311 = vld [vmem:[#allocation5 + $0xc9c] sm:$0xff]
    %v5312 = vld [vmem:[#allocation5 + $0xca4] sm:$0xff]
    %v5313 = vld [vmem:[#allocation5 + $0xcac] sm:$0xf]
    %v5314 = vld [vmem:[#allocation5 + $0xcb0] sm:$0xff]
    %v5315 = vld [vmem:[#allocation5 + $0xcb8] sm:$0xff]
    %v5316 = vld [vmem:[#allocation5 + $0xcc0] sm:$0xff]
    %v5317 = vld [vmem:[#allocation5 + $0xcc8] sm:$0xf]
    %v5318 = vld [vmem:[#allocation5 + $0xccc] sm:$0xff]
    %v5319 = vld [vmem:[#allocation5 + $0xcd4] sm:$0xff]
    %v5320 = vld [vmem:[#allocation5 + $0xcdc] sm:$0xff]
    %v5321 = vld [vmem:[#allocation5 + $0xce4] sm:$0xf]
    %v5322 = vld [vmem:[#allocation5 + $0xce8] sm:$0xff]
    %v5323 = vld [vmem:[#allocation5 + $0xcf0] sm:$0xff]
    %v5324 = vld [vmem:[#allocation5 + $0xcf8] sm:$0xff]
    %v5325 = vld [vmem:[#allocation5 + $0xd00] sm:$0xf]
    %v5326 = vld [vmem:[#allocation5 + $0xd04] sm:$0xff]
    %v5327 = vld [vmem:[#allocation5 + $0xd0c] sm:$0xff]
    %v5328 = vld [vmem:[#allocation5 + $0xd14] sm:$0xff]
    %v5329 = vld [vmem:[#allocation5 + $0xd1c] sm:$0xf]
    %v5330 = vld [vmem:[#allocation5 + $0xd20] sm:$0xff]
    %v5331 = vld [vmem:[#allocation5 + $0xd28] sm:$0xff]
    %v5332 = vld [vmem:[#allocation5 + $0xd30] sm:$0xff]
    %v5333 = vld [vmem:[#allocation5 + $0xd38] sm:$0xf]
    %v5334 = vld [vmem:[#allocation5 + $0xd3c] sm:$0xff]
    %v5335 = vld [vmem:[#allocation5 + $0xd44] sm:$0xff]
    %v5336 = vld [vmem:[#allocation5 + $0xd4c] sm:$0xff]
    %v5337 = vld [vmem:[#allocation5 + $0xd54] sm:$0xf]
    %v5338 = vld [vmem:[#allocation5 + $0xd58] sm:$0xff]
    %v5339 = vld [vmem:[#allocation5 + $0xd60] sm:$0xff]
    %v5340 = vld [vmem:[#allocation5 + $0xd68] sm:$0xff]
    %v5341 = vld [vmem:[#allocation5 + $0xd70] sm:$0xf]
    %v5342 = vld [vmem:[#allocation5 + $0xd74] sm:$0xff]
    %v5343 = vld [vmem:[#allocation5 + $0xd7c] sm:$0xff]
    %v5344 = vld [vmem:[#allocation5 + $0xd84] sm:$0xff]
    %v5345 = vld [vmem:[#allocation5 + $0xd8c] sm:$0xf]
    %v5346 = vld [vmem:[#allocation5 + $0xd90] sm:$0xff]
    %v5347 = vld [vmem:[#allocation5 + $0xd98] sm:$0xff]
    %v5348 = vld [vmem:[#allocation5 + $0xda0] sm:$0xff]
    %v5349 = vld [vmem:[#allocation5 + $0xda8] sm:$0xf]
    %v5350 = vld [vmem:[#allocation5 + $0xdac] sm:$0xff]
    %v5351 = vld [vmem:[#allocation5 + $0xdb4] sm:$0xff]
    %v5352 = vld [vmem:[#allocation5 + $0xdbc] sm:$0xff]
    %v5353 = vld [vmem:[#allocation5 + $0xdc4] sm:$0xf]
    %v5354 = vld [vmem:[#allocation5 + $0xdc8] sm:$0xff]
    %v5355 = vld [vmem:[#allocation5 + $0xdd0] sm:$0xff]
    %v5356 = vld [vmem:[#allocation5 + $0xdd8] sm:$0xff]
    %v5357 = vld [vmem:[#allocation5 + $0xde0] sm:$0xf]
    %v5358 = vld [vmem:[#allocation5 + $0xde4] sm:$0xff]
    %v5359 = vld [vmem:[#allocation5 + $0xdec] sm:$0xff]
    %v5360 = vld [vmem:[#allocation5 + $0xdf4] sm:$0xff]
    %v5361 = vld [vmem:[#allocation5 + $0xdfc] sm:$0xf]
    %v5362 = vpack.c.bf16 %v4838, %v4838
    %v5363 = vpack.c.bf16 %v4839, %v4839
    %v5364 = vpack.c.bf16 %v4840, %v4840
    %v5365 = vpack.c.bf16 %v4841, %v4841
    %v5366 = vpack.c.bf16 %v4842, %v4842
    %v5367 = vpack.c.bf16 %v4843, %v4843
    %v5368 = vpack.c.bf16 %v4844, %v4844
    %v5369 = vpack.c.bf16 %v4845, %v4845
    %v5370 = vld [vmem:[%s2 + $0x1d] sm:$0x7f]
    %v5372 = vlaneseq
    %v5373 = vshrl.u32 %v5372, 7
    %v5374 = vsub.s32 0, %v5373
    %v5375 = vrot.slane %v5370, %v5374
    %v5376 = vlaneseq
    %v5377 = vshrl.u32 %v5376, 7
    %v5378 = vsub.s32 1, %v5377
    %v5379 = vrot.slane %v5370, %v5378
    %v5380 = vlaneseq
    %v5381 = vshrl.u32 %v5380, 7
    %v5382 = vsub.s32 2, %v5381
    %v5383 = vrot.slane %v5370, %v5382
    %v5384 = vlaneseq
    %v5385 = vshrl.u32 %v5384, 7
    %v5386 = vsub.s32 3, %v5385
    %v5387 = vrot.slane %v5370, %v5386
    %v5388 = vlaneseq
    %v5389 = vshrl.u32 %v5388, 7
    %v5390 = vsub.s32 4, %v5389
    %v5391 = vrot.slane %v5370, %v5390
    %v5392 = vlaneseq
    %v5393 = vshrl.u32 %v5392, 7
    %v5394 = vsub.s32 5, %v5393
    %v5395 = vrot.slane %v5370, %v5394
    %v5396 = vlaneseq
    %v5397 = vshrl.u32 %v5396, 7
    %v5398 = vsub.s32 6, %v5397
    %v5399 = vrot.slane %v5370, %v5398
    %v5919 = vunpack.c.l.b16 %v4850
    %v5920 = vunpack.c.h.b16 %v4850
    %v5921 = vunpack.c.l.b16 %v4851
    %v5922 = vunpack.c.h.b16 %v4851
    %v5923 = vunpack.c.l.b16 %v4852
    %v5924 = vunpack.c.h.b16 %v4852
    %v5925 = vunpack.c.l.b16 %v4853
    %v5926 = vunpack.c.l.b16 %v4854
    %v5927 = vunpack.c.h.b16 %v4854
    %v5928 = vunpack.c.l.b16 %v4855
    %v5929 = vunpack.c.h.b16 %v4855
    %v5930 = vunpack.c.l.b16 %v4856
    %v5931 = vunpack.c.h.b16 %v4856
    %v5932 = vunpack.c.l.b16 %v4857
    %v5933 = vunpack.c.l.b16 %v4858
    %v5934 = vunpack.c.h.b16 %v4858
    %v5935 = vunpack.c.l.b16 %v4859
    %v5936 = vunpack.c.h.b16 %v4859
    %v5937 = vunpack.c.l.b16 %v4860
    %v5938 = vunpack.c.h.b16 %v4860
    %v5939 = vunpack.c.l.b16 %v4861
    %v5940 = vunpack.c.l.b16 %v4862
    %v5941 = vunpack.c.h.b16 %v4862
    %v5942 = vunpack.c.l.b16 %v4863
    %v5943 = vunpack.c.h.b16 %v4863
    %v5944 = vunpack.c.l.b16 %v4864
    %v5945 = vunpack.c.h.b16 %v4864
    %v5946 = vunpack.c.l.b16 %v4865
    %v5947 = vunpack.c.l.b16 %v4866
    %v5948 = vunpack.c.h.b16 %v4866
    %v5949 = vunpack.c.l.b16 %v4867
    %v5950 = vunpack.c.h.b16 %v4867
    %v5951 = vunpack.c.l.b16 %v4868
    %v5952 = vunpack.c.h.b16 %v4868
    %v5953 = vunpack.c.l.b16 %v4869
    %v5954 = vunpack.c.l.b16 %v4870
    %v5955 = vunpack.c.h.b16 %v4870
    %v5956 = vunpack.c.l.b16 %v4871
    %v5957 = vunpack.c.h.b16 %v4871
    %v5958 = vunpack.c.l.b16 %v4872
    %v5959 = vunpack.c.h.b16 %v4872
    %v5960 = vunpack.c.l.b16 %v4873
    %v5961 = vunpack.c.l.b16 %v4874
    %v5962 = vunpack.c.h.b16 %v4874
    %v5963 = vunpack.c.l.b16 %v4875
    %v5964 = vunpack.c.h.b16 %v4875
    %v5965 = vunpack.c.l.b16 %v4876
    %v5966 = vunpack.c.h.b16 %v4876
    %v5967 = vunpack.c.l.b16 %v4877
    %v5968 = vunpack.c.l.b16 %v4878
    %v5969 = vunpack.c.h.b16 %v4878
    %v5970 = vunpack.c.l.b16 %v4879
    %v5971 = vunpack.c.h.b16 %v4879
    %v5972 = vunpack.c.l.b16 %v4880
    %v5973 = vunpack.c.h.b16 %v4880
    %v5974 = vunpack.c.l.b16 %v4881
    %v5975 = vunpack.c.l.b16 %v4882
    %v5976 = vunpack.c.h.b16 %v4882
    %v5977 = vunpack.c.l.b16 %v4883
    %v5978 = vunpack.c.h.b16 %v4883
    %v5979 = vunpack.c.l.b16 %v4884
    %v5980 = vunpack.c.h.b16 %v4884
    %v5981 = vunpack.c.l.b16 %v4885
    %v5982 = vunpack.c.l.b16 %v4886
    %v5983 = vunpack.c.h.b16 %v4886
    %v5984 = vunpack.c.l.b16 %v4887
    %v5985 = vunpack.c.h.b16 %v4887
    %v5986 = vunpack.c.l.b16 %v4888
    %v5987 = vunpack.c.h.b16 %v4888
    %v5988 = vunpack.c.l.b16 %v4889
    %v5989 = vunpack.c.l.b16 %v4890
    %v5990 = vunpack.c.h.b16 %v4890
    %v5991 = vunpack.c.l.b16 %v4891
    %v5992 = vunpack.c.h.b16 %v4891
    %v5993 = vunpack.c.l.b16 %v4892
    %v5994 = vunpack.c.h.b16 %v4892
    %v5995 = vunpack.c.l.b16 %v4893
    %v5996 = vunpack.c.l.b16 %v4894
    %v5997 = vunpack.c.h.b16 %v4894
    %v5998 = vunpack.c.l.b16 %v4895
    %v5999 = vunpack.c.h.b16 %v4895
    %v6000 = vunpack.c.l.b16 %v4896
    %v6001 = vunpack.c.h.b16 %v4896
    %v6002 = vunpack.c.l.b16 %v4897
    %v6003 = vunpack.c.l.b16 %v4898
    %v6004 = vunpack.c.h.b16 %v4898
    %v6005 = vunpack.c.l.b16 %v4899
    %v6006 = vunpack.c.h.b16 %v4899
    %v6007 = vunpack.c.l.b16 %v4900
    %v6008 = vunpack.c.h.b16 %v4900
    %v6009 = vunpack.c.l.b16 %v4901
    %v6010 = vunpack.c.l.b16 %v4902
    %v6011 = vunpack.c.h.b16 %v4902
    %v6012 = vunpack.c.l.b16 %v4903
    %v6013 = vunpack.c.h.b16 %v4903
    %v6014 = vunpack.c.l.b16 %v4904
    %v6015 = vunpack.c.h.b16 %v4904
    %v6016 = vunpack.c.l.b16 %v4905
    %v6017 = vunpack.c.l.b16 %v4906
    %v6018 = vunpack.c.h.b16 %v4906
    %v6019 = vunpack.c.l.b16 %v4907
    %v6020 = vunpack.c.h.b16 %v4907
    %v6021 = vunpack.c.l.b16 %v4908
    %v6022 = vunpack.c.h.b16 %v4908
    %v6023 = vunpack.c.l.b16 %v4909
    %v6024 = vunpack.c.l.b16 %v4910
    %v6025 = vunpack.c.h.b16 %v4910
    %v6026 = vunpack.c.l.b16 %v4911
    %v6027 = vunpack.c.h.b16 %v4911
    %v6028 = vunpack.c.l.b16 %v4912
    %v6029 = vunpack.c.h.b16 %v4912
    %v6030 = vunpack.c.l.b16 %v4913
    %v6031 = vunpack.c.l.b16 %v4914
    %v6032 = vunpack.c.h.b16 %v4914
    %v6033 = vunpack.c.l.b16 %v4915
    %v6034 = vunpack.c.h.b16 %v4915
    %v6035 = vunpack.c.l.b16 %v4916
    %v6036 = vunpack.c.h.b16 %v4916
    %v6037 = vunpack.c.l.b16 %v4917
    %v6038 = vunpack.c.l.b16 %v4918
    %v6039 = vunpack.c.h.b16 %v4918
    %v6040 = vunpack.c.l.b16 %v4919
    %v6041 = vunpack.c.h.b16 %v4919
    %v6042 = vunpack.c.l.b16 %v4920
    %v6043 = vunpack.c.h.b16 %v4920
    %v6044 = vunpack.c.l.b16 %v4921
    %v6045 = vunpack.c.l.b16 %v4922
    %v6046 = vunpack.c.h.b16 %v4922
    %v6047 = vunpack.c.l.b16 %v4923
    %v6048 = vunpack.c.h.b16 %v4923
    %v6049 = vunpack.c.l.b16 %v4924
    %v6050 = vunpack.c.h.b16 %v4924
    %v6051 = vunpack.c.l.b16 %v4925
    %v6052 = vunpack.c.l.b16 %v4926
    %v6053 = vunpack.c.h.b16 %v4926
    %v6054 = vunpack.c.l.b16 %v4927
    %v6055 = vunpack.c.h.b16 %v4927
    %v6056 = vunpack.c.l.b16 %v4928
    %v6057 = vunpack.c.h.b16 %v4928
    %v6058 = vunpack.c.l.b16 %v4929
    %v6059 = vunpack.c.l.b16 %v4930
    %v6060 = vunpack.c.h.b16 %v4930
    %v6061 = vunpack.c.l.b16 %v4931
    %v6062 = vunpack.c.h.b16 %v4931
    %v6063 = vunpack.c.l.b16 %v4932
    %v6064 = vunpack.c.h.b16 %v4932
    %v6065 = vunpack.c.l.b16 %v4933
    %v6066 = vunpack.c.l.b16 %v4934
    %v6067 = vunpack.c.h.b16 %v4934
    %v6068 = vunpack.c.l.b16 %v4935
    %v6069 = vunpack.c.h.b16 %v4935
    %v6070 = vunpack.c.l.b16 %v4936
    %v6071 = vunpack.c.h.b16 %v4936
    %v6072 = vunpack.c.l.b16 %v4937
    %v6073 = vunpack.c.l.b16 %v4938
    %v6074 = vunpack.c.h.b16 %v4938
    %v6075 = vunpack.c.l.b16 %v4939
    %v6076 = vunpack.c.h.b16 %v4939
    %v6077 = vunpack.c.l.b16 %v4940
    %v6078 = vunpack.c.h.b16 %v4940
    %v6079 = vunpack.c.l.b16 %v4941
    %v6080 = vunpack.c.l.b16 %v4942
    %v6081 = vunpack.c.h.b16 %v4942
    %v6082 = vunpack.c.l.b16 %v4943
    %v6083 = vunpack.c.h.b16 %v4943
    %v6084 = vunpack.c.l.b16 %v4944
    %v6085 = vunpack.c.h.b16 %v4944
    %v6086 = vunpack.c.l.b16 %v4945
    %v6087 = vunpack.c.l.b16 %v4946
    %v6088 = vunpack.c.h.b16 %v4946
    %v6089 = vunpack.c.l.b16 %v4947
    %v6090 = vunpack.c.h.b16 %v4947
    %v6091 = vunpack.c.l.b16 %v4948
    %v6092 = vunpack.c.h.b16 %v4948
    %v6093 = vunpack.c.l.b16 %v4949
    %v6094 = vunpack.c.l.b16 %v4950
    %v6095 = vunpack.c.h.b16 %v4950
    %v6096 = vunpack.c.l.b16 %v4951
    %v6097 = vunpack.c.h.b16 %v4951
    %v6098 = vunpack.c.l.b16 %v4952
    %v6099 = vunpack.c.h.b16 %v4952
    %v6100 = vunpack.c.l.b16 %v4953
    %v6101 = vunpack.c.l.b16 %v4954
    %v6102 = vunpack.c.h.b16 %v4954
    %v6103 = vunpack.c.l.b16 %v4955
    %v6104 = vunpack.c.h.b16 %v4955
    %v6105 = vunpack.c.l.b16 %v4956
    %v6106 = vunpack.c.h.b16 %v4956
    %v6107 = vunpack.c.l.b16 %v4957
    %v6108 = vunpack.c.l.b16 %v4958
    %v6109 = vunpack.c.h.b16 %v4958
    %v6110 = vunpack.c.l.b16 %v4959
    %v6111 = vunpack.c.h.b16 %v4959
    %v6112 = vunpack.c.l.b16 %v4960
    %v6113 = vunpack.c.h.b16 %v4960
    %v6114 = vunpack.c.l.b16 %v4961
    %v6115 = vunpack.c.l.b16 %v4962
    %v6116 = vunpack.c.h.b16 %v4962
    %v6117 = vunpack.c.l.b16 %v4963
    %v6118 = vunpack.c.h.b16 %v4963
    %v6119 = vunpack.c.l.b16 %v4964
    %v6120 = vunpack.c.h.b16 %v4964
    %v6121 = vunpack.c.l.b16 %v4965
    %v6122 = vunpack.c.l.b16 %v4966
    %v6123 = vunpack.c.h.b16 %v4966
    %v6124 = vunpack.c.l.b16 %v4967
    %v6125 = vunpack.c.h.b16 %v4967
    %v6126 = vunpack.c.l.b16 %v4968
    %v6127 = vunpack.c.h.b16 %v4968
    %v6128 = vunpack.c.l.b16 %v4969
    %v6129 = vunpack.c.l.b16 %v4970
    %v6130 = vunpack.c.h.b16 %v4970
    %v6131 = vunpack.c.l.b16 %v4971
    %v6132 = vunpack.c.h.b16 %v4971
    %v6133 = vunpack.c.l.b16 %v4972
    %v6134 = vunpack.c.h.b16 %v4972
    %v6135 = vunpack.c.l.b16 %v4973
    %v6136 = vunpack.c.l.b16 %v4974
    %v6137 = vunpack.c.h.b16 %v4974
    %v6138 = vunpack.c.l.b16 %v4975
    %v6139 = vunpack.c.h.b16 %v4975
    %v6140 = vunpack.c.l.b16 %v4976
    %v6141 = vunpack.c.h.b16 %v4976
    %v6142 = vunpack.c.l.b16 %v4977
    %v6143 = vunpack.c.l.b16 %v4978
    %v6144 = vunpack.c.h.b16 %v4978
    %v6145 = vunpack.c.l.b16 %v4979
    %v6146 = vunpack.c.h.b16 %v4979
    %v6147 = vunpack.c.l.b16 %v4980
    %v6148 = vunpack.c.h.b16 %v4980
    %v6149 = vunpack.c.l.b16 %v4981
    %v6150 = vunpack.c.l.b16 %v4982
    %v6151 = vunpack.c.h.b16 %v4982
    %v6152 = vunpack.c.l.b16 %v4983
    %v6153 = vunpack.c.h.b16 %v4983
    %v6154 = vunpack.c.l.b16 %v4984
    %v6155 = vunpack.c.h.b16 %v4984
    %v6156 = vunpack.c.l.b16 %v4985
    %v6157 = vunpack.c.l.b16 %v4986
    %v6158 = vunpack.c.h.b16 %v4986
    %v6159 = vunpack.c.l.b16 %v4987
    %v6160 = vunpack.c.h.b16 %v4987
    %v6161 = vunpack.c.l.b16 %v4988
    %v6162 = vunpack.c.h.b16 %v4988
    %v6163 = vunpack.c.l.b16 %v4989
    %v6164 = vunpack.c.l.b16 %v4990
    %v6165 = vunpack.c.h.b16 %v4990
    %v6166 = vunpack.c.l.b16 %v4991
    %v6167 = vunpack.c.h.b16 %v4991
    %v6168 = vunpack.c.l.b16 %v4992
    %v6169 = vunpack.c.h.b16 %v4992
    %v6170 = vunpack.c.l.b16 %v4993
    %v6171 = vunpack.c.l.b16 %v4994
    %v6172 = vunpack.c.h.b16 %v4994
    %v6173 = vunpack.c.l.b16 %v4995
    %v6174 = vunpack.c.h.b16 %v4995
    %v6175 = vunpack.c.l.b16 %v4996
    %v6176 = vunpack.c.h.b16 %v4996
    %v6177 = vunpack.c.l.b16 %v4997
    %v6178 = vunpack.c.l.b16 %v4998
    %v6179 = vunpack.c.h.b16 %v4998
    %v6180 = vunpack.c.l.b16 %v4999
    %v6181 = vunpack.c.h.b16 %v4999
    %v6182 = vunpack.c.l.b16 %v5000
    %v6183 = vunpack.c.h.b16 %v5000
    %v6184 = vunpack.c.l.b16 %v5001
    %v6185 = vunpack.c.l.b16 %v5002
    %v6186 = vunpack.c.h.b16 %v5002
    %v6187 = vunpack.c.l.b16 %v5003
    %v6188 = vunpack.c.h.b16 %v5003
    %v6189 = vunpack.c.l.b16 %v5004
    %v6190 = vunpack.c.h.b16 %v5004
    %v6191 = vunpack.c.l.b16 %v5005
    %v6192 = vunpack.c.l.b16 %v5006
    %v6193 = vunpack.c.h.b16 %v5006
    %v6194 = vunpack.c.l.b16 %v5007
    %v6195 = vunpack.c.h.b16 %v5007
    %v6196 = vunpack.c.l.b16 %v5008
    %v6197 = vunpack.c.h.b16 %v5008
    %v6198 = vunpack.c.l.b16 %v5009
    %v6199 = vunpack.c.l.b16 %v5010
    %v6200 = vunpack.c.h.b16 %v5010
    %v6201 = vunpack.c.l.b16 %v5011
    %v6202 = vunpack.c.h.b16 %v5011
    %v6203 = vunpack.c.l.b16 %v5012
    %v6204 = vunpack.c.h.b16 %v5012
    %v6205 = vunpack.c.l.b16 %v5013
    %v6206 = vunpack.c.l.b16 %v5014
    %v6207 = vunpack.c.h.b16 %v5014
    %v6208 = vunpack.c.l.b16 %v5015
    %v6209 = vunpack.c.h.b16 %v5015
    %v6210 = vunpack.c.l.b16 %v5016
    %v6211 = vunpack.c.h.b16 %v5016
    %v6212 = vunpack.c.l.b16 %v5017
    %v6213 = vunpack.c.l.b16 %v5018
    %v6214 = vunpack.c.h.b16 %v5018
    %v6215 = vunpack.c.l.b16 %v5019
    %v6216 = vunpack.c.h.b16 %v5019
    %v6217 = vunpack.c.l.b16 %v5020
    %v6218 = vunpack.c.h.b16 %v5020
    %v6219 = vunpack.c.l.b16 %v5021
    %v6220 = vunpack.c.l.b16 %v5022
    %v6221 = vunpack.c.h.b16 %v5022
    %v6222 = vunpack.c.l.b16 %v5023
    %v6223 = vunpack.c.h.b16 %v5023
    %v6224 = vunpack.c.l.b16 %v5024
    %v6225 = vunpack.c.h.b16 %v5024
    %v6226 = vunpack.c.l.b16 %v5025
    %v6227 = vunpack.c.l.b16 %v5026
    %v6228 = vunpack.c.h.b16 %v5026
    %v6229 = vunpack.c.l.b16 %v5027
    %v6230 = vunpack.c.h.b16 %v5027
    %v6231 = vunpack.c.l.b16 %v5028
    %v6232 = vunpack.c.h.b16 %v5028
    %v6233 = vunpack.c.l.b16 %v5029
    %v6234 = vunpack.c.l.b16 %v5030
    %v6235 = vunpack.c.h.b16 %v5030
    %v6236 = vunpack.c.l.b16 %v5031
    %v6237 = vunpack.c.h.b16 %v5031
    %v6238 = vunpack.c.l.b16 %v5032
    %v6239 = vunpack.c.h.b16 %v5032
    %v6240 = vunpack.c.l.b16 %v5033
    %v6241 = vunpack.c.l.b16 %v5034
    %v6242 = vunpack.c.h.b16 %v5034
    %v6243 = vunpack.c.l.b16 %v5035
    %v6244 = vunpack.c.h.b16 %v5035
    %v6245 = vunpack.c.l.b16 %v5036
    %v6246 = vunpack.c.h.b16 %v5036
    %v6247 = vunpack.c.l.b16 %v5037
    %v6248 = vunpack.c.l.b16 %v5038
    %v6249 = vunpack.c.h.b16 %v5038
    %v6250 = vunpack.c.l.b16 %v5039
    %v6251 = vunpack.c.h.b16 %v5039
    %v6252 = vunpack.c.l.b16 %v5040
    %v6253 = vunpack.c.h.b16 %v5040
    %v6254 = vunpack.c.l.b16 %v5041
    %v6255 = vunpack.c.l.b16 %v5042
    %v6256 = vunpack.c.h.b16 %v5042
    %v6257 = vunpack.c.l.b16 %v5043
    %v6258 = vunpack.c.h.b16 %v5043
    %v6259 = vunpack.c.l.b16 %v5044
    %v6260 = vunpack.c.h.b16 %v5044
    %v6261 = vunpack.c.l.b16 %v5045
    %v6262 = vunpack.c.l.b16 %v5046
    %v6263 = vunpack.c.h.b16 %v5046
    %v6264 = vunpack.c.l.b16 %v5047
    %v6265 = vunpack.c.h.b16 %v5047
    %v6266 = vunpack.c.l.b16 %v5048
    %v6267 = vunpack.c.h.b16 %v5048
    %v6268 = vunpack.c.l.b16 %v5049
    %v6269 = vunpack.c.l.b16 %v5050
    %v6270 = vunpack.c.h.b16 %v5050
    %v6271 = vunpack.c.l.b16 %v5051
    %v6272 = vunpack.c.h.b16 %v5051
    %v6273 = vunpack.c.l.b16 %v5052
    %v6274 = vunpack.c.h.b16 %v5052
    %v6275 = vunpack.c.l.b16 %v5053
    %v6276 = vunpack.c.l.b16 %v5054
    %v6277 = vunpack.c.h.b16 %v5054
    %v6278 = vunpack.c.l.b16 %v5055
    %v6279 = vunpack.c.h.b16 %v5055
    %v6280 = vunpack.c.l.b16 %v5056
    %v6281 = vunpack.c.h.b16 %v5056
    %v6282 = vunpack.c.l.b16 %v5057
    %v6283 = vunpack.c.l.b16 %v5058
    %v6284 = vunpack.c.h.b16 %v5058
    %v6285 = vunpack.c.l.b16 %v5059
    %v6286 = vunpack.c.h.b16 %v5059
    %v6287 = vunpack.c.l.b16 %v5060
    %v6288 = vunpack.c.h.b16 %v5060
    %v6289 = vunpack.c.l.b16 %v5061
    %v6290 = vunpack.c.l.b16 %v5062
    %v6291 = vunpack.c.h.b16 %v5062
    %v6292 = vunpack.c.l.b16 %v5063
    %v6293 = vunpack.c.h.b16 %v5063
    %v6294 = vunpack.c.l.b16 %v5064
    %v6295 = vunpack.c.h.b16 %v5064
    %v6296 = vunpack.c.l.b16 %v5065
    %v6297 = vunpack.c.l.b16 %v5066
    %v6298 = vunpack.c.h.b16 %v5066
    %v6299 = vunpack.c.l.b16 %v5067
    %v6300 = vunpack.c.h.b16 %v5067
    %v6301 = vunpack.c.l.b16 %v5068
    %v6302 = vunpack.c.h.b16 %v5068
    %v6303 = vunpack.c.l.b16 %v5069
    %v6304 = vunpack.c.l.b16 %v5070
    %v6305 = vunpack.c.h.b16 %v5070
    %v6306 = vunpack.c.l.b16 %v5071
    %v6307 = vunpack.c.h.b16 %v5071
    %v6308 = vunpack.c.l.b16 %v5072
    %v6309 = vunpack.c.h.b16 %v5072
    %v6310 = vunpack.c.l.b16 %v5073
    %v6311 = vunpack.c.l.b16 %v5074
    %v6312 = vunpack.c.h.b16 %v5074
    %v6313 = vunpack.c.l.b16 %v5075
    %v6314 = vunpack.c.h.b16 %v5075
    %v6315 = vunpack.c.l.b16 %v5076
    %v6316 = vunpack.c.h.b16 %v5076
    %v6317 = vunpack.c.l.b16 %v5077
    %v6318 = vunpack.c.l.b16 %v5078
    %v6319 = vunpack.c.h.b16 %v5078
    %v6320 = vunpack.c.l.b16 %v5079
    %v6321 = vunpack.c.h.b16 %v5079
    %v6322 = vunpack.c.l.b16 %v5080
    %v6323 = vunpack.c.h.b16 %v5080
    %v6324 = vunpack.c.l.b16 %v5081
    %v6325 = vunpack.c.l.b16 %v5082
    %v6326 = vunpack.c.h.b16 %v5082
    %v6327 = vunpack.c.l.b16 %v5083
    %v6328 = vunpack.c.h.b16 %v5083
    %v6329 = vunpack.c.l.b16 %v5084
    %v6330 = vunpack.c.h.b16 %v5084
    %v6331 = vunpack.c.l.b16 %v5085
    %v6332 = vunpack.c.l.b16 %v5086
    %v6333 = vunpack.c.h.b16 %v5086
    %v6334 = vunpack.c.l.b16 %v5087
    %v6335 = vunpack.c.h.b16 %v5087
    %v6336 = vunpack.c.l.b16 %v5088
    %v6337 = vunpack.c.h.b16 %v5088
    %v6338 = vunpack.c.l.b16 %v5089
    %v6339 = vunpack.c.l.b16 %v5090
    %v6340 = vunpack.c.h.b16 %v5090
    %v6341 = vunpack.c.l.b16 %v5091
    %v6342 = vunpack.c.h.b16 %v5091
    %v6343 = vunpack.c.l.b16 %v5092
    %v6344 = vunpack.c.h.b16 %v5092
    %v6345 = vunpack.c.l.b16 %v5093
    %v6346 = vunpack.c.l.b16 %v5094
    %v6347 = vunpack.c.h.b16 %v5094
    %v6348 = vunpack.c.l.b16 %v5095
    %v6349 = vunpack.c.h.b16 %v5095
    %v6350 = vunpack.c.l.b16 %v5096
    %v6351 = vunpack.c.h.b16 %v5096
    %v6352 = vunpack.c.l.b16 %v5097
    %v6353 = vunpack.c.l.b16 %v5098
    %v6354 = vunpack.c.h.b16 %v5098
    %v6355 = vunpack.c.l.b16 %v5099
    %v6356 = vunpack.c.h.b16 %v5099
    %v6357 = vunpack.c.l.b16 %v5100
    %v6358 = vunpack.c.h.b16 %v5100
    %v6359 = vunpack.c.l.b16 %v5101
    %v6360 = vunpack.c.l.b16 %v5102
    %v6361 = vunpack.c.h.b16 %v5102
    %v6362 = vunpack.c.l.b16 %v5103
    %v6363 = vunpack.c.h.b16 %v5103
    %v6364 = vunpack.c.l.b16 %v5104
    %v6365 = vunpack.c.h.b16 %v5104
    %v6366 = vunpack.c.l.b16 %v5105
    %v6367 = vunpack.c.l.b16 %v5106
    %v6368 = vunpack.c.h.b16 %v5106
    %v6369 = vunpack.c.l.b16 %v5107
    %v6370 = vunpack.c.h.b16 %v5107
    %v6371 = vunpack.c.l.b16 %v5108
    %v6372 = vunpack.c.h.b16 %v5108
    %v6373 = vunpack.c.l.b16 %v5109
    %v6374 = vunpack.c.l.b16 %v5110
    %v6375 = vunpack.c.h.b16 %v5110
    %v6376 = vunpack.c.l.b16 %v5111
    %v6377 = vunpack.c.h.b16 %v5111
    %v6378 = vunpack.c.l.b16 %v5112
    %v6379 = vunpack.c.h.b16 %v5112
    %v6380 = vunpack.c.l.b16 %v5113
    %v6381 = vunpack.c.l.b16 %v5114
    %v6382 = vunpack.c.h.b16 %v5114
    %v6383 = vunpack.c.l.b16 %v5115
    %v6384 = vunpack.c.h.b16 %v5115
    %v6385 = vunpack.c.l.b16 %v5116
    %v6386 = vunpack.c.h.b16 %v5116
    %v6387 = vunpack.c.l.b16 %v5117
    %v6388 = vunpack.c.l.b16 %v5118
    %v6389 = vunpack.c.h.b16 %v5118
    %v6390 = vunpack.c.l.b16 %v5119
    %v6391 = vunpack.c.h.b16 %v5119
    %v6392 = vunpack.c.l.b16 %v5120
    %v6393 = vunpack.c.h.b16 %v5120
    %v6394 = vunpack.c.l.b16 %v5121
    %v6395 = vunpack.c.l.b16 %v5122
    %v6396 = vunpack.c.h.b16 %v5122
    %v6397 = vunpack.c.l.b16 %v5123
    %v6398 = vunpack.c.h.b16 %v5123
    %v6399 = vunpack.c.l.b16 %v5124
    %v6400 = vunpack.c.h.b16 %v5124
    %v6401 = vunpack.c.l.b16 %v5125
    %v6402 = vunpack.c.l.b16 %v5126
    %v6403 = vunpack.c.h.b16 %v5126
    %v6404 = vunpack.c.l.b16 %v5127
    %v6405 = vunpack.c.h.b16 %v5127
    %v6406 = vunpack.c.l.b16 %v5128
    %v6407 = vunpack.c.h.b16 %v5128
    %v6408 = vunpack.c.l.b16 %v5129
    %v6409 = vunpack.c.l.b16 %v5130
    %v6410 = vunpack.c.h.b16 %v5130
    %v6411 = vunpack.c.l.b16 %v5131
    %v6412 = vunpack.c.h.b16 %v5131
    %v6413 = vunpack.c.l.b16 %v5132
    %v6414 = vunpack.c.h.b16 %v5132
    %v6415 = vunpack.c.l.b16 %v5133
    %v6416 = vunpack.c.l.b16 %v5134
    %v6417 = vunpack.c.h.b16 %v5134
    %v6418 = vunpack.c.l.b16 %v5135
    %v6419 = vunpack.c.h.b16 %v5135
    %v6420 = vunpack.c.l.b16 %v5136
    %v6421 = vunpack.c.h.b16 %v5136
    %v6422 = vunpack.c.l.b16 %v5137
    %v6423 = vunpack.c.l.b16 %v5138
    %v6424 = vunpack.c.h.b16 %v5138
    %v6425 = vunpack.c.l.b16 %v5139
    %v6426 = vunpack.c.h.b16 %v5139
    %v6427 = vunpack.c.l.b16 %v5140
    %v6428 = vunpack.c.h.b16 %v5140
    %v6429 = vunpack.c.l.b16 %v5141
    %v6430 = vunpack.c.l.b16 %v5142
    %v6431 = vunpack.c.h.b16 %v5142
    %v6432 = vunpack.c.l.b16 %v5143
    %v6433 = vunpack.c.h.b16 %v5143
    %v6434 = vunpack.c.l.b16 %v5144
    %v6435 = vunpack.c.h.b16 %v5144
    %v6436 = vunpack.c.l.b16 %v5145
    %v6437 = vunpack.c.l.b16 %v5146
    %v6438 = vunpack.c.h.b16 %v5146
    %v6439 = vunpack.c.l.b16 %v5147
    %v6440 = vunpack.c.h.b16 %v5147
    %v6441 = vunpack.c.l.b16 %v5148
    %v6442 = vunpack.c.h.b16 %v5148
    %v6443 = vunpack.c.l.b16 %v5149
    %v6444 = vunpack.c.l.b16 %v5150
    %v6445 = vunpack.c.h.b16 %v5150
    %v6446 = vunpack.c.l.b16 %v5151
    %v6447 = vunpack.c.h.b16 %v5151
    %v6448 = vunpack.c.l.b16 %v5152
    %v6449 = vunpack.c.h.b16 %v5152
    %v6450 = vunpack.c.l.b16 %v5153
    %v6451 = vunpack.c.l.b16 %v5154
    %v6452 = vunpack.c.h.b16 %v5154
    %v6453 = vunpack.c.l.b16 %v5155
    %v6454 = vunpack.c.h.b16 %v5155
    %v6455 = vunpack.c.l.b16 %v5156
    %v6456 = vunpack.c.h.b16 %v5156
    %v6457 = vunpack.c.l.b16 %v5157
    %v6458 = vunpack.c.l.b16 %v5158
    %v6459 = vunpack.c.h.b16 %v5158
    %v6460 = vunpack.c.l.b16 %v5159
    %v6461 = vunpack.c.h.b16 %v5159
    %v6462 = vunpack.c.l.b16 %v5160
    %v6463 = vunpack.c.h.b16 %v5160
    %v6464 = vunpack.c.l.b16 %v5161
    %v6465 = vunpack.c.l.b16 %v5162
    %v6466 = vunpack.c.h.b16 %v5162
    %v6467 = vunpack.c.l.b16 %v5163
    %v6468 = vunpack.c.h.b16 %v5163
    %v6469 = vunpack.c.l.b16 %v5164
    %v6470 = vunpack.c.h.b16 %v5164
    %v6471 = vunpack.c.l.b16 %v5165
    %v6472 = vunpack.c.l.b16 %v5166
    %v6473 = vunpack.c.h.b16 %v5166
    %v6474 = vunpack.c.l.b16 %v5167
    %v6475 = vunpack.c.h.b16 %v5167
    %v6476 = vunpack.c.l.b16 %v5168
    %v6477 = vunpack.c.h.b16 %v5168
    %v6478 = vunpack.c.l.b16 %v5169
    %v6479 = vunpack.c.l.b16 %v5170
    %v6480 = vunpack.c.h.b16 %v5170
    %v6481 = vunpack.c.l.b16 %v5171
    %v6482 = vunpack.c.h.b16 %v5171
    %v6483 = vunpack.c.l.b16 %v5172
    %v6484 = vunpack.c.h.b16 %v5172
    %v6485 = vunpack.c.l.b16 %v5173
    %v6486 = vunpack.c.l.b16 %v5174
    %v6487 = vunpack.c.h.b16 %v5174
    %v6488 = vunpack.c.l.b16 %v5175
    %v6489 = vunpack.c.h.b16 %v5175
    %v6490 = vunpack.c.l.b16 %v5176
    %v6491 = vunpack.c.h.b16 %v5176
    %v6492 = vunpack.c.l.b16 %v5177
    %v6493 = vunpack.c.l.b16 %v5178
    %v6494 = vunpack.c.h.b16 %v5178
    %v6495 = vunpack.c.l.b16 %v5179
    %v6496 = vunpack.c.h.b16 %v5179
    %v6497 = vunpack.c.l.b16 %v5180
    %v6498 = vunpack.c.h.b16 %v5180
    %v6499 = vunpack.c.l.b16 %v5181
    %v6500 = vunpack.c.l.b16 %v5182
    %v6501 = vunpack.c.h.b16 %v5182
    %v6502 = vunpack.c.l.b16 %v5183
    %v6503 = vunpack.c.h.b16 %v5183
    %v6504 = vunpack.c.l.b16 %v5184
    %v6505 = vunpack.c.h.b16 %v5184
    %v6506 = vunpack.c.l.b16 %v5185
    %v6507 = vunpack.c.l.b16 %v5186
    %v6508 = vunpack.c.h.b16 %v5186
    %v6509 = vunpack.c.l.b16 %v5187
    %v6510 = vunpack.c.h.b16 %v5187
    %v6511 = vunpack.c.l.b16 %v5188
    %v6512 = vunpack.c.h.b16 %v5188
    %v6513 = vunpack.c.l.b16 %v5189
    %v6514 = vunpack.c.l.b16 %v5190
    %v6515 = vunpack.c.h.b16 %v5190
    %v6516 = vunpack.c.l.b16 %v5191
    %v6517 = vunpack.c.h.b16 %v5191
    %v6518 = vunpack.c.l.b16 %v5192
    %v6519 = vunpack.c.h.b16 %v5192
    %v6520 = vunpack.c.l.b16 %v5193
    %v6521 = vunpack.c.l.b16 %v5194
    %v6522 = vunpack.c.h.b16 %v5194
    %v6523 = vunpack.c.l.b16 %v5195
    %v6524 = vunpack.c.h.b16 %v5195
    %v6525 = vunpack.c.l.b16 %v5196
    %v6526 = vunpack.c.h.b16 %v5196
    %v6527 = vunpack.c.l.b16 %v5197
    %v6528 = vunpack.c.l.b16 %v5198
    %v6529 = vunpack.c.h.b16 %v5198
    %v6530 = vunpack.c.l.b16 %v5199
    %v6531 = vunpack.c.h.b16 %v5199
    %v6532 = vunpack.c.l.b16 %v5200
    %v6533 = vunpack.c.h.b16 %v5200
    %v6534 = vunpack.c.l.b16 %v5201
    %v6535 = vunpack.c.l.b16 %v5202
    %v6536 = vunpack.c.h.b16 %v5202
    %v6537 = vunpack.c.l.b16 %v5203
    %v6538 = vunpack.c.h.b16 %v5203
    %v6539 = vunpack.c.l.b16 %v5204
    %v6540 = vunpack.c.h.b16 %v5204
    %v6541 = vunpack.c.l.b16 %v5205
    %v6542 = vunpack.c.l.b16 %v5206
    %v6543 = vunpack.c.h.b16 %v5206
    %v6544 = vunpack.c.l.b16 %v5207
    %v6545 = vunpack.c.h.b16 %v5207
    %v6546 = vunpack.c.l.b16 %v5208
    %v6547 = vunpack.c.h.b16 %v5208
    %v6548 = vunpack.c.l.b16 %v5209
    %v6549 = vunpack.c.l.b16 %v5210
    %v6550 = vunpack.c.h.b16 %v5210
    %v6551 = vunpack.c.l.b16 %v5211
    %v6552 = vunpack.c.h.b16 %v5211
    %v6553 = vunpack.c.l.b16 %v5212
    %v6554 = vunpack.c.h.b16 %v5212
    %v6555 = vunpack.c.l.b16 %v5213
    %v6556 = vunpack.c.l.b16 %v5214
    %v6557 = vunpack.c.h.b16 %v5214
    %v6558 = vunpack.c.l.b16 %v5215
    %v6559 = vunpack.c.h.b16 %v5215
    %v6560 = vunpack.c.l.b16 %v5216
    %v6561 = vunpack.c.h.b16 %v5216
    %v6562 = vunpack.c.l.b16 %v5217
    %v6563 = vunpack.c.l.b16 %v5218
    %v6564 = vunpack.c.h.b16 %v5218
    %v6565 = vunpack.c.l.b16 %v5219
    %v6566 = vunpack.c.h.b16 %v5219
    %v6567 = vunpack.c.l.b16 %v5220
    %v6568 = vunpack.c.h.b16 %v5220
    %v6569 = vunpack.c.l.b16 %v5221
    %v6570 = vunpack.c.l.b16 %v5222
    %v6571 = vunpack.c.h.b16 %v5222
    %v6572 = vunpack.c.l.b16 %v5223
    %v6573 = vunpack.c.h.b16 %v5223
    %v6574 = vunpack.c.l.b16 %v5224
    %v6575 = vunpack.c.h.b16 %v5224
    %v6576 = vunpack.c.l.b16 %v5225
    %v6577 = vunpack.c.l.b16 %v5226
    %v6578 = vunpack.c.h.b16 %v5226
    %v6579 = vunpack.c.l.b16 %v5227
    %v6580 = vunpack.c.h.b16 %v5227
    %v6581 = vunpack.c.l.b16 %v5228
    %v6582 = vunpack.c.h.b16 %v5228
    %v6583 = vunpack.c.l.b16 %v5229
    %v6584 = vunpack.c.l.b16 %v5230
    %v6585 = vunpack.c.h.b16 %v5230
    %v6586 = vunpack.c.l.b16 %v5231
    %v6587 = vunpack.c.h.b16 %v5231
    %v6588 = vunpack.c.l.b16 %v5232
    %v6589 = vunpack.c.h.b16 %v5232
    %v6590 = vunpack.c.l.b16 %v5233
    %v6591 = vunpack.c.l.b16 %v5234
    %v6592 = vunpack.c.h.b16 %v5234
    %v6593 = vunpack.c.l.b16 %v5235
    %v6594 = vunpack.c.h.b16 %v5235
    %v6595 = vunpack.c.l.b16 %v5236
    %v6596 = vunpack.c.h.b16 %v5236
    %v6597 = vunpack.c.l.b16 %v5237
    %v6598 = vunpack.c.l.b16 %v5238
    %v6599 = vunpack.c.h.b16 %v5238
    %v6600 = vunpack.c.l.b16 %v5239
    %v6601 = vunpack.c.h.b16 %v5239
    %v6602 = vunpack.c.l.b16 %v5240
    %v6603 = vunpack.c.h.b16 %v5240
    %v6604 = vunpack.c.l.b16 %v5241
    %v6605 = vunpack.c.l.b16 %v5242
    %v6606 = vunpack.c.h.b16 %v5242
    %v6607 = vunpack.c.l.b16 %v5243
    %v6608 = vunpack.c.h.b16 %v5243
    %v6609 = vunpack.c.l.b16 %v5244
    %v6610 = vunpack.c.h.b16 %v5244
    %v6611 = vunpack.c.l.b16 %v5245
    %v6612 = vunpack.c.l.b16 %v5246
    %v6613 = vunpack.c.h.b16 %v5246
    %v6614 = vunpack.c.l.b16 %v5247
    %v6615 = vunpack.c.h.b16 %v5247
    %v6616 = vunpack.c.l.b16 %v5248
    %v6617 = vunpack.c.h.b16 %v5248
    %v6618 = vunpack.c.l.b16 %v5249
    %v6619 = vunpack.c.l.b16 %v5250
    %v6620 = vunpack.c.h.b16 %v5250
    %v6621 = vunpack.c.l.b16 %v5251
    %v6622 = vunpack.c.h.b16 %v5251
    %v6623 = vunpack.c.l.b16 %v5252
    %v6624 = vunpack.c.h.b16 %v5252
    %v6625 = vunpack.c.l.b16 %v5253
    %v6626 = vunpack.c.l.b16 %v5254
    %v6627 = vunpack.c.h.b16 %v5254
    %v6628 = vunpack.c.l.b16 %v5255
    %v6629 = vunpack.c.h.b16 %v5255
    %v6630 = vunpack.c.l.b16 %v5256
    %v6631 = vunpack.c.h.b16 %v5256
    %v6632 = vunpack.c.l.b16 %v5257
    %v6633 = vunpack.c.l.b16 %v5258
    %v6634 = vunpack.c.h.b16 %v5258
    %v6635 = vunpack.c.l.b16 %v5259
    %v6636 = vunpack.c.h.b16 %v5259
    %v6637 = vunpack.c.l.b16 %v5260
    %v6638 = vunpack.c.h.b16 %v5260
    %v6639 = vunpack.c.l.b16 %v5261
    %v6640 = vunpack.c.l.b16 %v5262
    %v6641 = vunpack.c.h.b16 %v5262
    %v6642 = vunpack.c.l.b16 %v5263
    %v6643 = vunpack.c.h.b16 %v5263
    %v6644 = vunpack.c.l.b16 %v5264
    %v6645 = vunpack.c.h.b16 %v5264
    %v6646 = vunpack.c.l.b16 %v5265
    %v6647 = vunpack.c.l.b16 %v5266
    %v6648 = vunpack.c.h.b16 %v5266
    %v6649 = vunpack.c.l.b16 %v5267
    %v6650 = vunpack.c.h.b16 %v5267
    %v6651 = vunpack.c.l.b16 %v5268
    %v6652 = vunpack.c.h.b16 %v5268
    %v6653 = vunpack.c.l.b16 %v5269
    %v6654 = vunpack.c.l.b16 %v5270
    %v6655 = vunpack.c.h.b16 %v5270
    %v6656 = vunpack.c.l.b16 %v5271
    %v6657 = vunpack.c.h.b16 %v5271
    %v6658 = vunpack.c.l.b16 %v5272
    %v6659 = vunpack.c.h.b16 %v5272
    %v6660 = vunpack.c.l.b16 %v5273
    %v6661 = vunpack.c.l.b16 %v5274
    %v6662 = vunpack.c.h.b16 %v5274
    %v6663 = vunpack.c.l.b16 %v5275
    %v6664 = vunpack.c.h.b16 %v5275
    %v6665 = vunpack.c.l.b16 %v5276
    %v6666 = vunpack.c.h.b16 %v5276
    %v6667 = vunpack.c.l.b16 %v5277
    %v6668 = vunpack.c.l.b16 %v5278
    %v6669 = vunpack.c.h.b16 %v5278
    %v6670 = vunpack.c.l.b16 %v5279
    %v6671 = vunpack.c.h.b16 %v5279
    %v6672 = vunpack.c.l.b16 %v5280
    %v6673 = vunpack.c.h.b16 %v5280
    %v6674 = vunpack.c.l.b16 %v5281
    %v6675 = vunpack.c.l.b16 %v5282
    %v6676 = vunpack.c.h.b16 %v5282
    %v6677 = vunpack.c.l.b16 %v5283
    %v6678 = vunpack.c.h.b16 %v5283
    %v6679 = vunpack.c.l.b16 %v5284
    %v6680 = vunpack.c.h.b16 %v5284
    %v6681 = vunpack.c.l.b16 %v5285
    %v6682 = vunpack.c.l.b16 %v5286
    %v6683 = vunpack.c.h.b16 %v5286
    %v6684 = vunpack.c.l.b16 %v5287
    %v6685 = vunpack.c.h.b16 %v5287
    %v6686 = vunpack.c.l.b16 %v5288
    %v6687 = vunpack.c.h.b16 %v5288
    %v6688 = vunpack.c.l.b16 %v5289
    %v6689 = vunpack.c.l.b16 %v5290
    %v6690 = vunpack.c.h.b16 %v5290
    %v6691 = vunpack.c.l.b16 %v5291
    %v6692 = vunpack.c.h.b16 %v5291
    %v6693 = vunpack.c.l.b16 %v5292
    %v6694 = vunpack.c.h.b16 %v5292
    %v6695 = vunpack.c.l.b16 %v5293
    %v6696 = vunpack.c.l.b16 %v5294
    %v6697 = vunpack.c.h.b16 %v5294
    %v6698 = vunpack.c.l.b16 %v5295
    %v6699 = vunpack.c.h.b16 %v5295
    %v6700 = vunpack.c.l.b16 %v5296
    %v6701 = vunpack.c.h.b16 %v5296
    %v6702 = vunpack.c.l.b16 %v5297
    %v6703 = vunpack.c.l.b16 %v5298
    %v6704 = vunpack.c.h.b16 %v5298
    %v6705 = vunpack.c.l.b16 %v5299
    %v6706 = vunpack.c.h.b16 %v5299
    %v6707 = vunpack.c.l.b16 %v5300
    %v6708 = vunpack.c.h.b16 %v5300
    %v6709 = vunpack.c.l.b16 %v5301
    %v6710 = vunpack.c.l.b16 %v5302
    %v6711 = vunpack.c.h.b16 %v5302
    %v6712 = vunpack.c.l.b16 %v5303
    %v6713 = vunpack.c.h.b16 %v5303
    %v6714 = vunpack.c.l.b16 %v5304
    %v6715 = vunpack.c.h.b16 %v5304
    %v6716 = vunpack.c.l.b16 %v5305
    %v6717 = vunpack.c.l.b16 %v5306
    %v6718 = vunpack.c.h.b16 %v5306
    %v6719 = vunpack.c.l.b16 %v5307
    %v6720 = vunpack.c.h.b16 %v5307
    %v6721 = vunpack.c.l.b16 %v5308
    %v6722 = vunpack.c.h.b16 %v5308
    %v6723 = vunpack.c.l.b16 %v5309
    %v6724 = vunpack.c.l.b16 %v5310
    %v6725 = vunpack.c.h.b16 %v5310
    %v6726 = vunpack.c.l.b16 %v5311
    %v6727 = vunpack.c.h.b16 %v5311
    %v6728 = vunpack.c.l.b16 %v5312
    %v6729 = vunpack.c.h.b16 %v5312
    %v6730 = vunpack.c.l.b16 %v5313
    %v6731 = vunpack.c.l.b16 %v5314
    %v6732 = vunpack.c.h.b16 %v5314
    %v6733 = vunpack.c.l.b16 %v5315
    %v6734 = vunpack.c.h.b16 %v5315
    %v6735 = vunpack.c.l.b16 %v5316
    %v6736 = vunpack.c.h.b16 %v5316
    %v6737 = vunpack.c.l.b16 %v5317
    %v6738 = vunpack.c.l.b16 %v5318
    %v6739 = vunpack.c.h.b16 %v5318
    %v6740 = vunpack.c.l.b16 %v5319
    %v6741 = vunpack.c.h.b16 %v5319
    %v6742 = vunpack.c.l.b16 %v5320
    %v6743 = vunpack.c.h.b16 %v5320
    %v6744 = vunpack.c.l.b16 %v5321
    %v6745 = vunpack.c.l.b16 %v5322
    %v6746 = vunpack.c.h.b16 %v5322
    %v6747 = vunpack.c.l.b16 %v5323
    %v6748 = vunpack.c.h.b16 %v5323
    %v6749 = vunpack.c.l.b16 %v5324
    %v6750 = vunpack.c.h.b16 %v5324
    %v6751 = vunpack.c.l.b16 %v5325
    %v6752 = vunpack.c.l.b16 %v5326
    %v6753 = vunpack.c.h.b16 %v5326
    %v6754 = vunpack.c.l.b16 %v5327
    %v6755 = vunpack.c.h.b16 %v5327
    %v6756 = vunpack.c.l.b16 %v5328
    %v6757 = vunpack.c.h.b16 %v5328
    %v6758 = vunpack.c.l.b16 %v5329
    %v6759 = vunpack.c.l.b16 %v5330
    %v6760 = vunpack.c.h.b16 %v5330
    %v6761 = vunpack.c.l.b16 %v5331
    %v6762 = vunpack.c.h.b16 %v5331
    %v6763 = vunpack.c.l.b16 %v5332
    %v6764 = vunpack.c.h.b16 %v5332
    %v6765 = vunpack.c.l.b16 %v5333
    %v6766 = vunpack.c.l.b16 %v5334
    %v6767 = vunpack.c.h.b16 %v5334
    %v6768 = vunpack.c.l.b16 %v5335
    %v6769 = vunpack.c.h.b16 %v5335
    %v6770 = vunpack.c.l.b16 %v5336
    %v6771 = vunpack.c.h.b16 %v5336
    %v6772 = vunpack.c.l.b16 %v5337
    %v6773 = vunpack.c.l.b16 %v5338
    %v6774 = vunpack.c.h.b16 %v5338
    %v6775 = vunpack.c.l.b16 %v5339
    %v6776 = vunpack.c.h.b16 %v5339
    %v6777 = vunpack.c.l.b16 %v5340
    %v6778 = vunpack.c.h.b16 %v5340
    %v6779 = vunpack.c.l.b16 %v5341
    %v6780 = vunpack.c.l.b16 %v5342
    %v6781 = vunpack.c.h.b16 %v5342
    %v6782 = vunpack.c.l.b16 %v5343
    %v6783 = vunpack.c.h.b16 %v5343
    %v6784 = vunpack.c.l.b16 %v5344
    %v6785 = vunpack.c.h.b16 %v5344
    %v6786 = vunpack.c.l.b16 %v5345
    %v6787 = vunpack.c.l.b16 %v5346
    %v6788 = vunpack.c.h.b16 %v5346
    %v6789 = vunpack.c.l.b16 %v5347
    %v6790 = vunpack.c.h.b16 %v5347
    %v6791 = vunpack.c.l.b16 %v5348
    %v6792 = vunpack.c.h.b16 %v5348
    %v6793 = vunpack.c.l.b16 %v5349
    %v6794 = vunpack.c.l.b16 %v5350
    %v6795 = vunpack.c.h.b16 %v5350
    %v6796 = vunpack.c.l.b16 %v5351
    %v6797 = vunpack.c.h.b16 %v5351
    %v6798 = vunpack.c.l.b16 %v5352
    %v6799 = vunpack.c.h.b16 %v5352
    %v6800 = vunpack.c.l.b16 %v5353
    %v6801 = vunpack.c.l.b16 %v5354
    %v6802 = vunpack.c.h.b16 %v5354
    %v6803 = vunpack.c.l.b16 %v5355
    %v6804 = vunpack.c.h.b16 %v5355
    %v6805 = vunpack.c.l.b16 %v5356
    %v6806 = vunpack.c.h.b16 %v5356
    %v6807 = vunpack.c.l.b16 %v5357
    %v6808 = vunpack.c.l.b16 %v5358
    %v6809 = vunpack.c.h.b16 %v5358
    %v6810 = vunpack.c.l.b16 %v5359
    %v6811 = vunpack.c.h.b16 %v5359
    %v6812 = vunpack.c.l.b16 %v5360
    %v6813 = vunpack.c.h.b16 %v5360
    %v6814 = vunpack.c.l.b16 %v5361
    %v6815 = vpack.c.b16 %v5926, %v5919
    %v6816 = vpack.c.b16 %v5927, %v5920
    %v6817 = vpack.c.b16 %v5928, %v5921
    %v6818 = vpack.c.b16 %v5929, %v5922
    %v6819 = vpack.c.b16 %v5930, %v5923
    %v6820 = vpack.c.b16 %v5931, %v5924
    %v6821 = vpack.c.b16 %v5932, %v5925
    %v6822 = vpack.c.b16 %v5940, %v5933
    %v6823 = vpack.c.b16 %v5941, %v5934
    %v6824 = vpack.c.b16 %v5942, %v5935
    %v6825 = vpack.c.b16 %v5943, %v5936
    %v6826 = vpack.c.b16 %v5944, %v5937
    %v6827 = vpack.c.b16 %v5945, %v5938
    %v6828 = vpack.c.b16 %v5946, %v5939
    %v6829 = vpack.c.b16 %v5954, %v5947
    %v6830 = vpack.c.b16 %v5955, %v5948
    %v6831 = vpack.c.b16 %v5956, %v5949
    %v6832 = vpack.c.b16 %v5957, %v5950
    %v6833 = vpack.c.b16 %v5958, %v5951
    %v6834 = vpack.c.b16 %v5959, %v5952
    %v6835 = vpack.c.b16 %v5960, %v5953
    %v6836 = vpack.c.b16 %v5968, %v5961
    %v6837 = vpack.c.b16 %v5969, %v5962
    %v6838 = vpack.c.b16 %v5970, %v5963
    %v6839 = vpack.c.b16 %v5971, %v5964
    %v6840 = vpack.c.b16 %v5972, %v5965
    %v6841 = vpack.c.b16 %v5973, %v5966
    %v6842 = vpack.c.b16 %v5974, %v5967
    %v6843 = vpack.c.b16 %v5982, %v5975
    %v6844 = vpack.c.b16 %v5983, %v5976
    %v6845 = vpack.c.b16 %v5984, %v5977
    %v6846 = vpack.c.b16 %v5985, %v5978
    %v6847 = vpack.c.b16 %v5986, %v5979
    %v6848 = vpack.c.b16 %v5987, %v5980
    %v6849 = vpack.c.b16 %v5988, %v5981
    %v6850 = vpack.c.b16 %v5996, %v5989
    %v6851 = vpack.c.b16 %v5997, %v5990
    %v6852 = vpack.c.b16 %v5998, %v5991
    %v6853 = vpack.c.b16 %v5999, %v5992
    %v6854 = vpack.c.b16 %v6000, %v5993
    %v6855 = vpack.c.b16 %v6001, %v5994
    %v6856 = vpack.c.b16 %v6002, %v5995
    %v6857 = vpack.c.b16 %v6010, %v6003
    %v6858 = vpack.c.b16 %v6011, %v6004
    %v6859 = vpack.c.b16 %v6012, %v6005
    %v6860 = vpack.c.b16 %v6013, %v6006
    %v6861 = vpack.c.b16 %v6014, %v6007
    %v6862 = vpack.c.b16 %v6015, %v6008
    %v6863 = vpack.c.b16 %v6016, %v6009
    %v6864 = vpack.c.b16 %v6024, %v6017
    %v6865 = vpack.c.b16 %v6025, %v6018
    %v6866 = vpack.c.b16 %v6026, %v6019
    %v6867 = vpack.c.b16 %v6027, %v6020
    %v6868 = vpack.c.b16 %v6028, %v6021
    %v6869 = vpack.c.b16 %v6029, %v6022
    %v6870 = vpack.c.b16 %v6030, %v6023
    %v6871 = vpack.c.b16 %v6038, %v6031
    %v6872 = vpack.c.b16 %v6039, %v6032
    %v6873 = vpack.c.b16 %v6040, %v6033
    %v6874 = vpack.c.b16 %v6041, %v6034
    %v6875 = vpack.c.b16 %v6042, %v6035
    %v6876 = vpack.c.b16 %v6043, %v6036
    %v6877 = vpack.c.b16 %v6044, %v6037
    %v6878 = vpack.c.b16 %v6052, %v6045
    %v6879 = vpack.c.b16 %v6053, %v6046
    %v6880 = vpack.c.b16 %v6054, %v6047
    %v6881 = vpack.c.b16 %v6055, %v6048
    %v6882 = vpack.c.b16 %v6056, %v6049
    %v6883 = vpack.c.b16 %v6057, %v6050
    %v6884 = vpack.c.b16 %v6058, %v6051
    %v6885 = vpack.c.b16 %v6066, %v6059
    %v6886 = vpack.c.b16 %v6067, %v6060
    %v6887 = vpack.c.b16 %v6068, %v6061
    %v6888 = vpack.c.b16 %v6069, %v6062
    %v6889 = vpack.c.b16 %v6070, %v6063
    %v6890 = vpack.c.b16 %v6071, %v6064
    %v6891 = vpack.c.b16 %v6072, %v6065
    %v6892 = vpack.c.b16 %v6080, %v6073
    %v6893 = vpack.c.b16 %v6081, %v6074
    %v6894 = vpack.c.b16 %v6082, %v6075
    %v6895 = vpack.c.b16 %v6083, %v6076
    %v6896 = vpack.c.b16 %v6084, %v6077
    %v6897 = vpack.c.b16 %v6085, %v6078
    %v6898 = vpack.c.b16 %v6086, %v6079
    %v6899 = vpack.c.b16 %v6094, %v6087
    %v6900 = vpack.c.b16 %v6095, %v6088
    %v6901 = vpack.c.b16 %v6096, %v6089
    %v6902 = vpack.c.b16 %v6097, %v6090
    %v6903 = vpack.c.b16 %v6098, %v6091
    %v6904 = vpack.c.b16 %v6099, %v6092
    %v6905 = vpack.c.b16 %v6100, %v6093
    %v6906 = vpack.c.b16 %v6108, %v6101
    %v6907 = vpack.c.b16 %v6109, %v6102
    %v6908 = vpack.c.b16 %v6110, %v6103
    %v6909 = vpack.c.b16 %v6111, %v6104
    %v6910 = vpack.c.b16 %v6112, %v6105
    %v6911 = vpack.c.b16 %v6113, %v6106
    %v6912 = vpack.c.b16 %v6114, %v6107
    %v6913 = vpack.c.b16 %v6122, %v6115
    %v6914 = vpack.c.b16 %v6123, %v6116
    %v6915 = vpack.c.b16 %v6124, %v6117
    %v6916 = vpack.c.b16 %v6125, %v6118
    %v6917 = vpack.c.b16 %v6126, %v6119
    %v6918 = vpack.c.b16 %v6127, %v6120
    %v6919 = vpack.c.b16 %v6128, %v6121
    %v6920 = vpack.c.b16 %v6136, %v6129
    %v6921 = vpack.c.b16 %v6137, %v6130
    %v6922 = vpack.c.b16 %v6138, %v6131
    %v6923 = vpack.c.b16 %v6139, %v6132
    %v6924 = vpack.c.b16 %v6140, %v6133
    %v6925 = vpack.c.b16 %v6141, %v6134
    %v6926 = vpack.c.b16 %v6142, %v6135
    %v6927 = vpack.c.b16 %v6150, %v6143
    %v6928 = vpack.c.b16 %v6151, %v6144
    %v6929 = vpack.c.b16 %v6152, %v6145
    %v6930 = vpack.c.b16 %v6153, %v6146
    %v6931 = vpack.c.b16 %v6154, %v6147
    %v6932 = vpack.c.b16 %v6155, %v6148
    %v6933 = vpack.c.b16 %v6156, %v6149
    %v6934 = vpack.c.b16 %v6164, %v6157
    %v6935 = vpack.c.b16 %v6165, %v6158
    %v6936 = vpack.c.b16 %v6166, %v6159
    %v6937 = vpack.c.b16 %v6167, %v6160
    %v6938 = vpack.c.b16 %v6168, %v6161
    %v6939 = vpack.c.b16 %v6169, %v6162
    %v6940 = vpack.c.b16 %v6170, %v6163
    %v6941 = vpack.c.b16 %v6178, %v6171
    %v6942 = vpack.c.b16 %v6179, %v6172
    %v6943 = vpack.c.b16 %v6180, %v6173
    %v6944 = vpack.c.b16 %v6181, %v6174
    %v6945 = vpack.c.b16 %v6182, %v6175
    %v6946 = vpack.c.b16 %v6183, %v6176
    %v6947 = vpack.c.b16 %v6184, %v6177
    %v6948 = vpack.c.b16 %v6192, %v6185
    %v6949 = vpack.c.b16 %v6193, %v6186
    %v6950 = vpack.c.b16 %v6194, %v6187
    %v6951 = vpack.c.b16 %v6195, %v6188
    %v6952 = vpack.c.b16 %v6196, %v6189
    %v6953 = vpack.c.b16 %v6197, %v6190
    %v6954 = vpack.c.b16 %v6198, %v6191
    %v6955 = vpack.c.b16 %v6206, %v6199
    %v6956 = vpack.c.b16 %v6207, %v6200
    %v6957 = vpack.c.b16 %v6208, %v6201
    %v6958 = vpack.c.b16 %v6209, %v6202
    %v6959 = vpack.c.b16 %v6210, %v6203
    %v6960 = vpack.c.b16 %v6211, %v6204
    %v6961 = vpack.c.b16 %v6212, %v6205
    %v6962 = vpack.c.b16 %v6220, %v6213
    %v6963 = vpack.c.b16 %v6221, %v6214
    %v6964 = vpack.c.b16 %v6222, %v6215
    %v6965 = vpack.c.b16 %v6223, %v6216
    %v6966 = vpack.c.b16 %v6224, %v6217
    %v6967 = vpack.c.b16 %v6225, %v6218
    %v6968 = vpack.c.b16 %v6226, %v6219
    %v6969 = vpack.c.b16 %v6234, %v6227
    %v6970 = vpack.c.b16 %v6235, %v6228
    %v6971 = vpack.c.b16 %v6236, %v6229
    %v6972 = vpack.c.b16 %v6237, %v6230
    %v6973 = vpack.c.b16 %v6238, %v6231
    %v6974 = vpack.c.b16 %v6239, %v6232
    %v6975 = vpack.c.b16 %v6240, %v6233
    %v6976 = vpack.c.b16 %v6248, %v6241
    %v6977 = vpack.c.b16 %v6249, %v6242
    %v6978 = vpack.c.b16 %v6250, %v6243
    %v6979 = vpack.c.b16 %v6251, %v6244
    %v6980 = vpack.c.b16 %v6252, %v6245
    %v6981 = vpack.c.b16 %v6253, %v6246
    %v6982 = vpack.c.b16 %v6254, %v6247
    %v6983 = vpack.c.b16 %v6262, %v6255
    %v6984 = vpack.c.b16 %v6263, %v6256
    %v6985 = vpack.c.b16 %v6264, %v6257
    %v6986 = vpack.c.b16 %v6265, %v6258
    %v6987 = vpack.c.b16 %v6266, %v6259
    %v6988 = vpack.c.b16 %v6267, %v6260
    %v6989 = vpack.c.b16 %v6268, %v6261
    %v6990 = vpack.c.b16 %v6276, %v6269
    %v6991 = vpack.c.b16 %v6277, %v6270
    %v6992 = vpack.c.b16 %v6278, %v6271
    %v6993 = vpack.c.b16 %v6279, %v6272
    %v6994 = vpack.c.b16 %v6280, %v6273
    %v6995 = vpack.c.b16 %v6281, %v6274
    %v6996 = vpack.c.b16 %v6282, %v6275
    %v6997 = vpack.c.b16 %v6290, %v6283
    %v6998 = vpack.c.b16 %v6291, %v6284
    %v6999 = vpack.c.b16 %v6292, %v6285
    %v7000 = vpack.c.b16 %v6293, %v6286
    %v7001 = vpack.c.b16 %v6294, %v6287
    %v7002 = vpack.c.b16 %v6295, %v6288
    %v7003 = vpack.c.b16 %v6296, %v6289
    %v7004 = vpack.c.b16 %v6304, %v6297
    %v7005 = vpack.c.b16 %v6305, %v6298
    %v7006 = vpack.c.b16 %v6306, %v6299
    %v7007 = vpack.c.b16 %v6307, %v6300
    %v7008 = vpack.c.b16 %v6308, %v6301
    %v7009 = vpack.c.b16 %v6309, %v6302
    %v7010 = vpack.c.b16 %v6310, %v6303
    %v7011 = vpack.c.b16 %v6318, %v6311
    %v7012 = vpack.c.b16 %v6319, %v6312
    %v7013 = vpack.c.b16 %v6320, %v6313
    %v7014 = vpack.c.b16 %v6321, %v6314
    %v7015 = vpack.c.b16 %v6322, %v6315
    %v7016 = vpack.c.b16 %v6323, %v6316
    %v7017 = vpack.c.b16 %v6324, %v6317
    %v7018 = vpack.c.b16 %v6332, %v6325
    %v7019 = vpack.c.b16 %v6333, %v6326
    %v7020 = vpack.c.b16 %v6334, %v6327
    %v7021 = vpack.c.b16 %v6335, %v6328
    %v7022 = vpack.c.b16 %v6336, %v6329
    %v7023 = vpack.c.b16 %v6337, %v6330
    %v7024 = vpack.c.b16 %v6338, %v6331
    %v7025 = vpack.c.b16 %v6346, %v6339
    %v7026 = vpack.c.b16 %v6347, %v6340
    %v7027 = vpack.c.b16 %v6348, %v6341
    %v7028 = vpack.c.b16 %v6349, %v6342
    %v7029 = vpack.c.b16 %v6350, %v6343
    %v7030 = vpack.c.b16 %v6351, %v6344
    %v7031 = vpack.c.b16 %v6352, %v6345
    %v7032 = vpack.c.b16 %v6360, %v6353
    %v7033 = vpack.c.b16 %v6361, %v6354
    %v7034 = vpack.c.b16 %v6362, %v6355
    %v7035 = vpack.c.b16 %v6363, %v6356
    %v7036 = vpack.c.b16 %v6364, %v6357
    %v7037 = vpack.c.b16 %v6365, %v6358
    %v7038 = vpack.c.b16 %v6366, %v6359
    %v7039 = vpack.c.b16 %v6374, %v6367
    %v7040 = vpack.c.b16 %v6375, %v6368
    %v7041 = vpack.c.b16 %v6376, %v6369
    %v7042 = vpack.c.b16 %v6377, %v6370
    %v7043 = vpack.c.b16 %v6378, %v6371
    %v7044 = vpack.c.b16 %v6379, %v6372
    %v7045 = vpack.c.b16 %v6380, %v6373
    %v7046 = vpack.c.b16 %v6388, %v6381
    %v7047 = vpack.c.b16 %v6389, %v6382
    %v7048 = vpack.c.b16 %v6390, %v6383
    %v7049 = vpack.c.b16 %v6391, %v6384
    %v7050 = vpack.c.b16 %v6392, %v6385
    %v7051 = vpack.c.b16 %v6393, %v6386
    %v7052 = vpack.c.b16 %v6394, %v6387
    %v7053 = vpack.c.b16 %v6402, %v6395
    %v7054 = vpack.c.b16 %v6403, %v6396
    %v7055 = vpack.c.b16 %v6404, %v6397
    %v7056 = vpack.c.b16 %v6405, %v6398
    %v7057 = vpack.c.b16 %v6406, %v6399
    %v7058 = vpack.c.b16 %v6407, %v6400
    %v7059 = vpack.c.b16 %v6408, %v6401
    %v7060 = vpack.c.b16 %v6416, %v6409
    %v7061 = vpack.c.b16 %v6417, %v6410
    %v7062 = vpack.c.b16 %v6418, %v6411
    %v7063 = vpack.c.b16 %v6419, %v6412
    %v7064 = vpack.c.b16 %v6420, %v6413
    %v7065 = vpack.c.b16 %v6421, %v6414
    %v7066 = vpack.c.b16 %v6422, %v6415
    %v7067 = vpack.c.b16 %v6430, %v6423
    %v7068 = vpack.c.b16 %v6431, %v6424
    %v7069 = vpack.c.b16 %v6432, %v6425
    %v7070 = vpack.c.b16 %v6433, %v6426
    %v7071 = vpack.c.b16 %v6434, %v6427
    %v7072 = vpack.c.b16 %v6435, %v6428
    %v7073 = vpack.c.b16 %v6436, %v6429
    %v7074 = vpack.c.b16 %v6444, %v6437
    %v7075 = vpack.c.b16 %v6445, %v6438
    %v7076 = vpack.c.b16 %v6446, %v6439
    %v7077 = vpack.c.b16 %v6447, %v6440
    %v7078 = vpack.c.b16 %v6448, %v6441
    %v7079 = vpack.c.b16 %v6449, %v6442
    %v7080 = vpack.c.b16 %v6450, %v6443
    %v7081 = vpack.c.b16 %v6458, %v6451
    %v7082 = vpack.c.b16 %v6459, %v6452
    %v7083 = vpack.c.b16 %v6460, %v6453
    %v7084 = vpack.c.b16 %v6461, %v6454
    %v7085 = vpack.c.b16 %v6462, %v6455
    %v7086 = vpack.c.b16 %v6463, %v6456
    %v7087 = vpack.c.b16 %v6464, %v6457
    %v7088 = vpack.c.b16 %v6472, %v6465
    %v7089 = vpack.c.b16 %v6473, %v6466
    %v7090 = vpack.c.b16 %v6474, %v6467
    %v7091 = vpack.c.b16 %v6475, %v6468
    %v7092 = vpack.c.b16 %v6476, %v6469
    %v7093 = vpack.c.b16 %v6477, %v6470
    %v7094 = vpack.c.b16 %v6478, %v6471
    %v7095 = vpack.c.b16 %v6486, %v6479
    %v7096 = vpack.c.b16 %v6487, %v6480
    %v7097 = vpack.c.b16 %v6488, %v6481
    %v7098 = vpack.c.b16 %v6489, %v6482
    %v7099 = vpack.c.b16 %v6490, %v6483
    %v7100 = vpack.c.b16 %v6491, %v6484
    %v7101 = vpack.c.b16 %v6492, %v6485
    %v7102 = vpack.c.b16 %v6500, %v6493
    %v7103 = vpack.c.b16 %v6501, %v6494
    %v7104 = vpack.c.b16 %v6502, %v6495
    %v7105 = vpack.c.b16 %v6503, %v6496
    %v7106 = vpack.c.b16 %v6504, %v6497
    %v7107 = vpack.c.b16 %v6505, %v6498
    %v7108 = vpack.c.b16 %v6506, %v6499
    %v7109 = vpack.c.b16 %v6514, %v6507
    %v7110 = vpack.c.b16 %v6515, %v6508
    %v7111 = vpack.c.b16 %v6516, %v6509
    %v7112 = vpack.c.b16 %v6517, %v6510
    %v7113 = vpack.c.b16 %v6518, %v6511
    %v7114 = vpack.c.b16 %v6519, %v6512
    %v7115 = vpack.c.b16 %v6520, %v6513
    %v7116 = vpack.c.b16 %v6528, %v6521
    %v7117 = vpack.c.b16 %v6529, %v6522
    %v7118 = vpack.c.b16 %v6530, %v6523
    %v7119 = vpack.c.b16 %v6531, %v6524
    %v7120 = vpack.c.b16 %v6532, %v6525
    %v7121 = vpack.c.b16 %v6533, %v6526
    %v7122 = vpack.c.b16 %v6534, %v6527
    %v7123 = vpack.c.b16 %v6542, %v6535
    %v7124 = vpack.c.b16 %v6543, %v6536
    %v7125 = vpack.c.b16 %v6544, %v6537
    %v7126 = vpack.c.b16 %v6545, %v6538
    %v7127 = vpack.c.b16 %v6546, %v6539
    %v7128 = vpack.c.b16 %v6547, %v6540
    %v7129 = vpack.c.b16 %v6548, %v6541
    %v7130 = vpack.c.b16 %v6556, %v6549
    %v7131 = vpack.c.b16 %v6557, %v6550
    %v7132 = vpack.c.b16 %v6558, %v6551
    %v7133 = vpack.c.b16 %v6559, %v6552
    %v7134 = vpack.c.b16 %v6560, %v6553
    %v7135 = vpack.c.b16 %v6561, %v6554
    %v7136 = vpack.c.b16 %v6562, %v6555
    %v7137 = vpack.c.b16 %v6570, %v6563
    %v7138 = vpack.c.b16 %v6571, %v6564
    %v7139 = vpack.c.b16 %v6572, %v6565
    %v7140 = vpack.c.b16 %v6573, %v6566
    %v7141 = vpack.c.b16 %v6574, %v6567
    %v7142 = vpack.c.b16 %v6575, %v6568
    %v7143 = vpack.c.b16 %v6576, %v6569
    %v7144 = vpack.c.b16 %v6584, %v6577
    %v7145 = vpack.c.b16 %v6585, %v6578
    %v7146 = vpack.c.b16 %v6586, %v6579
    %v7147 = vpack.c.b16 %v6587, %v6580
    %v7148 = vpack.c.b16 %v6588, %v6581
    %v7149 = vpack.c.b16 %v6589, %v6582
    %v7150 = vpack.c.b16 %v6590, %v6583
    %v7151 = vpack.c.b16 %v6598, %v6591
    %v7152 = vpack.c.b16 %v6599, %v6592
    %v7153 = vpack.c.b16 %v6600, %v6593
    %v7154 = vpack.c.b16 %v6601, %v6594
    %v7155 = vpack.c.b16 %v6602, %v6595
    %v7156 = vpack.c.b16 %v6603, %v6596
    %v7157 = vpack.c.b16 %v6604, %v6597
    %v7158 = vpack.c.b16 %v6612, %v6605
    %v7159 = vpack.c.b16 %v6613, %v6606
    %v7160 = vpack.c.b16 %v6614, %v6607
    %v7161 = vpack.c.b16 %v6615, %v6608
    %v7162 = vpack.c.b16 %v6616, %v6609
    %v7163 = vpack.c.b16 %v6617, %v6610
    %v7164 = vpack.c.b16 %v6618, %v6611
    %v7165 = vpack.c.b16 %v6626, %v6619
    %v7166 = vpack.c.b16 %v6627, %v6620
    %v7167 = vpack.c.b16 %v6628, %v6621
    %v7168 = vpack.c.b16 %v6629, %v6622
    %v7169 = vpack.c.b16 %v6630, %v6623
    %v7170 = vpack.c.b16 %v6631, %v6624
    %v7171 = vpack.c.b16 %v6632, %v6625
    %v7172 = vpack.c.b16 %v6640, %v6633
    %v7173 = vpack.c.b16 %v6641, %v6634
    %v7174 = vpack.c.b16 %v6642, %v6635
    %v7175 = vpack.c.b16 %v6643, %v6636
    %v7176 = vpack.c.b16 %v6644, %v6637
    %v7177 = vpack.c.b16 %v6645, %v6638
    %v7178 = vpack.c.b16 %v6646, %v6639
    %v7179 = vpack.c.b16 %v6654, %v6647
    %v7180 = vpack.c.b16 %v6655, %v6648
    %v7181 = vpack.c.b16 %v6656, %v6649
    %v7182 = vpack.c.b16 %v6657, %v6650
    %v7183 = vpack.c.b16 %v6658, %v6651
    %v7184 = vpack.c.b16 %v6659, %v6652
    %v7185 = vpack.c.b16 %v6660, %v6653
    %v7186 = vpack.c.b16 %v6668, %v6661
    %v7187 = vpack.c.b16 %v6669, %v6662
    %v7188 = vpack.c.b16 %v6670, %v6663
    %v7189 = vpack.c.b16 %v6671, %v6664
    %v7190 = vpack.c.b16 %v6672, %v6665
    %v7191 = vpack.c.b16 %v6673, %v6666
    %v7192 = vpack.c.b16 %v6674, %v6667
    %v7193 = vpack.c.b16 %v6682, %v6675
    %v7194 = vpack.c.b16 %v6683, %v6676
    %v7195 = vpack.c.b16 %v6684, %v6677
    %v7196 = vpack.c.b16 %v6685, %v6678
    %v7197 = vpack.c.b16 %v6686, %v6679
    %v7198 = vpack.c.b16 %v6687, %v6680
    %v7199 = vpack.c.b16 %v6688, %v6681
    %v7200 = vpack.c.b16 %v6696, %v6689
    %v7201 = vpack.c.b16 %v6697, %v6690
    %v7202 = vpack.c.b16 %v6698, %v6691
    %v7203 = vpack.c.b16 %v6699, %v6692
    %v7204 = vpack.c.b16 %v6700, %v6693
    %v7205 = vpack.c.b16 %v6701, %v6694
    %v7206 = vpack.c.b16 %v6702, %v6695
    %v7207 = vpack.c.b16 %v6710, %v6703
    %v7208 = vpack.c.b16 %v6711, %v6704
    %v7209 = vpack.c.b16 %v6712, %v6705
    %v7210 = vpack.c.b16 %v6713, %v6706
    %v7211 = vpack.c.b16 %v6714, %v6707
    %v7212 = vpack.c.b16 %v6715, %v6708
    %v7213 = vpack.c.b16 %v6716, %v6709
    %v7214 = vpack.c.b16 %v6724, %v6717
    %v7215 = vpack.c.b16 %v6725, %v6718
    %v7216 = vpack.c.b16 %v6726, %v6719
    %v7217 = vpack.c.b16 %v6727, %v6720
    %v7218 = vpack.c.b16 %v6728, %v6721
    %v7219 = vpack.c.b16 %v6729, %v6722
    %v7220 = vpack.c.b16 %v6730, %v6723
    %v7221 = vpack.c.b16 %v6738, %v6731
    %v7222 = vpack.c.b16 %v6739, %v6732
    %v7223 = vpack.c.b16 %v6740, %v6733
    %v7224 = vpack.c.b16 %v6741, %v6734
    %v7225 = vpack.c.b16 %v6742, %v6735
    %v7226 = vpack.c.b16 %v6743, %v6736
    %v7227 = vpack.c.b16 %v6744, %v6737
    %v7228 = vpack.c.b16 %v6752, %v6745
    %v7229 = vpack.c.b16 %v6753, %v6746
    %v7230 = vpack.c.b16 %v6754, %v6747
    %v7231 = vpack.c.b16 %v6755, %v6748
    %v7232 = vpack.c.b16 %v6756, %v6749
    %v7233 = vpack.c.b16 %v6757, %v6750
    %v7234 = vpack.c.b16 %v6758, %v6751
    %v7235 = vpack.c.b16 %v6766, %v6759
    %v7236 = vpack.c.b16 %v6767, %v6760
    %v7237 = vpack.c.b16 %v6768, %v6761
    %v7238 = vpack.c.b16 %v6769, %v6762
    %v7239 = vpack.c.b16 %v6770, %v6763
    %v7240 = vpack.c.b16 %v6771, %v6764
    %v7241 = vpack.c.b16 %v6772, %v6765
    %v7242 = vpack.c.b16 %v6780, %v6773
    %v7243 = vpack.c.b16 %v6781, %v6774
    %v7244 = vpack.c.b16 %v6782, %v6775
    %v7245 = vpack.c.b16 %v6783, %v6776
    %v7246 = vpack.c.b16 %v6784, %v6777
    %v7247 = vpack.c.b16 %v6785, %v6778
    %v7248 = vpack.c.b16 %v6786, %v6779
    %v7249 = vpack.c.b16 %v6794, %v6787
    %v7250 = vpack.c.b16 %v6795, %v6788
    %v7251 = vpack.c.b16 %v6796, %v6789
    %v7252 = vpack.c.b16 %v6797, %v6790
    %v7253 = vpack.c.b16 %v6798, %v6791
    %v7254 = vpack.c.b16 %v6799, %v6792
    %v7255 = vpack.c.b16 %v6800, %v6793
    %v7256 = vpack.c.b16 %v6808, %v6801
    %v7257 = vpack.c.b16 %v6809, %v6802
    %v7258 = vpack.c.b16 %v6810, %v6803
    %v7259 = vpack.c.b16 %v6811, %v6804
    %v7260 = vpack.c.b16 %v6812, %v6805
    %v7261 = vpack.c.b16 %v6813, %v6806
    %v7262 = vpack.c.b16 %v6814, %v6807
    %7711 = vmatprep.subr.bf16.mxu0 %v6865
    %7712 = vmatpush1.bf16.msra.mxu0 %v6864
    %7713 = vmatprep.subr.bf16.mxu0 %v6858
    %7714 = vmatpush1.bf16.msra.mxu0 %v6857
    %7715 = vmatprep.subr.bf16.mxu0 %v6851
    %7716 = vmatpush1.bf16.msra.mxu0 %v6850
    %7717 = vmatprep.subr.bf16.mxu0 %v6844
    %7718 = vmatpush1.bf16.msra.mxu0 %v6843
    %7719 = vmatprep.subr.bf16.mxu0 %v6837
    %7720 = vmatpush1.bf16.msra.mxu0 %v6836
    %7721 = vmatprep.subr.bf16.mxu0 %v6830
    %7722 = vmatpush1.bf16.msra.mxu0 %v6829
    %7723 = vmatprep.subr.bf16.mxu0 %v6823
    %7724 = vmatpush1.bf16.msra.mxu0 %v6822
    %7725 = vmatprep.subr.bf16.mxu0 %v6816
    %7726 = vmatpush1.bf16.msra.mxu0 %v6815
    %7727 = vmatprep.subr.bf16.mxu0 %v6921
    %7728 = vmatpush2.bf16.msra.mxu0 %v6920
    %7729 = vmatprep.subr.bf16.mxu0 %v6914
    %7730 = vmatpush2.bf16.msra.mxu0 %v6913
    %7731 = vmatprep.subr.bf16.mxu0 %v6907
    %7732 = vmatpush2.bf16.msra.mxu0 %v6906
    %7733 = vmatprep.subr.bf16.mxu0 %v6900
    %7734 = vmatpush2.bf16.msra.mxu0 %v6899
    %7735 = vmatprep.subr.bf16.mxu0 %v6893
    %7736 = vmatpush2.bf16.msra.mxu0 %v6892
    %7737 = vmatprep.subr.bf16.mxu0 %v6886
    %7738 = vmatpush2.bf16.msra.mxu0 %v6885
    %7739 = vmatprep.subr.bf16.mxu0 %v6879
    %7740 = vmatpush2.bf16.msra.mxu0 %v6878
    %7741 = vmatprep.subr.bf16.mxu0 %v6872
    %7742 = vmatpush2.bf16.msra.mxu0 %v6871
    %7743 = vmatprep.mubr.bf16.mxu0 %v5363
    %7744 = vmatmul.mubr.bf16.gmra.mxu0 %v5362
    %v7745 = vpop.f32.mrf.mxu0
    %v7746 = vadd.f32 %v5375, %v7745
    %v7747 = vpop.f32.mrf.mxu0
    %v7748 = vadd.f32 %v5379, %v7747
    %v7749 = vpop.f32.mrf.mxu0
    %v7750 = vpop.f32.mrf.mxu0
    %7751 = vdwg.mxu0
    %7752 = vmatprep.subr.bf16.mxu0 %v6977
    %7753 = vmatpush1.bf16.msra.mxu0 %v6976
    %7754 = vmatprep.subr.bf16.mxu0 %v6970
    %7755 = vmatpush1.bf16.msra.mxu0 %v6969
    %7756 = vmatprep.subr.bf16.mxu0 %v6963
    %7757 = vmatpush1.bf16.msra.mxu0 %v6962
    %7758 = vmatprep.subr.bf16.mxu0 %v6956
    %7759 = vmatpush1.bf16.msra.mxu0 %v6955
    %7760 = vmatprep.subr.bf16.mxu0 %v6949
    %7761 = vmatpush1.bf16.msra.mxu0 %v6948
    %7762 = vmatprep.subr.bf16.mxu0 %v6942
    %7763 = vmatpush1.bf16.msra.mxu0 %v6941
    %7764 = vmatprep.subr.bf16.mxu0 %v6935
    %7765 = vmatpush1.bf16.msra.mxu0 %v6934
    %7766 = vmatprep.subr.bf16.mxu0 %v6928
    %7767 = vmatpush1.bf16.msra.mxu0 %v6927
    %7768 = vmatprep.subr.bf16.mxu0 %v7033
    %7769 = vmatpush2.bf16.msra.mxu0 %v7032
    %7770 = vmatprep.subr.bf16.mxu0 %v7026
    %7771 = vmatpush2.bf16.msra.mxu0 %v7025
    %7772 = vmatprep.subr.bf16.mxu0 %v7019
    %7773 = vmatpush2.bf16.msra.mxu0 %v7018
    %7774 = vmatprep.subr.bf16.mxu0 %v7012
    %7775 = vmatpush2.bf16.msra.mxu0 %v7011
    %7776 = vmatprep.subr.bf16.mxu0 %v7005
    %7777 = vmatpush2.bf16.msra.mxu0 %v7004
    %7778 = vmatprep.subr.bf16.mxu0 %v6998
    %7779 = vmatpush2.bf16.msra.mxu0 %v6997
    %7780 = vmatprep.subr.bf16.mxu0 %v6991
    %7781 = vmatpush2.bf16.msra.mxu0 %v6990
    %7782 = vmatprep.subr.bf16.mxu0 %v6984
    %7783 = vmatpush2.bf16.msra.mxu0 %v6983
    %7784 = vmatprep.mubr.bf16.mxu0 %v5365
    %7785 = vmatmul.mubr.bf16.gmra.mxu0 %v5364
    %v7786 = vpop.f32.mrf.mxu0
    %v7787 = vadd.f32 %v7746, %v7786
    %v7788 = vpop.f32.mrf.mxu0
    %v7789 = vadd.f32 %v7748, %v7788
    %v7790 = vpop.f32.mrf.mxu0
    %v7791 = vpop.f32.mrf.mxu0
    %7792 = vdwg.mxu0
    %7793 = vmatprep.subr.bf16.mxu0 %v7089
    %7794 = vmatpush1.bf16.msra.mxu0 %v7088
    %7795 = vmatprep.subr.bf16.mxu0 %v7082
    %7796 = vmatpush1.bf16.msra.mxu0 %v7081
    %7797 = vmatprep.subr.bf16.mxu0 %v7075
    %7798 = vmatpush1.bf16.msra.mxu0 %v7074
    %7799 = vmatprep.subr.bf16.mxu0 %v7068
    %7800 = vmatpush1.bf16.msra.mxu0 %v7067
    %7801 = vmatprep.subr.bf16.mxu0 %v7061
    %7802 = vmatpush1.bf16.msra.mxu0 %v7060
    %7803 = vmatprep.subr.bf16.mxu0 %v7054
    %7804 = vmatpush1.bf16.msra.mxu0 %v7053
    %7805 = vmatprep.subr.bf16.mxu0 %v7047
    %7806 = vmatpush1.bf16.msra.mxu0 %v7046
    %7807 = vmatprep.subr.bf16.mxu0 %v7040
    %7808 = vmatpush1.bf16.msra.mxu0 %v7039
    %7809 = vmatprep.subr.bf16.mxu0 %v7145
    %7810 = vmatpush2.bf16.msra.mxu0 %v7144
    %7811 = vmatprep.subr.bf16.mxu0 %v7138
    %7812 = vmatpush2.bf16.msra.mxu0 %v7137
    %7813 = vmatprep.subr.bf16.mxu0 %v7131
    %7814 = vmatpush2.bf16.msra.mxu0 %v7130
    %7815 = vmatprep.subr.bf16.mxu0 %v7124
    %7816 = vmatpush2.bf16.msra.mxu0 %v7123
    %7817 = vmatprep.subr.bf16.mxu0 %v7117
    %7818 = vmatpush2.bf16.msra.mxu0 %v7116
    %7819 = vmatprep.subr.bf16.mxu0 %v7110
    %7820 = vmatpush2.bf16.msra.mxu0 %v7109
    %7821 = vmatprep.subr.bf16.mxu0 %v7103
    %7822 = vmatpush2.bf16.msra.mxu0 %v7102
    %7823 = vmatprep.subr.bf16.mxu0 %v7096
    %7824 = vmatpush2.bf16.msra.mxu0 %v7095
    %7825 = vmatprep.mubr.bf16.mxu0 %v5367
    %7826 = vmatmul.mubr.bf16.gmra.mxu0 %v5366
    %v7827 = vpop.f32.mrf.mxu0
    %v7828 = vadd.f32 %v7787, %v7827
    %v7829 = vpop.f32.mrf.mxu0
    %v7830 = vadd.f32 %v7789, %v7829
    %v7831 = vpop.f32.mrf.mxu0
    %v7832 = vpop.f32.mrf.mxu0
    %7833 = vdwg.mxu0
    %7834 = vmatprep.subr.bf16.mxu0 %v7201
    %7835 = vmatpush1.bf16.msra.mxu0 %v7200
    %7836 = vmatprep.subr.bf16.mxu0 %v7194
    %7837 = vmatpush1.bf16.msra.mxu0 %v7193
    %7838 = vmatprep.subr.bf16.mxu0 %v7187
    %7839 = vmatpush1.bf16.msra.mxu0 %v7186
    %7840 = vmatprep.subr.bf16.mxu0 %v7180
    %7841 = vmatpush1.bf16.msra.mxu0 %v7179
    %7842 = vmatprep.subr.bf16.mxu0 %v7173
    %7843 = vmatpush1.bf16.msra.mxu0 %v7172
    %7844 = vmatprep.subr.bf16.mxu0 %v7166
    %7845 = vmatpush1.bf16.msra.mxu0 %v7165
    %7846 = vmatprep.subr.bf16.mxu0 %v7159
    %7847 = vmatpush1.bf16.msra.mxu0 %v7158
    %7848 = vmatprep.subr.bf16.mxu0 %v7152
    %7849 = vmatpush1.bf16.msra.mxu0 %v7151
    %7850 = vmatprep.subr.bf16.mxu0 %v7257
    %7851 = vmatpush2.bf16.msra.mxu0 %v7256
    %7852 = vmatprep.subr.bf16.mxu0 %v7250
    %7853 = vmatpush2.bf16.msra.mxu0 %v7249
    %7854 = vmatprep.subr.bf16.mxu0 %v7243
    %7855 = vmatpush2.bf16.msra.mxu0 %v7242
    %7856 = vmatprep.subr.bf16.mxu0 %v7236
    %7857 = vmatpush2.bf16.msra.mxu0 %v7235
    %7858 = vmatprep.subr.bf16.mxu0 %v7229
    %7859 = vmatpush2.bf16.msra.mxu0 %v7228
    %7860 = vmatprep.subr.bf16.mxu0 %v7222
    %7861 = vmatpush2.bf16.msra.mxu0 %v7221
    %7862 = vmatprep.subr.bf16.mxu0 %v7215
    %7863 = vmatpush2.bf16.msra.mxu0 %v7214
    %7864 = vmatprep.subr.bf16.mxu0 %v7208
    %7865 = vmatpush2.bf16.msra.mxu0 %v7207
    %7866 = vmatprep.mubr.bf16.mxu0 %v5369
    %7867 = vmatmul.mubr.bf16.gmra.mxu0 %v5368
    %v7868 = vpop.f32.mrf.mxu0
    %v7869 = vadd.f32 %v7828, %v7868
    %v7870 = vpop.f32.mrf.mxu0
    %v7871 = vadd.f32 %v7830, %v7870
    %v7872 = vpop.f32.mrf.mxu0
    %v7873 = vpop.f32.mrf.mxu0
    %7874 = vdwg.mxu0
    %7875 = vmatprep.subr.bf16.mxu0 %v6867
    %7876 = vmatpush1.bf16.msra.mxu0 %v6866
    %7877 = vmatprep.subr.bf16.mxu0 %v6860
    %7878 = vmatpush1.bf16.msra.mxu0 %v6859
    %7879 = vmatprep.subr.bf16.mxu0 %v6853
    %7880 = vmatpush1.bf16.msra.mxu0 %v6852
    %7881 = vmatprep.subr.bf16.mxu0 %v6846
    %7882 = vmatpush1.bf16.msra.mxu0 %v6845
    %7883 = vmatprep.subr.bf16.mxu0 %v6839
    %7884 = vmatpush1.bf16.msra.mxu0 %v6838
    %7885 = vmatprep.subr.bf16.mxu0 %v6832
    %7886 = vmatpush1.bf16.msra.mxu0 %v6831
    %7887 = vmatprep.subr.bf16.mxu0 %v6825
    %7888 = vmatpush1.bf16.msra.mxu0 %v6824
    %7889 = vmatprep.subr.bf16.mxu0 %v6818
    %7890 = vmatpush1.bf16.msra.mxu0 %v6817
    %7891 = vmatprep.subr.bf16.mxu0 %v6923
    %7892 = vmatpush2.bf16.msra.mxu0 %v6922
    %7893 = vmatprep.subr.bf16.mxu0 %v6916
    %7894 = vmatpush2.bf16.msra.mxu0 %v6915
    %7895 = vmatprep.subr.bf16.mxu0 %v6909
    %7896 = vmatpush2.bf16.msra.mxu0 %v6908
    %7897 = vmatprep.subr.bf16.mxu0 %v6902
    %7898 = vmatpush2.bf16.msra.mxu0 %v6901
    %7899 = vmatprep.subr.bf16.mxu0 %v6895
    %7900 = vmatpush2.bf16.msra.mxu0 %v6894
    %7901 = vmatprep.subr.bf16.mxu0 %v6888
    %7902 = vmatpush2.bf16.msra.mxu0 %v6887
    %7903 = vmatprep.subr.bf16.mxu0 %v6881
    %7904 = vmatpush2.bf16.msra.mxu0 %v6880
    %7905 = vmatprep.subr.bf16.mxu0 %v6874
    %7906 = vmatpush2.bf16.msra.mxu0 %v6873
    %7907 = vmatprep.mubr.bf16.mxu0 %v5363
    %7908 = vmatmul.mubr.bf16.gmra.mxu0 %v5362
    %v7909 = vpop.f32.mrf.mxu0
    %v7910 = vadd.f32 %v5383, %v7909
    %v7911 = vpop.f32.mrf.mxu0
    %v7912 = vadd.f32 %v5387, %v7911
    %v7913 = vpop.f32.mrf.mxu0
    %v7914 = vpop.f32.mrf.mxu0
    %7915 = vdwg.mxu0
    %7916 = vmatprep.subr.bf16.mxu0 %v6979
    %7917 = vmatpush1.bf16.msra.mxu0 %v6978
    %7918 = vmatprep.subr.bf16.mxu0 %v6972
    %7919 = vmatpush1.bf16.msra.mxu0 %v6971
    %7920 = vmatprep.subr.bf16.mxu0 %v6965
    %7921 = vmatpush1.bf16.msra.mxu0 %v6964
    %7922 = vmatprep.subr.bf16.mxu0 %v6958
    %7923 = vmatpush1.bf16.msra.mxu0 %v6957
    %7924 = vmatprep.subr.bf16.mxu0 %v6951
    %7925 = vmatpush1.bf16.msra.mxu0 %v6950
    %7926 = vmatprep.subr.bf16.mxu0 %v6944
    %7927 = vmatpush1.bf16.msra.mxu0 %v6943
    %7928 = vmatprep.subr.bf16.mxu0 %v6937
    %7929 = vmatpush1.bf16.msra.mxu0 %v6936
    %7930 = vmatprep.subr.bf16.mxu0 %v6930
    %7931 = vmatpush1.bf16.msra.mxu0 %v6929
    %7932 = vmatprep.subr.bf16.mxu0 %v7035
    %7933 = vmatpush2.bf16.msra.mxu0 %v7034
    %7934 = vmatprep.subr.bf16.mxu0 %v7028
    %7935 = vmatpush2.bf16.msra.mxu0 %v7027
    %7936 = vmatprep.subr.bf16.mxu0 %v7021
    %7937 = vmatpush2.bf16.msra.mxu0 %v7020
    %7938 = vmatprep.subr.bf16.mxu0 %v7014
    %7939 = vmatpush2.bf16.msra.mxu0 %v7013
    %7940 = vmatprep.subr.bf16.mxu0 %v7007
    %7941 = vmatpush2.bf16.msra.mxu0 %v7006
    %7942 = vmatprep.subr.bf16.mxu0 %v7000
    %7943 = vmatpush2.bf16.msra.mxu0 %v6999
    %7944 = vmatprep.subr.bf16.mxu0 %v6993
    %7945 = vmatpush2.bf16.msra.mxu0 %v6992
    %7946 = vmatprep.subr.bf16.mxu0 %v6986
    %7947 = vmatpush2.bf16.msra.mxu0 %v6985
    %7948 = vmatprep.mubr.bf16.mxu0 %v5365
    %7949 = vmatmul.mubr.bf16.gmra.mxu0 %v5364
    %v7950 = vpop.f32.mrf.mxu0
    %v7951 = vadd.f32 %v7910, %v7950
    %v7952 = vpop.f32.mrf.mxu0
    %v7953 = vadd.f32 %v7912, %v7952
    %v7954 = vpop.f32.mrf.mxu0
    %v7955 = vpop.f32.mrf.mxu0
    %7956 = vdwg.mxu0
    %7957 = vmatprep.subr.bf16.mxu0 %v7091
    %7958 = vmatpush1.bf16.msra.mxu0 %v7090
    %7959 = vmatprep.subr.bf16.mxu0 %v7084
    %7960 = vmatpush1.bf16.msra.mxu0 %v7083
    %7961 = vmatprep.subr.bf16.mxu0 %v7077
    %7962 = vmatpush1.bf16.msra.mxu0 %v7076
    %7963 = vmatprep.subr.bf16.mxu0 %v7070
    %7964 = vmatpush1.bf16.msra.mxu0 %v7069
    %7965 = vmatprep.subr.bf16.mxu0 %v7063
    %7966 = vmatpush1.bf16.msra.mxu0 %v7062
    %7967 = vmatprep.subr.bf16.mxu0 %v7056
    %7968 = vmatpush1.bf16.msra.mxu0 %v7055
    %7969 = vmatprep.subr.bf16.mxu0 %v7049
    %7970 = vmatpush1.bf16.msra.mxu0 %v7048
    %7971 = vmatprep.subr.bf16.mxu0 %v7042
    %7972 = vmatpush1.bf16.msra.mxu0 %v7041
    %7973 = vmatprep.subr.bf16.mxu0 %v7147
    %7974 = vmatpush2.bf16.msra.mxu0 %v7146
    %7975 = vmatprep.subr.bf16.mxu0 %v7140
    %7976 = vmatpush2.bf16.msra.mxu0 %v7139
    %7977 = vmatprep.subr.bf16.mxu0 %v7133
    %7978 = vmatpush2.bf16.msra.mxu0 %v7132
    %7979 = vmatprep.subr.bf16.mxu0 %v7126
    %7980 = vmatpush2.bf16.msra.mxu0 %v7125
    %7981 = vmatprep.subr.bf16.mxu0 %v7119
    %7982 = vmatpush2.bf16.msra.mxu0 %v7118
    %7983 = vmatprep.subr.bf16.mxu0 %v7112
    %7984 = vmatpush2.bf16.msra.mxu0 %v7111
    %7985 = vmatprep.subr.bf16.mxu0 %v7105
    %7986 = vmatpush2.bf16.msra.mxu0 %v7104
    %7987 = vmatprep.subr.bf16.mxu0 %v7098
    %7988 = vmatpush2.bf16.msra.mxu0 %v7097
    %7989 = vmatprep.mubr.bf16.mxu0 %v5367
    %7990 = vmatmul.mubr.bf16.gmra.mxu0 %v5366
    %v7991 = vpop.f32.mrf.mxu0
    %v7992 = vadd.f32 %v7951, %v7991
    %v7993 = vpop.f32.mrf.mxu0
    %v7994 = vadd.f32 %v7953, %v7993
    %v7995 = vpop.f32.mrf.mxu0
    %v7996 = vpop.f32.mrf.mxu0
    %7997 = vdwg.mxu0
    %7998 = vmatprep.subr.bf16.mxu0 %v7203
    %7999 = vmatpush1.bf16.msra.mxu0 %v7202
    %8000 = vmatprep.subr.bf16.mxu0 %v7196
    %8001 = vmatpush1.bf16.msra.mxu0 %v7195
    %8002 = vmatprep.subr.bf16.mxu0 %v7189
    %8003 = vmatpush1.bf16.msra.mxu0 %v7188
    %8004 = vmatprep.subr.bf16.mxu0 %v7182
    %8005 = vmatpush1.bf16.msra.mxu0 %v7181
    %8006 = vmatprep.subr.bf16.mxu0 %v7175
    %8007 = vmatpush1.bf16.msra.mxu0 %v7174
    %8008 = vmatprep.subr.bf16.mxu0 %v7168
    %8009 = vmatpush1.bf16.msra.mxu0 %v7167
    %8010 = vmatprep.subr.bf16.mxu0 %v7161
    %8011 = vmatpush1.bf16.msra.mxu0 %v7160
    %8012 = vmatprep.subr.bf16.mxu0 %v7154
    %8013 = vmatpush1.bf16.msra.mxu0 %v7153
    %8014 = vmatprep.subr.bf16.mxu0 %v7259
    %8015 = vmatpush2.bf16.msra.mxu0 %v7258
    %8016 = vmatprep.subr.bf16.mxu0 %v7252
    %8017 = vmatpush2.bf16.msra.mxu0 %v7251
    %8018 = vmatprep.subr.bf16.mxu0 %v7245
    %8019 = vmatpush2.bf16.msra.mxu0 %v7244
    %8020 = vmatprep.subr.bf16.mxu0 %v7238
    %8021 = vmatpush2.bf16.msra.mxu0 %v7237
    %8022 = vmatprep.subr.bf16.mxu0 %v7231
    %8023 = vmatpush2.bf16.msra.mxu0 %v7230
    %8024 = vmatprep.subr.bf16.mxu0 %v7224
    %8025 = vmatpush2.bf16.msra.mxu0 %v7223
    %8026 = vmatprep.subr.bf16.mxu0 %v7217
    %8027 = vmatpush2.bf16.msra.mxu0 %v7216
    %8028 = vmatprep.subr.bf16.mxu0 %v7210
    %8029 = vmatpush2.bf16.msra.mxu0 %v7209
    %8030 = vmatprep.mubr.bf16.mxu0 %v5369
    %8031 = vmatmul.mubr.bf16.gmra.mxu0 %v5368
    %v8032 = vpop.f32.mrf.mxu0
    %v8033 = vadd.f32 %v7992, %v8032
    %v8034 = vpop.f32.mrf.mxu0
    %v8035 = vadd.f32 %v7994, %v8034
    %v8036 = vpop.f32.mrf.mxu0
    %v8037 = vpop.f32.mrf.mxu0
    %8038 = vdwg.mxu0
    %8039 = vmatprep.subr.bf16.mxu0 %v6869
    %8040 = vmatpush1.bf16.msra.mxu0 %v6868
    %8041 = vmatprep.subr.bf16.mxu0 %v6862
    %8042 = vmatpush1.bf16.msra.mxu0 %v6861
    %8043 = vmatprep.subr.bf16.mxu0 %v6855
    %8044 = vmatpush1.bf16.msra.mxu0 %v6854
    %8045 = vmatprep.subr.bf16.mxu0 %v6848
    %8046 = vmatpush1.bf16.msra.mxu0 %v6847
    %8047 = vmatprep.subr.bf16.mxu0 %v6841
    %8048 = vmatpush1.bf16.msra.mxu0 %v6840
    %8049 = vmatprep.subr.bf16.mxu0 %v6834
    %8050 = vmatpush1.bf16.msra.mxu0 %v6833
    %8051 = vmatprep.subr.bf16.mxu0 %v6827
    %8052 = vmatpush1.bf16.msra.mxu0 %v6826
    %8053 = vmatprep.subr.bf16.mxu0 %v6820
    %8054 = vmatpush1.bf16.msra.mxu0 %v6819
    %8055 = vmatprep.subr.bf16.mxu0 %v6925
    %8056 = vmatpush2.bf16.msra.mxu0 %v6924
    %8057 = vmatprep.subr.bf16.mxu0 %v6918
    %8058 = vmatpush2.bf16.msra.mxu0 %v6917
    %8059 = vmatprep.subr.bf16.mxu0 %v6911
    %8060 = vmatpush2.bf16.msra.mxu0 %v6910
    %8061 = vmatprep.subr.bf16.mxu0 %v6904
    %8062 = vmatpush2.bf16.msra.mxu0 %v6903
    %8063 = vmatprep.subr.bf16.mxu0 %v6897
    %8064 = vmatpush2.bf16.msra.mxu0 %v6896
    %8065 = vmatprep.subr.bf16.mxu0 %v6890
    %8066 = vmatpush2.bf16.msra.mxu0 %v6889
    %8067 = vmatprep.subr.bf16.mxu0 %v6883
    %8068 = vmatpush2.bf16.msra.mxu0 %v6882
    %8069 = vmatprep.subr.bf16.mxu0 %v6876
    %8070 = vmatpush2.bf16.msra.mxu0 %v6875
    %8071 = vmatprep.mubr.bf16.mxu0 %v5363
    %8072 = vmatmul.mubr.bf16.gmra.mxu0 %v5362
    %v8073 = vpop.f32.mrf.mxu0
    %v8074 = vadd.f32 %v5391, %v8073
    %v8075 = vpop.f32.mrf.mxu0
    %v8076 = vadd.f32 %v5395, %v8075
    %v8077 = vpop.f32.mrf.mxu0
    %v8078 = vpop.f32.mrf.mxu0
    %8079 = vdwg.mxu0
    %8080 = vmatprep.subr.bf16.mxu0 %v6981
    %8081 = vmatpush1.bf16.msra.mxu0 %v6980
    %8082 = vmatprep.subr.bf16.mxu0 %v6974
    %8083 = vmatpush1.bf16.msra.mxu0 %v6973
    %8084 = vmatprep.subr.bf16.mxu0 %v6967
    %8085 = vmatpush1.bf16.msra.mxu0 %v6966
    %8086 = vmatprep.subr.bf16.mxu0 %v6960
    %8087 = vmatpush1.bf16.msra.mxu0 %v6959
    %8088 = vmatprep.subr.bf16.mxu0 %v6953
    %8089 = vmatpush1.bf16.msra.mxu0 %v6952
    %8090 = vmatprep.subr.bf16.mxu0 %v6946
    %8091 = vmatpush1.bf16.msra.mxu0 %v6945
    %8092 = vmatprep.subr.bf16.mxu0 %v6939
    %8093 = vmatpush1.bf16.msra.mxu0 %v6938
    %8094 = vmatprep.subr.bf16.mxu0 %v6932
    %8095 = vmatpush1.bf16.msra.mxu0 %v6931
    %8096 = vmatprep.subr.bf16.mxu0 %v7037
    %8097 = vmatpush2.bf16.msra.mxu0 %v7036
    %8098 = vmatprep.subr.bf16.mxu0 %v7030
    %8099 = vmatpush2.bf16.msra.mxu0 %v7029
    %8100 = vmatprep.subr.bf16.mxu0 %v7023
    %8101 = vmatpush2.bf16.msra.mxu0 %v7022
    %8102 = vmatprep.subr.bf16.mxu0 %v7016
    %8103 = vmatpush2.bf16.msra.mxu0 %v7015
    %8104 = vmatprep.subr.bf16.mxu0 %v7009
    %8105 = vmatpush2.bf16.msra.mxu0 %v7008
    %8106 = vmatprep.subr.bf16.mxu0 %v7002
    %8107 = vmatpush2.bf16.msra.mxu0 %v7001
    %8108 = vmatprep.subr.bf16.mxu0 %v6995
    %8109 = vmatpush2.bf16.msra.mxu0 %v6994
    %8110 = vmatprep.subr.bf16.mxu0 %v6988
    %8111 = vmatpush2.bf16.msra.mxu0 %v6987
    %8112 = vmatprep.mubr.bf16.mxu0 %v5365
    %8113 = vmatmul.mubr.bf16.gmra.mxu0 %v5364
    %v8114 = vpop.f32.mrf.mxu0
    %v8115 = vadd.f32 %v8074, %v8114
    %v8116 = vpop.f32.mrf.mxu0
    %v8117 = vadd.f32 %v8076, %v8116
    %v8118 = vpop.f32.mrf.mxu0
    %v8119 = vpop.f32.mrf.mxu0
    %8120 = vdwg.mxu0
    %8121 = vmatprep.subr.bf16.mxu0 %v7093
    %8122 = vmatpush1.bf16.msra.mxu0 %v7092
    %8123 = vmatprep.subr.bf16.mxu0 %v7086
    %8124 = vmatpush1.bf16.msra.mxu0 %v7085
    %8125 = vmatprep.subr.bf16.mxu0 %v7079
    %8126 = vmatpush1.bf16.msra.mxu0 %v7078
    %8127 = vmatprep.subr.bf16.mxu0 %v7072
    %8128 = vmatpush1.bf16.msra.mxu0 %v7071
    %8129 = vmatprep.subr.bf16.mxu0 %v7065
    %8130 = vmatpush1.bf16.msra.mxu0 %v7064
    %8131 = vmatprep.subr.bf16.mxu0 %v7058
    %8132 = vmatpush1.bf16.msra.mxu0 %v7057
    %8133 = vmatprep.subr.bf16.mxu0 %v7051
    %8134 = vmatpush1.bf16.msra.mxu0 %v7050
    %8135 = vmatprep.subr.bf16.mxu0 %v7044
    %8136 = vmatpush1.bf16.msra.mxu0 %v7043
    %8137 = vmatprep.subr.bf16.mxu0 %v7149
    %8138 = vmatpush2.bf16.msra.mxu0 %v7148
    %8139 = vmatprep.subr.bf16.mxu0 %v7142
    %8140 = vmatpush2.bf16.msra.mxu0 %v7141
    %8141 = vmatprep.subr.bf16.mxu0 %v7135
    %8142 = vmatpush2.bf16.msra.mxu0 %v7134
    %8143 = vmatprep.subr.bf16.mxu0 %v7128
    %8144 = vmatpush2.bf16.msra.mxu0 %v7127
    %8145 = vmatprep.subr.bf16.mxu0 %v7121
    %8146 = vmatpush2.bf16.msra.mxu0 %v7120
    %8147 = vmatprep.subr.bf16.mxu0 %v7114
    %8148 = vmatpush2.bf16.msra.mxu0 %v7113
    %8149 = vmatprep.subr.bf16.mxu0 %v7107
    %8150 = vmatpush2.bf16.msra.mxu0 %v7106
    %8151 = vmatprep.subr.bf16.mxu0 %v7100
    %8152 = vmatpush2.bf16.msra.mxu0 %v7099
    %8153 = vmatprep.mubr.bf16.mxu0 %v5367
    %8154 = vmatmul.mubr.bf16.gmra.mxu0 %v5366
    %v8155 = vpop.f32.mrf.mxu0
    %v8156 = vadd.f32 %v8115, %v8155
    %v8157 = vpop.f32.mrf.mxu0
    %v8158 = vadd.f32 %v8117, %v8157
    %v8159 = vpop.f32.mrf.mxu0
    %v8160 = vpop.f32.mrf.mxu0
    %8161 = vdwg.mxu0
    %8162 = vmatprep.subr.bf16.mxu0 %v7205
    %8163 = vmatpush1.bf16.msra.mxu0 %v7204
    %8164 = vmatprep.subr.bf16.mxu0 %v7198
    %8165 = vmatpush1.bf16.msra.mxu0 %v7197
    %8166 = vmatprep.subr.bf16.mxu0 %v7191
    %8167 = vmatpush1.bf16.msra.mxu0 %v7190
    %8168 = vmatprep.subr.bf16.mxu0 %v7184
    %8169 = vmatpush1.bf16.msra.mxu0 %v7183
    %8170 = vmatprep.subr.bf16.mxu0 %v7177
    %8171 = vmatpush1.bf16.msra.mxu0 %v7176
    %8172 = vmatprep.subr.bf16.mxu0 %v7170
    %8173 = vmatpush1.bf16.msra.mxu0 %v7169
    %8174 = vmatprep.subr.bf16.mxu0 %v7163
    %8175 = vmatpush1.bf16.msra.mxu0 %v7162
    %8176 = vmatprep.subr.bf16.mxu0 %v7156
    %8177 = vmatpush1.bf16.msra.mxu0 %v7155
    %8178 = vmatprep.subr.bf16.mxu0 %v7261
    %8179 = vmatpush2.bf16.msra.mxu0 %v7260
    %8180 = vmatprep.subr.bf16.mxu0 %v7254
    %8181 = vmatpush2.bf16.msra.mxu0 %v7253
    %8182 = vmatprep.subr.bf16.mxu0 %v7247
    %8183 = vmatpush2.bf16.msra.mxu0 %v7246
    %8184 = vmatprep.subr.bf16.mxu0 %v7240
    %8185 = vmatpush2.bf16.msra.mxu0 %v7239
    %8186 = vmatprep.subr.bf16.mxu0 %v7233
    %8187 = vmatpush2.bf16.msra.mxu0 %v7232
    %8188 = vmatprep.subr.bf16.mxu0 %v7226
    %8189 = vmatpush2.bf16.msra.mxu0 %v7225
    %8190 = vmatprep.subr.bf16.mxu0 %v7219
    %8191 = vmatpush2.bf16.msra.mxu0 %v7218
    %8192 = vmatprep.subr.bf16.mxu0 %v7212
    %8193 = vmatpush2.bf16.msra.mxu0 %v7211
    %8194 = vmatprep.mubr.bf16.mxu0 %v5369
    %8195 = vmatmul.mubr.bf16.gmra.mxu0 %v5368
    %v8196 = vpop.f32.mrf.mxu0
    %v8197 = vadd.f32 %v8156, %v8196
    %v8198 = vpop.f32.mrf.mxu0
    %v8199 = vadd.f32 %v8158, %v8198
    %v8200 = vpop.f32.mrf.mxu0
    %v8201 = vpop.f32.mrf.mxu0
    %8202 = vdwg.mxu0
    %8203 = vmatprep.subr.bf16.mxu0 0
    %8204 = vmatpush1.bf16.msra.mxu0 %v6870
    %8205 = vmatprep.subr.bf16.mxu0 0
    %8206 = vmatpush1.bf16.msra.mxu0 %v6863
    %8207 = vmatprep.subr.bf16.mxu0 0
    %8208 = vmatpush1.bf16.msra.mxu0 %v6856
    %8209 = vmatprep.subr.bf16.mxu0 0
    %8210 = vmatpush1.bf16.msra.mxu0 %v6849
    %8211 = vmatprep.subr.bf16.mxu0 0
    %8212 = vmatpush1.bf16.msra.mxu0 %v6842
    %8213 = vmatprep.subr.bf16.mxu0 0
    %8214 = vmatpush1.bf16.msra.mxu0 %v6835
    %8215 = vmatprep.subr.bf16.mxu0 0
    %8216 = vmatpush1.bf16.msra.mxu0 %v6828
    %8217 = vmatprep.subr.bf16.mxu0 0
    %8218 = vmatpush1.bf16.msra.mxu0 %v6821
    %8219 = vmatprep.subr.bf16.mxu0 0
    %8220 = vmatpush2.bf16.msra.mxu0 %v6926
    %8221 = vmatprep.subr.bf16.mxu0 0
    %8222 = vmatpush2.bf16.msra.mxu0 %v6919
    %8223 = vmatprep.subr.bf16.mxu0 0
    %8224 = vmatpush2.bf16.msra.mxu0 %v6912
    %8225 = vmatprep.subr.bf16.mxu0 0
    %8226 = vmatpush2.bf16.msra.mxu0 %v6905
    %8227 = vmatprep.subr.bf16.mxu0 0
    %8228 = vmatpush2.bf16.msra.mxu0 %v6898
    %8229 = vmatprep.subr.bf16.mxu0 0
    %8230 = vmatpush2.bf16.msra.mxu0 %v6891
    %8231 = vmatprep.subr.bf16.mxu0 0
    %8232 = vmatpush2.bf16.msra.mxu0 %v6884
    %8233 = vmatprep.subr.bf16.mxu0 0
    %8234 = vmatpush2.bf16.msra.mxu0 %v6877
    %8235 = vmatprep.mubr.bf16.mxu0 %v5363
    %8236 = vmatmul.mubr.bf16.gmra.mxu0 %v5362
    %v8237 = vpop.f32.mrf.mxu0
    %v8238 = vadd.f32 %v5399, %v8237
    %v8239 = vpop.f32.mrf.mxu0
    %v8240 = vpop.f32.mrf.mxu0
    %v8241 = vpop.f32.mrf.mxu0
    %8242 = vdwg.mxu0
    %8243 = vmatprep.subr.bf16.mxu0 0
    %8244 = vmatpush1.bf16.msra.mxu0 %v6982
    %8245 = vmatprep.subr.bf16.mxu0 0
    %8246 = vmatpush1.bf16.msra.mxu0 %v6975
    %8247 = vmatprep.subr.bf16.mxu0 0
    %8248 = vmatpush1.bf16.msra.mxu0 %v6968
    %8249 = vmatprep.subr.bf16.mxu0 0
    %8250 = vmatpush1.bf16.msra.mxu0 %v6961
    %8251 = vmatprep.subr.bf16.mxu0 0
    %8252 = vmatpush1.bf16.msra.mxu0 %v6954
    %8253 = vmatprep.subr.bf16.mxu0 0
    %8254 = vmatpush1.bf16.msra.mxu0 %v6947
    %8255 = vmatprep.subr.bf16.mxu0 0
    %8256 = vmatpush1.bf16.msra.mxu0 %v6940
    %8257 = vmatprep.subr.bf16.mxu0 0
    %8258 = vmatpush1.bf16.msra.mxu0 %v6933
    %8259 = vmatprep.subr.bf16.mxu0 0
    %8260 = vmatpush2.bf16.msra.mxu0 %v7038
    %8261 = vmatprep.subr.bf16.mxu0 0
    %8262 = vmatpush2.bf16.msra.mxu0 %v7031
    %8263 = vmatprep.subr.bf16.mxu0 0
    %8264 = vmatpush2.bf16.msra.mxu0 %v7024
    %8265 = vmatprep.subr.bf16.mxu0 0
    %8266 = vmatpush2.bf16.msra.mxu0 %v7017
    %8267 = vmatprep.subr.bf16.mxu0 0
    %8268 = vmatpush2.bf16.msra.mxu0 %v7010
    %8269 = vmatprep.subr.bf16.mxu0 0
    %8270 = vmatpush2.bf16.msra.mxu0 %v7003
    %8271 = vmatprep.subr.bf16.mxu0 0
    %8272 = vmatpush2.bf16.msra.mxu0 %v6996
    %8273 = vmatprep.subr.bf16.mxu0 0
    %8274 = vmatpush2.bf16.msra.mxu0 %v6989
    %8275 = vmatprep.mubr.bf16.mxu0 %v5365
    %8276 = vmatmul.mubr.bf16.gmra.mxu0 %v5364
    %v8277 = vpop.f32.mrf.mxu0
    %v8278 = vadd.f32 %v8238, %v8277
    %v8279 = vpop.f32.mrf.mxu0
    %v8280 = vpop.f32.mrf.mxu0
    %v8281 = vpop.f32.mrf.mxu0
    %8282 = vdwg.mxu0
    %8283 = vmatprep.subr.bf16.mxu0 0
    %8284 = vmatpush1.bf16.msra.mxu0 %v7094
    %8285 = vmatprep.subr.bf16.mxu0 0
    %8286 = vmatpush1.bf16.msra.mxu0 %v7087
    %8287 = vmatprep.subr.bf16.mxu0 0
    %8288 = vmatpush1.bf16.msra.mxu0 %v7080
    %8289 = vmatprep.subr.bf16.mxu0 0
    %8290 = vmatpush1.bf16.msra.mxu0 %v7073
    %8291 = vmatprep.subr.bf16.mxu0 0
    %8292 = vmatpush1.bf16.msra.mxu0 %v7066
    %8293 = vmatprep.subr.bf16.mxu0 0
    %8294 = vmatpush1.bf16.msra.mxu0 %v7059
    %8295 = vmatprep.subr.bf16.mxu0 0
    %8296 = vmatpush1.bf16.msra.mxu0 %v7052
    %8297 = vmatprep.subr.bf16.mxu0 0
    %8298 = vmatpush1.bf16.msra.mxu0 %v7045
    %8299 = vmatprep.subr.bf16.mxu0 0
    %8300 = vmatpush2.bf16.msra.mxu0 %v7150
    %8301 = vmatprep.subr.bf16.mxu0 0
    %8302 = vmatpush2.bf16.msra.mxu0 %v7143
    %8303 = vmatprep.subr.bf16.mxu0 0
    %8304 = vmatpush2.bf16.msra.mxu0 %v7136
    %8305 = vmatprep.subr.bf16.mxu0 0
    %8306 = vmatpush2.bf16.msra.mxu0 %v7129
    %8307 = vmatprep.subr.bf16.mxu0 0
    %8308 = vmatpush2.bf16.msra.mxu0 %v7122
    %8309 = vmatprep.subr.bf16.mxu0 0
    %8310 = vmatpush2.bf16.msra.mxu0 %v7115
    %8311 = vmatprep.subr.bf16.mxu0 0
    %8312 = vmatpush2.bf16.msra.mxu0 %v7108
    %8313 = vmatprep.subr.bf16.mxu0 0
    %8314 = vmatpush2.bf16.msra.mxu0 %v7101
    %8315 = vmatprep.mubr.bf16.mxu0 %v5367
    %8316 = vmatmul.mubr.bf16.gmra.mxu0 %v5366
    %v8317 = vpop.f32.mrf.mxu0
    %v8318 = vadd.f32 %v8278, %v8317
    %v8319 = vpop.f32.mrf.mxu0
    %v8320 = vpop.f32.mrf.mxu0
    %v8321 = vpop.f32.mrf.mxu0
    %8322 = vdwg.mxu0
    %8323 = vmatprep.subr.bf16.mxu0 0
    %8324 = vmatpush1.bf16.msra.mxu0 %v7206
    %8325 = vmatprep.subr.bf16.mxu0 0
    %8326 = vmatpush1.bf16.msra.mxu0 %v7199
    %8327 = vmatprep.subr.bf16.mxu0 0
    %8328 = vmatpush1.bf16.msra.mxu0 %v7192
    %8329 = vmatprep.subr.bf16.mxu0 0
    %8330 = vmatpush1.bf16.msra.mxu0 %v7185
    %8331 = vmatprep.subr.bf16.mxu0 0
    %8332 = vmatpush1.bf16.msra.mxu0 %v7178
    %8333 = vmatprep.subr.bf16.mxu0 0
    %8334 = vmatpush1.bf16.msra.mxu0 %v7171
    %8335 = vmatprep.subr.bf16.mxu0 0
    %8336 = vmatpush1.bf16.msra.mxu0 %v7164
    %8337 = vmatprep.subr.bf16.mxu0 0
    %8338 = vmatpush1.bf16.msra.mxu0 %v7157
    %8339 = vmatprep.subr.bf16.mxu0 0
    %8340 = vmatpush2.bf16.msra.mxu0 %v7262
    %8341 = vmatprep.subr.bf16.mxu0 0
    %8342 = vmatpush2.bf16.msra.mxu0 %v7255
    %8343 = vmatprep.subr.bf16.mxu0 0
    %8344 = vmatpush2.bf16.msra.mxu0 %v7248
    %8345 = vmatprep.subr.bf16.mxu0 0
    %8346 = vmatpush2.bf16.msra.mxu0 %v7241
    %8347 = vmatprep.subr.bf16.mxu0 0
    %8348 = vmatpush2.bf16.msra.mxu0 %v7234
    %8349 = vmatprep.subr.bf16.mxu0 0
    %8350 = vmatpush2.bf16.msra.mxu0 %v7227
    %8351 = vmatprep.subr.bf16.mxu0 0
    %8352 = vmatpush2.bf16.msra.mxu0 %v7220
    %8353 = vmatprep.subr.bf16.mxu0 0
    %8354 = vmatpush2.bf16.msra.mxu0 %v7213
    %8355 = vmatprep.mubr.bf16.mxu0 %v5369
    %8356 = vmatmul.mubr.bf16.gmra.mxu0 %v5368
    %v8357 = vpop.f32.mrf.mxu0
    %v8358 = vadd.f32 %v8318, %v8357
    %v8359 = vpop.f32.mrf.mxu0
    %v8360 = vpop.f32.mrf.mxu0
    %v8361 = vpop.f32.mrf.mxu0
    %8362 = vdwg.mxu0
    %v8363 = vtanh.pop %v7869
    %v8364 = vtanh.pop %v7871
    %v8365 = vtanh.pop %v8033
    %v8366 = vtanh.pop %v8035
    %v8367 = vtanh.pop %v8197
    %v8368 = vtanh.pop %v8199
    %v8369 = vtanh.pop %v8358
    %8370 = vst [vmem:[#allocation7] sm:$0xff] %v8363
    %8371 = vst [vmem:[#allocation7 + $0x8] sm:$0xff] %v8364
    %8372 = vst [vmem:[#allocation7 + $0x10] sm:$0xff] %v8365
    %8373 = vst [vmem:[#allocation7 + $0x18] sm:$0xff] %v8366
    %8374 = vst [vmem:[#allocation7 + $0x20] sm:$0xff] %v8367
    %8375 = vst [vmem:[#allocation7 + $0x28] sm:$0xff] %v8368
    %vm8376 = vcmask 130048
    %8377 = vst.msk [vmem:[#allocation7 + $0x30] sm:$0xff] %vm8376, %v8369
    // Predicated region
    $region150: #{tpu_custom_call.1} parent=1 // pred_check
      _
    $region151: #{tpu_custom_call.1} parent=1 // pred_check_branch
      %8379 = sbr.rel (0) target = $region153
    $region152: #{tpu_custom_call.1} parent=1 // pred_region
      %s8381 = ssub.s32 896, 896
      %8382 = vsyncadd [#allocation8], %s8381
      %s8384 = sshll.u32 [#allocation7], 4
      %s8385 = int_to_ptr.vmem [resolvable:$true] %s8384
      %8387 = dma.vmem_to_hbm [thread:$0]  %s8385, 896, %s7, [#allocation8]
    $region153: #{tpu_custom_call.1} parent=1 // pred_fallthru
      _
    // Predicated region
    $region154: #{tpu_custom_call.1} parent=1 // pred_check
      _
    $region155: #{tpu_custom_call.1} parent=1 // pred_check_branch
      %8389 = sbr.rel (0) target = $region157
    $region156: #{tpu_custom_call.1} parent=1 // pred_region
      %8390 = dma.done [#allocation8], 896
    $region157: #{tpu_custom_call.1} parent=1 // pred_fallthru
      _
    %8391 = vsyncpa [#allocation8], 1
  %8392 = vsyncmov [#allocation6]
  %s8393 = vpop.sfrf %8392
  %p8394 = scmp.eq.s32.totalorder %s8393, 0
  %p8395 = pneg %p8394
  %8397 = shalt.err (%p8395)
  %s8398 = scalar_lea.sflag [#allocation6], 1
  %8399 = vsyncmov %s8398
  %s8400 = vpop.sfrf %8399
  %p8401 = scmp.eq.s32.totalorder %s8400, 0
  %p8402 = pneg %p8401
  %8404 = shalt.err (%p8402)
  %s8405 = scalar_lea.sflag [#allocation6], 2
  %8406 = vsyncmov %s8405
  %s8407 = vpop.sfrf %8406
  %p8408 = scmp.eq.s32.totalorder %s8407, 0
  %p8409 = pneg %p8408
  %8411 = shalt.err (%p8409)
  %s8412 = scalar_lea.sflag [#allocation6], 3
  %8413 = vsyncmov %s8412
  %s8414 = vpop.sfrf %8413
  %p8415 = scmp.eq.s32.totalorder %s8414, 0
  %p8416 = pneg %p8415
  %8418 = shalt.err (%p8416)

</llo_original>
